<compile_context>
chip_gen: v6e
topology: v6e:2x2x1
jax: 0.10.0
libtpu: 0.0.40
codegen_flags: <defaults>
</compile_context>

<pallas_src>
import functools

import jax
import jax.numpy as jnp
import numpy as np
from jax.experimental import pallas as pl
from jax.experimental.pallas import tpu as pltpu

# Fixed decoder geometry (from the PyTorch module).
H0, W0, C0 = 7, 7, 64            # fc output image (NHWC)
H1, W1, C1 = 14, 14, 32          # after first ConvTranspose2d
H2, W2, C2 = 28, 28, 1           # after second ConvTranspose2d
LAN0 = W0 * C0                   # 448 live lanes of a layer-1 input row (x*64+c)
LAN1 = W1 * C1                   # 448 live lanes of a layer-2 input row (x*32+c)
LAN2 = W2 * C2                   # 28  lanes of an output row
LANP = 512                       # lane-padded row width (448 -> 4*128)
NFC = H0 * LANP                  # 3584: 7 lane-padded fc rows, flattened
KSIZE, STRIDE, PAD = 4, 2, 1


# ----------------------------------------------------------------------------
# Fused decoder kernel: one grid step == Btile images, everything in VMEM.
# ----------------------------------------------------------------------------
def _decoder_kernel(z_ref, wfc_ref, bfc_ref, k1_ref, b1_ref, k2_ref, b2_ref,
                    out_ref, h_slab, y1_slab, *, btile):
    bt = btile
    f32 = jnp.float32

    # ---------------- fc(z): one MXU pass for the whole image tile ----------
    # h[i, y*512 + x*64 + c]; padded lanes [448:512) of every row stay zero.
    z = z_ref[0]                                                  # (bt, L)
    h = (jnp.dot(z, wfc_ref[...], preferred_element_type=f32)
         + bfc_ref[...])                                          # (bt, 3584)

    # Scatter the 7 row groups into the y-major, row-padded layer-1 slab:
    #   slab row (y+1)*bt + i  <-  image i, input row y.  Pad blocks 0 and 8.
    pad_blk = jnp.zeros((bt, LANP), f32)
    h_slab[0:bt, :] = pad_blk
    h_slab[(H0 + 1) * bt:(H0 + 2) * bt, :] = pad_blk
    for y in range(H0):
        h_slab[(y + 1) * bt:(y + 2) * bt, :] = h[:, y * LANP:(y + 1) * LANP]

    # -------- ConvTranspose2d(64->32, 4, 2, 1) + ReLU ------------------------
    # One fused Toeplitz matmul; k1 columns = [krow1 | krow2 | krow3 | krow0].
    #   even out row 2m : krow1 (ih=m)   + krow3 (ih=m-1)
    #   odd  out row 2m+1: krow2 (ih=m)  + krow0 (ih=m+1)
    # Row shifts are aligned shift-by-bt block slices in the y-major layout.
    d1 = jnp.dot(h_slab[...], k1_ref[...], preferred_element_type=f32)  # (9bt, 2048)
    b1 = b1_ref[...]                                                    # (1, 512)
    y1_even = jnp.maximum(
        d1[bt:(H0 + 1) * bt, 0:LANP]
        + d1[0:H0 * bt, 2 * LANP:3 * LANP] + b1, 0.0)                   # (7bt, 512)
    y1_odd = jnp.maximum(
        d1[bt:(H0 + 1) * bt, LANP:2 * LANP]
        + d1[2 * bt:(H0 + 2) * bt, 3 * LANP:4 * LANP] + b1, 0.0)        # (7bt, 512)

    # Interleave even/odd row blocks into the row-padded, y-major layer-2 slab
    # (14 contiguous (bt, 512) block stores -- no per-row masked stores).
    y1_slab[0:bt, :] = pad_blk
    y1_slab[(H1 + 1) * bt:(H1 + 2) * bt, :] = pad_blk
    for m in range(H0):
        y1_slab[(2 * m + 1) * bt:(2 * m + 2) * bt, :] = y1_even[m * bt:(m + 1) * bt, :]
        y1_slab[(2 * m + 2) * bt:(2 * m + 3) * bt, :] = y1_odd[m * bt:(m + 1) * bt, :]

    # -------- ConvTranspose2d(32->1, 4, 2, 1) + Sigmoid ----------------------
    rows_c = y1_slab[bt:(H1 + 1) * bt, :]          # input row q      (14bt, 512)
    rows_m1 = y1_slab[0:H1 * bt, :]                # input row q - 1
    rows_p1 = y1_slab[2 * bt:(H1 + 2) * bt, :]     # input row q + 1
    b2 = b2_ref[...]                               # (1, 1)
    y2_even = (jnp.dot(rows_c, k2_ref[1], preferred_element_type=f32)
               + jnp.dot(rows_m1, k2_ref[3], preferred_element_type=f32) + b2)
    y2_odd = (jnp.dot(rows_c, k2_ref[2], preferred_element_type=f32)
              + jnp.dot(rows_p1, k2_ref[0], preferred_element_type=f32) + b2)
    out_ref[0, 0, :, :] = jax.nn.sigmoid(y2_even)  # rows (q, i) -> out row 2q
    out_ref[0, 1, :, :] = jax.nn.sigmoid(y2_odd)   # rows (q, i) -> out row 2q+1


# ----------------------------------------------------------------------------
# One-time (host-side) parameter preparation -- hoisted out of the forward.
# ----------------------------------------------------------------------------
def _build_width_matrices(w, w_in):
    """Fold the width direction of a stride-2 / pad-1 ConvTranspose2d into one
    dense matrix per kernel row kh:
        K[kh][iw*Cin + ci, ow*Cout + co] = w[ci, co, kh, ow - 2*iw + 1]
    (zero where the kernel-column index falls outside [0, 4))."""
    cin, cout, n_kh, n_kw = w.shape
    w_out = STRIDE * w_in
    iw = np.arange(w_in)[:, None]
    ow = np.arange(w_out)[None, :]
    kcol = ow - STRIDE * iw + PAD                           # (w_in, w_out)
    valid = (kcol >= 0) & (kcol < n_kw)
    kcol = np.clip(kcol, 0, n_kw - 1)
    g = w[:, :, :, kcol] * valid[None, None, None]          # (Cin,Cout,KH,w_in,w_out)
    g = np.transpose(g, (2, 3, 0, 4, 1))                    # (KH,w_in,Cin,w_out,Cout)
    return np.ascontiguousarray(
        g.reshape(n_kh, w_in * cin, w_out * cout)).astype(np.float32)


def prepare_decoder_params(params):
    fc_w = np.asarray(params["fc_w"], np.float32)           # (3136, L) torch Linear
    fc_b = np.asarray(params["fc_b"], np.float32)           # (3136,)
    dc1_w = np.asarray(params["dc1_w"], np.float32)         # (64, 32, 4, 4)
    dc1_b = np.asarray(params["dc1_b"], np.float32)         # (32,)
    dc2_w = np.asarray(params["dc2_w"], np.float32)         # (32, 1, 4, 4)
    dc2_b = np.asarray(params["dc2_b"], np.float32)         # (1,)
    latent = fc_w.shape[1]

    # fc column f = c*49 + y*7 + x  ->  layout [l, y*512 + x*64 + c] (lane-padded).
    wfc = (fc_w.reshape(C0, H0, W0, latent)
           .transpose(3, 1, 2, 0).reshape(latent, H0, LAN0))
    wfc_p = np.zeros((latent, H0, LANP), np.float32)
    wfc_p[:, :, :LAN0] = wfc
    bfc = fc_b.reshape(C0, H0, W0).transpose(1, 2, 0).reshape(H0, LAN0)
    bfc_p = np.zeros((H0, LANP), np.float32)
    bfc_p[:, :LAN0] = bfc

    # Width-Toeplitz conv-transpose weights; K (and layer-1 N) zero-padded
    # 448 -> 512 so every MXU tile and every column slice is 128-lane aligned.
    k1 = _build_width_matrices(dc1_w, W0)                   # (4, 448, 448)
    k1_p = np.zeros((KSIZE, LANP, LANP), np.float32)
    k1_p[:, :LAN0, :LAN1] = k1
    # Fuse the 4 kernel-row matrices along N: [krow1 | krow2 | krow3 | krow0].
    k1_fused = np.concatenate([k1_p[1], k1_p[2], k1_p[3], k1_p[0]], axis=1)

    k2 = _build_width_matrices(dc2_w, W1)                   # (4, 448, 28)
    k2_p = np.zeros((KSIZE, LANP, LAN2), np.float32)
    k2_p[:, :LAN1, :] = k2

    b1_p = np.zeros((1, LANP), np.float32)
    b1_p[0, :LAN1] = np.tile(dc1_b, W1)

    prep = {
        "wfc": wfc_p.reshape(latent, NFC),                  # (L, 3584)
        "bfc": bfc_p.reshape(1, NFC),                       # (1, 3584)
        "k1": k1_fused,                                     # (512, 2048)
        "b1": b1_p,                                         # (1, 512)
        "k2": k2_p,                                         # (4, 512, 28)
        "b2": dc2_b.reshape(1, 1),                          # (1, 1)
    }
    # TODO(synk): optionally cast the matmul operands to bf16 on v6e/v7x once
    # the kernel is MXU-bound; requires loosening the 2e-3 tolerance below.
    return {k: jnp.asarray(v) for k, v in prep.items()}


# ----------------------------------------------------------------------------
# Forward wrapper: single pallas_call + cheap wrapper-side layout rearrange.
# ----------------------------------------------------------------------------
def _choose_btile(batch):
    # Target M ~ 128-256 rows per Toeplitz dot (M1 = 9*Btile, M2 = 14*Btile)
    # while keeping >= 2 grid steps when the batch allows it (feeds both v7x
    # TensorCores via dimension_semantics=("parallel",)).  Multiples of 8 keep
    # every row-block slice sublane-tile aligned.
    for bt in (16, 8):
        if batch >= 2 * bt:
            return bt
    return 8


@jax.jit
def decoder_forward(z, prep):
    B, latent = z.shape
    bt = _choose_btile(B)
    nsteps = -(-B // bt)
    bpad = nsteps * bt
    z = z.astype(jnp.float32)
    if bpad != B:
        z = jnp.concatenate([z, jnp.zeros((bpad - B, latent), jnp.float32)], axis=0)
    z3 = z.reshape(nsteps, bt, latent)

    out = pl.pallas_call(
        functools.partial(_decoder_kernel, btile=bt),
        out_shape=jax.ShapeDtypeStruct((nsteps, 2, H1 * bt, W2), jnp.float32),
        grid=(nsteps,),
        in_specs=[
            pl.BlockSpec((1, bt, latent), lambda s: (s, 0, 0)),        # z tile
            pl.BlockSpec((latent, NFC), lambda s: (0, 0)),             # wfc
            pl.BlockSpec((1, NFC), lambda s: (0, 0)),                  # bfc
            pl.BlockSpec((LANP, KSIZE * LANP), lambda s: (0, 0)),      # k1 fused
            pl.BlockSpec((1, LANP), lambda s: (0, 0)),                 # b1
            pl.BlockSpec((KSIZE, LANP, LAN2), lambda s: (0, 0, 0)),    # k2
            pl.BlockSpec((1, 1), lambda s: (0, 0)),                    # b2
        ],
        out_specs=pl.BlockSpec((1, 2, H1 * bt, W2), lambda s: (s, 0, 0, 0)),
        scratch_shapes=[
            pltpu.VMEM(((H0 + 2) * bt, LANP), jnp.float32),  # row-padded fc slab
            pltpu.VMEM(((H1 + 2) * bt, LANP), jnp.float32),  # row-padded layer-1 slab
        ],
        compiler_params=pltpu.CompilerParams(
            dimension_semantics=("parallel",)),
    )(z3, prep["wfc"], prep["bfc"], prep["k1"], prep["b1"],
      prep["k2"], prep["b2"])

    # (steps, parity, q*Btile+i, 28) -> (B, 1, 28, 28): interleave even/odd rows
    # and regroup by image.  Pure wrapper-side layout plumbing.
    y = (out.reshape(nsteps, 2, H1, bt, W2)
            .transpose(0, 3, 2, 1, 4)
            .reshape(bpad, H2, W2)[:B])
    return y[:, None, :, :]


# ----------------------------------------------------------------------------
# Pure-JAX reference (lax), used only for the correctness check.
# ----------------------------------------------------------------------------
def decoder_reference(z, params):
    h = z @ params["fc_w"].T + params["fc_b"]
    h = h.reshape(-1, 64, 7, 7)

    def deconv_ref(x, w, b, act):
        w_oihw = jnp.transpose(w, (1, 0, 2, 3))[:, :, ::-1, ::-1]
        y = jax.lax.conv_general_dilated(
            x, w_oihw, window_strides=(1, 1), padding=((2, 2), (2, 2)),
            lhs_dilation=(2, 2), dimension_numbers=("NCHW", "OIHW", "NCHW"))
        return act(y + b[None, :, None, None])

    y = deconv_ref(h, params["dc1_w"], params["dc1_b"], lambda v: jnp.maximum(v, 0.0))
    y = deconv_ref(y, params["dc2_w"], params["dc2_b"], jax.nn.sigmoid)
    return y


# ----------------------------------------------------------------------------
# Deterministic parameter init (PyTorch-style uniform bounds)
# ----------------------------------------------------------------------------
def init_params(key, latent_dim):
    ks = jax.random.split(key, 6)
    u = lambda k, shape, bound: jax.random.uniform(
        k, shape, jnp.float32, minval=-bound, maxval=bound)
    b_fc = 1.0 / np.sqrt(latent_dim)
    b1 = 1.0 / np.sqrt(64 * 4 * 4)
    b2 = 1.0 / np.sqrt(32 * 4 * 4)
    return {
        "fc_w": u(ks[0], (64 * 7 * 7, latent_dim), b_fc),   # torch Linear weight
        "fc_b": u(ks[1], (64 * 7 * 7,), b_fc),
        "dc1_w": u(ks[2], (64, 32, 4, 4), b1),              # torch ConvTranspose2d
        "dc1_b": u(ks[3], (32,), b1),
        "dc2_w": u(ks[4], (32, 1, 4, 4), b2),
        "dc2_b": u(ks[5], (1,), b2),
    }


if __name__ == "__main__":
    latent_dim = 16

    key = jax.random.PRNGKey(0)
    kp, kz = jax.random.split(key)
    params = init_params(kp, latent_dim)
    prep = prepare_decoder_params(params)      # one-time weight rearrangement

    # batch=2 exercises batch padding (Btile=8, 1 step); batch=20 exercises the
    # multi-step grid (Btile=8, 3 steps).
    for batch in (2, 20):
        z = jax.random.normal(jax.random.fold_in(kz, batch),
                              (batch, latent_dim), jnp.float32)
        out = jax.block_until_ready(decoder_forward(z, prep))
        assert out.shape == (batch, 1, 28, 28), out.shape
        ref = jax.block_until_ready(decoder_reference(z, params))
        np.testing.assert_allclose(np.asarray(out), np.asarray(ref),
                                   atol=2e-3, rtol=2e-3)

    print("KERNEL_OK")
</pallas_src>

<mosaic_0001>
module attributes {stable_mosaic.version = 11 : i64} {
  func.func @_decoder_kernel(%arg0: i32, %arg1: memref<1x8x16xf32, #tpu.memory_space<vmem>>, %arg2: memref<16x3584xf32, #tpu.memory_space<vmem>>, %arg3: memref<1x3584xf32, #tpu.memory_space<vmem>>, %arg4: memref<512x2048xf32, #tpu.memory_space<vmem>>, %arg5: memref<1x512xf32, #tpu.memory_space<vmem>>, %arg6: memref<4x512x28xf32, #tpu.memory_space<vmem>>, %arg7: memref<1x1xf32, #tpu.memory_space<vmem>>, %arg8: memref<1x2x112x28xf32, #tpu.memory_space<vmem>>, %arg9: memref<72x512xf32, #tpu.memory_space<vmem>>, %arg10: memref<128x512xf32, #tpu.memory_space<vmem>>) attributes {dimension_semantics = [#tpu.dimension_semantics<parallel>], iteration_bounds = array<i64: 1>, scalar_prefetch = 0 : i64, scratch_operands = 2 : i64, tpu.core_type = #tpu.core_type<tc>, window_params = [{transform_indices = @transform_0, window_bounds = array<i64: 1, 8, 16>}, {pipeline_mode = #tpu.pipeline_mode<synchronous>, transform_indices = @transform_1, window_bounds = array<i64: 16, 3584>}, {pipeline_mode = #tpu.pipeline_mode<synchronous>, transform_indices = @transform_2, window_bounds = array<i64: 1, 3584>}, {pipeline_mode = #tpu.pipeline_mode<synchronous>, transform_indices = @transform_3, window_bounds = array<i64: 512, 2048>}, {pipeline_mode = #tpu.pipeline_mode<synchronous>, transform_indices = @transform_4, window_bounds = array<i64: 1, 512>}, {pipeline_mode = #tpu.pipeline_mode<synchronous>, transform_indices = @transform_5, window_bounds = array<i64: 4, 512, 28>}, {pipeline_mode = #tpu.pipeline_mode<synchronous>, transform_indices = @transform_6, window_bounds = array<i64: 1, 1>}, {transform_indices = @transform_7, window_bounds = array<i64: 1, 2, 112, 28>}]} {
    %c0 = arith.constant 0 : index
    %c0_0 = arith.constant 0 : index
    %c0_1 = arith.constant 0 : index
    %0 = vector.load %arg1[%c0, %c0_0, %c0_1] : memref<1x8x16xf32, #tpu.memory_space<vmem>>, vector<1x8x16xf32>
    %1 = vector.shape_cast %0 : vector<1x8x16xf32> to vector<8x16xf32>
    %c0_2 = arith.constant 0 : index
    %c0_3 = arith.constant 0 : index
    %2 = vector.load %arg2[%c0_2, %c0_3] : memref<16x3584xf32, #tpu.memory_space<vmem>>, vector<16x3584xf32>
    %cst = arith.constant dense<0.000000e+00> : vector<8x3584xf32>
    %3 = tpu.matmul %1, %2, %cst {dimension_numbers = #tpu.dot_dimension_numbers<[1], [0], [0], [1], [0, 0, 1, 1], [], []>} : vector<8x16xf32>, vector<16x3584xf32>, vector<8x3584xf32> -> vector<8x3584xf32>
    %c0_4 = arith.constant 0 : index
    %c0_5 = arith.constant 0 : index
    %4 = vector.load %arg3[%c0_4, %c0_5] : memref<1x3584xf32, #tpu.memory_space<vmem>>, vector<1x3584xf32>
    %5 = vector.broadcast %4 : vector<1x3584xf32> to vector<8x3584xf32>
    %6 = arith.addf %3, %5 : vector<8x3584xf32>
    %cst_6 = arith.constant 0.000000e+00 : f32
    %7 = vector.broadcast %cst_6 : f32 to vector<8x512xf32>
    %c0_7 = arith.constant 0 : index
    %c0_8 = arith.constant 0 : index
    %8 = vector.load %arg9[%c0_7, %c0_8] : memref<72x512xf32, #tpu.memory_space<vmem>>, vector<8x512xf32>
    tpu.vector_store %arg9[%c0_7, %c0_8], %7 {strides = array<i32>} : memref<72x512xf32, #tpu.memory_space<vmem>>, vector<8x512xf32>,
    %c64 = arith.constant 64 : index
    %c0_9 = arith.constant 0 : index
    %9 = vector.load %arg9[%c64, %c0_9] : memref<72x512xf32, #tpu.memory_space<vmem>>, vector<8x512xf32>
    tpu.vector_store %arg9[%c64, %c0_9], %7 {strides = array<i32>} : memref<72x512xf32, #tpu.memory_space<vmem>>, vector<8x512xf32>,
    %10 = vector.extract_strided_slice %6 {offsets = [0, 0], sizes = [8, 512], strides = [1, 1]} : vector<8x3584xf32> to vector<8x512xf32>
    %c8 = arith.constant 8 : index
    %c0_10 = arith.constant 0 : index
    %11 = vector.load %arg9[%c8, %c0_10] : memref<72x512xf32, #tpu.memory_space<vmem>>, vector<8x512xf32>
    tpu.vector_store %arg9[%c8, %c0_10], %10 {strides = array<i32>} : memref<72x512xf32, #tpu.memory_space<vmem>>, vector<8x512xf32>,
    %12 = vector.extract_strided_slice %6 {offsets = [0, 512], sizes = [8, 512], strides = [1, 1]} : vector<8x3584xf32> to vector<8x512xf32>
    %c16 = arith.constant 16 : index
    %c0_11 = arith.constant 0 : index
    %13 = vector.load %arg9[%c16, %c0_11] : memref<72x512xf32, #tpu.memory_space<vmem>>, vector<8x512xf32>
    tpu.vector_store %arg9[%c16, %c0_11], %12 {strides = array<i32>} : memref<72x512xf32, #tpu.memory_space<vmem>>, vector<8x512xf32>,
    %14 = vector.extract_strided_slice %6 {offsets = [0, 1024], sizes = [8, 512], strides = [1, 1]} : vector<8x3584xf32> to vector<8x512xf32>
    %c24 = arith.constant 24 : index
    %c0_12 = arith.constant 0 : index
    %15 = vector.load %arg9[%c24, %c0_12] : memref<72x512xf32, #tpu.memory_space<vmem>>, vector<8x512xf32>
    tpu.vector_store %arg9[%c24, %c0_12], %14 {strides = array<i32>} : memref<72x512xf32, #tpu.memory_space<vmem>>, vector<8x512xf32>,
    %16 = vector.extract_strided_slice %6 {offsets = [0, 1536], sizes = [8, 512], strides = [1, 1]} : vector<8x3584xf32> to vector<8x512xf32>
    %c32 = arith.constant 32 : index
    %c0_13 = arith.constant 0 : index
    %17 = vector.load %arg9[%c32, %c0_13] : memref<72x512xf32, #tpu.memory_space<vmem>>, vector<8x512xf32>
    tpu.vector_store %arg9[%c32, %c0_13], %16 {strides = array<i32>} : memref<72x512xf32, #tpu.memory_space<vmem>>, vector<8x512xf32>,
    %18 = vector.extract_strided_slice %6 {offsets = [0, 2048], sizes = [8, 512], strides = [1, 1]} : vector<8x3584xf32> to vector<8x512xf32>
    %c40 = arith.constant 40 : index
    %c0_14 = arith.constant 0 : index
    %19 = vector.load %arg9[%c40, %c0_14] : memref<72x512xf32, #tpu.memory_space<vmem>>, vector<8x512xf32>
    tpu.vector_store %arg9[%c40, %c0_14], %18 {strides = array<i32>} : memref<72x512xf32, #tpu.memory_space<vmem>>, vector<8x512xf32>,
    %20 = vector.extract_strided_slice %6 {offsets = [0, 2560], sizes = [8, 512], strides = [1, 1]} : vector<8x3584xf32> to vector<8x512xf32>
    %c48 = arith.constant 48 : index
    %c0_15 = arith.constant 0 : index
    %21 = vector.load %arg9[%c48, %c0_15] : memref<72x512xf32, #tpu.memory_space<vmem>>, vector<8x512xf32>
    tpu.vector_store %arg9[%c48, %c0_15], %20 {strides = array<i32>} : memref<72x512xf32, #tpu.memory_space<vmem>>, vector<8x512xf32>,
    %22 = vector.extract_strided_slice %6 {offsets = [0, 3072], sizes = [8, 512], strides = [1, 1]} : vector<8x3584xf32> to vector<8x512xf32>
    %c56 = arith.constant 56 : index
    %c0_16 = arith.constant 0 : index
    %23 = vector.load %arg9[%c56, %c0_16] : memref<72x512xf32, #tpu.memory_space<vmem>>, vector<8x512xf32>
    tpu.vector_store %arg9[%c56, %c0_16], %22 {strides = array<i32>} : memref<72x512xf32, #tpu.memory_space<vmem>>, vector<8x512xf32>,
    %c0_17 = arith.constant 0 : index
    %c0_18 = arith.constant 0 : index
    %24 = vector.load %arg9[%c0_17, %c0_18] : memref<72x512xf32, #tpu.memory_space<vmem>>, vector<72x512xf32>
    %c0_19 = arith.constant 0 : index
    %c0_20 = arith.constant 0 : index
    %25 = vector.load %arg4[%c0_19, %c0_20] : memref<512x2048xf32, #tpu.memory_space<vmem>>, vector<512x2048xf32>
    %cst_21 = arith.constant dense<0.000000e+00> : vector<72x2048xf32>
    %26 = tpu.matmul %24, %25, %cst_21 {dimension_numbers = #tpu.dot_dimension_numbers<[1], [0], [0], [1], [0, 0, 1, 1], [], []>} : vector<72x512xf32>, vector<512x2048xf32>, vector<72x2048xf32> -> vector<72x2048xf32>
    %c0_22 = arith.constant 0 : index
    %c0_23 = arith.constant 0 : index
    %27 = vector.load %arg5[%c0_22, %c0_23] : memref<1x512xf32, #tpu.memory_space<vmem>>, vector<1x512xf32>
    %28 = vector.extract_strided_slice %26 {offsets = [8, 0], sizes = [56, 512], strides = [1, 1]} : vector<72x2048xf32> to vector<56x512xf32>
    %29 = vector.extract_strided_slice %26 {offsets = [0, 1024], sizes = [56, 512], strides = [1, 1]} : vector<72x2048xf32> to vector<56x512xf32>
    %30 = arith.addf %28, %29 : vector<56x512xf32>
    %31 = vector.broadcast %27 : vector<1x512xf32> to vector<56x512xf32>
    %32 = arith.addf %30, %31 : vector<56x512xf32>
    %cst_24 = arith.constant 0.000000e+00 : f32
    %33 = vector.broadcast %cst_24 : f32 to vector<56x512xf32>
    %34 = arith.maximumf %32, %33 : vector<56x512xf32>
    %35 = vector.extract_strided_slice %26 {offsets = [8, 512], sizes = [56, 512], strides = [1, 1]} : vector<72x2048xf32> to vector<56x512xf32>
    %36 = vector.extract_strided_slice %26 {offsets = [16, 1536], sizes = [56, 512], strides = [1, 1]} : vector<72x2048xf32> to vector<56x512xf32>
    %37 = arith.addf %35, %36 : vector<56x512xf32>
    %38 = vector.broadcast %27 : vector<1x512xf32> to vector<56x512xf32>
    %39 = arith.addf %37, %38 : vector<56x512xf32>
    %cst_25 = arith.constant 0.000000e+00 : f32
    %40 = vector.broadcast %cst_25 : f32 to vector<56x512xf32>
    %41 = arith.maximumf %39, %40 : vector<56x512xf32>
    %c0_26 = arith.constant 0 : index
    %c0_27 = arith.constant 0 : index
    %42 = vector.load %arg10[%c0_26, %c0_27] : memref<128x512xf32, #tpu.memory_space<vmem>>, vector<8x512xf32>
    tpu.vector_store %arg10[%c0_26, %c0_27], %7 {strides = array<i32>} : memref<128x512xf32, #tpu.memory_space<vmem>>, vector<8x512xf32>,
    %c120 = arith.constant 120 : index
    %c0_28 = arith.constant 0 : index
    %43 = vector.load %arg10[%c120, %c0_28] : memref<128x512xf32, #tpu.memory_space<vmem>>, vector<8x512xf32>
    tpu.vector_store %arg10[%c120, %c0_28], %7 {strides = array<i32>} : memref<128x512xf32, #tpu.memory_space<vmem>>, vector<8x512xf32>,
    %44 = vector.extract_strided_slice %34 {offsets = [0, 0], sizes = [8, 512], strides = [1, 1]} : vector<56x512xf32> to vector<8x512xf32>
    %c8_29 = arith.constant 8 : index
    %c0_30 = arith.constant 0 : index
    %45 = vector.load %arg10[%c8_29, %c0_30] : memref<128x512xf32, #tpu.memory_space<vmem>>, vector<8x512xf32>
    tpu.vector_store %arg10[%c8_29, %c0_30], %44 {strides = array<i32>} : memref<128x512xf32, #tpu.memory_space<vmem>>, vector<8x512xf32>,
    %46 = vector.extract_strided_slice %41 {offsets = [0, 0], sizes = [8, 512], strides = [1, 1]} : vector<56x512xf32> to vector<8x512xf32>
    %c16_31 = arith.constant 16 : index
    %c0_32 = arith.constant 0 : index
    %47 = vector.load %arg10[%c16_31, %c0_32] : memref<128x512xf32, #tpu.memory_space<vmem>>, vector<8x512xf32>
    tpu.vector_store %arg10[%c16_31, %c0_32], %46 {strides = array<i32>} : memref<128x512xf32, #tpu.memory_space<vmem>>, vector<8x512xf32>,
    %48 = vector.extract_strided_slice %34 {offsets = [8, 0], sizes = [8, 512], strides = [1, 1]} : vector<56x512xf32> to vector<8x512xf32>
    %c24_33 = arith.constant 24 : index
    %c0_34 = arith.constant 0 : index
    %49 = vector.load %arg10[%c24_33, %c0_34] : memref<128x512xf32, #tpu.memory_space<vmem>>, vector<8x512xf32>
    tpu.vector_store %arg10[%c24_33, %c0_34], %48 {strides = array<i32>} : memref<128x512xf32, #tpu.memory_space<vmem>>, vector<8x512xf32>,
    %50 = vector.extract_strided_slice %41 {offsets = [8, 0], sizes = [8, 512], strides = [1, 1]} : vector<56x512xf32> to vector<8x512xf32>
    %c32_35 = arith.constant 32 : index
    %c0_36 = arith.constant 0 : index
    %51 = vector.load %arg10[%c32_35, %c0_36] : memref<128x512xf32, #tpu.memory_space<vmem>>, vector<8x512xf32>
    tpu.vector_store %arg10[%c32_35, %c0_36], %50 {strides = array<i32>} : memref<128x512xf32, #tpu.memory_space<vmem>>, vector<8x512xf32>,
    %52 = vector.extract_strided_slice %34 {offsets = [16, 0], sizes = [8, 512], strides = [1, 1]} : vector<56x512xf32> to vector<8x512xf32>
    %c40_37 = arith.constant 40 : index
    %c0_38 = arith.constant 0 : index
    %53 = vector.load %arg10[%c40_37, %c0_38] : memref<128x512xf32, #tpu.memory_space<vmem>>, vector<8x512xf32>
    tpu.vector_store %arg10[%c40_37, %c0_38], %52 {strides = array<i32>} : memref<128x512xf32, #tpu.memory_space<vmem>>, vector<8x512xf32>,
    %54 = vector.extract_strided_slice %41 {offsets = [16, 0], sizes = [8, 512], strides = [1, 1]} : vector<56x512xf32> to vector<8x512xf32>
    %c48_39 = arith.constant 48 : index
    %c0_40 = arith.constant 0 : index
    %55 = vector.load %arg10[%c48_39, %c0_40] : memref<128x512xf32, #tpu.memory_space<vmem>>, vector<8x512xf32>
    tpu.vector_store %arg10[%c48_39, %c0_40], %54 {strides = array<i32>} : memref<128x512xf32, #tpu.memory_space<vmem>>, vector<8x512xf32>,
    %56 = vector.extract_strided_slice %34 {offsets = [24, 0], sizes = [8, 512], strides = [1, 1]} : vector<56x512xf32> to vector<8x512xf32>
    %c56_41 = arith.constant 56 : index
    %c0_42 = arith.constant 0 : index
    %57 = vector.load %arg10[%c56_41, %c0_42] : memref<128x512xf32, #tpu.memory_space<vmem>>, vector<8x512xf32>
    tpu.vector_store %arg10[%c56_41, %c0_42], %56 {strides = array<i32>} : memref<128x512xf32, #tpu.memory_space<vmem>>, vector<8x512xf32>,
    %58 = vector.extract_strided_slice %41 {offsets = [24, 0], sizes = [8, 512], strides = [1, 1]} : vector<56x512xf32> to vector<8x512xf32>
    %c64_43 = arith.constant 64 : index
    %c0_44 = arith.constant 0 : index
    %59 = vector.load %arg10[%c64_43, %c0_44] : memref<128x512xf32, #tpu.memory_space<vmem>>, vector<8x512xf32>
    tpu.vector_store %arg10[%c64_43, %c0_44], %58 {strides = array<i32>} : memref<128x512xf32, #tpu.memory_space<vmem>>, vector<8x512xf32>,
    %60 = vector.extract_strided_slice %34 {offsets = [32, 0], sizes = [8, 512], strides = [1, 1]} : vector<56x512xf32> to vector<8x512xf32>
    %c72 = arith.constant 72 : index
    %c0_45 = arith.constant 0 : index
    %61 = vector.load %arg10[%c72, %c0_45] : memref<128x512xf32, #tpu.memory_space<vmem>>, vector<8x512xf32>
    tpu.vector_store %arg10[%c72, %c0_45], %60 {strides = array<i32>} : memref<128x512xf32, #tpu.memory_space<vmem>>, vector<8x512xf32>,
    %62 = vector.extract_strided_slice %41 {offsets = [32, 0], sizes = [8, 512], strides = [1, 1]} : vector<56x512xf32> to vector<8x512xf32>
    %c80 = arith.constant 80 : index
    %c0_46 = arith.constant 0 : index
    %63 = vector.load %arg10[%c80, %c0_46] : memref<128x512xf32, #tpu.memory_space<vmem>>, vector<8x512xf32>
    tpu.vector_store %arg10[%c80, %c0_46], %62 {strides = array<i32>} : memref<128x512xf32, #tpu.memory_space<vmem>>, vector<8x512xf32>,
    %64 = vector.extract_strided_slice %34 {offsets = [40, 0], sizes = [8, 512], strides = [1, 1]} : vector<56x512xf32> to vector<8x512xf32>
    %c88 = arith.constant 88 : index
    %c0_47 = arith.constant 0 : index
    %65 = vector.load %arg10[%c88, %c0_47] : memref<128x512xf32, #tpu.memory_space<vmem>>, vector<8x512xf32>
    tpu.vector_store %arg10[%c88, %c0_47], %64 {strides = array<i32>} : memref<128x512xf32, #tpu.memory_space<vmem>>, vector<8x512xf32>,
    %66 = vector.extract_strided_slice %41 {offsets = [40, 0], sizes = [8, 512], strides = [1, 1]} : vector<56x512xf32> to vector<8x512xf32>
    %c96 = arith.constant 96 : index
    %c0_48 = arith.constant 0 : index
    %67 = vector.load %arg10[%c96, %c0_48] : memref<128x512xf32, #tpu.memory_space<vmem>>, vector<8x512xf32>
    tpu.vector_store %arg10[%c96, %c0_48], %66 {strides = array<i32>} : memref<128x512xf32, #tpu.memory_space<vmem>>, vector<8x512xf32>,
    %68 = vector.extract_strided_slice %34 {offsets = [48, 0], sizes = [8, 512], strides = [1, 1]} : vector<56x512xf32> to vector<8x512xf32>
    %c104 = arith.constant 104 : index
    %c0_49 = arith.constant 0 : index
    %69 = vector.load %arg10[%c104, %c0_49] : memref<128x512xf32, #tpu.memory_space<vmem>>, vector<8x512xf32>
    tpu.vector_store %arg10[%c104, %c0_49], %68 {strides = array<i32>} : memref<128x512xf32, #tpu.memory_space<vmem>>, vector<8x512xf32>,
    %70 = vector.extract_strided_slice %41 {offsets = [48, 0], sizes = [8, 512], strides = [1, 1]} : vector<56x512xf32> to vector<8x512xf32>
    %c112 = arith.constant 112 : index
    %c0_50 = arith.constant 0 : index
    %71 = vector.load %arg10[%c112, %c0_50] : memref<128x512xf32, #tpu.memory_space<vmem>>, vector<8x512xf32>
    tpu.vector_store %arg10[%c112, %c0_50], %70 {strides = array<i32>} : memref<128x512xf32, #tpu.memory_space<vmem>>, vector<8x512xf32>,
    %c8_51 = arith.constant 8 : index
    %c0_52 = arith.constant 0 : index
    %72 = vector.load %arg10[%c8_51, %c0_52] : memref<128x512xf32, #tpu.memory_space<vmem>>, vector<112x512xf32>
    %c0_53 = arith.constant 0 : index
    %c0_54 = arith.constant 0 : index
    %73 = vector.load %arg10[%c0_53, %c0_54] : memref<128x512xf32, #tpu.memory_space<vmem>>, vector<112x512xf32>
    %c16_55 = arith.constant 16 : index
    %c0_56 = arith.constant 0 : index
    %74 = vector.load %arg10[%c16_55, %c0_56] : memref<128x512xf32, #tpu.memory_space<vmem>>, vector<112x512xf32>
    %c0_57 = arith.constant 0 : index
    %c0_58 = arith.constant 0 : index
    %75 = vector.load %arg7[%c0_57, %c0_58] : memref<1x1xf32, #tpu.memory_space<vmem>>, vector<1x1xf32>
    %c1 = arith.constant 1 : index
    %c0_59 = arith.constant 0 : index
    %c0_60 = arith.constant 0 : index
    %76 = vector.load %arg6[%c1, %c0_59, %c0_60] : memref<4x512x28xf32, #tpu.memory_space<vmem>>, vector<1x512x28xf32>
    %77 = vector.shape_cast %76 : vector<1x512x28xf32> to vector<512x28xf32>
    %cst_61 = arith.constant dense<0.000000e+00> : vector<112x28xf32>
    %78 = tpu.matmul %72, %77, %cst_61 {dimension_numbers = #tpu.dot_dimension_numbers<[1], [0], [0], [1], [0, 0, 1, 1], [], []>} : vector<112x512xf32>, vector<512x28xf32>, vector<112x28xf32> -> vector<112x28xf32>
    %c3 = arith.constant 3 : index
    %c0_62 = arith.constant 0 : index
    %c0_63 = arith.constant 0 : index
    %79 = vector.load %arg6[%c3, %c0_62, %c0_63] : memref<4x512x28xf32, #tpu.memory_space<vmem>>, vector<1x512x28xf32>
    %80 = vector.shape_cast %79 : vector<1x512x28xf32> to vector<512x28xf32>
    %cst_64 = arith.constant dense<0.000000e+00> : vector<112x28xf32>
    %81 = tpu.matmul %73, %80, %cst_64 {dimension_numbers = #tpu.dot_dimension_numbers<[1], [0], [0], [1], [0, 0, 1, 1], [], []>} : vector<112x512xf32>, vector<512x28xf32>, vector<112x28xf32> -> vector<112x28xf32>
    %82 = arith.addf %78, %81 : vector<112x28xf32>
    %83 = vector.broadcast %75 : vector<1x1xf32> to vector<112x28xf32>
    %84 = arith.addf %82, %83 : vector<112x28xf32>
    %c2 = arith.constant 2 : index
    %c0_65 = arith.constant 0 : index
    %c0_66 = arith.constant 0 : index
    %85 = vector.load %arg6[%c2, %c0_65, %c0_66] : memref<4x512x28xf32, #tpu.memory_space<vmem>>, vector<1x512x28xf32>
    %86 = vector.shape_cast %85 : vector<1x512x28xf32> to vector<512x28xf32>
    %cst_67 = arith.constant dense<0.000000e+00> : vector<112x28xf32>
    %87 = tpu.matmul %72, %86, %cst_67 {dimension_numbers = #tpu.dot_dimension_numbers<[1], [0], [0], [1], [0, 0, 1, 1], [], []>} : vector<112x512xf32>, vector<512x28xf32>, vector<112x28xf32> -> vector<112x28xf32>
    %c0_68 = arith.constant 0 : index
    %c0_69 = arith.constant 0 : index
    %c0_70 = arith.constant 0 : index
    %88 = vector.load %arg6[%c0_68, %c0_69, %c0_70] : memref<4x512x28xf32, #tpu.memory_space<vmem>>, vector<1x512x28xf32>
    %89 = vector.shape_cast %88 : vector<1x512x28xf32> to vector<512x28xf32>
    %cst_71 = arith.constant dense<0.000000e+00> : vector<112x28xf32>
    %90 = tpu.matmul %74, %89, %cst_71 {dimension_numbers = #tpu.dot_dimension_numbers<[1], [0], [0], [1], [0, 0, 1, 1], [], []>} : vector<112x512xf32>, vector<512x28xf32>, vector<112x28xf32> -> vector<112x28xf32>
    %91 = arith.addf %87, %90 : vector<112x28xf32>
    %92 = vector.broadcast %75 : vector<1x1xf32> to vector<112x28xf32>
    %93 = arith.addf %91, %92 : vector<112x28xf32>
    %94 = arith.negf %84 : vector<112x28xf32>
    %95 = math.exp %94 : vector<112x28xf32>
    %cst_72 = arith.constant 1.000000e+00 : f32
    %96 = vector.broadcast %cst_72 : f32 to vector<112x28xf32>
    %97 = arith.addf %96, %95 : vector<112x28xf32>
    %98 = arith.divf %96, %97 : vector<112x28xf32>
    %c0_73 = arith.constant 0 : index
    %c0_74 = arith.constant 0 : index
    %c0_75 = arith.constant 0 : index
    %c0_76 = arith.constant 0 : index
    %99 = vector.load %arg8[%c0_73, %c0_74, %c0_75, %c0_76] : memref<1x2x112x28xf32, #tpu.memory_space<vmem>>, vector<1x1x112x28xf32>
    %100 = vector.shape_cast %99 : vector<1x1x112x28xf32> to vector<112x28xf32>
    %101 = vector.shape_cast %98 : vector<112x28xf32> to vector<1x1x112x28xf32>
    tpu.vector_store %arg8[%c0_73, %c0_74, %c0_75, %c0_76], %101 {strides = array<i32>} : memref<1x2x112x28xf32, #tpu.memory_space<vmem>>, vector<1x1x112x28xf32>,
    %102 = arith.negf %93 : vector<112x28xf32>
    %103 = math.exp %102 : vector<112x28xf32>
    %cst_77 = arith.constant 1.000000e+00 : f32
    %104 = vector.broadcast %cst_77 : f32 to vector<112x28xf32>
    %105 = arith.addf %104, %103 : vector<112x28xf32>
    %106 = arith.divf %104, %105 : vector<112x28xf32>
    %c0_78 = arith.constant 0 : index
    %c1_79 = arith.constant 1 : index
    %c0_80 = arith.constant 0 : index
    %c0_81 = arith.constant 0 : index
    %107 = vector.load %arg8[%c0_78, %c1_79, %c0_80, %c0_81] : memref<1x2x112x28xf32, #tpu.memory_space<vmem>>, vector<1x1x112x28xf32>
    %108 = vector.shape_cast %107 : vector<1x1x112x28xf32> to vector<112x28xf32>
    %109 = vector.shape_cast %106 : vector<112x28xf32> to vector<1x1x112x28xf32>
    tpu.vector_store %arg8[%c0_78, %c1_79, %c0_80, %c0_81], %109 {strides = array<i32>} : memref<1x2x112x28xf32, #tpu.memory_space<vmem>>, vector<1x1x112x28xf32>,
    return
  }
  func.func @transform_0(%arg0: i32) -> (i32, i32, i32) {
    %c0_i32 = arith.constant 0 : i32
    %c0_i32_0 = arith.constant 0 : i32
    %c0_i32_1 = arith.constant 0 : i32
    return %arg0, %c0_i32, %c0_i32_0 : i32, i32, i32
  }
  func.func @transform_1(%arg0: i32) -> (i32, i32) {
    %c0_i32 = arith.constant 0 : i32
    %c0_i32_0 = arith.constant 0 : i32
    %c0_i32_1 = arith.constant 0 : i32
    return %c0_i32, %c0_i32_0 : i32, i32
  }
  func.func @transform_2(%arg0: i32) -> (i32, i32) {
    %c0_i32 = arith.constant 0 : i32
    %c0_i32_0 = arith.constant 0 : i32
    %c0_i32_1 = arith.constant 0 : i32
    return %c0_i32, %c0_i32_0 : i32, i32
  }
  func.func @transform_3(%arg0: i32) -> (i32, i32) {
    %c0_i32 = arith.constant 0 : i32
    %c0_i32_0 = arith.constant 0 : i32
    %c0_i32_1 = arith.constant 0 : i32
    return %c0_i32, %c0_i32_0 : i32, i32
  }
  func.func @transform_4(%arg0: i32) -> (i32, i32) {
    %c0_i32 = arith.constant 0 : i32
    %c0_i32_0 = arith.constant 0 : i32
    %c0_i32_1 = arith.constant 0 : i32
    return %c0_i32, %c0_i32_0 : i32, i32
  }
  func.func @transform_5(%arg0: i32) -> (i32, i32, i32) {
    %c0_i32 = arith.constant 0 : i32
    %c0_i32_0 = arith.constant 0 : i32
    %c0_i32_1 = arith.constant 0 : i32
    %c0_i32_2 = arith.constant 0 : i32
    return %c0_i32, %c0_i32_0, %c0_i32_1 : i32, i32, i32
  }
  func.func @transform_6(%arg0: i32) -> (i32, i32) {
    %c0_i32 = arith.constant 0 : i32
    %c0_i32_0 = arith.constant 0 : i32
    %c0_i32_1 = arith.constant 0 : i32
    return %c0_i32, %c0_i32_0 : i32, i32
  }
  func.func @transform_7(%arg0: i32) -> (i32, i32, i32, i32) {
    %c0_i32 = arith.constant 0 : i32
    %c0_i32_0 = arith.constant 0 : i32
    %c0_i32_1 = arith.constant 0 : i32
    %c0_i32_2 = arith.constant 0 : i32
    return %arg0, %c0_i32, %c0_i32_0, %c0_i32_1 : i32, i32, i32, i32
  }
}

</mosaic_0001>

<llo_original>
// kernel: decoder_forward.1
$region0: #{decoder_forward.1}
  #allocation0 [shape = 'u32[]', space=smem, size = 0x4, offset = 0x4, fixed_abs, tag = 'smem constant byte address 0x4 - core index']
  #allocation1 [shape = 'u32[144,128]{1,0:T(1,128)}', space=vmem, size = 0x12000, scoped, tag = 'internal scratch']
  #allocation2 [shape = 'f32[72,512]{1,0:T(8,128)}', space=vmem, size = 0x24000, scoped, tag = 'scratch operand']
  #allocation3 [shape = 'f32[128,512]{1,0:T(8,128)}', space=vmem, size = 0x40000, scoped, tag = 'scratch operand']
  #allocation4 [shape = 'f32[1,1]{1,0:T(1,128)S(1)}', space=vmem, size = 0x200, scoped, tag = 'scoped memory for decoder_forward.1']
  %s0 = inlined_call_operand.vmem [shape: f32[1,8,16], index: 0, kind: input, shape index: {}]
  %s1 = inlined_call_operand.hbm [shape: f32[16,3584], index: 1, kind: input, shape index: {}]
  %s2 = inlined_call_operand.hbm [shape: f32[1,3584], index: 2, kind: input, shape index: {}]
  %s3 = inlined_call_operand.hbm [shape: f32[512,2048], index: 3, kind: input, shape index: {}]
  %s4 = inlined_call_operand.hbm [shape: f32[1,512], index: 4, kind: input, shape index: {}]
  %s5 = inlined_call_operand.vmem [shape: f32[4,512,28], index: 5, kind: input, shape index: {}]
  %s6 = inlined_call_operand.<no memory space> [shape: f32[1,1], index: 6, kind: input, shape index: {}]
  %s7 = inlined_call_operand.vmem [shape: f32[1,2,112,28], index: 7, kind: output, shape index: {}]
  %s8 = sld [smem:[#allocation0]]
  $region54: #{decoder_forward.1} parent=0
    _
  %s10 = ssub.s32 1, %s8
  %s11 = scalar_select 0, %s10, %s8
  %v12 = vstv %s6
  %13 = vst [vmem:[#allocation4] sm:$0x1] %v12
  $region1: #{decoder_forward.1} parent=0
    #allocation5 [shape = 'u8[229376]{0}', space=vmem, size = 0x38000, scoped, tag = 'input window, operand 1, single buffered']
    #allocation6 [shape = 's32[1]{0}', space=sflag, size = 0x4, scoped, tag = 'scoped memory for decoder_forward.1']
    #allocation7 [shape = 'u8[14336]{0}', space=vmem, size = 0x3800, scoped, tag = 'input window, operand 2, single buffered']
    #allocation8 [shape = 's32[1]{0}', space=sflag, size = 0x4, scoped, tag = 'scoped memory for decoder_forward.1']
    #allocation9 [shape = 'u8[4194304]{0}', space=vmem, size = 0x400000, scoped, tag = 'input window, operand 3, single buffered']
    #allocation10 [shape = 'u8[2048]{0}', space=vmem, size = 0x800, scoped, tag = 'input window, operand 4, single buffered']
    #allocation11 [shape = 's32[1]{0}', space=sflag, size = 0x4, scoped, tag = 'scoped memory for decoder_forward.1']
    %14 = vsyncpa [#allocation6], 0
    %15 = vsyncpa [#allocation8], 0
    %16 = vsyncpa [#allocation11], 0
    // Predicated region
    $region2: #{decoder_forward.1} parent=1 // pred_check
      _
    $region3: #{decoder_forward.1} parent=1 // pred_check_branch
      %18 = sbr.rel (0) target = $region5
    $region4: #{decoder_forward.1} parent=1 // pred_region
      _
    $region5: #{decoder_forward.1} parent=1 // pred_fallthru
      _
    // Predicated region
    $region6: #{decoder_forward.1} parent=1 // pred_check
      _
    $region7: #{decoder_forward.1} parent=1 // pred_check_branch
      %20 = sbr.rel (0) target = $region9
    $region8: #{decoder_forward.1} parent=1 // pred_region
      %s22 = ssub.s32 7168, 7168
      %23 = vsyncadd [#allocation6], %s22
      %s24 = sshll.u32 [#allocation5], 4
      %s25 = int_to_ptr.vmem [resolvable:$true] %s24
      %30 = dma.hbm_to_vmem [thread:$0]  %s1, 7168, %s25, [#allocation6], 3584, 3584, 224
    $region9: #{decoder_forward.1} parent=1 // pred_fallthru
      _
    // Predicated region
    $region10: #{decoder_forward.1} parent=1 // pred_check
      _
    $region11: #{decoder_forward.1} parent=1 // pred_check_branch
      %32 = sbr.rel (0) target = $region13
    $region12: #{decoder_forward.1} parent=1 // pred_region
      %s34 = ssub.s32 448, 448
      %35 = vsyncadd [#allocation8], %s34
      %s37 = sshll.u32 [#allocation7], 4
      %s38 = int_to_ptr.vmem [resolvable:$true] %s37
      %40 = dma.hbm_to_vmem [thread:$0]  %s2, 448, %s38, [#allocation8]
    $region13: #{decoder_forward.1} parent=1 // pred_fallthru
      _
    // Predicated region
    $region14: #{decoder_forward.1} parent=1 // pred_check
      _
    $region15: #{decoder_forward.1} parent=1 // pred_check_branch
      %42 = sbr.rel (0) target = $region17
    $region16: #{decoder_forward.1} parent=1 // pred_region
      %s44 = ssub.s32 131072, 131072
      %45 = vsyncadd [#allocation8], %s44
      %s46 = sshll.u32 [#allocation9], 4
      %s47 = int_to_ptr.vmem [resolvable:$true] %s46
      %52 = dma.hbm_to_vmem [thread:$0]  %s3, 131072, %s47, [#allocation8], 2048, 2048, 128
    $region17: #{decoder_forward.1} parent=1 // pred_fallthru
      _
    // Predicated region
    $region18: #{decoder_forward.1} parent=1 // pred_check
      _
    $region19: #{decoder_forward.1} parent=1 // pred_check_branch
      %54 = sbr.rel (0) target = $region21
    $region20: #{decoder_forward.1} parent=1 // pred_region
      %s56 = ssub.s32 64, 64
      %57 = vsyncadd [#allocation11], %s56
      %s59 = sshll.u32 [#allocation10], 4
      %s60 = int_to_ptr.vmem [resolvable:$true] %s59
      %62 = dma.hbm_to_vmem [thread:$0]  %s4, 64, %s60, [#allocation11]
    $region21: #{decoder_forward.1} parent=1 // pred_fallthru
      _
    // Predicated region
    $region22: #{decoder_forward.1} parent=1 // pred_check
      _
    $region23: #{decoder_forward.1} parent=1 // pred_check_branch
      %64 = sbr.rel (0) target = $region25
    $region24: #{decoder_forward.1} parent=1 // pred_region
      _
    $region25: #{decoder_forward.1} parent=1 // pred_fallthru
      _
    // Predicated region
    $region26: #{decoder_forward.1} parent=1 // pred_check
      _
    $region27: #{decoder_forward.1} parent=1 // pred_check_branch
      %66 = sbr.rel (0) target = $region29
    $region28: #{decoder_forward.1} parent=1 // pred_region
      _
    $region29: #{decoder_forward.1} parent=1 // pred_fallthru
      _
    // Predicated region
    $region30: #{decoder_forward.1} parent=1 // pred_check
      _
    $region31: #{decoder_forward.1} parent=1 // pred_check_branch
      %68 = sbr.rel (0) target = $region33
    $region32: #{decoder_forward.1} parent=1 // pred_region
      %69 = dma.done [#allocation6], 7168
    $region33: #{decoder_forward.1} parent=1 // pred_fallthru
      _
    // Predicated region
    $region34: #{decoder_forward.1} parent=1 // pred_check
      _
    $region35: #{decoder_forward.1} parent=1 // pred_check_branch
      %71 = sbr.rel (0) target = $region37
    $region36: #{decoder_forward.1} parent=1 // pred_region
      %72 = dma.done [#allocation8], 448
    $region37: #{decoder_forward.1} parent=1 // pred_fallthru
      _
    // Predicated region
    $region38: #{decoder_forward.1} parent=1 // pred_check
      _
    $region39: #{decoder_forward.1} parent=1 // pred_check_branch
      %74 = sbr.rel (0) target = $region41
    $region40: #{decoder_forward.1} parent=1 // pred_region
      %75 = dma.done [#allocation8], 131072
    $region41: #{decoder_forward.1} parent=1 // pred_fallthru
      _
    // Predicated region
    $region42: #{decoder_forward.1} parent=1 // pred_check
      _
    $region43: #{decoder_forward.1} parent=1 // pred_check_branch
      %77 = sbr.rel (0) target = $region45
    $region44: #{decoder_forward.1} parent=1 // pred_region
      %78 = dma.done [#allocation11], 64
    $region45: #{decoder_forward.1} parent=1 // pred_fallthru
      _
    %v79 = vld [vmem:[%s0] sm:$0xff]
    %v80 = vld [vmem:[#allocation5] sm:$0xff]
    %v81 = vld [vmem:[#allocation5 + $0x8] sm:$0xff]
    %v82 = vld [vmem:[#allocation5 + $0x10] sm:$0xff]
    %v83 = vld [vmem:[#allocation5 + $0x18] sm:$0xff]
    %v84 = vld [vmem:[#allocation5 + $0x20] sm:$0xff]
    %v85 = vld [vmem:[#allocation5 + $0x28] sm:$0xff]
    %v86 = vld [vmem:[#allocation5 + $0x30] sm:$0xff]
    %v87 = vld [vmem:[#allocation5 + $0x38] sm:$0xff]
    %v88 = vld [vmem:[#allocation5 + $0x40] sm:$0xff]
    %v89 = vld [vmem:[#allocation5 + $0x48] sm:$0xff]
    %v90 = vld [vmem:[#allocation5 + $0x50] sm:$0xff]
    %v91 = vld [vmem:[#allocation5 + $0x58] sm:$0xff]
    %v92 = vld [vmem:[#allocation5 + $0x60] sm:$0xff]
    %v93 = vld [vmem:[#allocation5 + $0x68] sm:$0xff]
    %v94 = vld [vmem:[#allocation5 + $0x70] sm:$0xff]
    %v95 = vld [vmem:[#allocation5 + $0x78] sm:$0xff]
    %v96 = vld [vmem:[#allocation5 + $0x80] sm:$0xff]
    %v97 = vld [vmem:[#allocation5 + $0x88] sm:$0xff]
    %v98 = vld [vmem:[#allocation5 + $0x90] sm:$0xff]
    %v99 = vld [vmem:[#allocation5 + $0x98] sm:$0xff]
    %v100 = vld [vmem:[#allocation5 + $0xa0] sm:$0xff]
    %v101 = vld [vmem:[#allocation5 + $0xa8] sm:$0xff]
    %v102 = vld [vmem:[#allocation5 + $0xb0] sm:$0xff]
    %v103 = vld [vmem:[#allocation5 + $0xb8] sm:$0xff]
    %v104 = vld [vmem:[#allocation5 + $0xc0] sm:$0xff]
    %v105 = vld [vmem:[#allocation5 + $0xc8] sm:$0xff]
    %v106 = vld [vmem:[#allocation5 + $0xd0] sm:$0xff]
    %v107 = vld [vmem:[#allocation5 + $0xd8] sm:$0xff]
    %v108 = vld [vmem:[#allocation5 + $0xe0] sm:$0xff]
    %v109 = vld [vmem:[#allocation5 + $0xe8] sm:$0xff]
    %v110 = vld [vmem:[#allocation5 + $0xf0] sm:$0xff]
    %v111 = vld [vmem:[#allocation5 + $0xf8] sm:$0xff]
    %v112 = vld [vmem:[#allocation5 + $0x100] sm:$0xff]
    %v113 = vld [vmem:[#allocation5 + $0x108] sm:$0xff]
    %v114 = vld [vmem:[#allocation5 + $0x110] sm:$0xff]
    %v115 = vld [vmem:[#allocation5 + $0x118] sm:$0xff]
    %v116 = vld [vmem:[#allocation5 + $0x120] sm:$0xff]
    %v117 = vld [vmem:[#allocation5 + $0x128] sm:$0xff]
    %v118 = vld [vmem:[#allocation5 + $0x130] sm:$0xff]
    %v119 = vld [vmem:[#allocation5 + $0x138] sm:$0xff]
    %v120 = vld [vmem:[#allocation5 + $0x140] sm:$0xff]
    %v121 = vld [vmem:[#allocation5 + $0x148] sm:$0xff]
    %v122 = vld [vmem:[#allocation5 + $0x150] sm:$0xff]
    %v123 = vld [vmem:[#allocation5 + $0x158] sm:$0xff]
    %v124 = vld [vmem:[#allocation5 + $0x160] sm:$0xff]
    %v125 = vld [vmem:[#allocation5 + $0x168] sm:$0xff]
    %v126 = vld [vmem:[#allocation5 + $0x170] sm:$0xff]
    %v127 = vld [vmem:[#allocation5 + $0x178] sm:$0xff]
    %v128 = vld [vmem:[#allocation5 + $0x180] sm:$0xff]
    %v129 = vld [vmem:[#allocation5 + $0x188] sm:$0xff]
    %v130 = vld [vmem:[#allocation5 + $0x190] sm:$0xff]
    %v131 = vld [vmem:[#allocation5 + $0x198] sm:$0xff]
    %v132 = vld [vmem:[#allocation5 + $0x1a0] sm:$0xff]
    %v133 = vld [vmem:[#allocation5 + $0x1a8] sm:$0xff]
    %v134 = vld [vmem:[#allocation5 + $0x1b0] sm:$0xff]
    %v135 = vld [vmem:[#allocation5 + $0x1b8] sm:$0xff]
    %v136 = vld [vmem:[#allocation7] sm:$0xff]
    %v137 = vld [vmem:[#allocation7 + $0x8] sm:$0xff]
    %v138 = vld [vmem:[#allocation7 + $0x10] sm:$0xff]
    %v139 = vld [vmem:[#allocation7 + $0x18] sm:$0xf]
    %v144 = vlaneseq
    %v145 = vshrl.u32 %v144, 7
    %v146 = vsub.s32 0, %v145
    %v147 = vrot.slane %v136, %v146
    %v148 = vlaneseq
    %v149 = vshrl.u32 %v148, 7
    %v150 = vsub.s32 1, %v149
    %v151 = vrot.slane %v136, %v150
    %v152 = vlaneseq
    %v153 = vshrl.u32 %v152, 7
    %v154 = vsub.s32 2, %v153
    %v155 = vrot.slane %v136, %v154
    %v156 = vlaneseq
    %v157 = vshrl.u32 %v156, 7
    %v158 = vsub.s32 3, %v157
    %v159 = vrot.slane %v136, %v158
    %v160 = vlaneseq
    %v161 = vshrl.u32 %v160, 7
    %v162 = vsub.s32 4, %v161
    %v163 = vrot.slane %v136, %v162
    %v164 = vlaneseq
    %v165 = vshrl.u32 %v164, 7
    %v166 = vsub.s32 5, %v165
    %v167 = vrot.slane %v136, %v166
    %v168 = vlaneseq
    %v169 = vshrl.u32 %v168, 7
    %v170 = vsub.s32 6, %v169
    %v171 = vrot.slane %v136, %v170
    %v172 = vlaneseq
    %v173 = vshrl.u32 %v172, 7
    %v174 = vsub.s32 7, %v173
    %v175 = vrot.slane %v136, %v174
    %v176 = vlaneseq
    %v177 = vshrl.u32 %v176, 7
    %v178 = vsub.s32 0, %v177
    %v179 = vrot.slane %v137, %v178
    %v180 = vlaneseq
    %v181 = vshrl.u32 %v180, 7
    %v182 = vsub.s32 1, %v181
    %v183 = vrot.slane %v137, %v182
    %v184 = vlaneseq
    %v185 = vshrl.u32 %v184, 7
    %v186 = vsub.s32 2, %v185
    %v187 = vrot.slane %v137, %v186
    %v188 = vlaneseq
    %v189 = vshrl.u32 %v188, 7
    %v190 = vsub.s32 3, %v189
    %v191 = vrot.slane %v137, %v190
    %v192 = vlaneseq
    %v193 = vshrl.u32 %v192, 7
    %v194 = vsub.s32 4, %v193
    %v195 = vrot.slane %v137, %v194
    %v196 = vlaneseq
    %v197 = vshrl.u32 %v196, 7
    %v198 = vsub.s32 5, %v197
    %v199 = vrot.slane %v137, %v198
    %v200 = vlaneseq
    %v201 = vshrl.u32 %v200, 7
    %v202 = vsub.s32 6, %v201
    %v203 = vrot.slane %v137, %v202
    %v204 = vlaneseq
    %v205 = vshrl.u32 %v204, 7
    %v206 = vsub.s32 7, %v205
    %v207 = vrot.slane %v137, %v206
    %v208 = vlaneseq
    %v209 = vshrl.u32 %v208, 7
    %v210 = vsub.s32 0, %v209
    %v211 = vrot.slane %v138, %v210
    %v212 = vlaneseq
    %v213 = vshrl.u32 %v212, 7
    %v214 = vsub.s32 1, %v213
    %v215 = vrot.slane %v138, %v214
    %v216 = vlaneseq
    %v217 = vshrl.u32 %v216, 7
    %v218 = vsub.s32 2, %v217
    %v219 = vrot.slane %v138, %v218
    %v220 = vlaneseq
    %v221 = vshrl.u32 %v220, 7
    %v222 = vsub.s32 3, %v221
    %v223 = vrot.slane %v138, %v222
    %v224 = vlaneseq
    %v225 = vshrl.u32 %v224, 7
    %v226 = vsub.s32 4, %v225
    %v227 = vrot.slane %v138, %v226
    %v228 = vlaneseq
    %v229 = vshrl.u32 %v228, 7
    %v230 = vsub.s32 5, %v229
    %v231 = vrot.slane %v138, %v230
    %v232 = vlaneseq
    %v233 = vshrl.u32 %v232, 7
    %v234 = vsub.s32 6, %v233
    %v235 = vrot.slane %v138, %v234
    %v236 = vlaneseq
    %v237 = vshrl.u32 %v236, 7
    %v238 = vsub.s32 7, %v237
    %v239 = vrot.slane %v138, %v238
    %v240 = vlaneseq
    %v241 = vshrl.u32 %v240, 7
    %v242 = vsub.s32 0, %v241
    %v243 = vrot.slane %v139, %v242
    %v244 = vlaneseq
    %v245 = vshrl.u32 %v244, 7
    %v246 = vsub.s32 1, %v245
    %v247 = vrot.slane %v139, %v246
    %v248 = vlaneseq
    %v249 = vshrl.u32 %v248, 7
    %v250 = vsub.s32 2, %v249
    %v251 = vrot.slane %v139, %v250
    %v252 = vlaneseq
    %v253 = vshrl.u32 %v252, 7
    %v254 = vsub.s32 3, %v253
    %v255 = vrot.slane %v139, %v254
    %vm284 = vcmask 130048
    %v286 = vsel %vm284, %v79, 0
    %288 = vmatprep.subr.mxu0 0.0
    %289 = vmatpush1.msra.mxu0 0.0
    %290 = vmatprep.subr.mxu0 0.0
    %291 = vmatpush1.msra.mxu0 0.0
    %292 = vmatprep.subr.mxu0 0.0
    %293 = vmatpush1.msra.mxu0 0.0
    %294 = vmatprep.subr.mxu0 0.0
    %295 = vmatpush1.msra.mxu0 0.0
    %296 = vmatprep.subr.mxu0 0.0
    %297 = vmatpush1.msra.mxu0 0.0
    %298 = vmatprep.subr.mxu0 0.0
    %299 = vmatpush1.msra.mxu0 0.0
    %300 = vmatprep.subr.mxu0 0.0
    %301 = vmatpush1.msra.mxu0 0.0
    %302 = vmatprep.subr.mxu0 0.0
    %303 = vmatpush1.msra.mxu0 0.0
    %304 = vmatprep.subr.mxu0 0.0
    %305 = vmatpush1.msra.mxu0 0.0
    %306 = vmatprep.subr.mxu0 0.0
    %307 = vmatpush1.msra.mxu0 0.0
    %308 = vmatprep.subr.mxu0 0.0
    %309 = vmatpush1.msra.mxu0 0.0
    %310 = vmatprep.subr.mxu0 0.0
    %311 = vmatpush1.msra.mxu0 0.0
    %312 = vmatprep.subr.mxu0 0.0
    %313 = vmatpush1.msra.mxu0 0.0
    %314 = vmatprep.subr.mxu0 0.0
    %315 = vmatpush1.msra.mxu0 0.0
    %316 = vmatprep.subr.mxu0 %v109
    %317 = vmatpush1.msra.mxu0 %v108
    %318 = vmatprep.subr.mxu0 %v81
    %319 = vmatpush1.msra.mxu0 %v80
    %320 = vmatprep.subr.mxu0 0.0
    %321 = vmatpush2.msra.mxu0 0.0
    %322 = vmatprep.subr.mxu0 0.0
    %323 = vmatpush2.msra.mxu0 0.0
    %324 = vmatprep.subr.mxu0 0.0
    %325 = vmatpush2.msra.mxu0 0.0
    %326 = vmatprep.subr.mxu0 0.0
    %327 = vmatpush2.msra.mxu0 0.0
    %328 = vmatprep.subr.mxu0 0.0
    %329 = vmatpush2.msra.mxu0 0.0
    %330 = vmatprep.subr.mxu0 0.0
    %331 = vmatpush2.msra.mxu0 0.0
    %332 = vmatprep.subr.mxu0 0.0
    %333 = vmatpush2.msra.mxu0 0.0
    %334 = vmatprep.subr.mxu0 0.0
    %335 = vmatpush2.msra.mxu0 0.0
    %336 = vmatprep.subr.mxu0 0.0
    %337 = vmatpush2.msra.mxu0 0.0
    %338 = vmatprep.subr.mxu0 0.0
    %339 = vmatpush2.msra.mxu0 0.0
    %340 = vmatprep.subr.mxu0 0.0
    %341 = vmatpush2.msra.mxu0 0.0
    %342 = vmatprep.subr.mxu0 0.0
    %343 = vmatpush2.msra.mxu0 0.0
    %344 = vmatprep.subr.mxu0 0.0
    %345 = vmatpush2.msra.mxu0 0.0
    %346 = vmatprep.subr.mxu0 0.0
    %347 = vmatpush2.msra.mxu0 0.0
    %348 = vmatprep.subr.mxu0 0.0
    %349 = vmatpush2.msra.mxu0 0.0
    %350 = vmatprep.subr.mxu0 0.0
    %351 = vmatpush2.msra.mxu0 0.0
    %352 = vmatprep.mubr.f32.mxu0 0.0
    %353 = vmatmul.mubr.f32.gmra.mxu0 %v286
    %v354 = vpop.f32.mrf.mxu0
    %v355 = vadd.f32 %v147, %v354
    %v356 = vpop.f32.mrf.mxu0
    %v357 = vadd.f32 %v151, %v356
    %358 = vdwg.mxu0
    %359 = vmatprep.subr.mxu0 0.0
    %360 = vmatpush1.msra.mxu0 0.0
    %361 = vmatprep.subr.mxu0 0.0
    %362 = vmatpush1.msra.mxu0 0.0
    %363 = vmatprep.subr.mxu0 0.0
    %364 = vmatpush1.msra.mxu0 0.0
    %365 = vmatprep.subr.mxu0 0.0
    %366 = vmatpush1.msra.mxu0 0.0
    %367 = vmatprep.subr.mxu0 0.0
    %368 = vmatpush1.msra.mxu0 0.0
    %369 = vmatprep.subr.mxu0 0.0
    %370 = vmatpush1.msra.mxu0 0.0
    %371 = vmatprep.subr.mxu0 0.0
    %372 = vmatpush1.msra.mxu0 0.0
    %373 = vmatprep.subr.mxu0 0.0
    %374 = vmatpush1.msra.mxu0 0.0
    %375 = vmatprep.subr.mxu0 0.0
    %376 = vmatpush1.msra.mxu0 0.0
    %377 = vmatprep.subr.mxu0 0.0
    %378 = vmatpush1.msra.mxu0 0.0
    %379 = vmatprep.subr.mxu0 0.0
    %380 = vmatpush1.msra.mxu0 0.0
    %381 = vmatprep.subr.mxu0 0.0
    %382 = vmatpush1.msra.mxu0 0.0
    %383 = vmatprep.subr.mxu0 0.0
    %384 = vmatpush1.msra.mxu0 0.0
    %385 = vmatprep.subr.mxu0 0.0
    %386 = vmatpush1.msra.mxu0 0.0
    %387 = vmatprep.subr.mxu0 %v111
    %388 = vmatpush1.msra.mxu0 %v110
    %389 = vmatprep.subr.mxu0 %v83
    %390 = vmatpush1.msra.mxu0 %v82
    %391 = vmatprep.subr.mxu0 0.0
    %392 = vmatpush2.msra.mxu0 0.0
    %393 = vmatprep.subr.mxu0 0.0
    %394 = vmatpush2.msra.mxu0 0.0
    %395 = vmatprep.subr.mxu0 0.0
    %396 = vmatpush2.msra.mxu0 0.0
    %397 = vmatprep.subr.mxu0 0.0
    %398 = vmatpush2.msra.mxu0 0.0
    %399 = vmatprep.subr.mxu0 0.0
    %400 = vmatpush2.msra.mxu0 0.0
    %401 = vmatprep.subr.mxu0 0.0
    %402 = vmatpush2.msra.mxu0 0.0
    %403 = vmatprep.subr.mxu0 0.0
    %404 = vmatpush2.msra.mxu0 0.0
    %405 = vmatprep.subr.mxu0 0.0
    %406 = vmatpush2.msra.mxu0 0.0
    %407 = vmatprep.subr.mxu0 0.0
    %408 = vmatpush2.msra.mxu0 0.0
    %409 = vmatprep.subr.mxu0 0.0
    %410 = vmatpush2.msra.mxu0 0.0
    %411 = vmatprep.subr.mxu0 0.0
    %412 = vmatpush2.msra.mxu0 0.0
    %413 = vmatprep.subr.mxu0 0.0
    %414 = vmatpush2.msra.mxu0 0.0
    %415 = vmatprep.subr.mxu0 0.0
    %416 = vmatpush2.msra.mxu0 0.0
    %417 = vmatprep.subr.mxu0 0.0
    %418 = vmatpush2.msra.mxu0 0.0
    %419 = vmatprep.subr.mxu0 0.0
    %420 = vmatpush2.msra.mxu0 0.0
    %421 = vmatprep.subr.mxu0 0.0
    %422 = vmatpush2.msra.mxu0 0.0
    %423 = vmatprep.mubr.f32.mxu0 0.0
    %424 = vmatmul.mubr.f32.gmra.mxu0 %v286
    %v425 = vpop.f32.mrf.mxu0
    %v426 = vadd.f32 %v155, %v425
    %v427 = vpop.f32.mrf.mxu0
    %v428 = vadd.f32 %v159, %v427
    %429 = vdwg.mxu0
    %430 = vmatprep.subr.mxu0 0.0
    %431 = vmatpush1.msra.mxu0 0.0
    %432 = vmatprep.subr.mxu0 0.0
    %433 = vmatpush1.msra.mxu0 0.0
    %434 = vmatprep.subr.mxu0 0.0
    %435 = vmatpush1.msra.mxu0 0.0
    %436 = vmatprep.subr.mxu0 0.0
    %437 = vmatpush1.msra.mxu0 0.0
    %438 = vmatprep.subr.mxu0 0.0
    %439 = vmatpush1.msra.mxu0 0.0
    %440 = vmatprep.subr.mxu0 0.0
    %441 = vmatpush1.msra.mxu0 0.0
    %442 = vmatprep.subr.mxu0 0.0
    %443 = vmatpush1.msra.mxu0 0.0
    %444 = vmatprep.subr.mxu0 0.0
    %445 = vmatpush1.msra.mxu0 0.0
    %446 = vmatprep.subr.mxu0 0.0
    %447 = vmatpush1.msra.mxu0 0.0
    %448 = vmatprep.subr.mxu0 0.0
    %449 = vmatpush1.msra.mxu0 0.0
    %450 = vmatprep.subr.mxu0 0.0
    %451 = vmatpush1.msra.mxu0 0.0
    %452 = vmatprep.subr.mxu0 0.0
    %453 = vmatpush1.msra.mxu0 0.0
    %454 = vmatprep.subr.mxu0 0.0
    %455 = vmatpush1.msra.mxu0 0.0
    %456 = vmatprep.subr.mxu0 0.0
    %457 = vmatpush1.msra.mxu0 0.0
    %458 = vmatprep.subr.mxu0 %v113
    %459 = vmatpush1.msra.mxu0 %v112
    %460 = vmatprep.subr.mxu0 %v85
    %461 = vmatpush1.msra.mxu0 %v84
    %462 = vmatprep.subr.mxu0 0.0
    %463 = vmatpush2.msra.mxu0 0.0
    %464 = vmatprep.subr.mxu0 0.0
    %465 = vmatpush2.msra.mxu0 0.0
    %466 = vmatprep.subr.mxu0 0.0
    %467 = vmatpush2.msra.mxu0 0.0
    %468 = vmatprep.subr.mxu0 0.0
    %469 = vmatpush2.msra.mxu0 0.0
    %470 = vmatprep.subr.mxu0 0.0
    %471 = vmatpush2.msra.mxu0 0.0
    %472 = vmatprep.subr.mxu0 0.0
    %473 = vmatpush2.msra.mxu0 0.0
    %474 = vmatprep.subr.mxu0 0.0
    %475 = vmatpush2.msra.mxu0 0.0
    %476 = vmatprep.subr.mxu0 0.0
    %477 = vmatpush2.msra.mxu0 0.0
    %478 = vmatprep.subr.mxu0 0.0
    %479 = vmatpush2.msra.mxu0 0.0
    %480 = vmatprep.subr.mxu0 0.0
    %481 = vmatpush2.msra.mxu0 0.0
    %482 = vmatprep.subr.mxu0 0.0
    %483 = vmatpush2.msra.mxu0 0.0
    %484 = vmatprep.subr.mxu0 0.0
    %485 = vmatpush2.msra.mxu0 0.0
    %486 = vmatprep.subr.mxu0 0.0
    %487 = vmatpush2.msra.mxu0 0.0
    %488 = vmatprep.subr.mxu0 0.0
    %489 = vmatpush2.msra.mxu0 0.0
    %490 = vmatprep.subr.mxu0 0.0
    %491 = vmatpush2.msra.mxu0 0.0
    %492 = vmatprep.subr.mxu0 0.0
    %493 = vmatpush2.msra.mxu0 0.0
    %494 = vmatprep.mubr.f32.mxu0 0.0
    %495 = vmatmul.mubr.f32.gmra.mxu0 %v286
    %v496 = vpop.f32.mrf.mxu0
    %v497 = vadd.f32 %v163, %v496
    %v498 = vpop.f32.mrf.mxu0
    %v499 = vadd.f32 %v167, %v498
    %500 = vdwg.mxu0
    %501 = vmatprep.subr.mxu0 0.0
    %502 = vmatpush1.msra.mxu0 0.0
    %503 = vmatprep.subr.mxu0 0.0
    %504 = vmatpush1.msra.mxu0 0.0
    %505 = vmatprep.subr.mxu0 0.0
    %506 = vmatpush1.msra.mxu0 0.0
    %507 = vmatprep.subr.mxu0 0.0
    %508 = vmatpush1.msra.mxu0 0.0
    %509 = vmatprep.subr.mxu0 0.0
    %510 = vmatpush1.msra.mxu0 0.0
    %511 = vmatprep.subr.mxu0 0.0
    %512 = vmatpush1.msra.mxu0 0.0
    %513 = vmatprep.subr.mxu0 0.0
    %514 = vmatpush1.msra.mxu0 0.0
    %515 = vmatprep.subr.mxu0 0.0
    %516 = vmatpush1.msra.mxu0 0.0
    %517 = vmatprep.subr.mxu0 0.0
    %518 = vmatpush1.msra.mxu0 0.0
    %519 = vmatprep.subr.mxu0 0.0
    %520 = vmatpush1.msra.mxu0 0.0
    %521 = vmatprep.subr.mxu0 0.0
    %522 = vmatpush1.msra.mxu0 0.0
    %523 = vmatprep.subr.mxu0 0.0
    %524 = vmatpush1.msra.mxu0 0.0
    %525 = vmatprep.subr.mxu0 0.0
    %526 = vmatpush1.msra.mxu0 0.0
    %527 = vmatprep.subr.mxu0 0.0
    %528 = vmatpush1.msra.mxu0 0.0
    %529 = vmatprep.subr.mxu0 %v115
    %530 = vmatpush1.msra.mxu0 %v114
    %531 = vmatprep.subr.mxu0 %v87
    %532 = vmatpush1.msra.mxu0 %v86
    %533 = vmatprep.subr.mxu0 0.0
    %534 = vmatpush2.msra.mxu0 0.0
    %535 = vmatprep.subr.mxu0 0.0
    %536 = vmatpush2.msra.mxu0 0.0
    %537 = vmatprep.subr.mxu0 0.0
    %538 = vmatpush2.msra.mxu0 0.0
    %539 = vmatprep.subr.mxu0 0.0
    %540 = vmatpush2.msra.mxu0 0.0
    %541 = vmatprep.subr.mxu0 0.0
    %542 = vmatpush2.msra.mxu0 0.0
    %543 = vmatprep.subr.mxu0 0.0
    %544 = vmatpush2.msra.mxu0 0.0
    %545 = vmatprep.subr.mxu0 0.0
    %546 = vmatpush2.msra.mxu0 0.0
    %547 = vmatprep.subr.mxu0 0.0
    %548 = vmatpush2.msra.mxu0 0.0
    %549 = vmatprep.subr.mxu0 0.0
    %550 = vmatpush2.msra.mxu0 0.0
    %551 = vmatprep.subr.mxu0 0.0
    %552 = vmatpush2.msra.mxu0 0.0
    %553 = vmatprep.subr.mxu0 0.0
    %554 = vmatpush2.msra.mxu0 0.0
    %555 = vmatprep.subr.mxu0 0.0
    %556 = vmatpush2.msra.mxu0 0.0
    %557 = vmatprep.subr.mxu0 0.0
    %558 = vmatpush2.msra.mxu0 0.0
    %559 = vmatprep.subr.mxu0 0.0
    %560 = vmatpush2.msra.mxu0 0.0
    %561 = vmatprep.subr.mxu0 0.0
    %562 = vmatpush2.msra.mxu0 0.0
    %563 = vmatprep.subr.mxu0 0.0
    %564 = vmatpush2.msra.mxu0 0.0
    %565 = vmatprep.mubr.f32.mxu0 0.0
    %566 = vmatmul.mubr.f32.gmra.mxu0 %v286
    %v567 = vpop.f32.mrf.mxu0
    %v568 = vadd.f32 %v171, %v567
    %v569 = vpop.f32.mrf.mxu0
    %v570 = vadd.f32 %v175, %v569
    %571 = vdwg.mxu0
    %572 = vmatprep.subr.mxu0 0.0
    %573 = vmatpush1.msra.mxu0 0.0
    %574 = vmatprep.subr.mxu0 0.0
    %575 = vmatpush1.msra.mxu0 0.0
    %576 = vmatprep.subr.mxu0 0.0
    %577 = vmatpush1.msra.mxu0 0.0
    %578 = vmatprep.subr.mxu0 0.0
    %579 = vmatpush1.msra.mxu0 0.0
    %580 = vmatprep.subr.mxu0 0.0
    %581 = vmatpush1.msra.mxu0 0.0
    %582 = vmatprep.subr.mxu0 0.0
    %583 = vmatpush1.msra.mxu0 0.0
    %584 = vmatprep.subr.mxu0 0.0
    %585 = vmatpush1.msra.mxu0 0.0
    %586 = vmatprep.subr.mxu0 0.0
    %587 = vmatpush1.msra.mxu0 0.0
    %588 = vmatprep.subr.mxu0 0.0
    %589 = vmatpush1.msra.mxu0 0.0
    %590 = vmatprep.subr.mxu0 0.0
    %591 = vmatpush1.msra.mxu0 0.0
    %592 = vmatprep.subr.mxu0 0.0
    %593 = vmatpush1.msra.mxu0 0.0
    %594 = vmatprep.subr.mxu0 0.0
    %595 = vmatpush1.msra.mxu0 0.0
    %596 = vmatprep.subr.mxu0 0.0
    %597 = vmatpush1.msra.mxu0 0.0
    %598 = vmatprep.subr.mxu0 0.0
    %599 = vmatpush1.msra.mxu0 0.0
    %600 = vmatprep.subr.mxu0 %v117
    %601 = vmatpush1.msra.mxu0 %v116
    %602 = vmatprep.subr.mxu0 %v89
    %603 = vmatpush1.msra.mxu0 %v88
    %604 = vmatprep.subr.mxu0 0.0
    %605 = vmatpush2.msra.mxu0 0.0
    %606 = vmatprep.subr.mxu0 0.0
    %607 = vmatpush2.msra.mxu0 0.0
    %608 = vmatprep.subr.mxu0 0.0
    %609 = vmatpush2.msra.mxu0 0.0
    %610 = vmatprep.subr.mxu0 0.0
    %611 = vmatpush2.msra.mxu0 0.0
    %612 = vmatprep.subr.mxu0 0.0
    %613 = vmatpush2.msra.mxu0 0.0
    %614 = vmatprep.subr.mxu0 0.0
    %615 = vmatpush2.msra.mxu0 0.0
    %616 = vmatprep.subr.mxu0 0.0
    %617 = vmatpush2.msra.mxu0 0.0
    %618 = vmatprep.subr.mxu0 0.0
    %619 = vmatpush2.msra.mxu0 0.0
    %620 = vmatprep.subr.mxu0 0.0
    %621 = vmatpush2.msra.mxu0 0.0
    %622 = vmatprep.subr.mxu0 0.0
    %623 = vmatpush2.msra.mxu0 0.0
    %624 = vmatprep.subr.mxu0 0.0
    %625 = vmatpush2.msra.mxu0 0.0
    %626 = vmatprep.subr.mxu0 0.0
    %627 = vmatpush2.msra.mxu0 0.0
    %628 = vmatprep.subr.mxu0 0.0
    %629 = vmatpush2.msra.mxu0 0.0
    %630 = vmatprep.subr.mxu0 0.0
    %631 = vmatpush2.msra.mxu0 0.0
    %632 = vmatprep.subr.mxu0 0.0
    %633 = vmatpush2.msra.mxu0 0.0
    %634 = vmatprep.subr.mxu0 0.0
    %635 = vmatpush2.msra.mxu0 0.0
    %636 = vmatprep.mubr.f32.mxu0 0.0
    %637 = vmatmul.mubr.f32.gmra.mxu0 %v286
    %v638 = vpop.f32.mrf.mxu0
    %v639 = vadd.f32 %v179, %v638
    %v640 = vpop.f32.mrf.mxu0
    %v641 = vadd.f32 %v183, %v640
    %642 = vdwg.mxu0
    %643 = vmatprep.subr.mxu0 0.0
    %644 = vmatpush1.msra.mxu0 0.0
    %645 = vmatprep.subr.mxu0 0.0
    %646 = vmatpush1.msra.mxu0 0.0
    %647 = vmatprep.subr.mxu0 0.0
    %648 = vmatpush1.msra.mxu0 0.0
    %649 = vmatprep.subr.mxu0 0.0
    %650 = vmatpush1.msra.mxu0 0.0
    %651 = vmatprep.subr.mxu0 0.0
    %652 = vmatpush1.msra.mxu0 0.0
    %653 = vmatprep.subr.mxu0 0.0
    %654 = vmatpush1.msra.mxu0 0.0
    %655 = vmatprep.subr.mxu0 0.0
    %656 = vmatpush1.msra.mxu0 0.0
    %657 = vmatprep.subr.mxu0 0.0
    %658 = vmatpush1.msra.mxu0 0.0
    %659 = vmatprep.subr.mxu0 0.0
    %660 = vmatpush1.msra.mxu0 0.0
    %661 = vmatprep.subr.mxu0 0.0
    %662 = vmatpush1.msra.mxu0 0.0
    %663 = vmatprep.subr.mxu0 0.0
    %664 = vmatpush1.msra.mxu0 0.0
    %665 = vmatprep.subr.mxu0 0.0
    %666 = vmatpush1.msra.mxu0 0.0
    %667 = vmatprep.subr.mxu0 0.0
    %668 = vmatpush1.msra.mxu0 0.0
    %669 = vmatprep.subr.mxu0 0.0
    %670 = vmatpush1.msra.mxu0 0.0
    %671 = vmatprep.subr.mxu0 %v119
    %672 = vmatpush1.msra.mxu0 %v118
    %673 = vmatprep.subr.mxu0 %v91
    %674 = vmatpush1.msra.mxu0 %v90
    %675 = vmatprep.subr.mxu0 0.0
    %676 = vmatpush2.msra.mxu0 0.0
    %677 = vmatprep.subr.mxu0 0.0
    %678 = vmatpush2.msra.mxu0 0.0
    %679 = vmatprep.subr.mxu0 0.0
    %680 = vmatpush2.msra.mxu0 0.0
    %681 = vmatprep.subr.mxu0 0.0
    %682 = vmatpush2.msra.mxu0 0.0
    %683 = vmatprep.subr.mxu0 0.0
    %684 = vmatpush2.msra.mxu0 0.0
    %685 = vmatprep.subr.mxu0 0.0
    %686 = vmatpush2.msra.mxu0 0.0
    %687 = vmatprep.subr.mxu0 0.0
    %688 = vmatpush2.msra.mxu0 0.0
    %689 = vmatprep.subr.mxu0 0.0
    %690 = vmatpush2.msra.mxu0 0.0
    %691 = vmatprep.subr.mxu0 0.0
    %692 = vmatpush2.msra.mxu0 0.0
    %693 = vmatprep.subr.mxu0 0.0
    %694 = vmatpush2.msra.mxu0 0.0
    %695 = vmatprep.subr.mxu0 0.0
    %696 = vmatpush2.msra.mxu0 0.0
    %697 = vmatprep.subr.mxu0 0.0
    %698 = vmatpush2.msra.mxu0 0.0
    %699 = vmatprep.subr.mxu0 0.0
    %700 = vmatpush2.msra.mxu0 0.0
    %701 = vmatprep.subr.mxu0 0.0
    %702 = vmatpush2.msra.mxu0 0.0
    %703 = vmatprep.subr.mxu0 0.0
    %704 = vmatpush2.msra.mxu0 0.0
    %705 = vmatprep.subr.mxu0 0.0
    %706 = vmatpush2.msra.mxu0 0.0
    %707 = vmatprep.mubr.f32.mxu0 0.0
    %708 = vmatmul.mubr.f32.gmra.mxu0 %v286
    %v709 = vpop.f32.mrf.mxu0
    %v710 = vadd.f32 %v187, %v709
    %v711 = vpop.f32.mrf.mxu0
    %v712 = vadd.f32 %v191, %v711
    %713 = vdwg.mxu0
    %714 = vmatprep.subr.mxu0 0.0
    %715 = vmatpush1.msra.mxu0 0.0
    %716 = vmatprep.subr.mxu0 0.0
    %717 = vmatpush1.msra.mxu0 0.0
    %718 = vmatprep.subr.mxu0 0.0
    %719 = vmatpush1.msra.mxu0 0.0
    %720 = vmatprep.subr.mxu0 0.0
    %721 = vmatpush1.msra.mxu0 0.0
    %722 = vmatprep.subr.mxu0 0.0
    %723 = vmatpush1.msra.mxu0 0.0
    %724 = vmatprep.subr.mxu0 0.0
    %725 = vmatpush1.msra.mxu0 0.0
    %726 = vmatprep.subr.mxu0 0.0
    %727 = vmatpush1.msra.mxu0 0.0
    %728 = vmatprep.subr.mxu0 0.0
    %729 = vmatpush1.msra.mxu0 0.0
    %730 = vmatprep.subr.mxu0 0.0
    %731 = vmatpush1.msra.mxu0 0.0
    %732 = vmatprep.subr.mxu0 0.0
    %733 = vmatpush1.msra.mxu0 0.0
    %734 = vmatprep.subr.mxu0 0.0
    %735 = vmatpush1.msra.mxu0 0.0
    %736 = vmatprep.subr.mxu0 0.0
    %737 = vmatpush1.msra.mxu0 0.0
    %738 = vmatprep.subr.mxu0 0.0
    %739 = vmatpush1.msra.mxu0 0.0
    %740 = vmatprep.subr.mxu0 0.0
    %741 = vmatpush1.msra.mxu0 0.0
    %742 = vmatprep.subr.mxu0 %v121
    %743 = vmatpush1.msra.mxu0 %v120
    %744 = vmatprep.subr.mxu0 %v93
    %745 = vmatpush1.msra.mxu0 %v92
    %746 = vmatprep.subr.mxu0 0.0
    %747 = vmatpush2.msra.mxu0 0.0
    %748 = vmatprep.subr.mxu0 0.0
    %749 = vmatpush2.msra.mxu0 0.0
    %750 = vmatprep.subr.mxu0 0.0
    %751 = vmatpush2.msra.mxu0 0.0
    %752 = vmatprep.subr.mxu0 0.0
    %753 = vmatpush2.msra.mxu0 0.0
    %754 = vmatprep.subr.mxu0 0.0
    %755 = vmatpush2.msra.mxu0 0.0
    %756 = vmatprep.subr.mxu0 0.0
    %757 = vmatpush2.msra.mxu0 0.0
    %758 = vmatprep.subr.mxu0 0.0
    %759 = vmatpush2.msra.mxu0 0.0
    %760 = vmatprep.subr.mxu0 0.0
    %761 = vmatpush2.msra.mxu0 0.0
    %762 = vmatprep.subr.mxu0 0.0
    %763 = vmatpush2.msra.mxu0 0.0
    %764 = vmatprep.subr.mxu0 0.0
    %765 = vmatpush2.msra.mxu0 0.0
    %766 = vmatprep.subr.mxu0 0.0
    %767 = vmatpush2.msra.mxu0 0.0
    %768 = vmatprep.subr.mxu0 0.0
    %769 = vmatpush2.msra.mxu0 0.0
    %770 = vmatprep.subr.mxu0 0.0
    %771 = vmatpush2.msra.mxu0 0.0
    %772 = vmatprep.subr.mxu0 0.0
    %773 = vmatpush2.msra.mxu0 0.0
    %774 = vmatprep.subr.mxu0 0.0
    %775 = vmatpush2.msra.mxu0 0.0
    %776 = vmatprep.subr.mxu0 0.0
    %777 = vmatpush2.msra.mxu0 0.0
    %778 = vmatprep.mubr.f32.mxu0 0.0
    %779 = vmatmul.mubr.f32.gmra.mxu0 %v286
    %v780 = vpop.f32.mrf.mxu0
    %v781 = vadd.f32 %v195, %v780
    %v782 = vpop.f32.mrf.mxu0
    %v783 = vadd.f32 %v199, %v782
    %784 = vdwg.mxu0
    %785 = vmatprep.subr.mxu0 0.0
    %786 = vmatpush1.msra.mxu0 0.0
    %787 = vmatprep.subr.mxu0 0.0
    %788 = vmatpush1.msra.mxu0 0.0
    %789 = vmatprep.subr.mxu0 0.0
    %790 = vmatpush1.msra.mxu0 0.0
    %791 = vmatprep.subr.mxu0 0.0
    %792 = vmatpush1.msra.mxu0 0.0
    %793 = vmatprep.subr.mxu0 0.0
    %794 = vmatpush1.msra.mxu0 0.0
    %795 = vmatprep.subr.mxu0 0.0
    %796 = vmatpush1.msra.mxu0 0.0
    %797 = vmatprep.subr.mxu0 0.0
    %798 = vmatpush1.msra.mxu0 0.0
    %799 = vmatprep.subr.mxu0 0.0
    %800 = vmatpush1.msra.mxu0 0.0
    %801 = vmatprep.subr.mxu0 0.0
    %802 = vmatpush1.msra.mxu0 0.0
    %803 = vmatprep.subr.mxu0 0.0
    %804 = vmatpush1.msra.mxu0 0.0
    %805 = vmatprep.subr.mxu0 0.0
    %806 = vmatpush1.msra.mxu0 0.0
    %807 = vmatprep.subr.mxu0 0.0
    %808 = vmatpush1.msra.mxu0 0.0
    %809 = vmatprep.subr.mxu0 0.0
    %810 = vmatpush1.msra.mxu0 0.0
    %811 = vmatprep.subr.mxu0 0.0
    %812 = vmatpush1.msra.mxu0 0.0
    %813 = vmatprep.subr.mxu0 %v123
    %814 = vmatpush1.msra.mxu0 %v122
    %815 = vmatprep.subr.mxu0 %v95
    %816 = vmatpush1.msra.mxu0 %v94
    %817 = vmatprep.subr.mxu0 0.0
    %818 = vmatpush2.msra.mxu0 0.0
    %819 = vmatprep.subr.mxu0 0.0
    %820 = vmatpush2.msra.mxu0 0.0
    %821 = vmatprep.subr.mxu0 0.0
    %822 = vmatpush2.msra.mxu0 0.0
    %823 = vmatprep.subr.mxu0 0.0
    %824 = vmatpush2.msra.mxu0 0.0
    %825 = vmatprep.subr.mxu0 0.0
    %826 = vmatpush2.msra.mxu0 0.0
    %827 = vmatprep.subr.mxu0 0.0
    %828 = vmatpush2.msra.mxu0 0.0
    %829 = vmatprep.subr.mxu0 0.0
    %830 = vmatpush2.msra.mxu0 0.0
    %831 = vmatprep.subr.mxu0 0.0
    %832 = vmatpush2.msra.mxu0 0.0
    %833 = vmatprep.subr.mxu0 0.0
    %834 = vmatpush2.msra.mxu0 0.0
    %835 = vmatprep.subr.mxu0 0.0
    %836 = vmatpush2.msra.mxu0 0.0
    %837 = vmatprep.subr.mxu0 0.0
    %838 = vmatpush2.msra.mxu0 0.0
    %839 = vmatprep.subr.mxu0 0.0
    %840 = vmatpush2.msra.mxu0 0.0
    %841 = vmatprep.subr.mxu0 0.0
    %842 = vmatpush2.msra.mxu0 0.0
    %843 = vmatprep.subr.mxu0 0.0
    %844 = vmatpush2.msra.mxu0 0.0
    %845 = vmatprep.subr.mxu0 0.0
    %846 = vmatpush2.msra.mxu0 0.0
    %847 = vmatprep.subr.mxu0 0.0
    %848 = vmatpush2.msra.mxu0 0.0
    %849 = vmatprep.mubr.f32.mxu0 0.0
    %850 = vmatmul.mubr.f32.gmra.mxu0 %v286
    %v851 = vpop.f32.mrf.mxu0
    %v852 = vadd.f32 %v203, %v851
    %v853 = vpop.f32.mrf.mxu0
    %v854 = vadd.f32 %v207, %v853
    %855 = vdwg.mxu0
    %856 = vmatprep.subr.mxu0 0.0
    %857 = vmatpush1.msra.mxu0 0.0
    %858 = vmatprep.subr.mxu0 0.0
    %859 = vmatpush1.msra.mxu0 0.0
    %860 = vmatprep.subr.mxu0 0.0
    %861 = vmatpush1.msra.mxu0 0.0
    %862 = vmatprep.subr.mxu0 0.0
    %863 = vmatpush1.msra.mxu0 0.0
    %864 = vmatprep.subr.mxu0 0.0
    %865 = vmatpush1.msra.mxu0 0.0
    %866 = vmatprep.subr.mxu0 0.0
    %867 = vmatpush1.msra.mxu0 0.0
    %868 = vmatprep.subr.mxu0 0.0
    %869 = vmatpush1.msra.mxu0 0.0
    %870 = vmatprep.subr.mxu0 0.0
    %871 = vmatpush1.msra.mxu0 0.0
    %872 = vmatprep.subr.mxu0 0.0
    %873 = vmatpush1.msra.mxu0 0.0
    %874 = vmatprep.subr.mxu0 0.0
    %875 = vmatpush1.msra.mxu0 0.0
    %876 = vmatprep.subr.mxu0 0.0
    %877 = vmatpush1.msra.mxu0 0.0
    %878 = vmatprep.subr.mxu0 0.0
    %879 = vmatpush1.msra.mxu0 0.0
    %880 = vmatprep.subr.mxu0 0.0
    %881 = vmatpush1.msra.mxu0 0.0
    %882 = vmatprep.subr.mxu0 0.0
    %883 = vmatpush1.msra.mxu0 0.0
    %884 = vmatprep.subr.mxu0 %v125
    %885 = vmatpush1.msra.mxu0 %v124
    %886 = vmatprep.subr.mxu0 %v97
    %887 = vmatpush1.msra.mxu0 %v96
    %888 = vmatprep.subr.mxu0 0.0
    %889 = vmatpush2.msra.mxu0 0.0
    %890 = vmatprep.subr.mxu0 0.0
    %891 = vmatpush2.msra.mxu0 0.0
    %892 = vmatprep.subr.mxu0 0.0
    %893 = vmatpush2.msra.mxu0 0.0
    %894 = vmatprep.subr.mxu0 0.0
    %895 = vmatpush2.msra.mxu0 0.0
    %896 = vmatprep.subr.mxu0 0.0
    %897 = vmatpush2.msra.mxu0 0.0
    %898 = vmatprep.subr.mxu0 0.0
    %899 = vmatpush2.msra.mxu0 0.0
    %900 = vmatprep.subr.mxu0 0.0
    %901 = vmatpush2.msra.mxu0 0.0
    %902 = vmatprep.subr.mxu0 0.0
    %903 = vmatpush2.msra.mxu0 0.0
    %904 = vmatprep.subr.mxu0 0.0
    %905 = vmatpush2.msra.mxu0 0.0
    %906 = vmatprep.subr.mxu0 0.0
    %907 = vmatpush2.msra.mxu0 0.0
    %908 = vmatprep.subr.mxu0 0.0
    %909 = vmatpush2.msra.mxu0 0.0
    %910 = vmatprep.subr.mxu0 0.0
    %911 = vmatpush2.msra.mxu0 0.0
    %912 = vmatprep.subr.mxu0 0.0
    %913 = vmatpush2.msra.mxu0 0.0
    %914 = vmatprep.subr.mxu0 0.0
    %915 = vmatpush2.msra.mxu0 0.0
    %916 = vmatprep.subr.mxu0 0.0
    %917 = vmatpush2.msra.mxu0 0.0
    %918 = vmatprep.subr.mxu0 0.0
    %919 = vmatpush2.msra.mxu0 0.0
    %920 = vmatprep.mubr.f32.mxu0 0.0
    %921 = vmatmul.mubr.f32.gmra.mxu0 %v286
    %v922 = vpop.f32.mrf.mxu0
    %v923 = vadd.f32 %v211, %v922
    %v924 = vpop.f32.mrf.mxu0
    %v925 = vadd.f32 %v215, %v924
    %926 = vdwg.mxu0
    %927 = vmatprep.subr.mxu0 0.0
    %928 = vmatpush1.msra.mxu0 0.0
    %929 = vmatprep.subr.mxu0 0.0
    %930 = vmatpush1.msra.mxu0 0.0
    %931 = vmatprep.subr.mxu0 0.0
    %932 = vmatpush1.msra.mxu0 0.0
    %933 = vmatprep.subr.mxu0 0.0
    %934 = vmatpush1.msra.mxu0 0.0
    %935 = vmatprep.subr.mxu0 0.0
    %936 = vmatpush1.msra.mxu0 0.0
    %937 = vmatprep.subr.mxu0 0.0
    %938 = vmatpush1.msra.mxu0 0.0
    %939 = vmatprep.subr.mxu0 0.0
    %940 = vmatpush1.msra.mxu0 0.0
    %941 = vmatprep.subr.mxu0 0.0
    %942 = vmatpush1.msra.mxu0 0.0
    %943 = vmatprep.subr.mxu0 0.0
    %944 = vmatpush1.msra.mxu0 0.0
    %945 = vmatprep.subr.mxu0 0.0
    %946 = vmatpush1.msra.mxu0 0.0
    %947 = vmatprep.subr.mxu0 0.0
    %948 = vmatpush1.msra.mxu0 0.0
    %949 = vmatprep.subr.mxu0 0.0
    %950 = vmatpush1.msra.mxu0 0.0
    %951 = vmatprep.subr.mxu0 0.0
    %952 = vmatpush1.msra.mxu0 0.0
    %953 = vmatprep.subr.mxu0 0.0
    %954 = vmatpush1.msra.mxu0 0.0
    %955 = vmatprep.subr.mxu0 %v127
    %956 = vmatpush1.msra.mxu0 %v126
    %957 = vmatprep.subr.mxu0 %v99
    %958 = vmatpush1.msra.mxu0 %v98
    %959 = vmatprep.subr.mxu0 0.0
    %960 = vmatpush2.msra.mxu0 0.0
    %961 = vmatprep.subr.mxu0 0.0
    %962 = vmatpush2.msra.mxu0 0.0
    %963 = vmatprep.subr.mxu0 0.0
    %964 = vmatpush2.msra.mxu0 0.0
    %965 = vmatprep.subr.mxu0 0.0
    %966 = vmatpush2.msra.mxu0 0.0
    %967 = vmatprep.subr.mxu0 0.0
    %968 = vmatpush2.msra.mxu0 0.0
    %969 = vmatprep.subr.mxu0 0.0
    %970 = vmatpush2.msra.mxu0 0.0
    %971 = vmatprep.subr.mxu0 0.0
    %972 = vmatpush2.msra.mxu0 0.0
    %973 = vmatprep.subr.mxu0 0.0
    %974 = vmatpush2.msra.mxu0 0.0
    %975 = vmatprep.subr.mxu0 0.0
    %976 = vmatpush2.msra.mxu0 0.0
    %977 = vmatprep.subr.mxu0 0.0
    %978 = vmatpush2.msra.mxu0 0.0
    %979 = vmatprep.subr.mxu0 0.0
    %980 = vmatpush2.msra.mxu0 0.0
    %981 = vmatprep.subr.mxu0 0.0
    %982 = vmatpush2.msra.mxu0 0.0
    %983 = vmatprep.subr.mxu0 0.0
    %984 = vmatpush2.msra.mxu0 0.0
    %985 = vmatprep.subr.mxu0 0.0
    %986 = vmatpush2.msra.mxu0 0.0
    %987 = vmatprep.subr.mxu0 0.0
    %988 = vmatpush2.msra.mxu0 0.0
    %989 = vmatprep.subr.mxu0 0.0
    %990 = vmatpush2.msra.mxu0 0.0
    %991 = vmatprep.mubr.f32.mxu0 0.0
    %992 = vmatmul.mubr.f32.gmra.mxu0 %v286
    %v993 = vpop.f32.mrf.mxu0
    %v994 = vadd.f32 %v219, %v993
    %v995 = vpop.f32.mrf.mxu0
    %v996 = vadd.f32 %v223, %v995
    %997 = vdwg.mxu0
    %998 = vmatprep.subr.mxu0 0.0
    %999 = vmatpush1.msra.mxu0 0.0
    %1000 = vmatprep.subr.mxu0 0.0
    %1001 = vmatpush1.msra.mxu0 0.0
    %1002 = vmatprep.subr.mxu0 0.0
    %1003 = vmatpush1.msra.mxu0 0.0
    %1004 = vmatprep.subr.mxu0 0.0
    %1005 = vmatpush1.msra.mxu0 0.0
    %1006 = vmatprep.subr.mxu0 0.0
    %1007 = vmatpush1.msra.mxu0 0.0
    %1008 = vmatprep.subr.mxu0 0.0
    %1009 = vmatpush1.msra.mxu0 0.0
    %1010 = vmatprep.subr.mxu0 0.0
    %1011 = vmatpush1.msra.mxu0 0.0
    %1012 = vmatprep.subr.mxu0 0.0
    %1013 = vmatpush1.msra.mxu0 0.0
    %1014 = vmatprep.subr.mxu0 0.0
    %1015 = vmatpush1.msra.mxu0 0.0
    %1016 = vmatprep.subr.mxu0 0.0
    %1017 = vmatpush1.msra.mxu0 0.0
    %1018 = vmatprep.subr.mxu0 0.0
    %1019 = vmatpush1.msra.mxu0 0.0
    %1020 = vmatprep.subr.mxu0 0.0
    %1021 = vmatpush1.msra.mxu0 0.0
    %1022 = vmatprep.subr.mxu0 0.0
    %1023 = vmatpush1.msra.mxu0 0.0
    %1024 = vmatprep.subr.mxu0 0.0
    %1025 = vmatpush1.msra.mxu0 0.0
    %1026 = vmatprep.subr.mxu0 %v129
    %1027 = vmatpush1.msra.mxu0 %v128
    %1028 = vmatprep.subr.mxu0 %v101
    %1029 = vmatpush1.msra.mxu0 %v100
    %1030 = vmatprep.subr.mxu0 0.0
    %1031 = vmatpush2.msra.mxu0 0.0
    %1032 = vmatprep.subr.mxu0 0.0
    %1033 = vmatpush2.msra.mxu0 0.0
    %1034 = vmatprep.subr.mxu0 0.0
    %1035 = vmatpush2.msra.mxu0 0.0
    %1036 = vmatprep.subr.mxu0 0.0
    %1037 = vmatpush2.msra.mxu0 0.0
    %1038 = vmatprep.subr.mxu0 0.0
    %1039 = vmatpush2.msra.mxu0 0.0
    %1040 = vmatprep.subr.mxu0 0.0
    %1041 = vmatpush2.msra.mxu0 0.0
    %1042 = vmatprep.subr.mxu0 0.0
    %1043 = vmatpush2.msra.mxu0 0.0
    %1044 = vmatprep.subr.mxu0 0.0
    %1045 = vmatpush2.msra.mxu0 0.0
    %1046 = vmatprep.subr.mxu0 0.0
    %1047 = vmatpush2.msra.mxu0 0.0
    %1048 = vmatprep.subr.mxu0 0.0
    %1049 = vmatpush2.msra.mxu0 0.0
    %1050 = vmatprep.subr.mxu0 0.0
    %1051 = vmatpush2.msra.mxu0 0.0
    %1052 = vmatprep.subr.mxu0 0.0
    %1053 = vmatpush2.msra.mxu0 0.0
    %1054 = vmatprep.subr.mxu0 0.0
    %1055 = vmatpush2.msra.mxu0 0.0
    %1056 = vmatprep.subr.mxu0 0.0
    %1057 = vmatpush2.msra.mxu0 0.0
    %1058 = vmatprep.subr.mxu0 0.0
    %1059 = vmatpush2.msra.mxu0 0.0
    %1060 = vmatprep.subr.mxu0 0.0
    %1061 = vmatpush2.msra.mxu0 0.0
    %1062 = vmatprep.mubr.f32.mxu0 0.0
    %1063 = vmatmul.mubr.f32.gmra.mxu0 %v286
    %v1064 = vpop.f32.mrf.mxu0
    %v1065 = vadd.f32 %v227, %v1064
    %v1066 = vpop.f32.mrf.mxu0
    %v1067 = vadd.f32 %v231, %v1066
    %1068 = vdwg.mxu0
    %1069 = vmatprep.subr.mxu0 0.0
    %1070 = vmatpush1.msra.mxu0 0.0
    %1071 = vmatprep.subr.mxu0 0.0
    %1072 = vmatpush1.msra.mxu0 0.0
    %1073 = vmatprep.subr.mxu0 0.0
    %1074 = vmatpush1.msra.mxu0 0.0
    %1075 = vmatprep.subr.mxu0 0.0
    %1076 = vmatpush1.msra.mxu0 0.0
    %1077 = vmatprep.subr.mxu0 0.0
    %1078 = vmatpush1.msra.mxu0 0.0
    %1079 = vmatprep.subr.mxu0 0.0
    %1080 = vmatpush1.msra.mxu0 0.0
    %1081 = vmatprep.subr.mxu0 0.0
    %1082 = vmatpush1.msra.mxu0 0.0
    %1083 = vmatprep.subr.mxu0 0.0
    %1084 = vmatpush1.msra.mxu0 0.0
    %1085 = vmatprep.subr.mxu0 0.0
    %1086 = vmatpush1.msra.mxu0 0.0
    %1087 = vmatprep.subr.mxu0 0.0
    %1088 = vmatpush1.msra.mxu0 0.0
    %1089 = vmatprep.subr.mxu0 0.0
    %1090 = vmatpush1.msra.mxu0 0.0
    %1091 = vmatprep.subr.mxu0 0.0
    %1092 = vmatpush1.msra.mxu0 0.0
    %1093 = vmatprep.subr.mxu0 0.0
    %1094 = vmatpush1.msra.mxu0 0.0
    %1095 = vmatprep.subr.mxu0 0.0
    %1096 = vmatpush1.msra.mxu0 0.0
    %1097 = vmatprep.subr.mxu0 %v131
    %1098 = vmatpush1.msra.mxu0 %v130
    %1099 = vmatprep.subr.mxu0 %v103
    %1100 = vmatpush1.msra.mxu0 %v102
    %1101 = vmatprep.subr.mxu0 0.0
    %1102 = vmatpush2.msra.mxu0 0.0
    %1103 = vmatprep.subr.mxu0 0.0
    %1104 = vmatpush2.msra.mxu0 0.0
    %1105 = vmatprep.subr.mxu0 0.0
    %1106 = vmatpush2.msra.mxu0 0.0
    %1107 = vmatprep.subr.mxu0 0.0
    %1108 = vmatpush2.msra.mxu0 0.0
    %1109 = vmatprep.subr.mxu0 0.0
    %1110 = vmatpush2.msra.mxu0 0.0
    %1111 = vmatprep.subr.mxu0 0.0
    %1112 = vmatpush2.msra.mxu0 0.0
    %1113 = vmatprep.subr.mxu0 0.0
    %1114 = vmatpush2.msra.mxu0 0.0
    %1115 = vmatprep.subr.mxu0 0.0
    %1116 = vmatpush2.msra.mxu0 0.0
    %1117 = vmatprep.subr.mxu0 0.0
    %1118 = vmatpush2.msra.mxu0 0.0
    %1119 = vmatprep.subr.mxu0 0.0
    %1120 = vmatpush2.msra.mxu0 0.0
    %1121 = vmatprep.subr.mxu0 0.0
    %1122 = vmatpush2.msra.mxu0 0.0
    %1123 = vmatprep.subr.mxu0 0.0
    %1124 = vmatpush2.msra.mxu0 0.0
    %1125 = vmatprep.subr.mxu0 0.0
    %1126 = vmatpush2.msra.mxu0 0.0
    %1127 = vmatprep.subr.mxu0 0.0
    %1128 = vmatpush2.msra.mxu0 0.0
    %1129 = vmatprep.subr.mxu0 0.0
    %1130 = vmatpush2.msra.mxu0 0.0
    %1131 = vmatprep.subr.mxu0 0.0
    %1132 = vmatpush2.msra.mxu0 0.0
    %1133 = vmatprep.mubr.f32.mxu0 0.0
    %1134 = vmatmul.mubr.f32.gmra.mxu0 %v286
    %v1135 = vpop.f32.mrf.mxu0
    %v1136 = vadd.f32 %v235, %v1135
    %v1137 = vpop.f32.mrf.mxu0
    %v1138 = vadd.f32 %v239, %v1137
    %1139 = vdwg.mxu0
    %1140 = vmatprep.subr.mxu0 0.0
    %1141 = vmatpush1.msra.mxu0 0.0
    %1142 = vmatprep.subr.mxu0 0.0
    %1143 = vmatpush1.msra.mxu0 0.0
    %1144 = vmatprep.subr.mxu0 0.0
    %1145 = vmatpush1.msra.mxu0 0.0
    %1146 = vmatprep.subr.mxu0 0.0
    %1147 = vmatpush1.msra.mxu0 0.0
    %1148 = vmatprep.subr.mxu0 0.0
    %1149 = vmatpush1.msra.mxu0 0.0
    %1150 = vmatprep.subr.mxu0 0.0
    %1151 = vmatpush1.msra.mxu0 0.0
    %1152 = vmatprep.subr.mxu0 0.0
    %1153 = vmatpush1.msra.mxu0 0.0
    %1154 = vmatprep.subr.mxu0 0.0
    %1155 = vmatpush1.msra.mxu0 0.0
    %1156 = vmatprep.subr.mxu0 0.0
    %1157 = vmatpush1.msra.mxu0 0.0
    %1158 = vmatprep.subr.mxu0 0.0
    %1159 = vmatpush1.msra.mxu0 0.0
    %1160 = vmatprep.subr.mxu0 0.0
    %1161 = vmatpush1.msra.mxu0 0.0
    %1162 = vmatprep.subr.mxu0 0.0
    %1163 = vmatpush1.msra.mxu0 0.0
    %1164 = vmatprep.subr.mxu0 0.0
    %1165 = vmatpush1.msra.mxu0 0.0
    %1166 = vmatprep.subr.mxu0 0.0
    %1167 = vmatpush1.msra.mxu0 0.0
    %1168 = vmatprep.subr.mxu0 %v133
    %1169 = vmatpush1.msra.mxu0 %v132
    %1170 = vmatprep.subr.mxu0 %v105
    %1171 = vmatpush1.msra.mxu0 %v104
    %1172 = vmatprep.subr.mxu0 0.0
    %1173 = vmatpush2.msra.mxu0 0.0
    %1174 = vmatprep.subr.mxu0 0.0
    %1175 = vmatpush2.msra.mxu0 0.0
    %1176 = vmatprep.subr.mxu0 0.0
    %1177 = vmatpush2.msra.mxu0 0.0
    %1178 = vmatprep.subr.mxu0 0.0
    %1179 = vmatpush2.msra.mxu0 0.0
    %1180 = vmatprep.subr.mxu0 0.0
    %1181 = vmatpush2.msra.mxu0 0.0
    %1182 = vmatprep.subr.mxu0 0.0
    %1183 = vmatpush2.msra.mxu0 0.0
    %1184 = vmatprep.subr.mxu0 0.0
    %1185 = vmatpush2.msra.mxu0 0.0
    %1186 = vmatprep.subr.mxu0 0.0
    %1187 = vmatpush2.msra.mxu0 0.0
    %1188 = vmatprep.subr.mxu0 0.0
    %1189 = vmatpush2.msra.mxu0 0.0
    %1190 = vmatprep.subr.mxu0 0.0
    %1191 = vmatpush2.msra.mxu0 0.0
    %1192 = vmatprep.subr.mxu0 0.0
    %1193 = vmatpush2.msra.mxu0 0.0
    %1194 = vmatprep.subr.mxu0 0.0
    %1195 = vmatpush2.msra.mxu0 0.0
    %1196 = vmatprep.subr.mxu0 0.0
    %1197 = vmatpush2.msra.mxu0 0.0
    %1198 = vmatprep.subr.mxu0 0.0
    %1199 = vmatpush2.msra.mxu0 0.0
    %1200 = vmatprep.subr.mxu0 0.0
    %1201 = vmatpush2.msra.mxu0 0.0
    %1202 = vmatprep.subr.mxu0 0.0
    %1203 = vmatpush2.msra.mxu0 0.0
    %1204 = vmatprep.mubr.f32.mxu0 0.0
    %1205 = vmatmul.mubr.f32.gmra.mxu0 %v286
    %v1206 = vpop.f32.mrf.mxu0
    %v1207 = vadd.f32 %v243, %v1206
    %v1208 = vpop.f32.mrf.mxu0
    %v1209 = vadd.f32 %v247, %v1208
    %1210 = vdwg.mxu0
    %1211 = vmatprep.subr.mxu0 0.0
    %1212 = vmatpush1.msra.mxu0 0.0
    %1213 = vmatprep.subr.mxu0 0.0
    %1214 = vmatpush1.msra.mxu0 0.0
    %1215 = vmatprep.subr.mxu0 0.0
    %1216 = vmatpush1.msra.mxu0 0.0
    %1217 = vmatprep.subr.mxu0 0.0
    %1218 = vmatpush1.msra.mxu0 0.0
    %1219 = vmatprep.subr.mxu0 0.0
    %1220 = vmatpush1.msra.mxu0 0.0
    %1221 = vmatprep.subr.mxu0 0.0
    %1222 = vmatpush1.msra.mxu0 0.0
    %1223 = vmatprep.subr.mxu0 0.0
    %1224 = vmatpush1.msra.mxu0 0.0
    %1225 = vmatprep.subr.mxu0 0.0
    %1226 = vmatpush1.msra.mxu0 0.0
    %1227 = vmatprep.subr.mxu0 0.0
    %1228 = vmatpush1.msra.mxu0 0.0
    %1229 = vmatprep.subr.mxu0 0.0
    %1230 = vmatpush1.msra.mxu0 0.0
    %1231 = vmatprep.subr.mxu0 0.0
    %1232 = vmatpush1.msra.mxu0 0.0
    %1233 = vmatprep.subr.mxu0 0.0
    %1234 = vmatpush1.msra.mxu0 0.0
    %1235 = vmatprep.subr.mxu0 0.0
    %1236 = vmatpush1.msra.mxu0 0.0
    %1237 = vmatprep.subr.mxu0 0.0
    %1238 = vmatpush1.msra.mxu0 0.0
    %1239 = vmatprep.subr.mxu0 %v135
    %1240 = vmatpush1.msra.mxu0 %v134
    %1241 = vmatprep.subr.mxu0 %v107
    %1242 = vmatpush1.msra.mxu0 %v106
    %1243 = vmatprep.subr.mxu0 0.0
    %1244 = vmatpush2.msra.mxu0 0.0
    %1245 = vmatprep.subr.mxu0 0.0
    %1246 = vmatpush2.msra.mxu0 0.0
    %1247 = vmatprep.subr.mxu0 0.0
    %1248 = vmatpush2.msra.mxu0 0.0
    %1249 = vmatprep.subr.mxu0 0.0
    %1250 = vmatpush2.msra.mxu0 0.0
    %1251 = vmatprep.subr.mxu0 0.0
    %1252 = vmatpush2.msra.mxu0 0.0
    %1253 = vmatprep.subr.mxu0 0.0
    %1254 = vmatpush2.msra.mxu0 0.0
    %1255 = vmatprep.subr.mxu0 0.0
    %1256 = vmatpush2.msra.mxu0 0.0
    %1257 = vmatprep.subr.mxu0 0.0
    %1258 = vmatpush2.msra.mxu0 0.0
    %1259 = vmatprep.subr.mxu0 0.0
    %1260 = vmatpush2.msra.mxu0 0.0
    %1261 = vmatprep.subr.mxu0 0.0
    %1262 = vmatpush2.msra.mxu0 0.0
    %1263 = vmatprep.subr.mxu0 0.0
    %1264 = vmatpush2.msra.mxu0 0.0
    %1265 = vmatprep.subr.mxu0 0.0
    %1266 = vmatpush2.msra.mxu0 0.0
    %1267 = vmatprep.subr.mxu0 0.0
    %1268 = vmatpush2.msra.mxu0 0.0
    %1269 = vmatprep.subr.mxu0 0.0
    %1270 = vmatpush2.msra.mxu0 0.0
    %1271 = vmatprep.subr.mxu0 0.0
    %1272 = vmatpush2.msra.mxu0 0.0
    %1273 = vmatprep.subr.mxu0 0.0
    %1274 = vmatpush2.msra.mxu0 0.0
    %1275 = vmatprep.mubr.f32.mxu0 0.0
    %1276 = vmatmul.mubr.f32.gmra.mxu0 %v286
    %v1277 = vpop.f32.mrf.mxu0
    %v1278 = vadd.f32 %v251, %v1277
    %v1279 = vpop.f32.mrf.mxu0
    %v1280 = vadd.f32 %v255, %v1279
    %1281 = vdwg.mxu0
    %1282 = vst [vmem:[#allocation2] sm:$0xff] 0.0
    %1283 = vst [vmem:[#allocation2 + $0x8] sm:$0xff] 0.0
    %1284 = vst [vmem:[#allocation2 + $0x10] sm:$0xff] 0.0
    %1285 = vst [vmem:[#allocation2 + $0x18] sm:$0xff] 0.0
    %1286 = vst [vmem:[#allocation2 + $0x100] sm:$0xff] 0.0
    %1287 = vst [vmem:[#allocation2 + $0x108] sm:$0xff] 0.0
    %1288 = vst [vmem:[#allocation2 + $0x110] sm:$0xff] 0.0
    %1289 = vst [vmem:[#allocation2 + $0x118] sm:$0xff] 0.0
    %1290 = vst [vmem:[#allocation2 + $0x20] sm:$0xff] %v355
    %1291 = vst [vmem:[#allocation2 + $0x28] sm:$0xff] %v357
    %1292 = vst [vmem:[#allocation2 + $0x30] sm:$0xff] %v426
    %1293 = vst [vmem:[#allocation2 + $0x38] sm:$0xff] %v428
    %1294 = vst [vmem:[#allocation2 + $0x40] sm:$0xff] %v497
    %1295 = vst [vmem:[#allocation2 + $0x48] sm:$0xff] %v499
    %1296 = vst [vmem:[#allocation2 + $0x50] sm:$0xff] %v568
    %1297 = vst [vmem:[#allocation2 + $0x58] sm:$0xff] %v570
    %1298 = vst [vmem:[#allocation2 + $0x60] sm:$0xff] %v639
    %1299 = vst [vmem:[#allocation2 + $0x68] sm:$0xff] %v641
    %1300 = vst [vmem:[#allocation2 + $0x70] sm:$0xff] %v710
    %1301 = vst [vmem:[#allocation2 + $0x78] sm:$0xff] %v712
    %1302 = vst [vmem:[#allocation2 + $0x80] sm:$0xff] %v781
    %1303 = vst [vmem:[#allocation2 + $0x88] sm:$0xff] %v783
    %1304 = vst [vmem:[#allocation2 + $0x90] sm:$0xff] %v852
    %1305 = vst [vmem:[#allocation2 + $0x98] sm:$0xff] %v854
    %1306 = vst [vmem:[#allocation2 + $0xa0] sm:$0xff] %v923
    %1307 = vst [vmem:[#allocation2 + $0xa8] sm:$0xff] %v925
    %1308 = vst [vmem:[#allocation2 + $0xb0] sm:$0xff] %v994
    %1309 = vst [vmem:[#allocation2 + $0xb8] sm:$0xff] %v996
    %1310 = vst [vmem:[#allocation2 + $0xc0] sm:$0xff] %v1065
    %1311 = vst [vmem:[#allocation2 + $0xc8] sm:$0xff] %v1067
    %1312 = vst [vmem:[#allocation2 + $0xd0] sm:$0xff] %v1136
    %1313 = vst [vmem:[#allocation2 + $0xd8] sm:$0xff] %v1138
    %1314 = vst [vmem:[#allocation2 + $0xe0] sm:$0xff] %v1207
    %1315 = vst [vmem:[#allocation2 + $0xe8] sm:$0xff] %v1209
    %1316 = vst [vmem:[#allocation2 + $0xf0] sm:$0xff] %v1278
    %1317 = vst [vmem:[#allocation2 + $0xf8] sm:$0xff] %v1280
    %v1318 = vld [vmem:[#allocation2] sm:$0xff]
    %v1319 = vld [vmem:[#allocation2 + $0x8] sm:$0xff]
    %v1320 = vld [vmem:[#allocation2 + $0x10] sm:$0xff]
    %v1321 = vld [vmem:[#allocation2 + $0x18] sm:$0xff]
    %v1322 = vld [vmem:[#allocation2 + $0x20] sm:$0xff]
    %v1323 = vld [vmem:[#allocation2 + $0x28] sm:$0xff]
    %v1324 = vld [vmem:[#allocation2 + $0x30] sm:$0xff]
    %v1325 = vld [vmem:[#allocation2 + $0x38] sm:$0xff]
    %v1326 = vld [vmem:[#allocation2 + $0x40] sm:$0xff]
    %v1327 = vld [vmem:[#allocation2 + $0x48] sm:$0xff]
    %v1328 = vld [vmem:[#allocation2 + $0x50] sm:$0xff]
    %v1329 = vld [vmem:[#allocation2 + $0x58] sm:$0xff]
    %v1330 = vld [vmem:[#allocation2 + $0x60] sm:$0xff]
    %v1331 = vld [vmem:[#allocation2 + $0x68] sm:$0xff]
    %v1332 = vld [vmem:[#allocation2 + $0x70] sm:$0xff]
    %v1333 = vld [vmem:[#allocation2 + $0x78] sm:$0xff]
    %v1334 = vld [vmem:[#allocation2 + $0x80] sm:$0xff]
    %v1335 = vld [vmem:[#allocation2 + $0x88] sm:$0xff]
    %v1336 = vld [vmem:[#allocation2 + $0x90] sm:$0xff]
    %v1337 = vld [vmem:[#allocation2 + $0x98] sm:$0xff]
    %v1338 = vld [vmem:[#allocation2 + $0xa0] sm:$0xff]
    %v1339 = vld [vmem:[#allocation2 + $0xa8] sm:$0xff]
    %v1340 = vld [vmem:[#allocation2 + $0xb0] sm:$0xff]
    %v1341 = vld [vmem:[#allocation2 + $0xb8] sm:$0xff]
    %v1342 = vld [vmem:[#allocation2 + $0xc0] sm:$0xff]
    %v1343 = vld [vmem:[#allocation2 + $0xc8] sm:$0xff]
    %v1344 = vld [vmem:[#allocation2 + $0xd0] sm:$0xff]
    %v1345 = vld [vmem:[#allocation2 + $0xd8] sm:$0xff]
    %v1346 = vld [vmem:[#allocation2 + $0xe0] sm:$0xff]
    %v1347 = vld [vmem:[#allocation2 + $0xe8] sm:$0xff]
    %v1348 = vld [vmem:[#allocation2 + $0xf0] sm:$0xff]
    %v1349 = vld [vmem:[#allocation2 + $0xf8] sm:$0xff]
    %v1350 = vld [vmem:[#allocation2 + $0x100] sm:$0xff]
    %v1351 = vld [vmem:[#allocation2 + $0x108] sm:$0xff]
    %v1352 = vld [vmem:[#allocation2 + $0x110] sm:$0xff]
    %v1353 = vld [vmem:[#allocation2 + $0x118] sm:$0xff]
    %v1354 = vld [vmem:[#allocation9] sm:$0xff]
    %v1355 = vld [vmem:[#allocation9 + $0x8] sm:$0xff]
    %v1356 = vld [vmem:[#allocation9 + $0x10] sm:$0xff]
    %v1357 = vld [vmem:[#allocation9 + $0x18] sm:$0xff]
    %v1358 = vld [vmem:[#allocation9 + $0x20] sm:$0xff]
    %v1359 = vld [vmem:[#allocation9 + $0x28] sm:$0xff]
    %v1360 = vld [vmem:[#allocation9 + $0x30] sm:$0xff]
    %v1361 = vld [vmem:[#allocation9 + $0x38] sm:$0xff]
    %v1362 = vld [vmem:[#allocation9 + $0x40] sm:$0xff]
    %v1363 = vld [vmem:[#allocation9 + $0x48] sm:$0xff]
    %v1364 = vld [vmem:[#allocation9 + $0x50] sm:$0xff]
    %v1365 = vld [vmem:[#allocation9 + $0x58] sm:$0xff]
    %v1366 = vld [vmem:[#allocation9 + $0x60] sm:$0xff]
    %v1367 = vld [vmem:[#allocation9 + $0x68] sm:$0xff]
    %v1368 = vld [vmem:[#allocation9 + $0x70] sm:$0xff]
    %v1369 = vld [vmem:[#allocation9 + $0x78] sm:$0xff]
    %v1370 = vld [vmem:[#allocation9 + $0x80] sm:$0xff]
    %v1371 = vld [vmem:[#allocation9 + $0x88] sm:$0xff]
    %v1372 = vld [vmem:[#allocation9 + $0x90] sm:$0xff]
    %v1373 = vld [vmem:[#allocation9 + $0x98] sm:$0xff]
    %v1374 = vld [vmem:[#allocation9 + $0xa0] sm:$0xff]
    %v1375 = vld [vmem:[#allocation9 + $0xa8] sm:$0xff]
    %v1376 = vld [vmem:[#allocation9 + $0xb0] sm:$0xff]
    %v1377 = vld [vmem:[#allocation9 + $0xb8] sm:$0xff]
    %v1378 = vld [vmem:[#allocation9 + $0xc0] sm:$0xff]
    %v1379 = vld [vmem:[#allocation9 + $0xc8] sm:$0xff]
    %v1380 = vld [vmem:[#allocation9 + $0xd0] sm:$0xff]
    %v1381 = vld [vmem:[#allocation9 + $0xd8] sm:$0xff]
    %v1382 = vld [vmem:[#allocation9 + $0xe0] sm:$0xff]
    %v1383 = vld [vmem:[#allocation9 + $0xe8] sm:$0xff]
    %v1384 = vld [vmem:[#allocation9 + $0xf0] sm:$0xff]
    %v1385 = vld [vmem:[#allocation9 + $0xf8] sm:$0xff]
    %v1386 = vld [vmem:[#allocation9 + $0x100] sm:$0xff]
    %v1387 = vld [vmem:[#allocation9 + $0x108] sm:$0xff]
    %v1388 = vld [vmem:[#allocation9 + $0x110] sm:$0xff]
    %v1389 = vld [vmem:[#allocation9 + $0x118] sm:$0xff]
    %v1390 = vld [vmem:[#allocation9 + $0x120] sm:$0xff]
    %v1391 = vld [vmem:[#allocation9 + $0x128] sm:$0xff]
    %v1392 = vld [vmem:[#allocation9 + $0x130] sm:$0xff]
    %v1393 = vld [vmem:[#allocation9 + $0x138] sm:$0xff]
    %v1394 = vld [vmem:[#allocation9 + $0x140] sm:$0xff]
    %v1395 = vld [vmem:[#allocation9 + $0x148] sm:$0xff]
    %v1396 = vld [vmem:[#allocation9 + $0x150] sm:$0xff]
    %v1397 = vld [vmem:[#allocation9 + $0x158] sm:$0xff]
    %v1398 = vld [vmem:[#allocation9 + $0x160] sm:$0xff]
    %v1399 = vld [vmem:[#allocation9 + $0x168] sm:$0xff]
    %v1400 = vld [vmem:[#allocation9 + $0x170] sm:$0xff]
    %v1401 = vld [vmem:[#allocation9 + $0x178] sm:$0xff]
    %v1402 = vld [vmem:[#allocation9 + $0x180] sm:$0xff]
    %v1403 = vld [vmem:[#allocation9 + $0x188] sm:$0xff]
    %v1404 = vld [vmem:[#allocation9 + $0x190] sm:$0xff]
    %v1405 = vld [vmem:[#allocation9 + $0x198] sm:$0xff]
    %v1406 = vld [vmem:[#allocation9 + $0x1a0] sm:$0xff]
    %v1407 = vld [vmem:[#allocation9 + $0x1a8] sm:$0xff]
    %v1408 = vld [vmem:[#allocation9 + $0x1b0] sm:$0xff]
    %v1409 = vld [vmem:[#allocation9 + $0x1b8] sm:$0xff]
    %v1410 = vld [vmem:[#allocation9 + $0x1c0] sm:$0xff]
    %v1411 = vld [vmem:[#allocation9 + $0x1c8] sm:$0xff]
    %v1412 = vld [vmem:[#allocation9 + $0x1d0] sm:$0xff]
    %v1413 = vld [vmem:[#allocation9 + $0x1d8] sm:$0xff]
    %v1414 = vld [vmem:[#allocation9 + $0x1e0] sm:$0xff]
    %v1415 = vld [vmem:[#allocation9 + $0x1e8] sm:$0xff]
    %v1416 = vld [vmem:[#allocation9 + $0x1f0] sm:$0xff]
    %v1417 = vld [vmem:[#allocation9 + $0x1f8] sm:$0xff]
    %v1418 = vld [vmem:[#allocation9 + $0x200] sm:$0xff]
    %v1419 = vld [vmem:[#allocation9 + $0x208] sm:$0xff]
    %v1420 = vld [vmem:[#allocation9 + $0x210] sm:$0xff]
    %v1421 = vld [vmem:[#allocation9 + $0x218] sm:$0xff]
    %v1422 = vld [vmem:[#allocation9 + $0x220] sm:$0xff]
    %v1423 = vld [vmem:[#allocation9 + $0x228] sm:$0xff]
    %v1424 = vld [vmem:[#allocation9 + $0x230] sm:$0xff]
    %v1425 = vld [vmem:[#allocation9 + $0x238] sm:$0xff]
    %v1426 = vld [vmem:[#allocation9 + $0x240] sm:$0xff]
    %v1427 = vld [vmem:[#allocation9 + $0x248] sm:$0xff]
    %v1428 = vld [vmem:[#allocation9 + $0x250] sm:$0xff]
    %v1429 = vld [vmem:[#allocation9 + $0x258] sm:$0xff]
    %v1430 = vld [vmem:[#allocation9 + $0x260] sm:$0xff]
    %v1431 = vld [vmem:[#allocation9 + $0x268] sm:$0xff]
    %v1432 = vld [vmem:[#allocation9 + $0x270] sm:$0xff]
    %v1433 = vld [vmem:[#allocation9 + $0x278] sm:$0xff]
    %v1434 = vld [vmem:[#allocation9 + $0x280] sm:$0xff]
    %v1435 = vld [vmem:[#allocation9 + $0x288] sm:$0xff]
    %v1436 = vld [vmem:[#allocation9 + $0x290] sm:$0xff]
    %v1437 = vld [vmem:[#allocation9 + $0x298] sm:$0xff]
    %v1438 = vld [vmem:[#allocation9 + $0x2a0] sm:$0xff]
    %v1439 = vld [vmem:[#allocation9 + $0x2a8] sm:$0xff]
    %v1440 = vld [vmem:[#allocation9 + $0x2b0] sm:$0xff]
    %v1441 = vld [vmem:[#allocation9 + $0x2b8] sm:$0xff]
    %v1442 = vld [vmem:[#allocation9 + $0x2c0] sm:$0xff]
    %v1443 = vld [vmem:[#allocation9 + $0x2c8] sm:$0xff]
    %v1444 = vld [vmem:[#allocation9 + $0x2d0] sm:$0xff]
    %v1445 = vld [vmem:[#allocation9 + $0x2d8] sm:$0xff]
    %v1446 = vld [vmem:[#allocation9 + $0x2e0] sm:$0xff]
    %v1447 = vld [vmem:[#allocation9 + $0x2e8] sm:$0xff]
    %v1448 = vld [vmem:[#allocation9 + $0x2f0] sm:$0xff]
    %v1449 = vld [vmem:[#allocation9 + $0x2f8] sm:$0xff]
    %v1450 = vld [vmem:[#allocation9 + $0x300] sm:$0xff]
    %v1451 = vld [vmem:[#allocation9 + $0x308] sm:$0xff]
    %v1452 = vld [vmem:[#allocation9 + $0x310] sm:$0xff]
    %v1453 = vld [vmem:[#allocation9 + $0x318] sm:$0xff]
    %v1454 = vld [vmem:[#allocation9 + $0x320] sm:$0xff]
    %v1455 = vld [vmem:[#allocation9 + $0x328] sm:$0xff]
    %v1456 = vld [vmem:[#allocation9 + $0x330] sm:$0xff]
    %v1457 = vld [vmem:[#allocation9 + $0x338] sm:$0xff]
    %v1458 = vld [vmem:[#allocation9 + $0x340] sm:$0xff]
    %v1459 = vld [vmem:[#allocation9 + $0x348] sm:$0xff]
    %v1460 = vld [vmem:[#allocation9 + $0x350] sm:$0xff]
    %v1461 = vld [vmem:[#allocation9 + $0x358] sm:$0xff]
    %v1462 = vld [vmem:[#allocation9 + $0x360] sm:$0xff]
    %v1463 = vld [vmem:[#allocation9 + $0x368] sm:$0xff]
    %v1464 = vld [vmem:[#allocation9 + $0x370] sm:$0xff]
    %v1465 = vld [vmem:[#allocation9 + $0x378] sm:$0xff]
    %v1466 = vld [vmem:[#allocation9 + $0x380] sm:$0xff]
    %v1467 = vld [vmem:[#allocation9 + $0x388] sm:$0xff]
    %v1468 = vld [vmem:[#allocation9 + $0x390] sm:$0xff]
    %v1469 = vld [vmem:[#allocation9 + $0x398] sm:$0xff]
    %v1470 = vld [vmem:[#allocation9 + $0x3a0] sm:$0xff]
    %v1471 = vld [vmem:[#allocation9 + $0x3a8] sm:$0xff]
    %v1472 = vld [vmem:[#allocation9 + $0x3b0] sm:$0xff]
    %v1473 = vld [vmem:[#allocation9 + $0x3b8] sm:$0xff]
    %v1474 = vld [vmem:[#allocation9 + $0x3c0] sm:$0xff]
    %v1475 = vld [vmem:[#allocation9 + $0x3c8] sm:$0xff]
    %v1476 = vld [vmem:[#allocation9 + $0x3d0] sm:$0xff]
    %v1477 = vld [vmem:[#allocation9 + $0x3d8] sm:$0xff]
    %v1478 = vld [vmem:[#allocation9 + $0x3e0] sm:$0xff]
    %v1479 = vld [vmem:[#allocation9 + $0x3e8] sm:$0xff]
    %v1480 = vld [vmem:[#allocation9 + $0x3f0] sm:$0xff]
    %v1481 = vld [vmem:[#allocation9 + $0x3f8] sm:$0xff]
    %v1482 = vld [vmem:[#allocation9 + $0x400] sm:$0xff]
    %v1483 = vld [vmem:[#allocation9 + $0x408] sm:$0xff]
    %v1484 = vld [vmem:[#allocation9 + $0x410] sm:$0xff]
    %v1485 = vld [vmem:[#allocation9 + $0x418] sm:$0xff]
    %v1486 = vld [vmem:[#allocation9 + $0x420] sm:$0xff]
    %v1487 = vld [vmem:[#allocation9 + $0x428] sm:$0xff]
    %v1488 = vld [vmem:[#allocation9 + $0x430] sm:$0xff]
    %v1489 = vld [vmem:[#allocation9 + $0x438] sm:$0xff]
    %v1490 = vld [vmem:[#allocation9 + $0x440] sm:$0xff]
    %v1491 = vld [vmem:[#allocation9 + $0x448] sm:$0xff]
    %v1492 = vld [vmem:[#allocation9 + $0x450] sm:$0xff]
    %v1493 = vld [vmem:[#allocation9 + $0x458] sm:$0xff]
    %v1494 = vld [vmem:[#allocation9 + $0x460] sm:$0xff]
    %v1495 = vld [vmem:[#allocation9 + $0x468] sm:$0xff]
    %v1496 = vld [vmem:[#allocation9 + $0x470] sm:$0xff]
    %v1497 = vld [vmem:[#allocation9 + $0x478] sm:$0xff]
    %v1498 = vld [vmem:[#allocation9 + $0x480] sm:$0xff]
    %v1499 = vld [vmem:[#allocation9 + $0x488] sm:$0xff]
    %v1500 = vld [vmem:[#allocation9 + $0x490] sm:$0xff]
    %v1501 = vld [vmem:[#allocation9 + $0x498] sm:$0xff]
    %v1502 = vld [vmem:[#allocation9 + $0x4a0] sm:$0xff]
    %v1503 = vld [vmem:[#allocation9 + $0x4a8] sm:$0xff]
    %v1504 = vld [vmem:[#allocation9 + $0x4b0] sm:$0xff]
    %v1505 = vld [vmem:[#allocation9 + $0x4b8] sm:$0xff]
    %v1506 = vld [vmem:[#allocation9 + $0x4c0] sm:$0xff]
    %v1507 = vld [vmem:[#allocation9 + $0x4c8] sm:$0xff]
    %v1508 = vld [vmem:[#allocation9 + $0x4d0] sm:$0xff]
    %v1509 = vld [vmem:[#allocation9 + $0x4d8] sm:$0xff]
    %v1510 = vld [vmem:[#allocation9 + $0x4e0] sm:$0xff]
    %v1511 = vld [vmem:[#allocation9 + $0x4e8] sm:$0xff]
    %v1512 = vld [vmem:[#allocation9 + $0x4f0] sm:$0xff]
    %v1513 = vld [vmem:[#allocation9 + $0x4f8] sm:$0xff]
    %v1514 = vld [vmem:[#allocation9 + $0x500] sm:$0xff]
    %v1515 = vld [vmem:[#allocation9 + $0x508] sm:$0xff]
    %v1516 = vld [vmem:[#allocation9 + $0x510] sm:$0xff]
    %v1517 = vld [vmem:[#allocation9 + $0x518] sm:$0xff]
    %v1518 = vld [vmem:[#allocation9 + $0x520] sm:$0xff]
    %v1519 = vld [vmem:[#allocation9 + $0x528] sm:$0xff]
    %v1520 = vld [vmem:[#allocation9 + $0x530] sm:$0xff]
    %v1521 = vld [vmem:[#allocation9 + $0x538] sm:$0xff]
    %v1522 = vld [vmem:[#allocation9 + $0x540] sm:$0xff]
    %v1523 = vld [vmem:[#allocation9 + $0x548] sm:$0xff]
    %v1524 = vld [vmem:[#allocation9 + $0x550] sm:$0xff]
    %v1525 = vld [vmem:[#allocation9 + $0x558] sm:$0xff]
    %v1526 = vld [vmem:[#allocation9 + $0x560] sm:$0xff]
    %v1527 = vld [vmem:[#allocation9 + $0x568] sm:$0xff]
    %v1528 = vld [vmem:[#allocation9 + $0x570] sm:$0xff]
    %v1529 = vld [vmem:[#allocation9 + $0x578] sm:$0xff]
    %v1530 = vld [vmem:[#allocation9 + $0x580] sm:$0xff]
    %v1531 = vld [vmem:[#allocation9 + $0x588] sm:$0xff]
    %v1532 = vld [vmem:[#allocation9 + $0x590] sm:$0xff]
    %v1533 = vld [vmem:[#allocation9 + $0x598] sm:$0xff]
    %v1534 = vld [vmem:[#allocation9 + $0x5a0] sm:$0xff]
    %v1535 = vld [vmem:[#allocation9 + $0x5a8] sm:$0xff]
    %v1536 = vld [vmem:[#allocation9 + $0x5b0] sm:$0xff]
    %v1537 = vld [vmem:[#allocation9 + $0x5b8] sm:$0xff]
    %v1538 = vld [vmem:[#allocation9 + $0x5c0] sm:$0xff]
    %v1539 = vld [vmem:[#allocation9 + $0x5c8] sm:$0xff]
    %v1540 = vld [vmem:[#allocation9 + $0x5d0] sm:$0xff]
    %v1541 = vld [vmem:[#allocation9 + $0x5d8] sm:$0xff]
    %v1542 = vld [vmem:[#allocation9 + $0x5e0] sm:$0xff]
    %v1543 = vld [vmem:[#allocation9 + $0x5e8] sm:$0xff]
    %v1544 = vld [vmem:[#allocation9 + $0x5f0] sm:$0xff]
    %v1545 = vld [vmem:[#allocation9 + $0x5f8] sm:$0xff]
    %v1546 = vld [vmem:[#allocation9 + $0x600] sm:$0xff]
    %v1547 = vld [vmem:[#allocation9 + $0x608] sm:$0xff]
    %v1548 = vld [vmem:[#allocation9 + $0x610] sm:$0xff]
    %v1549 = vld [vmem:[#allocation9 + $0x618] sm:$0xff]
    %v1550 = vld [vmem:[#allocation9 + $0x620] sm:$0xff]
    %v1551 = vld [vmem:[#allocation9 + $0x628] sm:$0xff]
    %v1552 = vld [vmem:[#allocation9 + $0x630] sm:$0xff]
    %v1553 = vld [vmem:[#allocation9 + $0x638] sm:$0xff]
    %v1554 = vld [vmem:[#allocation9 + $0x640] sm:$0xff]
    %v1555 = vld [vmem:[#allocation9 + $0x648] sm:$0xff]
    %v1556 = vld [vmem:[#allocation9 + $0x650] sm:$0xff]
    %v1557 = vld [vmem:[#allocation9 + $0x658] sm:$0xff]
    %v1558 = vld [vmem:[#allocation9 + $0x660] sm:$0xff]
    %v1559 = vld [vmem:[#allocation9 + $0x668] sm:$0xff]
    %v1560 = vld [vmem:[#allocation9 + $0x670] sm:$0xff]
    %v1561 = vld [vmem:[#allocation9 + $0x678] sm:$0xff]
    %v1562 = vld [vmem:[#allocation9 + $0x680] sm:$0xff]
    %v1563 = vld [vmem:[#allocation9 + $0x688] sm:$0xff]
    %v1564 = vld [vmem:[#allocation9 + $0x690] sm:$0xff]
    %v1565 = vld [vmem:[#allocation9 + $0x698] sm:$0xff]
    %v1566 = vld [vmem:[#allocation9 + $0x6a0] sm:$0xff]
    %v1567 = vld [vmem:[#allocation9 + $0x6a8] sm:$0xff]
    %v1568 = vld [vmem:[#allocation9 + $0x6b0] sm:$0xff]
    %v1569 = vld [vmem:[#allocation9 + $0x6b8] sm:$0xff]
    %v1570 = vld [vmem:[#allocation9 + $0x6c0] sm:$0xff]
    %v1571 = vld [vmem:[#allocation9 + $0x6c8] sm:$0xff]
    %v1572 = vld [vmem:[#allocation9 + $0x6d0] sm:$0xff]
    %v1573 = vld [vmem:[#allocation9 + $0x6d8] sm:$0xff]
    %v1574 = vld [vmem:[#allocation9 + $0x6e0] sm:$0xff]
    %v1575 = vld [vmem:[#allocation9 + $0x6e8] sm:$0xff]
    %v1576 = vld [vmem:[#allocation9 + $0x6f0] sm:$0xff]
    %v1577 = vld [vmem:[#allocation9 + $0x6f8] sm:$0xff]
    %v1578 = vld [vmem:[#allocation9 + $0x700] sm:$0xff]
    %v1579 = vld [vmem:[#allocation9 + $0x708] sm:$0xff]
    %v1580 = vld [vmem:[#allocation9 + $0x710] sm:$0xff]
    %v1581 = vld [vmem:[#allocation9 + $0x718] sm:$0xff]
    %v1582 = vld [vmem:[#allocation9 + $0x720] sm:$0xff]
    %v1583 = vld [vmem:[#allocation9 + $0x728] sm:$0xff]
    %v1584 = vld [vmem:[#allocation9 + $0x730] sm:$0xff]
    %v1585 = vld [vmem:[#allocation9 + $0x738] sm:$0xff]
    %v1586 = vld [vmem:[#allocation9 + $0x740] sm:$0xff]
    %v1587 = vld [vmem:[#allocation9 + $0x748] sm:$0xff]
    %v1588 = vld [vmem:[#allocation9 + $0x750] sm:$0xff]
    %v1589 = vld [vmem:[#allocation9 + $0x758] sm:$0xff]
    %v1590 = vld [vmem:[#allocation9 + $0x760] sm:$0xff]
    %v1591 = vld [vmem:[#allocation9 + $0x768] sm:$0xff]
    %v1592 = vld [vmem:[#allocation9 + $0x770] sm:$0xff]
    %v1593 = vld [vmem:[#allocation9 + $0x778] sm:$0xff]
    %v1594 = vld [vmem:[#allocation9 + $0x780] sm:$0xff]
    %v1595 = vld [vmem:[#allocation9 + $0x788] sm:$0xff]
    %v1596 = vld [vmem:[#allocation9 + $0x790] sm:$0xff]
    %v1597 = vld [vmem:[#allocation9 + $0x798] sm:$0xff]
    %v1598 = vld [vmem:[#allocation9 + $0x7a0] sm:$0xff]
    %v1599 = vld [vmem:[#allocation9 + $0x7a8] sm:$0xff]
    %v1600 = vld [vmem:[#allocation9 + $0x7b0] sm:$0xff]
    %v1601 = vld [vmem:[#allocation9 + $0x7b8] sm:$0xff]
    %v1602 = vld [vmem:[#allocation9 + $0x7c0] sm:$0xff]
    %v1603 = vld [vmem:[#allocation9 + $0x7c8] sm:$0xff]
    %v1604 = vld [vmem:[#allocation9 + $0x7d0] sm:$0xff]
    %v1605 = vld [vmem:[#allocation9 + $0x7d8] sm:$0xff]
    %v1606 = vld [vmem:[#allocation9 + $0x7e0] sm:$0xff]
    %v1607 = vld [vmem:[#allocation9 + $0x7e8] sm:$0xff]
    %v1608 = vld [vmem:[#allocation9 + $0x7f0] sm:$0xff]
    %v1609 = vld [vmem:[#allocation9 + $0x7f8] sm:$0xff]
    %v1610 = vld [vmem:[#allocation9 + $0x800] sm:$0xff]
    %v1611 = vld [vmem:[#allocation9 + $0x808] sm:$0xff]
    %v1612 = vld [vmem:[#allocation9 + $0x810] sm:$0xff]
    %v1613 = vld [vmem:[#allocation9 + $0x818] sm:$0xff]
    %v1614 = vld [vmem:[#allocation9 + $0x820] sm:$0xff]
    %v1615 = vld [vmem:[#allocation9 + $0x828] sm:$0xff]
    %v1616 = vld [vmem:[#allocation9 + $0x830] sm:$0xff]
    %v1617 = vld [vmem:[#allocation9 + $0x838] sm:$0xff]
    %v1618 = vld [vmem:[#allocation9 + $0x840] sm:$0xff]
    %v1619 = vld [vmem:[#allocation9 + $0x848] sm:$0xff]
    %v1620 = vld [vmem:[#allocation9 + $0x850] sm:$0xff]
    %v1621 = vld [vmem:[#allocation9 + $0x858] sm:$0xff]
    %v1622 = vld [vmem:[#allocation9 + $0x860] sm:$0xff]
    %v1623 = vld [vmem:[#allocation9 + $0x868] sm:$0xff]
    %v1624 = vld [vmem:[#allocation9 + $0x870] sm:$0xff]
    %v1625 = vld [vmem:[#allocation9 + $0x878] sm:$0xff]
    %v1626 = vld [vmem:[#allocation9 + $0x880] sm:$0xff]
    %v1627 = vld [vmem:[#allocation9 + $0x888] sm:$0xff]
    %v1628 = vld [vmem:[#allocation9 + $0x890] sm:$0xff]
    %v1629 = vld [vmem:[#allocation9 + $0x898] sm:$0xff]
    %v1630 = vld [vmem:[#allocation9 + $0x8a0] sm:$0xff]
    %v1631 = vld [vmem:[#allocation9 + $0x8a8] sm:$0xff]
    %v1632 = vld [vmem:[#allocation9 + $0x8b0] sm:$0xff]
    %v1633 = vld [vmem:[#allocation9 + $0x8b8] sm:$0xff]
    %v1634 = vld [vmem:[#allocation9 + $0x8c0] sm:$0xff]
    %v1635 = vld [vmem:[#allocation9 + $0x8c8] sm:$0xff]
    %v1636 = vld [vmem:[#allocation9 + $0x8d0] sm:$0xff]
    %v1637 = vld [vmem:[#allocation9 + $0x8d8] sm:$0xff]
    %v1638 = vld [vmem:[#allocation9 + $0x8e0] sm:$0xff]
    %v1639 = vld [vmem:[#allocation9 + $0x8e8] sm:$0xff]
    %v1640 = vld [vmem:[#allocation9 + $0x8f0] sm:$0xff]
    %v1641 = vld [vmem:[#allocation9 + $0x8f8] sm:$0xff]
    %v1642 = vld [vmem:[#allocation9 + $0x900] sm:$0xff]
    %v1643 = vld [vmem:[#allocation9 + $0x908] sm:$0xff]
    %v1644 = vld [vmem:[#allocation9 + $0x910] sm:$0xff]
    %v1645 = vld [vmem:[#allocation9 + $0x918] sm:$0xff]
    %v1646 = vld [vmem:[#allocation9 + $0x920] sm:$0xff]
    %v1647 = vld [vmem:[#allocation9 + $0x928] sm:$0xff]
    %v1648 = vld [vmem:[#allocation9 + $0x930] sm:$0xff]
    %v1649 = vld [vmem:[#allocation9 + $0x938] sm:$0xff]
    %v1650 = vld [vmem:[#allocation9 + $0x940] sm:$0xff]
    %v1651 = vld [vmem:[#allocation9 + $0x948] sm:$0xff]
    %v1652 = vld [vmem:[#allocation9 + $0x950] sm:$0xff]
    %v1653 = vld [vmem:[#allocation9 + $0x958] sm:$0xff]
    %v1654 = vld [vmem:[#allocation9 + $0x960] sm:$0xff]
    %v1655 = vld [vmem:[#allocation9 + $0x968] sm:$0xff]
    %v1656 = vld [vmem:[#allocation9 + $0x970] sm:$0xff]
    %v1657 = vld [vmem:[#allocation9 + $0x978] sm:$0xff]
    %v1658 = vld [vmem:[#allocation9 + $0x980] sm:$0xff]
    %v1659 = vld [vmem:[#allocation9 + $0x988] sm:$0xff]
    %v1660 = vld [vmem:[#allocation9 + $0x990] sm:$0xff]
    %v1661 = vld [vmem:[#allocation9 + $0x998] sm:$0xff]
    %v1662 = vld [vmem:[#allocation9 + $0x9a0] sm:$0xff]
    %v1663 = vld [vmem:[#allocation9 + $0x9a8] sm:$0xff]
    %v1664 = vld [vmem:[#allocation9 + $0x9b0] sm:$0xff]
    %v1665 = vld [vmem:[#allocation9 + $0x9b8] sm:$0xff]
    %v1666 = vld [vmem:[#allocation9 + $0x9c0] sm:$0xff]
    %v1667 = vld [vmem:[#allocation9 + $0x9c8] sm:$0xff]
    %v1668 = vld [vmem:[#allocation9 + $0x9d0] sm:$0xff]
    %v1669 = vld [vmem:[#allocation9 + $0x9d8] sm:$0xff]
    %v1670 = vld [vmem:[#allocation9 + $0x9e0] sm:$0xff]
    %v1671 = vld [vmem:[#allocation9 + $0x9e8] sm:$0xff]
    %v1672 = vld [vmem:[#allocation9 + $0x9f0] sm:$0xff]
    %v1673 = vld [vmem:[#allocation9 + $0x9f8] sm:$0xff]
    %v1674 = vld [vmem:[#allocation9 + $0xa00] sm:$0xff]
    %v1675 = vld [vmem:[#allocation9 + $0xa08] sm:$0xff]
    %v1676 = vld [vmem:[#allocation9 + $0xa10] sm:$0xff]
    %v1677 = vld [vmem:[#allocation9 + $0xa18] sm:$0xff]
    %v1678 = vld [vmem:[#allocation9 + $0xa20] sm:$0xff]
    %v1679 = vld [vmem:[#allocation9 + $0xa28] sm:$0xff]
    %v1680 = vld [vmem:[#allocation9 + $0xa30] sm:$0xff]
    %v1681 = vld [vmem:[#allocation9 + $0xa38] sm:$0xff]
    %v1682 = vld [vmem:[#allocation9 + $0xa40] sm:$0xff]
    %v1683 = vld [vmem:[#allocation9 + $0xa48] sm:$0xff]
    %v1684 = vld [vmem:[#allocation9 + $0xa50] sm:$0xff]
    %v1685 = vld [vmem:[#allocation9 + $0xa58] sm:$0xff]
    %v1686 = vld [vmem:[#allocation9 + $0xa60] sm:$0xff]
    %v1687 = vld [vmem:[#allocation9 + $0xa68] sm:$0xff]
    %v1688 = vld [vmem:[#allocation9 + $0xa70] sm:$0xff]
    %v1689 = vld [vmem:[#allocation9 + $0xa78] sm:$0xff]
    %v1690 = vld [vmem:[#allocation9 + $0xa80] sm:$0xff]
    %v1691 = vld [vmem:[#allocation9 + $0xa88] sm:$0xff]
    %v1692 = vld [vmem:[#allocation9 + $0xa90] sm:$0xff]
    %v1693 = vld [vmem:[#allocation9 + $0xa98] sm:$0xff]
    %v1694 = vld [vmem:[#allocation9 + $0xaa0] sm:$0xff]
    %v1695 = vld [vmem:[#allocation9 + $0xaa8] sm:$0xff]
    %v1696 = vld [vmem:[#allocation9 + $0xab0] sm:$0xff]
    %v1697 = vld [vmem:[#allocation9 + $0xab8] sm:$0xff]
    %v1698 = vld [vmem:[#allocation9 + $0xac0] sm:$0xff]
    %v1699 = vld [vmem:[#allocation9 + $0xac8] sm:$0xff]
    %v1700 = vld [vmem:[#allocation9 + $0xad0] sm:$0xff]
    %v1701 = vld [vmem:[#allocation9 + $0xad8] sm:$0xff]
    %v1702 = vld [vmem:[#allocation9 + $0xae0] sm:$0xff]
    %v1703 = vld [vmem:[#allocation9 + $0xae8] sm:$0xff]
    %v1704 = vld [vmem:[#allocation9 + $0xaf0] sm:$0xff]
    %v1705 = vld [vmem:[#allocation9 + $0xaf8] sm:$0xff]
    %v1706 = vld [vmem:[#allocation9 + $0xb00] sm:$0xff]
    %v1707 = vld [vmem:[#allocation9 + $0xb08] sm:$0xff]
    %v1708 = vld [vmem:[#allocation9 + $0xb10] sm:$0xff]
    %v1709 = vld [vmem:[#allocation9 + $0xb18] sm:$0xff]
    %v1710 = vld [vmem:[#allocation9 + $0xb20] sm:$0xff]
    %v1711 = vld [vmem:[#allocation9 + $0xb28] sm:$0xff]
    %v1712 = vld [vmem:[#allocation9 + $0xb30] sm:$0xff]
    %v1713 = vld [vmem:[#allocation9 + $0xb38] sm:$0xff]
    %v1714 = vld [vmem:[#allocation9 + $0xb40] sm:$0xff]
    %v1715 = vld [vmem:[#allocation9 + $0xb48] sm:$0xff]
    %v1716 = vld [vmem:[#allocation9 + $0xb50] sm:$0xff]
    %v1717 = vld [vmem:[#allocation9 + $0xb58] sm:$0xff]
    %v1718 = vld [vmem:[#allocation9 + $0xb60] sm:$0xff]
    %v1719 = vld [vmem:[#allocation9 + $0xb68] sm:$0xff]
    %v1720 = vld [vmem:[#allocation9 + $0xb70] sm:$0xff]
    %v1721 = vld [vmem:[#allocation9 + $0xb78] sm:$0xff]
    %v1722 = vld [vmem:[#allocation9 + $0xb80] sm:$0xff]
    %v1723 = vld [vmem:[#allocation9 + $0xb88] sm:$0xff]
    %v1724 = vld [vmem:[#allocation9 + $0xb90] sm:$0xff]
    %v1725 = vld [vmem:[#allocation9 + $0xb98] sm:$0xff]
    %v1726 = vld [vmem:[#allocation9 + $0xba0] sm:$0xff]
    %v1727 = vld [vmem:[#allocation9 + $0xba8] sm:$0xff]
    %v1728 = vld [vmem:[#allocation9 + $0xbb0] sm:$0xff]
    %v1729 = vld [vmem:[#allocation9 + $0xbb8] sm:$0xff]
    %v1730 = vld [vmem:[#allocation9 + $0xbc0] sm:$0xff]
    %v1731 = vld [vmem:[#allocation9 + $0xbc8] sm:$0xff]
    %v1732 = vld [vmem:[#allocation9 + $0xbd0] sm:$0xff]
    %v1733 = vld [vmem:[#allocation9 + $0xbd8] sm:$0xff]
    %v1734 = vld [vmem:[#allocation9 + $0xbe0] sm:$0xff]
    %v1735 = vld [vmem:[#allocation9 + $0xbe8] sm:$0xff]
    %v1736 = vld [vmem:[#allocation9 + $0xbf0] sm:$0xff]
    %v1737 = vld [vmem:[#allocation9 + $0xbf8] sm:$0xff]
    %v1738 = vld [vmem:[#allocation9 + $0xc00] sm:$0xff]
    %v1739 = vld [vmem:[#allocation9 + $0xc08] sm:$0xff]
    %v1740 = vld [vmem:[#allocation9 + $0xc10] sm:$0xff]
    %v1741 = vld [vmem:[#allocation9 + $0xc18] sm:$0xff]
    %v1742 = vld [vmem:[#allocation9 + $0xc20] sm:$0xff]
    %v1743 = vld [vmem:[#allocation9 + $0xc28] sm:$0xff]
    %v1744 = vld [vmem:[#allocation9 + $0xc30] sm:$0xff]
    %v1745 = vld [vmem:[#allocation9 + $0xc38] sm:$0xff]
    %v1746 = vld [vmem:[#allocation9 + $0xc40] sm:$0xff]
    %v1747 = vld [vmem:[#allocation9 + $0xc48] sm:$0xff]
    %v1748 = vld [vmem:[#allocation9 + $0xc50] sm:$0xff]
    %v1749 = vld [vmem:[#allocation9 + $0xc58] sm:$0xff]
    %v1750 = vld [vmem:[#allocation9 + $0xc60] sm:$0xff]
    %v1751 = vld [vmem:[#allocation9 + $0xc68] sm:$0xff]
    %v1752 = vld [vmem:[#allocation9 + $0xc70] sm:$0xff]
    %v1753 = vld [vmem:[#allocation9 + $0xc78] sm:$0xff]
    %v1754 = vld [vmem:[#allocation9 + $0xc80] sm:$0xff]
    %v1755 = vld [vmem:[#allocation9 + $0xc88] sm:$0xff]
    %v1756 = vld [vmem:[#allocation9 + $0xc90] sm:$0xff]
    %v1757 = vld [vmem:[#allocation9 + $0xc98] sm:$0xff]
    %v1758 = vld [vmem:[#allocation9 + $0xca0] sm:$0xff]
    %v1759 = vld [vmem:[#allocation9 + $0xca8] sm:$0xff]
    %v1760 = vld [vmem:[#allocation9 + $0xcb0] sm:$0xff]
    %v1761 = vld [vmem:[#allocation9 + $0xcb8] sm:$0xff]
    %v1762 = vld [vmem:[#allocation9 + $0xcc0] sm:$0xff]
    %v1763 = vld [vmem:[#allocation9 + $0xcc8] sm:$0xff]
    %v1764 = vld [vmem:[#allocation9 + $0xcd0] sm:$0xff]
    %v1765 = vld [vmem:[#allocation9 + $0xcd8] sm:$0xff]
    %v1766 = vld [vmem:[#allocation9 + $0xce0] sm:$0xff]
    %v1767 = vld [vmem:[#allocation9 + $0xce8] sm:$0xff]
    %v1768 = vld [vmem:[#allocation9 + $0xcf0] sm:$0xff]
    %v1769 = vld [vmem:[#allocation9 + $0xcf8] sm:$0xff]
    %v1770 = vld [vmem:[#allocation9 + $0xd00] sm:$0xff]
    %v1771 = vld [vmem:[#allocation9 + $0xd08] sm:$0xff]
    %v1772 = vld [vmem:[#allocation9 + $0xd10] sm:$0xff]
    %v1773 = vld [vmem:[#allocation9 + $0xd18] sm:$0xff]
    %v1774 = vld [vmem:[#allocation9 + $0xd20] sm:$0xff]
    %v1775 = vld [vmem:[#allocation9 + $0xd28] sm:$0xff]
    %v1776 = vld [vmem:[#allocation9 + $0xd30] sm:$0xff]
    %v1777 = vld [vmem:[#allocation9 + $0xd38] sm:$0xff]
    %v1778 = vld [vmem:[#allocation9 + $0xd40] sm:$0xff]
    %v1779 = vld [vmem:[#allocation9 + $0xd48] sm:$0xff]
    %v1780 = vld [vmem:[#allocation9 + $0xd50] sm:$0xff]
    %v1781 = vld [vmem:[#allocation9 + $0xd58] sm:$0xff]
    %v1782 = vld [vmem:[#allocation9 + $0xd60] sm:$0xff]
    %v1783 = vld [vmem:[#allocation9 + $0xd68] sm:$0xff]
    %v1784 = vld [vmem:[#allocation9 + $0xd70] sm:$0xff]
    %v1785 = vld [vmem:[#allocation9 + $0xd78] sm:$0xff]
    %v1786 = vld [vmem:[#allocation9 + $0xd80] sm:$0xff]
    %v1787 = vld [vmem:[#allocation9 + $0xd88] sm:$0xff]
    %v1788 = vld [vmem:[#allocation9 + $0xd90] sm:$0xff]
    %v1789 = vld [vmem:[#allocation9 + $0xd98] sm:$0xff]
    %v1790 = vld [vmem:[#allocation9 + $0xda0] sm:$0xff]
    %v1791 = vld [vmem:[#allocation9 + $0xda8] sm:$0xff]
    %v1792 = vld [vmem:[#allocation9 + $0xdb0] sm:$0xff]
    %v1793 = vld [vmem:[#allocation9 + $0xdb8] sm:$0xff]
    %v1794 = vld [vmem:[#allocation9 + $0xdc0] sm:$0xff]
    %v1795 = vld [vmem:[#allocation9 + $0xdc8] sm:$0xff]
    %v1796 = vld [vmem:[#allocation9 + $0xdd0] sm:$0xff]
    %v1797 = vld [vmem:[#allocation9 + $0xdd8] sm:$0xff]
    %v1798 = vld [vmem:[#allocation9 + $0xde0] sm:$0xff]
    %v1799 = vld [vmem:[#allocation9 + $0xde8] sm:$0xff]
    %v1800 = vld [vmem:[#allocation9 + $0xdf0] sm:$0xff]
    %v1801 = vld [vmem:[#allocation9 + $0xdf8] sm:$0xff]
    %v1802 = vld [vmem:[#allocation9 + $0xe00] sm:$0xff]
    %v1803 = vld [vmem:[#allocation9 + $0xe08] sm:$0xff]
    %v1804 = vld [vmem:[#allocation9 + $0xe10] sm:$0xff]
    %v1805 = vld [vmem:[#allocation9 + $0xe18] sm:$0xff]
    %v1806 = vld [vmem:[#allocation9 + $0xe20] sm:$0xff]
    %v1807 = vld [vmem:[#allocation9 + $0xe28] sm:$0xff]
    %v1808 = vld [vmem:[#allocation9 + $0xe30] sm:$0xff]
    %v1809 = vld [vmem:[#allocation9 + $0xe38] sm:$0xff]
    %v1810 = vld [vmem:[#allocation9 + $0xe40] sm:$0xff]
    %v1811 = vld [vmem:[#allocation9 + $0xe48] sm:$0xff]
    %v1812 = vld [vmem:[#allocation9 + $0xe50] sm:$0xff]
    %v1813 = vld [vmem:[#allocation9 + $0xe58] sm:$0xff]
    %v1814 = vld [vmem:[#allocation9 + $0xe60] sm:$0xff]
    %v1815 = vld [vmem:[#allocation9 + $0xe68] sm:$0xff]
    %v1816 = vld [vmem:[#allocation9 + $0xe70] sm:$0xff]
    %v1817 = vld [vmem:[#allocation9 + $0xe78] sm:$0xff]
    %v1818 = vld [vmem:[#allocation9 + $0xe80] sm:$0xff]
    %v1819 = vld [vmem:[#allocation9 + $0xe88] sm:$0xff]
    %v1820 = vld [vmem:[#allocation9 + $0xe90] sm:$0xff]
    %v1821 = vld [vmem:[#allocation9 + $0xe98] sm:$0xff]
    %v1822 = vld [vmem:[#allocation9 + $0xea0] sm:$0xff]
    %v1823 = vld [vmem:[#allocation9 + $0xea8] sm:$0xff]
    %v1824 = vld [vmem:[#allocation9 + $0xeb0] sm:$0xff]
    %v1825 = vld [vmem:[#allocation9 + $0xeb8] sm:$0xff]
    %v1826 = vld [vmem:[#allocation9 + $0xec0] sm:$0xff]
    %v1827 = vld [vmem:[#allocation9 + $0xec8] sm:$0xff]
    %v1828 = vld [vmem:[#allocation9 + $0xed0] sm:$0xff]
    %v1829 = vld [vmem:[#allocation9 + $0xed8] sm:$0xff]
    %v1830 = vld [vmem:[#allocation9 + $0xee0] sm:$0xff]
    %v1831 = vld [vmem:[#allocation9 + $0xee8] sm:$0xff]
    %v1832 = vld [vmem:[#allocation9 + $0xef0] sm:$0xff]
    %v1833 = vld [vmem:[#allocation9 + $0xef8] sm:$0xff]
    %v1834 = vld [vmem:[#allocation9 + $0xf00] sm:$0xff]
    %v1835 = vld [vmem:[#allocation9 + $0xf08] sm:$0xff]
    %v1836 = vld [vmem:[#allocation9 + $0xf10] sm:$0xff]
    %v1837 = vld [vmem:[#allocation9 + $0xf18] sm:$0xff]
    %v1838 = vld [vmem:[#allocation9 + $0xf20] sm:$0xff]
    %v1839 = vld [vmem:[#allocation9 + $0xf28] sm:$0xff]
    %v1840 = vld [vmem:[#allocation9 + $0xf30] sm:$0xff]
    %v1841 = vld [vmem:[#allocation9 + $0xf38] sm:$0xff]
    %v1842 = vld [vmem:[#allocation9 + $0xf40] sm:$0xff]
    %v1843 = vld [vmem:[#allocation9 + $0xf48] sm:$0xff]
    %v1844 = vld [vmem:[#allocation9 + $0xf50] sm:$0xff]
    %v1845 = vld [vmem:[#allocation9 + $0xf58] sm:$0xff]
    %v1846 = vld [vmem:[#allocation9 + $0xf60] sm:$0xff]
    %v1847 = vld [vmem:[#allocation9 + $0xf68] sm:$0xff]
    %v1848 = vld [vmem:[#allocation9 + $0xf70] sm:$0xff]
    %v1849 = vld [vmem:[#allocation9 + $0xf78] sm:$0xff]
    %v1850 = vld [vmem:[#allocation9 + $0xf80] sm:$0xff]
    %v1851 = vld [vmem:[#allocation9 + $0xf88] sm:$0xff]
    %v1852 = vld [vmem:[#allocation9 + $0xf90] sm:$0xff]
    %v1853 = vld [vmem:[#allocation9 + $0xf98] sm:$0xff]
    %v1854 = vld [vmem:[#allocation9 + $0xfa0] sm:$0xff]
    %v1855 = vld [vmem:[#allocation9 + $0xfa8] sm:$0xff]
    %v1856 = vld [vmem:[#allocation9 + $0xfb0] sm:$0xff]
    %v1857 = vld [vmem:[#allocation9 + $0xfb8] sm:$0xff]
    %v1858 = vld [vmem:[#allocation9 + $0xfc0] sm:$0xff]
    %v1859 = vld [vmem:[#allocation9 + $0xfc8] sm:$0xff]
    %v1860 = vld [vmem:[#allocation9 + $0xfd0] sm:$0xff]
    %v1861 = vld [vmem:[#allocation9 + $0xfd8] sm:$0xff]
    %v1862 = vld [vmem:[#allocation9 + $0xfe0] sm:$0xff]
    %v1863 = vld [vmem:[#allocation9 + $0xfe8] sm:$0xff]
    %v1864 = vld [vmem:[#allocation9 + $0xff0] sm:$0xff]
    %v1865 = vld [vmem:[#allocation9 + $0xff8] sm:$0xff]
    %v1866 = vld [vmem:[#allocation9 + $0x1000] sm:$0xff]
    %v1867 = vld [vmem:[#allocation9 + $0x1008] sm:$0xff]
    %v1868 = vld [vmem:[#allocation9 + $0x1010] sm:$0xff]
    %v1869 = vld [vmem:[#allocation9 + $0x1018] sm:$0xff]
    %v1870 = vld [vmem:[#allocation9 + $0x1020] sm:$0xff]
    %v1871 = vld [vmem:[#allocation9 + $0x1028] sm:$0xff]
    %v1872 = vld [vmem:[#allocation9 + $0x1030] sm:$0xff]
    %v1873 = vld [vmem:[#allocation9 + $0x1038] sm:$0xff]
    %v1874 = vld [vmem:[#allocation9 + $0x1040] sm:$0xff]
    %v1875 = vld [vmem:[#allocation9 + $0x1048] sm:$0xff]
    %v1876 = vld [vmem:[#allocation9 + $0x1050] sm:$0xff]
    %v1877 = vld [vmem:[#allocation9 + $0x1058] sm:$0xff]
    %v1878 = vld [vmem:[#allocation9 + $0x1060] sm:$0xff]
    %v1879 = vld [vmem:[#allocation9 + $0x1068] sm:$0xff]
    %v1880 = vld [vmem:[#allocation9 + $0x1070] sm:$0xff]
    %v1881 = vld [vmem:[#allocation9 + $0x1078] sm:$0xff]
    %v1882 = vld [vmem:[#allocation9 + $0x1080] sm:$0xff]
    %v1883 = vld [vmem:[#allocation9 + $0x1088] sm:$0xff]
    %v1884 = vld [vmem:[#allocation9 + $0x1090] sm:$0xff]
    %v1885 = vld [vmem:[#allocation9 + $0x1098] sm:$0xff]
    %v1886 = vld [vmem:[#allocation9 + $0x10a0] sm:$0xff]
    %v1887 = vld [vmem:[#allocation9 + $0x10a8] sm:$0xff]
    %v1888 = vld [vmem:[#allocation9 + $0x10b0] sm:$0xff]
    %v1889 = vld [vmem:[#allocation9 + $0x10b8] sm:$0xff]
    %v1890 = vld [vmem:[#allocation9 + $0x10c0] sm:$0xff]
    %v1891 = vld [vmem:[#allocation9 + $0x10c8] sm:$0xff]
    %v1892 = vld [vmem:[#allocation9 + $0x10d0] sm:$0xff]
    %v1893 = vld [vmem:[#allocation9 + $0x10d8] sm:$0xff]
    %v1894 = vld [vmem:[#allocation9 + $0x10e0] sm:$0xff]
    %v1895 = vld [vmem:[#allocation9 + $0x10e8] sm:$0xff]
    %v1896 = vld [vmem:[#allocation9 + $0x10f0] sm:$0xff]
    %v1897 = vld [vmem:[#allocation9 + $0x10f8] sm:$0xff]
    %v1898 = vld [vmem:[#allocation9 + $0x1100] sm:$0xff]
    %v1899 = vld [vmem:[#allocation9 + $0x1108] sm:$0xff]
    %v1900 = vld [vmem:[#allocation9 + $0x1110] sm:$0xff]
    %v1901 = vld [vmem:[#allocation9 + $0x1118] sm:$0xff]
    %v1902 = vld [vmem:[#allocation9 + $0x1120] sm:$0xff]
    %v1903 = vld [vmem:[#allocation9 + $0x1128] sm:$0xff]
    %v1904 = vld [vmem:[#allocation9 + $0x1130] sm:$0xff]
    %v1905 = vld [vmem:[#allocation9 + $0x1138] sm:$0xff]
    %v1906 = vld [vmem:[#allocation9 + $0x1140] sm:$0xff]
    %v1907 = vld [vmem:[#allocation9 + $0x1148] sm:$0xff]
    %v1908 = vld [vmem:[#allocation9 + $0x1150] sm:$0xff]
    %v1909 = vld [vmem:[#allocation9 + $0x1158] sm:$0xff]
    %v1910 = vld [vmem:[#allocation9 + $0x1160] sm:$0xff]
    %v1911 = vld [vmem:[#allocation9 + $0x1168] sm:$0xff]
    %v1912 = vld [vmem:[#allocation9 + $0x1170] sm:$0xff]
    %v1913 = vld [vmem:[#allocation9 + $0x1178] sm:$0xff]
    %v1914 = vld [vmem:[#allocation9 + $0x1180] sm:$0xff]
    %v1915 = vld [vmem:[#allocation9 + $0x1188] sm:$0xff]
    %v1916 = vld [vmem:[#allocation9 + $0x1190] sm:$0xff]
    %v1917 = vld [vmem:[#allocation9 + $0x1198] sm:$0xff]
    %v1918 = vld [vmem:[#allocation9 + $0x11a0] sm:$0xff]
    %v1919 = vld [vmem:[#allocation9 + $0x11a8] sm:$0xff]
    %v1920 = vld [vmem:[#allocation9 + $0x11b0] sm:$0xff]
    %v1921 = vld [vmem:[#allocation9 + $0x11b8] sm:$0xff]
    %v1922 = vld [vmem:[#allocation9 + $0x11c0] sm:$0xff]
    %v1923 = vld [vmem:[#allocation9 + $0x11c8] sm:$0xff]
    %v1924 = vld [vmem:[#allocation9 + $0x11d0] sm:$0xff]
    %v1925 = vld [vmem:[#allocation9 + $0x11d8] sm:$0xff]
    %v1926 = vld [vmem:[#allocation9 + $0x11e0] sm:$0xff]
    %v1927 = vld [vmem:[#allocation9 + $0x11e8] sm:$0xff]
    %v1928 = vld [vmem:[#allocation9 + $0x11f0] sm:$0xff]
    %v1929 = vld [vmem:[#allocation9 + $0x11f8] sm:$0xff]
    %v1930 = vld [vmem:[#allocation9 + $0x1200] sm:$0xff]
    %v1931 = vld [vmem:[#allocation9 + $0x1208] sm:$0xff]
    %v1932 = vld [vmem:[#allocation9 + $0x1210] sm:$0xff]
    %v1933 = vld [vmem:[#allocation9 + $0x1218] sm:$0xff]
    %v1934 = vld [vmem:[#allocation9 + $0x1220] sm:$0xff]
    %v1935 = vld [vmem:[#allocation9 + $0x1228] sm:$0xff]
    %v1936 = vld [vmem:[#allocation9 + $0x1230] sm:$0xff]
    %v1937 = vld [vmem:[#allocation9 + $0x1238] sm:$0xff]
    %v1938 = vld [vmem:[#allocation9 + $0x1240] sm:$0xff]
    %v1939 = vld [vmem:[#allocation9 + $0x1248] sm:$0xff]
    %v1940 = vld [vmem:[#allocation9 + $0x1250] sm:$0xff]
    %v1941 = vld [vmem:[#allocation9 + $0x1258] sm:$0xff]
    %v1942 = vld [vmem:[#allocation9 + $0x1260] sm:$0xff]
    %v1943 = vld [vmem:[#allocation9 + $0x1268] sm:$0xff]
    %v1944 = vld [vmem:[#allocation9 + $0x1270] sm:$0xff]
    %v1945 = vld [vmem:[#allocation9 + $0x1278] sm:$0xff]
    %v1946 = vld [vmem:[#allocation9 + $0x1280] sm:$0xff]
    %v1947 = vld [vmem:[#allocation9 + $0x1288] sm:$0xff]
    %v1948 = vld [vmem:[#allocation9 + $0x1290] sm:$0xff]
    %v1949 = vld [vmem:[#allocation9 + $0x1298] sm:$0xff]
    %v1950 = vld [vmem:[#allocation9 + $0x12a0] sm:$0xff]
    %v1951 = vld [vmem:[#allocation9 + $0x12a8] sm:$0xff]
    %v1952 = vld [vmem:[#allocation9 + $0x12b0] sm:$0xff]
    %v1953 = vld [vmem:[#allocation9 + $0x12b8] sm:$0xff]
    %v1954 = vld [vmem:[#allocation9 + $0x12c0] sm:$0xff]
    %v1955 = vld [vmem:[#allocation9 + $0x12c8] sm:$0xff]
    %v1956 = vld [vmem:[#allocation9 + $0x12d0] sm:$0xff]
    %v1957 = vld [vmem:[#allocation9 + $0x12d8] sm:$0xff]
    %v1958 = vld [vmem:[#allocation9 + $0x12e0] sm:$0xff]
    %v1959 = vld [vmem:[#allocation9 + $0x12e8] sm:$0xff]
    %v1960 = vld [vmem:[#allocation9 + $0x12f0] sm:$0xff]
    %v1961 = vld [vmem:[#allocation9 + $0x12f8] sm:$0xff]
    %v1962 = vld [vmem:[#allocation9 + $0x1300] sm:$0xff]
    %v1963 = vld [vmem:[#allocation9 + $0x1308] sm:$0xff]
    %v1964 = vld [vmem:[#allocation9 + $0x1310] sm:$0xff]
    %v1965 = vld [vmem:[#allocation9 + $0x1318] sm:$0xff]
    %v1966 = vld [vmem:[#allocation9 + $0x1320] sm:$0xff]
    %v1967 = vld [vmem:[#allocation9 + $0x1328] sm:$0xff]
    %v1968 = vld [vmem:[#allocation9 + $0x1330] sm:$0xff]
    %v1969 = vld [vmem:[#allocation9 + $0x1338] sm:$0xff]
    %v1970 = vld [vmem:[#allocation9 + $0x1340] sm:$0xff]
    %v1971 = vld [vmem:[#allocation9 + $0x1348] sm:$0xff]
    %v1972 = vld [vmem:[#allocation9 + $0x1350] sm:$0xff]
    %v1973 = vld [vmem:[#allocation9 + $0x1358] sm:$0xff]
    %v1974 = vld [vmem:[#allocation9 + $0x1360] sm:$0xff]
    %v1975 = vld [vmem:[#allocation9 + $0x1368] sm:$0xff]
    %v1976 = vld [vmem:[#allocation9 + $0x1370] sm:$0xff]
    %v1977 = vld [vmem:[#allocation9 + $0x1378] sm:$0xff]
    %v1978 = vld [vmem:[#allocation9 + $0x1380] sm:$0xff]
    %v1979 = vld [vmem:[#allocation9 + $0x1388] sm:$0xff]
    %v1980 = vld [vmem:[#allocation9 + $0x1390] sm:$0xff]
    %v1981 = vld [vmem:[#allocation9 + $0x1398] sm:$0xff]
    %v1982 = vld [vmem:[#allocation9 + $0x13a0] sm:$0xff]
    %v1983 = vld [vmem:[#allocation9 + $0x13a8] sm:$0xff]
    %v1984 = vld [vmem:[#allocation9 + $0x13b0] sm:$0xff]
    %v1985 = vld [vmem:[#allocation9 + $0x13b8] sm:$0xff]
    %v1986 = vld [vmem:[#allocation9 + $0x13c0] sm:$0xff]
    %v1987 = vld [vmem:[#allocation9 + $0x13c8] sm:$0xff]
    %v1988 = vld [vmem:[#allocation9 + $0x13d0] sm:$0xff]
    %v1989 = vld [vmem:[#allocation9 + $0x13d8] sm:$0xff]
    %v1990 = vld [vmem:[#allocation9 + $0x13e0] sm:$0xff]
    %v1991 = vld [vmem:[#allocation9 + $0x13e8] sm:$0xff]
    %v1992 = vld [vmem:[#allocation9 + $0x13f0] sm:$0xff]
    %v1993 = vld [vmem:[#allocation9 + $0x13f8] sm:$0xff]
    %v1994 = vld [vmem:[#allocation9 + $0x1400] sm:$0xff]
    %v1995 = vld [vmem:[#allocation9 + $0x1408] sm:$0xff]
    %v1996 = vld [vmem:[#allocation9 + $0x1410] sm:$0xff]
    %v1997 = vld [vmem:[#allocation9 + $0x1418] sm:$0xff]
    %v1998 = vld [vmem:[#allocation9 + $0x1420] sm:$0xff]
    %v1999 = vld [vmem:[#allocation9 + $0x1428] sm:$0xff]
    %v2000 = vld [vmem:[#allocation9 + $0x1430] sm:$0xff]
    %v2001 = vld [vmem:[#allocation9 + $0x1438] sm:$0xff]
    %v2002 = vld [vmem:[#allocation9 + $0x1440] sm:$0xff]
    %v2003 = vld [vmem:[#allocation9 + $0x1448] sm:$0xff]
    %v2004 = vld [vmem:[#allocation9 + $0x1450] sm:$0xff]
    %v2005 = vld [vmem:[#allocation9 + $0x1458] sm:$0xff]
    %v2006 = vld [vmem:[#allocation9 + $0x1460] sm:$0xff]
    %v2007 = vld [vmem:[#allocation9 + $0x1468] sm:$0xff]
    %v2008 = vld [vmem:[#allocation9 + $0x1470] sm:$0xff]
    %v2009 = vld [vmem:[#allocation9 + $0x1478] sm:$0xff]
    %v2010 = vld [vmem:[#allocation9 + $0x1480] sm:$0xff]
    %v2011 = vld [vmem:[#allocation9 + $0x1488] sm:$0xff]
    %v2012 = vld [vmem:[#allocation9 + $0x1490] sm:$0xff]
    %v2013 = vld [vmem:[#allocation9 + $0x1498] sm:$0xff]
    %v2014 = vld [vmem:[#allocation9 + $0x14a0] sm:$0xff]
    %v2015 = vld [vmem:[#allocation9 + $0x14a8] sm:$0xff]
    %v2016 = vld [vmem:[#allocation9 + $0x14b0] sm:$0xff]
    %v2017 = vld [vmem:[#allocation9 + $0x14b8] sm:$0xff]
    %v2018 = vld [vmem:[#allocation9 + $0x14c0] sm:$0xff]
    %v2019 = vld [vmem:[#allocation9 + $0x14c8] sm:$0xff]
    %v2020 = vld [vmem:[#allocation9 + $0x14d0] sm:$0xff]
    %v2021 = vld [vmem:[#allocation9 + $0x14d8] sm:$0xff]
    %v2022 = vld [vmem:[#allocation9 + $0x14e0] sm:$0xff]
    %v2023 = vld [vmem:[#allocation9 + $0x14e8] sm:$0xff]
    %v2024 = vld [vmem:[#allocation9 + $0x14f0] sm:$0xff]
    %v2025 = vld [vmem:[#allocation9 + $0x14f8] sm:$0xff]
    %v2026 = vld [vmem:[#allocation9 + $0x1500] sm:$0xff]
    %v2027 = vld [vmem:[#allocation9 + $0x1508] sm:$0xff]
    %v2028 = vld [vmem:[#allocation9 + $0x1510] sm:$0xff]
    %v2029 = vld [vmem:[#allocation9 + $0x1518] sm:$0xff]
    %v2030 = vld [vmem:[#allocation9 + $0x1520] sm:$0xff]
    %v2031 = vld [vmem:[#allocation9 + $0x1528] sm:$0xff]
    %v2032 = vld [vmem:[#allocation9 + $0x1530] sm:$0xff]
    %v2033 = vld [vmem:[#allocation9 + $0x1538] sm:$0xff]
    %v2034 = vld [vmem:[#allocation9 + $0x1540] sm:$0xff]
    %v2035 = vld [vmem:[#allocation9 + $0x1548] sm:$0xff]
    %v2036 = vld [vmem:[#allocation9 + $0x1550] sm:$0xff]
    %v2037 = vld [vmem:[#allocation9 + $0x1558] sm:$0xff]
    %v2038 = vld [vmem:[#allocation9 + $0x1560] sm:$0xff]
    %v2039 = vld [vmem:[#allocation9 + $0x1568] sm:$0xff]
    %v2040 = vld [vmem:[#allocation9 + $0x1570] sm:$0xff]
    %v2041 = vld [vmem:[#allocation9 + $0x1578] sm:$0xff]
    %v2042 = vld [vmem:[#allocation9 + $0x1580] sm:$0xff]
    %v2043 = vld [vmem:[#allocation9 + $0x1588] sm:$0xff]
    %v2044 = vld [vmem:[#allocation9 + $0x1590] sm:$0xff]
    %v2045 = vld [vmem:[#allocation9 + $0x1598] sm:$0xff]
    %v2046 = vld [vmem:[#allocation9 + $0x15a0] sm:$0xff]
    %v2047 = vld [vmem:[#allocation9 + $0x15a8] sm:$0xff]
    %v2048 = vld [vmem:[#allocation9 + $0x15b0] sm:$0xff]
    %v2049 = vld [vmem:[#allocation9 + $0x15b8] sm:$0xff]
    %v2050 = vld [vmem:[#allocation9 + $0x15c0] sm:$0xff]
    %v2051 = vld [vmem:[#allocation9 + $0x15c8] sm:$0xff]
    %v2052 = vld [vmem:[#allocation9 + $0x15d0] sm:$0xff]
    %v2053 = vld [vmem:[#allocation9 + $0x15d8] sm:$0xff]
    %v2054 = vld [vmem:[#allocation9 + $0x15e0] sm:$0xff]
    %v2055 = vld [vmem:[#allocation9 + $0x15e8] sm:$0xff]
    %v2056 = vld [vmem:[#allocation9 + $0x15f0] sm:$0xff]
    %v2057 = vld [vmem:[#allocation9 + $0x15f8] sm:$0xff]
    %v2058 = vld [vmem:[#allocation9 + $0x1600] sm:$0xff]
    %v2059 = vld [vmem:[#allocation9 + $0x1608] sm:$0xff]
    %v2060 = vld [vmem:[#allocation9 + $0x1610] sm:$0xff]
    %v2061 = vld [vmem:[#allocation9 + $0x1618] sm:$0xff]
    %v2062 = vld [vmem:[#allocation9 + $0x1620] sm:$0xff]
    %v2063 = vld [vmem:[#allocation9 + $0x1628] sm:$0xff]
    %v2064 = vld [vmem:[#allocation9 + $0x1630] sm:$0xff]
    %v2065 = vld [vmem:[#allocation9 + $0x1638] sm:$0xff]
    %v2066 = vld [vmem:[#allocation9 + $0x1640] sm:$0xff]
    %v2067 = vld [vmem:[#allocation9 + $0x1648] sm:$0xff]
    %v2068 = vld [vmem:[#allocation9 + $0x1650] sm:$0xff]
    %v2069 = vld [vmem:[#allocation9 + $0x1658] sm:$0xff]
    %v2070 = vld [vmem:[#allocation9 + $0x1660] sm:$0xff]
    %v2071 = vld [vmem:[#allocation9 + $0x1668] sm:$0xff]
    %v2072 = vld [vmem:[#allocation9 + $0x1670] sm:$0xff]
    %v2073 = vld [vmem:[#allocation9 + $0x1678] sm:$0xff]
    %v2074 = vld [vmem:[#allocation9 + $0x1680] sm:$0xff]
    %v2075 = vld [vmem:[#allocation9 + $0x1688] sm:$0xff]
    %v2076 = vld [vmem:[#allocation9 + $0x1690] sm:$0xff]
    %v2077 = vld [vmem:[#allocation9 + $0x1698] sm:$0xff]
    %v2078 = vld [vmem:[#allocation9 + $0x16a0] sm:$0xff]
    %v2079 = vld [vmem:[#allocation9 + $0x16a8] sm:$0xff]
    %v2080 = vld [vmem:[#allocation9 + $0x16b0] sm:$0xff]
    %v2081 = vld [vmem:[#allocation9 + $0x16b8] sm:$0xff]
    %v2082 = vld [vmem:[#allocation9 + $0x16c0] sm:$0xff]
    %v2083 = vld [vmem:[#allocation9 + $0x16c8] sm:$0xff]
    %v2084 = vld [vmem:[#allocation9 + $0x16d0] sm:$0xff]
    %v2085 = vld [vmem:[#allocation9 + $0x16d8] sm:$0xff]
    %v2086 = vld [vmem:[#allocation9 + $0x16e0] sm:$0xff]
    %v2087 = vld [vmem:[#allocation9 + $0x16e8] sm:$0xff]
    %v2088 = vld [vmem:[#allocation9 + $0x16f0] sm:$0xff]
    %v2089 = vld [vmem:[#allocation9 + $0x16f8] sm:$0xff]
    %v2090 = vld [vmem:[#allocation9 + $0x1700] sm:$0xff]
    %v2091 = vld [vmem:[#allocation9 + $0x1708] sm:$0xff]
    %v2092 = vld [vmem:[#allocation9 + $0x1710] sm:$0xff]
    %v2093 = vld [vmem:[#allocation9 + $0x1718] sm:$0xff]
    %v2094 = vld [vmem:[#allocation9 + $0x1720] sm:$0xff]
    %v2095 = vld [vmem:[#allocation9 + $0x1728] sm:$0xff]
    %v2096 = vld [vmem:[#allocation9 + $0x1730] sm:$0xff]
    %v2097 = vld [vmem:[#allocation9 + $0x1738] sm:$0xff]
    %v2098 = vld [vmem:[#allocation9 + $0x1740] sm:$0xff]
    %v2099 = vld [vmem:[#allocation9 + $0x1748] sm:$0xff]
    %v2100 = vld [vmem:[#allocation9 + $0x1750] sm:$0xff]
    %v2101 = vld [vmem:[#allocation9 + $0x1758] sm:$0xff]
    %v2102 = vld [vmem:[#allocation9 + $0x1760] sm:$0xff]
    %v2103 = vld [vmem:[#allocation9 + $0x1768] sm:$0xff]
    %v2104 = vld [vmem:[#allocation9 + $0x1770] sm:$0xff]
    %v2105 = vld [vmem:[#allocation9 + $0x1778] sm:$0xff]
    %v2106 = vld [vmem:[#allocation9 + $0x1780] sm:$0xff]
    %v2107 = vld [vmem:[#allocation9 + $0x1788] sm:$0xff]
    %v2108 = vld [vmem:[#allocation9 + $0x1790] sm:$0xff]
    %v2109 = vld [vmem:[#allocation9 + $0x1798] sm:$0xff]
    %v2110 = vld [vmem:[#allocation9 + $0x17a0] sm:$0xff]
    %v2111 = vld [vmem:[#allocation9 + $0x17a8] sm:$0xff]
    %v2112 = vld [vmem:[#allocation9 + $0x17b0] sm:$0xff]
    %v2113 = vld [vmem:[#allocation9 + $0x17b8] sm:$0xff]
    %v2114 = vld [vmem:[#allocation9 + $0x17c0] sm:$0xff]
    %v2115 = vld [vmem:[#allocation9 + $0x17c8] sm:$0xff]
    %v2116 = vld [vmem:[#allocation9 + $0x17d0] sm:$0xff]
    %v2117 = vld [vmem:[#allocation9 + $0x17d8] sm:$0xff]
    %v2118 = vld [vmem:[#allocation9 + $0x17e0] sm:$0xff]
    %v2119 = vld [vmem:[#allocation9 + $0x17e8] sm:$0xff]
    %v2120 = vld [vmem:[#allocation9 + $0x17f0] sm:$0xff]
    %v2121 = vld [vmem:[#allocation9 + $0x17f8] sm:$0xff]
    %v2122 = vld [vmem:[#allocation9 + $0x1800] sm:$0xff]
    %v2123 = vld [vmem:[#allocation9 + $0x1808] sm:$0xff]
    %v2124 = vld [vmem:[#allocation9 + $0x1810] sm:$0xff]
    %v2125 = vld [vmem:[#allocation9 + $0x1818] sm:$0xff]
    %v2126 = vld [vmem:[#allocation9 + $0x1820] sm:$0xff]
    %v2127 = vld [vmem:[#allocation9 + $0x1828] sm:$0xff]
    %v2128 = vld [vmem:[#allocation9 + $0x1830] sm:$0xff]
    %v2129 = vld [vmem:[#allocation9 + $0x1838] sm:$0xff]
    %v2130 = vld [vmem:[#allocation9 + $0x1840] sm:$0xff]
    %v2131 = vld [vmem:[#allocation9 + $0x1848] sm:$0xff]
    %v2132 = vld [vmem:[#allocation9 + $0x1850] sm:$0xff]
    %v2133 = vld [vmem:[#allocation9 + $0x1858] sm:$0xff]
    %v2134 = vld [vmem:[#allocation9 + $0x1860] sm:$0xff]
    %v2135 = vld [vmem:[#allocation9 + $0x1868] sm:$0xff]
    %v2136 = vld [vmem:[#allocation9 + $0x1870] sm:$0xff]
    %v2137 = vld [vmem:[#allocation9 + $0x1878] sm:$0xff]
    %v2138 = vld [vmem:[#allocation9 + $0x1880] sm:$0xff]
    %v2139 = vld [vmem:[#allocation9 + $0x1888] sm:$0xff]
    %v2140 = vld [vmem:[#allocation9 + $0x1890] sm:$0xff]
    %v2141 = vld [vmem:[#allocation9 + $0x1898] sm:$0xff]
    %v2142 = vld [vmem:[#allocation9 + $0x18a0] sm:$0xff]
    %v2143 = vld [vmem:[#allocation9 + $0x18a8] sm:$0xff]
    %v2144 = vld [vmem:[#allocation9 + $0x18b0] sm:$0xff]
    %v2145 = vld [vmem:[#allocation9 + $0x18b8] sm:$0xff]
    %v2146 = vld [vmem:[#allocation9 + $0x18c0] sm:$0xff]
    %v2147 = vld [vmem:[#allocation9 + $0x18c8] sm:$0xff]
    %v2148 = vld [vmem:[#allocation9 + $0x18d0] sm:$0xff]
    %v2149 = vld [vmem:[#allocation9 + $0x18d8] sm:$0xff]
    %v2150 = vld [vmem:[#allocation9 + $0x18e0] sm:$0xff]
    %v2151 = vld [vmem:[#allocation9 + $0x18e8] sm:$0xff]
    %v2152 = vld [vmem:[#allocation9 + $0x18f0] sm:$0xff]
    %v2153 = vld [vmem:[#allocation9 + $0x18f8] sm:$0xff]
    %v2154 = vld [vmem:[#allocation9 + $0x1900] sm:$0xff]
    %v2155 = vld [vmem:[#allocation9 + $0x1908] sm:$0xff]
    %v2156 = vld [vmem:[#allocation9 + $0x1910] sm:$0xff]
    %v2157 = vld [vmem:[#allocation9 + $0x1918] sm:$0xff]
    %v2158 = vld [vmem:[#allocation9 + $0x1920] sm:$0xff]
    %v2159 = vld [vmem:[#allocation9 + $0x1928] sm:$0xff]
    %v2160 = vld [vmem:[#allocation9 + $0x1930] sm:$0xff]
    %v2161 = vld [vmem:[#allocation9 + $0x1938] sm:$0xff]
    %v2162 = vld [vmem:[#allocation9 + $0x1940] sm:$0xff]
    %v2163 = vld [vmem:[#allocation9 + $0x1948] sm:$0xff]
    %v2164 = vld [vmem:[#allocation9 + $0x1950] sm:$0xff]
    %v2165 = vld [vmem:[#allocation9 + $0x1958] sm:$0xff]
    %v2166 = vld [vmem:[#allocation9 + $0x1960] sm:$0xff]
    %v2167 = vld [vmem:[#allocation9 + $0x1968] sm:$0xff]
    %v2168 = vld [vmem:[#allocation9 + $0x1970] sm:$0xff]
    %v2169 = vld [vmem:[#allocation9 + $0x1978] sm:$0xff]
    %v2170 = vld [vmem:[#allocation9 + $0x1980] sm:$0xff]
    %v2171 = vld [vmem:[#allocation9 + $0x1988] sm:$0xff]
    %v2172 = vld [vmem:[#allocation9 + $0x1990] sm:$0xff]
    %v2173 = vld [vmem:[#allocation9 + $0x1998] sm:$0xff]
    %v2174 = vld [vmem:[#allocation9 + $0x19a0] sm:$0xff]
    %v2175 = vld [vmem:[#allocation9 + $0x19a8] sm:$0xff]
    %v2176 = vld [vmem:[#allocation9 + $0x19b0] sm:$0xff]
    %v2177 = vld [vmem:[#allocation9 + $0x19b8] sm:$0xff]
    %v2178 = vld [vmem:[#allocation9 + $0x19c0] sm:$0xff]
    %v2179 = vld [vmem:[#allocation9 + $0x19c8] sm:$0xff]
    %v2180 = vld [vmem:[#allocation9 + $0x19d0] sm:$0xff]
    %v2181 = vld [vmem:[#allocation9 + $0x19d8] sm:$0xff]
    %v2182 = vld [vmem:[#allocation9 + $0x19e0] sm:$0xff]
    %v2183 = vld [vmem:[#allocation9 + $0x19e8] sm:$0xff]
    %v2184 = vld [vmem:[#allocation9 + $0x19f0] sm:$0xff]
    %v2185 = vld [vmem:[#allocation9 + $0x19f8] sm:$0xff]
    %v2186 = vld [vmem:[#allocation9 + $0x1a00] sm:$0xff]
    %v2187 = vld [vmem:[#allocation9 + $0x1a08] sm:$0xff]
    %v2188 = vld [vmem:[#allocation9 + $0x1a10] sm:$0xff]
    %v2189 = vld [vmem:[#allocation9 + $0x1a18] sm:$0xff]
    %v2190 = vld [vmem:[#allocation9 + $0x1a20] sm:$0xff]
    %v2191 = vld [vmem:[#allocation9 + $0x1a28] sm:$0xff]
    %v2192 = vld [vmem:[#allocation9 + $0x1a30] sm:$0xff]
    %v2193 = vld [vmem:[#allocation9 + $0x1a38] sm:$0xff]
    %v2194 = vld [vmem:[#allocation9 + $0x1a40] sm:$0xff]
    %v2195 = vld [vmem:[#allocation9 + $0x1a48] sm:$0xff]
    %v2196 = vld [vmem:[#allocation9 + $0x1a50] sm:$0xff]
    %v2197 = vld [vmem:[#allocation9 + $0x1a58] sm:$0xff]
    %v2198 = vld [vmem:[#allocation9 + $0x1a60] sm:$0xff]
    %v2199 = vld [vmem:[#allocation9 + $0x1a68] sm:$0xff]
    %v2200 = vld [vmem:[#allocation9 + $0x1a70] sm:$0xff]
    %v2201 = vld [vmem:[#allocation9 + $0x1a78] sm:$0xff]
    %v2202 = vld [vmem:[#allocation9 + $0x1a80] sm:$0xff]
    %v2203 = vld [vmem:[#allocation9 + $0x1a88] sm:$0xff]
    %v2204 = vld [vmem:[#allocation9 + $0x1a90] sm:$0xff]
    %v2205 = vld [vmem:[#allocation9 + $0x1a98] sm:$0xff]
    %v2206 = vld [vmem:[#allocation9 + $0x1aa0] sm:$0xff]
    %v2207 = vld [vmem:[#allocation9 + $0x1aa8] sm:$0xff]
    %v2208 = vld [vmem:[#allocation9 + $0x1ab0] sm:$0xff]
    %v2209 = vld [vmem:[#allocation9 + $0x1ab8] sm:$0xff]
    %v2210 = vld [vmem:[#allocation9 + $0x1ac0] sm:$0xff]
    %v2211 = vld [vmem:[#allocation9 + $0x1ac8] sm:$0xff]
    %v2212 = vld [vmem:[#allocation9 + $0x1ad0] sm:$0xff]
    %v2213 = vld [vmem:[#allocation9 + $0x1ad8] sm:$0xff]
    %v2214 = vld [vmem:[#allocation9 + $0x1ae0] sm:$0xff]
    %v2215 = vld [vmem:[#allocation9 + $0x1ae8] sm:$0xff]
    %v2216 = vld [vmem:[#allocation9 + $0x1af0] sm:$0xff]
    %v2217 = vld [vmem:[#allocation9 + $0x1af8] sm:$0xff]
    %v2218 = vld [vmem:[#allocation9 + $0x1b00] sm:$0xff]
    %v2219 = vld [vmem:[#allocation9 + $0x1b08] sm:$0xff]
    %v2220 = vld [vmem:[#allocation9 + $0x1b10] sm:$0xff]
    %v2221 = vld [vmem:[#allocation9 + $0x1b18] sm:$0xff]
    %v2222 = vld [vmem:[#allocation9 + $0x1b20] sm:$0xff]
    %v2223 = vld [vmem:[#allocation9 + $0x1b28] sm:$0xff]
    %v2224 = vld [vmem:[#allocation9 + $0x1b30] sm:$0xff]
    %v2225 = vld [vmem:[#allocation9 + $0x1b38] sm:$0xff]
    %v2226 = vld [vmem:[#allocation9 + $0x1b40] sm:$0xff]
    %v2227 = vld [vmem:[#allocation9 + $0x1b48] sm:$0xff]
    %v2228 = vld [vmem:[#allocation9 + $0x1b50] sm:$0xff]
    %v2229 = vld [vmem:[#allocation9 + $0x1b58] sm:$0xff]
    %v2230 = vld [vmem:[#allocation9 + $0x1b60] sm:$0xff]
    %v2231 = vld [vmem:[#allocation9 + $0x1b68] sm:$0xff]
    %v2232 = vld [vmem:[#allocation9 + $0x1b70] sm:$0xff]
    %v2233 = vld [vmem:[#allocation9 + $0x1b78] sm:$0xff]
    %v2234 = vld [vmem:[#allocation9 + $0x1b80] sm:$0xff]
    %v2235 = vld [vmem:[#allocation9 + $0x1b88] sm:$0xff]
    %v2236 = vld [vmem:[#allocation9 + $0x1b90] sm:$0xff]
    %v2237 = vld [vmem:[#allocation9 + $0x1b98] sm:$0xff]
    %v2238 = vld [vmem:[#allocation9 + $0x1ba0] sm:$0xff]
    %v2239 = vld [vmem:[#allocation9 + $0x1ba8] sm:$0xff]
    %v2240 = vld [vmem:[#allocation9 + $0x1bb0] sm:$0xff]
    %v2241 = vld [vmem:[#allocation9 + $0x1bb8] sm:$0xff]
    %v2242 = vld [vmem:[#allocation9 + $0x1bc0] sm:$0xff]
    %v2243 = vld [vmem:[#allocation9 + $0x1bc8] sm:$0xff]
    %v2244 = vld [vmem:[#allocation9 + $0x1bd0] sm:$0xff]
    %v2245 = vld [vmem:[#allocation9 + $0x1bd8] sm:$0xff]
    %v2246 = vld [vmem:[#allocation9 + $0x1be0] sm:$0xff]
    %v2247 = vld [vmem:[#allocation9 + $0x1be8] sm:$0xff]
    %v2248 = vld [vmem:[#allocation9 + $0x1bf0] sm:$0xff]
    %v2249 = vld [vmem:[#allocation9 + $0x1bf8] sm:$0xff]
    %v2250 = vld [vmem:[#allocation9 + $0x1c00] sm:$0xff]
    %v2251 = vld [vmem:[#allocation9 + $0x1c08] sm:$0xff]
    %v2252 = vld [vmem:[#allocation9 + $0x1c10] sm:$0xff]
    %v2253 = vld [vmem:[#allocation9 + $0x1c18] sm:$0xff]
    %v2254 = vld [vmem:[#allocation9 + $0x1c20] sm:$0xff]
    %v2255 = vld [vmem:[#allocation9 + $0x1c28] sm:$0xff]
    %v2256 = vld [vmem:[#allocation9 + $0x1c30] sm:$0xff]
    %v2257 = vld [vmem:[#allocation9 + $0x1c38] sm:$0xff]
    %v2258 = vld [vmem:[#allocation9 + $0x1c40] sm:$0xff]
    %v2259 = vld [vmem:[#allocation9 + $0x1c48] sm:$0xff]
    %v2260 = vld [vmem:[#allocation9 + $0x1c50] sm:$0xff]
    %v2261 = vld [vmem:[#allocation9 + $0x1c58] sm:$0xff]
    %v2262 = vld [vmem:[#allocation9 + $0x1c60] sm:$0xff]
    %v2263 = vld [vmem:[#allocation9 + $0x1c68] sm:$0xff]
    %v2264 = vld [vmem:[#allocation9 + $0x1c70] sm:$0xff]
    %v2265 = vld [vmem:[#allocation9 + $0x1c78] sm:$0xff]
    %v2266 = vld [vmem:[#allocation9 + $0x1c80] sm:$0xff]
    %v2267 = vld [vmem:[#allocation9 + $0x1c88] sm:$0xff]
    %v2268 = vld [vmem:[#allocation9 + $0x1c90] sm:$0xff]
    %v2269 = vld [vmem:[#allocation9 + $0x1c98] sm:$0xff]
    %v2270 = vld [vmem:[#allocation9 + $0x1ca0] sm:$0xff]
    %v2271 = vld [vmem:[#allocation9 + $0x1ca8] sm:$0xff]
    %v2272 = vld [vmem:[#allocation9 + $0x1cb0] sm:$0xff]
    %v2273 = vld [vmem:[#allocation9 + $0x1cb8] sm:$0xff]
    %v2274 = vld [vmem:[#allocation9 + $0x1cc0] sm:$0xff]
    %v2275 = vld [vmem:[#allocation9 + $0x1cc8] sm:$0xff]
    %v2276 = vld [vmem:[#allocation9 + $0x1cd0] sm:$0xff]
    %v2277 = vld [vmem:[#allocation9 + $0x1cd8] sm:$0xff]
    %v2278 = vld [vmem:[#allocation9 + $0x1ce0] sm:$0xff]
    %v2279 = vld [vmem:[#allocation9 + $0x1ce8] sm:$0xff]
    %v2280 = vld [vmem:[#allocation9 + $0x1cf0] sm:$0xff]
    %v2281 = vld [vmem:[#allocation9 + $0x1cf8] sm:$0xff]
    %v2282 = vld [vmem:[#allocation9 + $0x1d00] sm:$0xff]
    %v2283 = vld [vmem:[#allocation9 + $0x1d08] sm:$0xff]
    %v2284 = vld [vmem:[#allocation9 + $0x1d10] sm:$0xff]
    %v2285 = vld [vmem:[#allocation9 + $0x1d18] sm:$0xff]
    %v2286 = vld [vmem:[#allocation9 + $0x1d20] sm:$0xff]
    %v2287 = vld [vmem:[#allocation9 + $0x1d28] sm:$0xff]
    %v2288 = vld [vmem:[#allocation9 + $0x1d30] sm:$0xff]
    %v2289 = vld [vmem:[#allocation9 + $0x1d38] sm:$0xff]
    %v2290 = vld [vmem:[#allocation9 + $0x1d40] sm:$0xff]
    %v2291 = vld [vmem:[#allocation9 + $0x1d48] sm:$0xff]
    %v2292 = vld [vmem:[#allocation9 + $0x1d50] sm:$0xff]
    %v2293 = vld [vmem:[#allocation9 + $0x1d58] sm:$0xff]
    %v2294 = vld [vmem:[#allocation9 + $0x1d60] sm:$0xff]
    %v2295 = vld [vmem:[#allocation9 + $0x1d68] sm:$0xff]
    %v2296 = vld [vmem:[#allocation9 + $0x1d70] sm:$0xff]
    %v2297 = vld [vmem:[#allocation9 + $0x1d78] sm:$0xff]
    %v2298 = vld [vmem:[#allocation9 + $0x1d80] sm:$0xff]
    %v2299 = vld [vmem:[#allocation9 + $0x1d88] sm:$0xff]
    %v2300 = vld [vmem:[#allocation9 + $0x1d90] sm:$0xff]
    %v2301 = vld [vmem:[#allocation9 + $0x1d98] sm:$0xff]
    %v2302 = vld [vmem:[#allocation9 + $0x1da0] sm:$0xff]
    %v2303 = vld [vmem:[#allocation9 + $0x1da8] sm:$0xff]
    %v2304 = vld [vmem:[#allocation9 + $0x1db0] sm:$0xff]
    %v2305 = vld [vmem:[#allocation9 + $0x1db8] sm:$0xff]
    %v2306 = vld [vmem:[#allocation9 + $0x1dc0] sm:$0xff]
    %v2307 = vld [vmem:[#allocation9 + $0x1dc8] sm:$0xff]
    %v2308 = vld [vmem:[#allocation9 + $0x1dd0] sm:$0xff]
    %v2309 = vld [vmem:[#allocation9 + $0x1dd8] sm:$0xff]
    %v2310 = vld [vmem:[#allocation9 + $0x1de0] sm:$0xff]
    %v2311 = vld [vmem:[#allocation9 + $0x1de8] sm:$0xff]
    %v2312 = vld [vmem:[#allocation9 + $0x1df0] sm:$0xff]
    %v2313 = vld [vmem:[#allocation9 + $0x1df8] sm:$0xff]
    %v2314 = vld [vmem:[#allocation9 + $0x1e00] sm:$0xff]
    %v2315 = vld [vmem:[#allocation9 + $0x1e08] sm:$0xff]
    %v2316 = vld [vmem:[#allocation9 + $0x1e10] sm:$0xff]
    %v2317 = vld [vmem:[#allocation9 + $0x1e18] sm:$0xff]
    %v2318 = vld [vmem:[#allocation9 + $0x1e20] sm:$0xff]
    %v2319 = vld [vmem:[#allocation9 + $0x1e28] sm:$0xff]
    %v2320 = vld [vmem:[#allocation9 + $0x1e30] sm:$0xff]
    %v2321 = vld [vmem:[#allocation9 + $0x1e38] sm:$0xff]
    %v2322 = vld [vmem:[#allocation9 + $0x1e40] sm:$0xff]
    %v2323 = vld [vmem:[#allocation9 + $0x1e48] sm:$0xff]
    %v2324 = vld [vmem:[#allocation9 + $0x1e50] sm:$0xff]
    %v2325 = vld [vmem:[#allocation9 + $0x1e58] sm:$0xff]
    %v2326 = vld [vmem:[#allocation9 + $0x1e60] sm:$0xff]
    %v2327 = vld [vmem:[#allocation9 + $0x1e68] sm:$0xff]
    %v2328 = vld [vmem:[#allocation9 + $0x1e70] sm:$0xff]
    %v2329 = vld [vmem:[#allocation9 + $0x1e78] sm:$0xff]
    %v2330 = vld [vmem:[#allocation9 + $0x1e80] sm:$0xff]
    %v2331 = vld [vmem:[#allocation9 + $0x1e88] sm:$0xff]
    %v2332 = vld [vmem:[#allocation9 + $0x1e90] sm:$0xff]
    %v2333 = vld [vmem:[#allocation9 + $0x1e98] sm:$0xff]
    %v2334 = vld [vmem:[#allocation9 + $0x1ea0] sm:$0xff]
    %v2335 = vld [vmem:[#allocation9 + $0x1ea8] sm:$0xff]
    %v2336 = vld [vmem:[#allocation9 + $0x1eb0] sm:$0xff]
    %v2337 = vld [vmem:[#allocation9 + $0x1eb8] sm:$0xff]
    %v2338 = vld [vmem:[#allocation9 + $0x1ec0] sm:$0xff]
    %v2339 = vld [vmem:[#allocation9 + $0x1ec8] sm:$0xff]
    %v2340 = vld [vmem:[#allocation9 + $0x1ed0] sm:$0xff]
    %v2341 = vld [vmem:[#allocation9 + $0x1ed8] sm:$0xff]
    %v2342 = vld [vmem:[#allocation9 + $0x1ee0] sm:$0xff]
    %v2343 = vld [vmem:[#allocation9 + $0x1ee8] sm:$0xff]
    %v2344 = vld [vmem:[#allocation9 + $0x1ef0] sm:$0xff]
    %v2345 = vld [vmem:[#allocation9 + $0x1ef8] sm:$0xff]
    %v2346 = vld [vmem:[#allocation9 + $0x1f00] sm:$0xff]
    %v2347 = vld [vmem:[#allocation9 + $0x1f08] sm:$0xff]
    %v2348 = vld [vmem:[#allocation9 + $0x1f10] sm:$0xff]
    %v2349 = vld [vmem:[#allocation9 + $0x1f18] sm:$0xff]
    %v2350 = vld [vmem:[#allocation9 + $0x1f20] sm:$0xff]
    %v2351 = vld [vmem:[#allocation9 + $0x1f28] sm:$0xff]
    %v2352 = vld [vmem:[#allocation9 + $0x1f30] sm:$0xff]
    %v2353 = vld [vmem:[#allocation9 + $0x1f38] sm:$0xff]
    %v2354 = vld [vmem:[#allocation9 + $0x1f40] sm:$0xff]
    %v2355 = vld [vmem:[#allocation9 + $0x1f48] sm:$0xff]
    %v2356 = vld [vmem:[#allocation9 + $0x1f50] sm:$0xff]
    %v2357 = vld [vmem:[#allocation9 + $0x1f58] sm:$0xff]
    %v2358 = vld [vmem:[#allocation9 + $0x1f60] sm:$0xff]
    %v2359 = vld [vmem:[#allocation9 + $0x1f68] sm:$0xff]
    %v2360 = vld [vmem:[#allocation9 + $0x1f70] sm:$0xff]
    %v2361 = vld [vmem:[#allocation9 + $0x1f78] sm:$0xff]
    %v2362 = vld [vmem:[#allocation9 + $0x1f80] sm:$0xff]
    %v2363 = vld [vmem:[#allocation9 + $0x1f88] sm:$0xff]
    %v2364 = vld [vmem:[#allocation9 + $0x1f90] sm:$0xff]
    %v2365 = vld [vmem:[#allocation9 + $0x1f98] sm:$0xff]
    %v2366 = vld [vmem:[#allocation9 + $0x1fa0] sm:$0xff]
    %v2367 = vld [vmem:[#allocation9 + $0x1fa8] sm:$0xff]
    %v2368 = vld [vmem:[#allocation9 + $0x1fb0] sm:$0xff]
    %v2369 = vld [vmem:[#allocation9 + $0x1fb8] sm:$0xff]
    %v2370 = vld [vmem:[#allocation9 + $0x1fc0] sm:$0xff]
    %v2371 = vld [vmem:[#allocation9 + $0x1fc8] sm:$0xff]
    %v2372 = vld [vmem:[#allocation9 + $0x1fd0] sm:$0xff]
    %v2373 = vld [vmem:[#allocation9 + $0x1fd8] sm:$0xff]
    %v2374 = vld [vmem:[#allocation9 + $0x1fe0] sm:$0xff]
    %v2375 = vld [vmem:[#allocation9 + $0x1fe8] sm:$0xff]
    %v2376 = vld [vmem:[#allocation9 + $0x1ff0] sm:$0xff]
    %v2377 = vld [vmem:[#allocation9 + $0x1ff8] sm:$0xff]
    %2378 = vmatprep.subr.mxu0 %v1595
    %2379 = vmatpush1.msra.mxu0 %v1594
    %2380 = vmatprep.subr.mxu0 %v1579
    %2381 = vmatpush1.msra.mxu0 %v1578
    %2382 = vmatprep.subr.mxu0 %v1563
    %2383 = vmatpush1.msra.mxu0 %v1562
    %2384 = vmatprep.subr.mxu0 %v1547
    %2385 = vmatpush1.msra.mxu0 %v1546
    %2386 = vmatprep.subr.mxu0 %v1531
    %2387 = vmatpush1.msra.mxu0 %v1530
    %2388 = vmatprep.subr.mxu0 %v1515
    %2389 = vmatpush1.msra.mxu0 %v1514
    %2390 = vmatprep.subr.mxu0 %v1499
    %2391 = vmatpush1.msra.mxu0 %v1498
    %2392 = vmatprep.subr.mxu0 %v1483
    %2393 = vmatpush1.msra.mxu0 %v1482
    %2394 = vmatprep.subr.mxu0 %v1467
    %2395 = vmatpush1.msra.mxu0 %v1466
    %2396 = vmatprep.subr.mxu0 %v1451
    %2397 = vmatpush1.msra.mxu0 %v1450
    %2398 = vmatprep.subr.mxu0 %v1435
    %2399 = vmatpush1.msra.mxu0 %v1434
    %2400 = vmatprep.subr.mxu0 %v1419
    %2401 = vmatpush1.msra.mxu0 %v1418
    %2402 = vmatprep.subr.mxu0 %v1403
    %2403 = vmatpush1.msra.mxu0 %v1402
    %2404 = vmatprep.subr.mxu0 %v1387
    %2405 = vmatpush1.msra.mxu0 %v1386
    %2406 = vmatprep.subr.mxu0 %v1371
    %2407 = vmatpush1.msra.mxu0 %v1370
    %2408 = vmatprep.subr.mxu0 %v1355
    %2409 = vmatpush1.msra.mxu0 %v1354
    %2410 = vmatprep.subr.mxu0 %v1851
    %2411 = vmatpush2.msra.mxu0 %v1850
    %2412 = vmatprep.subr.mxu0 %v1835
    %2413 = vmatpush2.msra.mxu0 %v1834
    %2414 = vmatprep.subr.mxu0 %v1819
    %2415 = vmatpush2.msra.mxu0 %v1818
    %2416 = vmatprep.subr.mxu0 %v1803
    %2417 = vmatpush2.msra.mxu0 %v1802
    %2418 = vmatprep.subr.mxu0 %v1787
    %2419 = vmatpush2.msra.mxu0 %v1786
    %2420 = vmatprep.subr.mxu0 %v1771
    %2421 = vmatpush2.msra.mxu0 %v1770
    %2422 = vmatprep.subr.mxu0 %v1755
    %2423 = vmatpush2.msra.mxu0 %v1754
    %2424 = vmatprep.subr.mxu0 %v1739
    %2425 = vmatpush2.msra.mxu0 %v1738
    %2426 = vmatprep.subr.mxu0 %v1723
    %2427 = vmatpush2.msra.mxu0 %v1722
    %2428 = vmatprep.subr.mxu0 %v1707
    %2429 = vmatpush2.msra.mxu0 %v1706
    %2430 = vmatprep.subr.mxu0 %v1691
    %2431 = vmatpush2.msra.mxu0 %v1690
    %2432 = vmatprep.subr.mxu0 %v1675
    %2433 = vmatpush2.msra.mxu0 %v1674
    %2434 = vmatprep.subr.mxu0 %v1659
    %2435 = vmatpush2.msra.mxu0 %v1658
    %2436 = vmatprep.subr.mxu0 %v1643
    %2437 = vmatpush2.msra.mxu0 %v1642
    %2438 = vmatprep.subr.mxu0 %v1627
    %2439 = vmatpush2.msra.mxu0 %v1626
    %2440 = vmatprep.subr.mxu0 %v1611
    %2441 = vmatpush2.msra.mxu0 %v1610
    %2442 = vmatprep.mubr.f32.mxu0 %v1319
    %2443 = vmatmul.mubr.f32.gmra.mxu0 %v1318
    %v2444 = vpop.f32.mrf.mxu0
    %v2445 = vpop.f32.mrf.mxu0
    %2446 = vmatprep.mubr.f32.mxu0 %v1323
    %2447 = vmatmul.mubr.f32.gmra.mxu0 %v1322
    %v2448 = vpop.f32.mrf.mxu0
    %v2449 = vadd.f32 0.0, %v2448
    %v2450 = vpop.f32.mrf.mxu0
    %v2451 = vadd.f32 0.0, %v2450
    %2452 = vmatprep.mubr.f32.mxu0 %v1327
    %2453 = vmatmul.mubr.f32.gmra.mxu0 %v1326
    %v2454 = vpop.f32.mrf.mxu0
    %v2455 = vadd.f32 0.0, %v2454
    %v2456 = vpop.f32.mrf.mxu0
    %v2457 = vadd.f32 0.0, %v2456
    %2458 = vmatprep.mubr.f32.mxu0 %v1331
    %2459 = vmatmul.mubr.f32.gmra.mxu0 %v1330
    %v2460 = vpop.f32.mrf.mxu0
    %v2461 = vadd.f32 0.0, %v2460
    %v2462 = vpop.f32.mrf.mxu0
    %v2463 = vadd.f32 0.0, %v2462
    %2464 = vmatprep.mubr.f32.mxu0 %v1335
    %2465 = vmatmul.mubr.f32.gmra.mxu0 %v1334
    %v2466 = vpop.f32.mrf.mxu0
    %v2467 = vadd.f32 0.0, %v2466
    %v2468 = vpop.f32.mrf.mxu0
    %v2469 = vadd.f32 0.0, %v2468
    %2470 = vmatprep.mubr.f32.mxu0 %v1339
    %2471 = vmatmul.mubr.f32.gmra.mxu0 %v1338
    %v2472 = vpop.f32.mrf.mxu0
    %v2473 = vadd.f32 0.0, %v2472
    %v2474 = vpop.f32.mrf.mxu0
    %v2475 = vadd.f32 0.0, %v2474
    %2476 = vmatprep.mubr.f32.mxu0 %v1343
    %2477 = vmatmul.mubr.f32.gmra.mxu0 %v1342
    %v2478 = vpop.f32.mrf.mxu0
    %v2479 = vadd.f32 0.0, %v2478
    %v2480 = vpop.f32.mrf.mxu0
    %v2481 = vadd.f32 0.0, %v2480
    %2482 = vmatprep.mubr.f32.mxu0 %v1347
    %2483 = vmatmul.mubr.f32.gmra.mxu0 %v1346
    %v2484 = vpop.f32.mrf.mxu0
    %v2485 = vadd.f32 0.0, %v2484
    %v2486 = vpop.f32.mrf.mxu0
    %v2487 = vadd.f32 0.0, %v2486
    %2488 = vmatprep.mubr.f32.mxu0 %v1351
    %2489 = vmatmul.mubr.f32.gmra.mxu0 %v1350
    %v2490 = vpop.f32.mrf.mxu0
    %v2491 = vpop.f32.mrf.mxu0
    %2492 = vdwg.mxu0
    %2493 = vmatprep.subr.mxu0 %v2107
    %2494 = vmatpush1.msra.mxu0 %v2106
    %2495 = vmatprep.subr.mxu0 %v2091
    %2496 = vmatpush1.msra.mxu0 %v2090
    %2497 = vmatprep.subr.mxu0 %v2075
    %2498 = vmatpush1.msra.mxu0 %v2074
    %2499 = vmatprep.subr.mxu0 %v2059
    %2500 = vmatpush1.msra.mxu0 %v2058
    %2501 = vmatprep.subr.mxu0 %v2043
    %2502 = vmatpush1.msra.mxu0 %v2042
    %2503 = vmatprep.subr.mxu0 %v2027
    %2504 = vmatpush1.msra.mxu0 %v2026
    %2505 = vmatprep.subr.mxu0 %v2011
    %2506 = vmatpush1.msra.mxu0 %v2010
    %2507 = vmatprep.subr.mxu0 %v1995
    %2508 = vmatpush1.msra.mxu0 %v1994
    %2509 = vmatprep.subr.mxu0 %v1979
    %2510 = vmatpush1.msra.mxu0 %v1978
    %2511 = vmatprep.subr.mxu0 %v1963
    %2512 = vmatpush1.msra.mxu0 %v1962
    %2513 = vmatprep.subr.mxu0 %v1947
    %2514 = vmatpush1.msra.mxu0 %v1946
    %2515 = vmatprep.subr.mxu0 %v1931
    %2516 = vmatpush1.msra.mxu0 %v1930
    %2517 = vmatprep.subr.mxu0 %v1915
    %2518 = vmatpush1.msra.mxu0 %v1914
    %2519 = vmatprep.subr.mxu0 %v1899
    %2520 = vmatpush1.msra.mxu0 %v1898
    %2521 = vmatprep.subr.mxu0 %v1883
    %2522 = vmatpush1.msra.mxu0 %v1882
    %2523 = vmatprep.subr.mxu0 %v1867
    %2524 = vmatpush1.msra.mxu0 %v1866
    %2525 = vmatprep.subr.mxu0 %v2363
    %2526 = vmatpush2.msra.mxu0 %v2362
    %2527 = vmatprep.subr.mxu0 %v2347
    %2528 = vmatpush2.msra.mxu0 %v2346
    %2529 = vmatprep.subr.mxu0 %v2331
    %2530 = vmatpush2.msra.mxu0 %v2330
    %2531 = vmatprep.subr.mxu0 %v2315
    %2532 = vmatpush2.msra.mxu0 %v2314
    %2533 = vmatprep.subr.mxu0 %v2299
    %2534 = vmatpush2.msra.mxu0 %v2298
    %2535 = vmatprep.subr.mxu0 %v2283
    %2536 = vmatpush2.msra.mxu0 %v2282
    %2537 = vmatprep.subr.mxu0 %v2267
    %2538 = vmatpush2.msra.mxu0 %v2266
    %2539 = vmatprep.subr.mxu0 %v2251
    %2540 = vmatpush2.msra.mxu0 %v2250
    %2541 = vmatprep.subr.mxu0 %v2235
    %2542 = vmatpush2.msra.mxu0 %v2234
    %2543 = vmatprep.subr.mxu0 %v2219
    %2544 = vmatpush2.msra.mxu0 %v2218
    %2545 = vmatprep.subr.mxu0 %v2203
    %2546 = vmatpush2.msra.mxu0 %v2202
    %2547 = vmatprep.subr.mxu0 %v2187
    %2548 = vmatpush2.msra.mxu0 %v2186
    %2549 = vmatprep.subr.mxu0 %v2171
    %2550 = vmatpush2.msra.mxu0 %v2170
    %2551 = vmatprep.subr.mxu0 %v2155
    %2552 = vmatpush2.msra.mxu0 %v2154
    %2553 = vmatprep.subr.mxu0 %v2139
    %2554 = vmatpush2.msra.mxu0 %v2138
    %2555 = vmatprep.subr.mxu0 %v2123
    %2556 = vmatpush2.msra.mxu0 %v2122
    %2557 = vmatprep.mubr.f32.mxu0 %v1321
    %2558 = vmatmul.mubr.f32.gmra.mxu0 %v1320
    %v2559 = vpop.f32.mrf.mxu0
    %v2560 = vpop.f32.mrf.mxu0
    %2561 = vmatprep.mubr.f32.mxu0 %v1325
    %2562 = vmatmul.mubr.f32.gmra.mxu0 %v1324
    %v2563 = vpop.f32.mrf.mxu0
    %v2564 = vadd.f32 %v2449, %v2563
    %v2565 = vpop.f32.mrf.mxu0
    %v2566 = vadd.f32 %v2451, %v2565
    %2567 = vmatprep.mubr.f32.mxu0 %v1329
    %2568 = vmatmul.mubr.f32.gmra.mxu0 %v1328
    %v2569 = vpop.f32.mrf.mxu0
    %v2570 = vadd.f32 %v2455, %v2569
    %v2571 = vpop.f32.mrf.mxu0
    %v2572 = vadd.f32 %v2457, %v2571
    %2573 = vmatprep.mubr.f32.mxu0 %v1333
    %2574 = vmatmul.mubr.f32.gmra.mxu0 %v1332
    %v2575 = vpop.f32.mrf.mxu0
    %v2576 = vadd.f32 %v2461, %v2575
    %v2577 = vpop.f32.mrf.mxu0
    %v2578 = vadd.f32 %v2463, %v2577
    %2579 = vmatprep.mubr.f32.mxu0 %v1337
    %2580 = vmatmul.mubr.f32.gmra.mxu0 %v1336
    %v2581 = vpop.f32.mrf.mxu0
    %v2582 = vadd.f32 %v2467, %v2581
    %v2583 = vpop.f32.mrf.mxu0
    %v2584 = vadd.f32 %v2469, %v2583
    %2585 = vmatprep.mubr.f32.mxu0 %v1341
    %2586 = vmatmul.mubr.f32.gmra.mxu0 %v1340
    %v2587 = vpop.f32.mrf.mxu0
    %v2588 = vadd.f32 %v2473, %v2587
    %v2589 = vpop.f32.mrf.mxu0
    %v2590 = vadd.f32 %v2475, %v2589
    %2591 = vmatprep.mubr.f32.mxu0 %v1345
    %2592 = vmatmul.mubr.f32.gmra.mxu0 %v1344
    %v2593 = vpop.f32.mrf.mxu0
    %v2594 = vadd.f32 %v2479, %v2593
    %v2595 = vpop.f32.mrf.mxu0
    %v2596 = vadd.f32 %v2481, %v2595
    %2597 = vmatprep.mubr.f32.mxu0 %v1349
    %2598 = vmatmul.mubr.f32.gmra.mxu0 %v1348
    %v2599 = vpop.f32.mrf.mxu0
    %v2600 = vadd.f32 %v2485, %v2599
    %v2601 = vpop.f32.mrf.mxu0
    %v2602 = vadd.f32 %v2487, %v2601
    %2603 = vmatprep.mubr.f32.mxu0 %v1353
    %2604 = vmatmul.mubr.f32.gmra.mxu0 %v1352
    %v2605 = vpop.f32.mrf.mxu0
    %v2606 = vpop.f32.mrf.mxu0
    %2607 = vdwg.mxu0
    %2608 = vmatprep.subr.mxu0 %v1597
    %2609 = vmatpush1.msra.mxu0 %v1596
    %2610 = vmatprep.subr.mxu0 %v1581
    %2611 = vmatpush1.msra.mxu0 %v1580
    %2612 = vmatprep.subr.mxu0 %v1565
    %2613 = vmatpush1.msra.mxu0 %v1564
    %2614 = vmatprep.subr.mxu0 %v1549
    %2615 = vmatpush1.msra.mxu0 %v1548
    %2616 = vmatprep.subr.mxu0 %v1533
    %2617 = vmatpush1.msra.mxu0 %v1532
    %2618 = vmatprep.subr.mxu0 %v1517
    %2619 = vmatpush1.msra.mxu0 %v1516
    %2620 = vmatprep.subr.mxu0 %v1501
    %2621 = vmatpush1.msra.mxu0 %v1500
    %2622 = vmatprep.subr.mxu0 %v1485
    %2623 = vmatpush1.msra.mxu0 %v1484
    %2624 = vmatprep.subr.mxu0 %v1469
    %2625 = vmatpush1.msra.mxu0 %v1468
    %2626 = vmatprep.subr.mxu0 %v1453
    %2627 = vmatpush1.msra.mxu0 %v1452
    %2628 = vmatprep.subr.mxu0 %v1437
    %2629 = vmatpush1.msra.mxu0 %v1436
    %2630 = vmatprep.subr.mxu0 %v1421
    %2631 = vmatpush1.msra.mxu0 %v1420
    %2632 = vmatprep.subr.mxu0 %v1405
    %2633 = vmatpush1.msra.mxu0 %v1404
    %2634 = vmatprep.subr.mxu0 %v1389
    %2635 = vmatpush1.msra.mxu0 %v1388
    %2636 = vmatprep.subr.mxu0 %v1373
    %2637 = vmatpush1.msra.mxu0 %v1372
    %2638 = vmatprep.subr.mxu0 %v1357
    %2639 = vmatpush1.msra.mxu0 %v1356
    %2640 = vmatprep.subr.mxu0 %v1853
    %2641 = vmatpush2.msra.mxu0 %v1852
    %2642 = vmatprep.subr.mxu0 %v1837
    %2643 = vmatpush2.msra.mxu0 %v1836
    %2644 = vmatprep.subr.mxu0 %v1821
    %2645 = vmatpush2.msra.mxu0 %v1820
    %2646 = vmatprep.subr.mxu0 %v1805
    %2647 = vmatpush2.msra.mxu0 %v1804
    %2648 = vmatprep.subr.mxu0 %v1789
    %2649 = vmatpush2.msra.mxu0 %v1788
    %2650 = vmatprep.subr.mxu0 %v1773
    %2651 = vmatpush2.msra.mxu0 %v1772
    %2652 = vmatprep.subr.mxu0 %v1757
    %2653 = vmatpush2.msra.mxu0 %v1756
    %2654 = vmatprep.subr.mxu0 %v1741
    %2655 = vmatpush2.msra.mxu0 %v1740
    %2656 = vmatprep.subr.mxu0 %v1725
    %2657 = vmatpush2.msra.mxu0 %v1724
    %2658 = vmatprep.subr.mxu0 %v1709
    %2659 = vmatpush2.msra.mxu0 %v1708
    %2660 = vmatprep.subr.mxu0 %v1693
    %2661 = vmatpush2.msra.mxu0 %v1692
    %2662 = vmatprep.subr.mxu0 %v1677
    %2663 = vmatpush2.msra.mxu0 %v1676
    %2664 = vmatprep.subr.mxu0 %v1661
    %2665 = vmatpush2.msra.mxu0 %v1660
    %2666 = vmatprep.subr.mxu0 %v1645
    %2667 = vmatpush2.msra.mxu0 %v1644
    %2668 = vmatprep.subr.mxu0 %v1629
    %2669 = vmatpush2.msra.mxu0 %v1628
    %2670 = vmatprep.subr.mxu0 %v1613
    %2671 = vmatpush2.msra.mxu0 %v1612
    %2672 = vmatprep.mubr.f32.mxu0 %v1319
    %2673 = vmatmul.mubr.f32.gmra.mxu0 %v1318
    %v2674 = vpop.f32.mrf.mxu0
    %v2675 = vpop.f32.mrf.mxu0
    %2676 = vmatprep.mubr.f32.mxu0 %v1323
    %2677 = vmatmul.mubr.f32.gmra.mxu0 %v1322
    %v2678 = vpop.f32.mrf.mxu0
    %v2679 = vadd.f32 0.0, %v2678
    %v2680 = vpop.f32.mrf.mxu0
    %v2681 = vadd.f32 0.0, %v2680
    %2682 = vmatprep.mubr.f32.mxu0 %v1327
    %2683 = vmatmul.mubr.f32.gmra.mxu0 %v1326
    %v2684 = vpop.f32.mrf.mxu0
    %v2685 = vadd.f32 0.0, %v2684
    %v2686 = vpop.f32.mrf.mxu0
    %v2687 = vadd.f32 0.0, %v2686
    %2688 = vmatprep.mubr.f32.mxu0 %v1331
    %2689 = vmatmul.mubr.f32.gmra.mxu0 %v1330
    %v2690 = vpop.f32.mrf.mxu0
    %v2691 = vadd.f32 0.0, %v2690
    %v2692 = vpop.f32.mrf.mxu0
    %v2693 = vadd.f32 0.0, %v2692
    %2694 = vmatprep.mubr.f32.mxu0 %v1335
    %2695 = vmatmul.mubr.f32.gmra.mxu0 %v1334
    %v2696 = vpop.f32.mrf.mxu0
    %v2697 = vadd.f32 0.0, %v2696
    %v2698 = vpop.f32.mrf.mxu0
    %v2699 = vadd.f32 0.0, %v2698
    %2700 = vmatprep.mubr.f32.mxu0 %v1339
    %2701 = vmatmul.mubr.f32.gmra.mxu0 %v1338
    %v2702 = vpop.f32.mrf.mxu0
    %v2703 = vadd.f32 0.0, %v2702
    %v2704 = vpop.f32.mrf.mxu0
    %v2705 = vadd.f32 0.0, %v2704
    %2706 = vmatprep.mubr.f32.mxu0 %v1343
    %2707 = vmatmul.mubr.f32.gmra.mxu0 %v1342
    %v2708 = vpop.f32.mrf.mxu0
    %v2709 = vadd.f32 0.0, %v2708
    %v2710 = vpop.f32.mrf.mxu0
    %v2711 = vadd.f32 0.0, %v2710
    %2712 = vmatprep.mubr.f32.mxu0 %v1347
    %2713 = vmatmul.mubr.f32.gmra.mxu0 %v1346
    %v2714 = vpop.f32.mrf.mxu0
    %v2715 = vadd.f32 0.0, %v2714
    %v2716 = vpop.f32.mrf.mxu0
    %v2717 = vadd.f32 0.0, %v2716
    %2718 = vmatprep.mubr.f32.mxu0 %v1351
    %2719 = vmatmul.mubr.f32.gmra.mxu0 %v1350
    %v2720 = vpop.f32.mrf.mxu0
    %v2721 = vpop.f32.mrf.mxu0
    %2722 = vdwg.mxu0
    %2723 = vmatprep.subr.mxu0 %v2109
    %2724 = vmatpush1.msra.mxu0 %v2108
    %2725 = vmatprep.subr.mxu0 %v2093
    %2726 = vmatpush1.msra.mxu0 %v2092
    %2727 = vmatprep.subr.mxu0 %v2077
    %2728 = vmatpush1.msra.mxu0 %v2076
    %2729 = vmatprep.subr.mxu0 %v2061
    %2730 = vmatpush1.msra.mxu0 %v2060
    %2731 = vmatprep.subr.mxu0 %v2045
    %2732 = vmatpush1.msra.mxu0 %v2044
    %2733 = vmatprep.subr.mxu0 %v2029
    %2734 = vmatpush1.msra.mxu0 %v2028
    %2735 = vmatprep.subr.mxu0 %v2013
    %2736 = vmatpush1.msra.mxu0 %v2012
    %2737 = vmatprep.subr.mxu0 %v1997
    %2738 = vmatpush1.msra.mxu0 %v1996
    %2739 = vmatprep.subr.mxu0 %v1981
    %2740 = vmatpush1.msra.mxu0 %v1980
    %2741 = vmatprep.subr.mxu0 %v1965
    %2742 = vmatpush1.msra.mxu0 %v1964
    %2743 = vmatprep.subr.mxu0 %v1949
    %2744 = vmatpush1.msra.mxu0 %v1948
    %2745 = vmatprep.subr.mxu0 %v1933
    %2746 = vmatpush1.msra.mxu0 %v1932
    %2747 = vmatprep.subr.mxu0 %v1917
    %2748 = vmatpush1.msra.mxu0 %v1916
    %2749 = vmatprep.subr.mxu0 %v1901
    %2750 = vmatpush1.msra.mxu0 %v1900
    %2751 = vmatprep.subr.mxu0 %v1885
    %2752 = vmatpush1.msra.mxu0 %v1884
    %2753 = vmatprep.subr.mxu0 %v1869
    %2754 = vmatpush1.msra.mxu0 %v1868
    %2755 = vmatprep.subr.mxu0 %v2365
    %2756 = vmatpush2.msra.mxu0 %v2364
    %2757 = vmatprep.subr.mxu0 %v2349
    %2758 = vmatpush2.msra.mxu0 %v2348
    %2759 = vmatprep.subr.mxu0 %v2333
    %2760 = vmatpush2.msra.mxu0 %v2332
    %2761 = vmatprep.subr.mxu0 %v2317
    %2762 = vmatpush2.msra.mxu0 %v2316
    %2763 = vmatprep.subr.mxu0 %v2301
    %2764 = vmatpush2.msra.mxu0 %v2300
    %2765 = vmatprep.subr.mxu0 %v2285
    %2766 = vmatpush2.msra.mxu0 %v2284
    %2767 = vmatprep.subr.mxu0 %v2269
    %2768 = vmatpush2.msra.mxu0 %v2268
    %2769 = vmatprep.subr.mxu0 %v2253
    %2770 = vmatpush2.msra.mxu0 %v2252
    %2771 = vmatprep.subr.mxu0 %v2237
    %2772 = vmatpush2.msra.mxu0 %v2236
    %2773 = vmatprep.subr.mxu0 %v2221
    %2774 = vmatpush2.msra.mxu0 %v2220
    %2775 = vmatprep.subr.mxu0 %v2205
    %2776 = vmatpush2.msra.mxu0 %v2204
    %2777 = vmatprep.subr.mxu0 %v2189
    %2778 = vmatpush2.msra.mxu0 %v2188
    %2779 = vmatprep.subr.mxu0 %v2173
    %2780 = vmatpush2.msra.mxu0 %v2172
    %2781 = vmatprep.subr.mxu0 %v2157
    %2782 = vmatpush2.msra.mxu0 %v2156
    %2783 = vmatprep.subr.mxu0 %v2141
    %2784 = vmatpush2.msra.mxu0 %v2140
    %2785 = vmatprep.subr.mxu0 %v2125
    %2786 = vmatpush2.msra.mxu0 %v2124
    %2787 = vmatprep.mubr.f32.mxu0 %v1321
    %2788 = vmatmul.mubr.f32.gmra.mxu0 %v1320
    %v2789 = vpop.f32.mrf.mxu0
    %v2790 = vpop.f32.mrf.mxu0
    %2791 = vmatprep.mubr.f32.mxu0 %v1325
    %2792 = vmatmul.mubr.f32.gmra.mxu0 %v1324
    %v2793 = vpop.f32.mrf.mxu0
    %v2794 = vadd.f32 %v2679, %v2793
    %v2795 = vpop.f32.mrf.mxu0
    %v2796 = vadd.f32 %v2681, %v2795
    %2797 = vmatprep.mubr.f32.mxu0 %v1329
    %2798 = vmatmul.mubr.f32.gmra.mxu0 %v1328
    %v2799 = vpop.f32.mrf.mxu0
    %v2800 = vadd.f32 %v2685, %v2799
    %v2801 = vpop.f32.mrf.mxu0
    %v2802 = vadd.f32 %v2687, %v2801
    %2803 = vmatprep.mubr.f32.mxu0 %v1333
    %2804 = vmatmul.mubr.f32.gmra.mxu0 %v1332
    %v2805 = vpop.f32.mrf.mxu0
    %v2806 = vadd.f32 %v2691, %v2805
    %v2807 = vpop.f32.mrf.mxu0
    %v2808 = vadd.f32 %v2693, %v2807
    %2809 = vmatprep.mubr.f32.mxu0 %v1337
    %2810 = vmatmul.mubr.f32.gmra.mxu0 %v1336
    %v2811 = vpop.f32.mrf.mxu0
    %v2812 = vadd.f32 %v2697, %v2811
    %v2813 = vpop.f32.mrf.mxu0
    %v2814 = vadd.f32 %v2699, %v2813
    %2815 = vmatprep.mubr.f32.mxu0 %v1341
    %2816 = vmatmul.mubr.f32.gmra.mxu0 %v1340
    %v2817 = vpop.f32.mrf.mxu0
    %v2818 = vadd.f32 %v2703, %v2817
    %v2819 = vpop.f32.mrf.mxu0
    %v2820 = vadd.f32 %v2705, %v2819
    %2821 = vmatprep.mubr.f32.mxu0 %v1345
    %2822 = vmatmul.mubr.f32.gmra.mxu0 %v1344
    %v2823 = vpop.f32.mrf.mxu0
    %v2824 = vadd.f32 %v2709, %v2823
    %v2825 = vpop.f32.mrf.mxu0
    %v2826 = vadd.f32 %v2711, %v2825
    %2827 = vmatprep.mubr.f32.mxu0 %v1349
    %2828 = vmatmul.mubr.f32.gmra.mxu0 %v1348
    %v2829 = vpop.f32.mrf.mxu0
    %v2830 = vadd.f32 %v2715, %v2829
    %v2831 = vpop.f32.mrf.mxu0
    %v2832 = vadd.f32 %v2717, %v2831
    %2833 = vmatprep.mubr.f32.mxu0 %v1353
    %2834 = vmatmul.mubr.f32.gmra.mxu0 %v1352
    %v2835 = vpop.f32.mrf.mxu0
    %v2836 = vpop.f32.mrf.mxu0
    %2837 = vdwg.mxu0
    %2838 = vmatprep.subr.mxu0 %v1599
    %2839 = vmatpush1.msra.mxu0 %v1598
    %2840 = vmatprep.subr.mxu0 %v1583
    %2841 = vmatpush1.msra.mxu0 %v1582
    %2842 = vmatprep.subr.mxu0 %v1567
    %2843 = vmatpush1.msra.mxu0 %v1566
    %2844 = vmatprep.subr.mxu0 %v1551
    %2845 = vmatpush1.msra.mxu0 %v1550
    %2846 = vmatprep.subr.mxu0 %v1535
    %2847 = vmatpush1.msra.mxu0 %v1534
    %2848 = vmatprep.subr.mxu0 %v1519
    %2849 = vmatpush1.msra.mxu0 %v1518
    %2850 = vmatprep.subr.mxu0 %v1503
    %2851 = vmatpush1.msra.mxu0 %v1502
    %2852 = vmatprep.subr.mxu0 %v1487
    %2853 = vmatpush1.msra.mxu0 %v1486
    %2854 = vmatprep.subr.mxu0 %v1471
    %2855 = vmatpush1.msra.mxu0 %v1470
    %2856 = vmatprep.subr.mxu0 %v1455
    %2857 = vmatpush1.msra.mxu0 %v1454
    %2858 = vmatprep.subr.mxu0 %v1439
    %2859 = vmatpush1.msra.mxu0 %v1438
    %2860 = vmatprep.subr.mxu0 %v1423
    %2861 = vmatpush1.msra.mxu0 %v1422
    %2862 = vmatprep.subr.mxu0 %v1407
    %2863 = vmatpush1.msra.mxu0 %v1406
    %2864 = vmatprep.subr.mxu0 %v1391
    %2865 = vmatpush1.msra.mxu0 %v1390
    %2866 = vmatprep.subr.mxu0 %v1375
    %2867 = vmatpush1.msra.mxu0 %v1374
    %2868 = vmatprep.subr.mxu0 %v1359
    %2869 = vmatpush1.msra.mxu0 %v1358
    %2870 = vmatprep.subr.mxu0 %v1855
    %2871 = vmatpush2.msra.mxu0 %v1854
    %2872 = vmatprep.subr.mxu0 %v1839
    %2873 = vmatpush2.msra.mxu0 %v1838
    %2874 = vmatprep.subr.mxu0 %v1823
    %2875 = vmatpush2.msra.mxu0 %v1822
    %2876 = vmatprep.subr.mxu0 %v1807
    %2877 = vmatpush2.msra.mxu0 %v1806
    %2878 = vmatprep.subr.mxu0 %v1791
    %2879 = vmatpush2.msra.mxu0 %v1790
    %2880 = vmatprep.subr.mxu0 %v1775
    %2881 = vmatpush2.msra.mxu0 %v1774
    %2882 = vmatprep.subr.mxu0 %v1759
    %2883 = vmatpush2.msra.mxu0 %v1758
    %2884 = vmatprep.subr.mxu0 %v1743
    %2885 = vmatpush2.msra.mxu0 %v1742
    %2886 = vmatprep.subr.mxu0 %v1727
    %2887 = vmatpush2.msra.mxu0 %v1726
    %2888 = vmatprep.subr.mxu0 %v1711
    %2889 = vmatpush2.msra.mxu0 %v1710
    %2890 = vmatprep.subr.mxu0 %v1695
    %2891 = vmatpush2.msra.mxu0 %v1694
    %2892 = vmatprep.subr.mxu0 %v1679
    %2893 = vmatpush2.msra.mxu0 %v1678
    %2894 = vmatprep.subr.mxu0 %v1663
    %2895 = vmatpush2.msra.mxu0 %v1662
    %2896 = vmatprep.subr.mxu0 %v1647
    %2897 = vmatpush2.msra.mxu0 %v1646
    %2898 = vmatprep.subr.mxu0 %v1631
    %2899 = vmatpush2.msra.mxu0 %v1630
    %2900 = vmatprep.subr.mxu0 %v1615
    %2901 = vmatpush2.msra.mxu0 %v1614
    %2902 = vmatprep.mubr.f32.mxu0 %v1319
    %2903 = vmatmul.mubr.f32.gmra.mxu0 %v1318
    %v2904 = vpop.f32.mrf.mxu0
    %v2905 = vpop.f32.mrf.mxu0
    %2906 = vmatprep.mubr.f32.mxu0 %v1323
    %2907 = vmatmul.mubr.f32.gmra.mxu0 %v1322
    %v2908 = vpop.f32.mrf.mxu0
    %v2909 = vadd.f32 0.0, %v2908
    %v2910 = vpop.f32.mrf.mxu0
    %v2911 = vadd.f32 0.0, %v2910
    %2912 = vmatprep.mubr.f32.mxu0 %v1327
    %2913 = vmatmul.mubr.f32.gmra.mxu0 %v1326
    %v2914 = vpop.f32.mrf.mxu0
    %v2915 = vadd.f32 0.0, %v2914
    %v2916 = vpop.f32.mrf.mxu0
    %v2917 = vadd.f32 0.0, %v2916
    %2918 = vmatprep.mubr.f32.mxu0 %v1331
    %2919 = vmatmul.mubr.f32.gmra.mxu0 %v1330
    %v2920 = vpop.f32.mrf.mxu0
    %v2921 = vadd.f32 0.0, %v2920
    %v2922 = vpop.f32.mrf.mxu0
    %v2923 = vadd.f32 0.0, %v2922
    %2924 = vmatprep.mubr.f32.mxu0 %v1335
    %2925 = vmatmul.mubr.f32.gmra.mxu0 %v1334
    %v2926 = vpop.f32.mrf.mxu0
    %v2927 = vadd.f32 0.0, %v2926
    %v2928 = vpop.f32.mrf.mxu0
    %v2929 = vadd.f32 0.0, %v2928
    %2930 = vmatprep.mubr.f32.mxu0 %v1339
    %2931 = vmatmul.mubr.f32.gmra.mxu0 %v1338
    %v2932 = vpop.f32.mrf.mxu0
    %v2933 = vadd.f32 0.0, %v2932
    %v2934 = vpop.f32.mrf.mxu0
    %v2935 = vadd.f32 0.0, %v2934
    %2936 = vmatprep.mubr.f32.mxu0 %v1343
    %2937 = vmatmul.mubr.f32.gmra.mxu0 %v1342
    %v2938 = vpop.f32.mrf.mxu0
    %v2939 = vadd.f32 0.0, %v2938
    %v2940 = vpop.f32.mrf.mxu0
    %v2941 = vadd.f32 0.0, %v2940
    %2942 = vmatprep.mubr.f32.mxu0 %v1347
    %2943 = vmatmul.mubr.f32.gmra.mxu0 %v1346
    %v2944 = vpop.f32.mrf.mxu0
    %v2945 = vadd.f32 0.0, %v2944
    %v2946 = vpop.f32.mrf.mxu0
    %v2947 = vadd.f32 0.0, %v2946
    %2948 = vmatprep.mubr.f32.mxu0 %v1351
    %2949 = vmatmul.mubr.f32.gmra.mxu0 %v1350
    %v2950 = vpop.f32.mrf.mxu0
    %v2951 = vpop.f32.mrf.mxu0
    %2952 = vdwg.mxu0
    %2953 = vmatprep.subr.mxu0 %v2111
    %2954 = vmatpush1.msra.mxu0 %v2110
    %2955 = vmatprep.subr.mxu0 %v2095
    %2956 = vmatpush1.msra.mxu0 %v2094
    %2957 = vmatprep.subr.mxu0 %v2079
    %2958 = vmatpush1.msra.mxu0 %v2078
    %2959 = vmatprep.subr.mxu0 %v2063
    %2960 = vmatpush1.msra.mxu0 %v2062
    %2961 = vmatprep.subr.mxu0 %v2047
    %2962 = vmatpush1.msra.mxu0 %v2046
    %2963 = vmatprep.subr.mxu0 %v2031
    %2964 = vmatpush1.msra.mxu0 %v2030
    %2965 = vmatprep.subr.mxu0 %v2015
    %2966 = vmatpush1.msra.mxu0 %v2014
    %2967 = vmatprep.subr.mxu0 %v1999
    %2968 = vmatpush1.msra.mxu0 %v1998
    %2969 = vmatprep.subr.mxu0 %v1983
    %2970 = vmatpush1.msra.mxu0 %v1982
    %2971 = vmatprep.subr.mxu0 %v1967
    %2972 = vmatpush1.msra.mxu0 %v1966
    %2973 = vmatprep.subr.mxu0 %v1951
    %2974 = vmatpush1.msra.mxu0 %v1950
    %2975 = vmatprep.subr.mxu0 %v1935
    %2976 = vmatpush1.msra.mxu0 %v1934
    %2977 = vmatprep.subr.mxu0 %v1919
    %2978 = vmatpush1.msra.mxu0 %v1918
    %2979 = vmatprep.subr.mxu0 %v1903
    %2980 = vmatpush1.msra.mxu0 %v1902
    %2981 = vmatprep.subr.mxu0 %v1887
    %2982 = vmatpush1.msra.mxu0 %v1886
    %2983 = vmatprep.subr.mxu0 %v1871
    %2984 = vmatpush1.msra.mxu0 %v1870
    %2985 = vmatprep.subr.mxu0 %v2367
    %2986 = vmatpush2.msra.mxu0 %v2366
    %2987 = vmatprep.subr.mxu0 %v2351
    %2988 = vmatpush2.msra.mxu0 %v2350
    %2989 = vmatprep.subr.mxu0 %v2335
    %2990 = vmatpush2.msra.mxu0 %v2334
    %2991 = vmatprep.subr.mxu0 %v2319
    %2992 = vmatpush2.msra.mxu0 %v2318
    %2993 = vmatprep.subr.mxu0 %v2303
    %2994 = vmatpush2.msra.mxu0 %v2302
    %2995 = vmatprep.subr.mxu0 %v2287
    %2996 = vmatpush2.msra.mxu0 %v2286
    %2997 = vmatprep.subr.mxu0 %v2271
    %2998 = vmatpush2.msra.mxu0 %v2270
    %2999 = vmatprep.subr.mxu0 %v2255
    %3000 = vmatpush2.msra.mxu0 %v2254
    %3001 = vmatprep.subr.mxu0 %v2239
    %3002 = vmatpush2.msra.mxu0 %v2238
    %3003 = vmatprep.subr.mxu0 %v2223
    %3004 = vmatpush2.msra.mxu0 %v2222
    %3005 = vmatprep.subr.mxu0 %v2207
    %3006 = vmatpush2.msra.mxu0 %v2206
    %3007 = vmatprep.subr.mxu0 %v2191
    %3008 = vmatpush2.msra.mxu0 %v2190
    %3009 = vmatprep.subr.mxu0 %v2175
    %3010 = vmatpush2.msra.mxu0 %v2174
    %3011 = vmatprep.subr.mxu0 %v2159
    %3012 = vmatpush2.msra.mxu0 %v2158
    %3013 = vmatprep.subr.mxu0 %v2143
    %3014 = vmatpush2.msra.mxu0 %v2142
    %3015 = vmatprep.subr.mxu0 %v2127
    %3016 = vmatpush2.msra.mxu0 %v2126
    %3017 = vmatprep.mubr.f32.mxu0 %v1321
    %3018 = vmatmul.mubr.f32.gmra.mxu0 %v1320
    %v3019 = vpop.f32.mrf.mxu0
    %v3020 = vpop.f32.mrf.mxu0
    %3021 = vmatprep.mubr.f32.mxu0 %v1325
    %3022 = vmatmul.mubr.f32.gmra.mxu0 %v1324
    %v3023 = vpop.f32.mrf.mxu0
    %v3024 = vadd.f32 %v2909, %v3023
    %v3025 = vpop.f32.mrf.mxu0
    %v3026 = vadd.f32 %v2911, %v3025
    %3027 = vmatprep.mubr.f32.mxu0 %v1329
    %3028 = vmatmul.mubr.f32.gmra.mxu0 %v1328
    %v3029 = vpop.f32.mrf.mxu0
    %v3030 = vadd.f32 %v2915, %v3029
    %v3031 = vpop.f32.mrf.mxu0
    %v3032 = vadd.f32 %v2917, %v3031
    %3033 = vmatprep.mubr.f32.mxu0 %v1333
    %3034 = vmatmul.mubr.f32.gmra.mxu0 %v1332
    %v3035 = vpop.f32.mrf.mxu0
    %v3036 = vadd.f32 %v2921, %v3035
    %v3037 = vpop.f32.mrf.mxu0
    %v3038 = vadd.f32 %v2923, %v3037
    %3039 = vmatprep.mubr.f32.mxu0 %v1337
    %3040 = vmatmul.mubr.f32.gmra.mxu0 %v1336
    %v3041 = vpop.f32.mrf.mxu0
    %v3042 = vadd.f32 %v2927, %v3041
    %v3043 = vpop.f32.mrf.mxu0
    %v3044 = vadd.f32 %v2929, %v3043
    %3045 = vmatprep.mubr.f32.mxu0 %v1341
    %3046 = vmatmul.mubr.f32.gmra.mxu0 %v1340
    %v3047 = vpop.f32.mrf.mxu0
    %v3048 = vadd.f32 %v2933, %v3047
    %v3049 = vpop.f32.mrf.mxu0
    %v3050 = vadd.f32 %v2935, %v3049
    %3051 = vmatprep.mubr.f32.mxu0 %v1345
    %3052 = vmatmul.mubr.f32.gmra.mxu0 %v1344
    %v3053 = vpop.f32.mrf.mxu0
    %v3054 = vadd.f32 %v2939, %v3053
    %v3055 = vpop.f32.mrf.mxu0
    %v3056 = vadd.f32 %v2941, %v3055
    %3057 = vmatprep.mubr.f32.mxu0 %v1349
    %3058 = vmatmul.mubr.f32.gmra.mxu0 %v1348
    %v3059 = vpop.f32.mrf.mxu0
    %v3060 = vadd.f32 %v2945, %v3059
    %v3061 = vpop.f32.mrf.mxu0
    %v3062 = vadd.f32 %v2947, %v3061
    %3063 = vmatprep.mubr.f32.mxu0 %v1353
    %3064 = vmatmul.mubr.f32.gmra.mxu0 %v1352
    %v3065 = vpop.f32.mrf.mxu0
    %v3066 = vpop.f32.mrf.mxu0
    %3067 = vdwg.mxu0
    %3068 = vmatprep.subr.mxu0 %v1601
    %3069 = vmatpush1.msra.mxu0 %v1600
    %3070 = vmatprep.subr.mxu0 %v1585
    %3071 = vmatpush1.msra.mxu0 %v1584
    %3072 = vmatprep.subr.mxu0 %v1569
    %3073 = vmatpush1.msra.mxu0 %v1568
    %3074 = vmatprep.subr.mxu0 %v1553
    %3075 = vmatpush1.msra.mxu0 %v1552
    %3076 = vmatprep.subr.mxu0 %v1537
    %3077 = vmatpush1.msra.mxu0 %v1536
    %3078 = vmatprep.subr.mxu0 %v1521
    %3079 = vmatpush1.msra.mxu0 %v1520
    %3080 = vmatprep.subr.mxu0 %v1505
    %3081 = vmatpush1.msra.mxu0 %v1504
    %3082 = vmatprep.subr.mxu0 %v1489
    %3083 = vmatpush1.msra.mxu0 %v1488
    %3084 = vmatprep.subr.mxu0 %v1473
    %3085 = vmatpush1.msra.mxu0 %v1472
    %3086 = vmatprep.subr.mxu0 %v1457
    %3087 = vmatpush1.msra.mxu0 %v1456
    %3088 = vmatprep.subr.mxu0 %v1441
    %3089 = vmatpush1.msra.mxu0 %v1440
    %3090 = vmatprep.subr.mxu0 %v1425
    %3091 = vmatpush1.msra.mxu0 %v1424
    %3092 = vmatprep.subr.mxu0 %v1409
    %3093 = vmatpush1.msra.mxu0 %v1408
    %3094 = vmatprep.subr.mxu0 %v1393
    %3095 = vmatpush1.msra.mxu0 %v1392
    %3096 = vmatprep.subr.mxu0 %v1377
    %3097 = vmatpush1.msra.mxu0 %v1376
    %3098 = vmatprep.subr.mxu0 %v1361
    %3099 = vmatpush1.msra.mxu0 %v1360
    %3100 = vmatprep.subr.mxu0 %v1857
    %3101 = vmatpush2.msra.mxu0 %v1856
    %3102 = vmatprep.subr.mxu0 %v1841
    %3103 = vmatpush2.msra.mxu0 %v1840
    %3104 = vmatprep.subr.mxu0 %v1825
    %3105 = vmatpush2.msra.mxu0 %v1824
    %3106 = vmatprep.subr.mxu0 %v1809
    %3107 = vmatpush2.msra.mxu0 %v1808
    %3108 = vmatprep.subr.mxu0 %v1793
    %3109 = vmatpush2.msra.mxu0 %v1792
    %3110 = vmatprep.subr.mxu0 %v1777
    %3111 = vmatpush2.msra.mxu0 %v1776
    %3112 = vmatprep.subr.mxu0 %v1761
    %3113 = vmatpush2.msra.mxu0 %v1760
    %3114 = vmatprep.subr.mxu0 %v1745
    %3115 = vmatpush2.msra.mxu0 %v1744
    %3116 = vmatprep.subr.mxu0 %v1729
    %3117 = vmatpush2.msra.mxu0 %v1728
    %3118 = vmatprep.subr.mxu0 %v1713
    %3119 = vmatpush2.msra.mxu0 %v1712
    %3120 = vmatprep.subr.mxu0 %v1697
    %3121 = vmatpush2.msra.mxu0 %v1696
    %3122 = vmatprep.subr.mxu0 %v1681
    %3123 = vmatpush2.msra.mxu0 %v1680
    %3124 = vmatprep.subr.mxu0 %v1665
    %3125 = vmatpush2.msra.mxu0 %v1664
    %3126 = vmatprep.subr.mxu0 %v1649
    %3127 = vmatpush2.msra.mxu0 %v1648
    %3128 = vmatprep.subr.mxu0 %v1633
    %3129 = vmatpush2.msra.mxu0 %v1632
    %3130 = vmatprep.subr.mxu0 %v1617
    %3131 = vmatpush2.msra.mxu0 %v1616
    %3132 = vmatprep.mubr.f32.mxu0 %v1319
    %3133 = vmatmul.mubr.f32.gmra.mxu0 %v1318
    %v3134 = vpop.f32.mrf.mxu0
    %v3135 = vpop.f32.mrf.mxu0
    %3136 = vmatprep.mubr.f32.mxu0 %v1323
    %3137 = vmatmul.mubr.f32.gmra.mxu0 %v1322
    %v3138 = vpop.f32.mrf.mxu0
    %v3139 = vadd.f32 0.0, %v3138
    %v3140 = vpop.f32.mrf.mxu0
    %v3141 = vadd.f32 0.0, %v3140
    %3142 = vmatprep.mubr.f32.mxu0 %v1327
    %3143 = vmatmul.mubr.f32.gmra.mxu0 %v1326
    %v3144 = vpop.f32.mrf.mxu0
    %v3145 = vadd.f32 0.0, %v3144
    %v3146 = vpop.f32.mrf.mxu0
    %v3147 = vadd.f32 0.0, %v3146
    %3148 = vmatprep.mubr.f32.mxu0 %v1331
    %3149 = vmatmul.mubr.f32.gmra.mxu0 %v1330
    %v3150 = vpop.f32.mrf.mxu0
    %v3151 = vadd.f32 0.0, %v3150
    %v3152 = vpop.f32.mrf.mxu0
    %v3153 = vadd.f32 0.0, %v3152
    %3154 = vmatprep.mubr.f32.mxu0 %v1335
    %3155 = vmatmul.mubr.f32.gmra.mxu0 %v1334
    %v3156 = vpop.f32.mrf.mxu0
    %v3157 = vadd.f32 0.0, %v3156
    %v3158 = vpop.f32.mrf.mxu0
    %v3159 = vadd.f32 0.0, %v3158
    %3160 = vmatprep.mubr.f32.mxu0 %v1339
    %3161 = vmatmul.mubr.f32.gmra.mxu0 %v1338
    %v3162 = vpop.f32.mrf.mxu0
    %v3163 = vadd.f32 0.0, %v3162
    %v3164 = vpop.f32.mrf.mxu0
    %v3165 = vadd.f32 0.0, %v3164
    %3166 = vmatprep.mubr.f32.mxu0 %v1343
    %3167 = vmatmul.mubr.f32.gmra.mxu0 %v1342
    %v3168 = vpop.f32.mrf.mxu0
    %v3169 = vadd.f32 0.0, %v3168
    %v3170 = vpop.f32.mrf.mxu0
    %v3171 = vadd.f32 0.0, %v3170
    %3172 = vmatprep.mubr.f32.mxu0 %v1347
    %3173 = vmatmul.mubr.f32.gmra.mxu0 %v1346
    %v3174 = vpop.f32.mrf.mxu0
    %v3175 = vadd.f32 0.0, %v3174
    %v3176 = vpop.f32.mrf.mxu0
    %v3177 = vadd.f32 0.0, %v3176
    %3178 = vmatprep.mubr.f32.mxu0 %v1351
    %3179 = vmatmul.mubr.f32.gmra.mxu0 %v1350
    %v3180 = vpop.f32.mrf.mxu0
    %v3181 = vpop.f32.mrf.mxu0
    %3182 = vdwg.mxu0
    %3183 = vmatprep.subr.mxu0 %v2113
    %3184 = vmatpush1.msra.mxu0 %v2112
    %3185 = vmatprep.subr.mxu0 %v2097
    %3186 = vmatpush1.msra.mxu0 %v2096
    %3187 = vmatprep.subr.mxu0 %v2081
    %3188 = vmatpush1.msra.mxu0 %v2080
    %3189 = vmatprep.subr.mxu0 %v2065
    %3190 = vmatpush1.msra.mxu0 %v2064
    %3191 = vmatprep.subr.mxu0 %v2049
    %3192 = vmatpush1.msra.mxu0 %v2048
    %3193 = vmatprep.subr.mxu0 %v2033
    %3194 = vmatpush1.msra.mxu0 %v2032
    %3195 = vmatprep.subr.mxu0 %v2017
    %3196 = vmatpush1.msra.mxu0 %v2016
    %3197 = vmatprep.subr.mxu0 %v2001
    %3198 = vmatpush1.msra.mxu0 %v2000
    %3199 = vmatprep.subr.mxu0 %v1985
    %3200 = vmatpush1.msra.mxu0 %v1984
    %3201 = vmatprep.subr.mxu0 %v1969
    %3202 = vmatpush1.msra.mxu0 %v1968
    %3203 = vmatprep.subr.mxu0 %v1953
    %3204 = vmatpush1.msra.mxu0 %v1952
    %3205 = vmatprep.subr.mxu0 %v1937
    %3206 = vmatpush1.msra.mxu0 %v1936
    %3207 = vmatprep.subr.mxu0 %v1921
    %3208 = vmatpush1.msra.mxu0 %v1920
    %3209 = vmatprep.subr.mxu0 %v1905
    %3210 = vmatpush1.msra.mxu0 %v1904
    %3211 = vmatprep.subr.mxu0 %v1889
    %3212 = vmatpush1.msra.mxu0 %v1888
    %3213 = vmatprep.subr.mxu0 %v1873
    %3214 = vmatpush1.msra.mxu0 %v1872
    %3215 = vmatprep.subr.mxu0 %v2369
    %3216 = vmatpush2.msra.mxu0 %v2368
    %3217 = vmatprep.subr.mxu0 %v2353
    %3218 = vmatpush2.msra.mxu0 %v2352
    %3219 = vmatprep.subr.mxu0 %v2337
    %3220 = vmatpush2.msra.mxu0 %v2336
    %3221 = vmatprep.subr.mxu0 %v2321
    %3222 = vmatpush2.msra.mxu0 %v2320
    %3223 = vmatprep.subr.mxu0 %v2305
    %3224 = vmatpush2.msra.mxu0 %v2304
    %3225 = vmatprep.subr.mxu0 %v2289
    %3226 = vmatpush2.msra.mxu0 %v2288
    %3227 = vmatprep.subr.mxu0 %v2273
    %3228 = vmatpush2.msra.mxu0 %v2272
    %3229 = vmatprep.subr.mxu0 %v2257
    %3230 = vmatpush2.msra.mxu0 %v2256
    %3231 = vmatprep.subr.mxu0 %v2241
    %3232 = vmatpush2.msra.mxu0 %v2240
    %3233 = vmatprep.subr.mxu0 %v2225
    %3234 = vmatpush2.msra.mxu0 %v2224
    %3235 = vmatprep.subr.mxu0 %v2209
    %3236 = vmatpush2.msra.mxu0 %v2208
    %3237 = vmatprep.subr.mxu0 %v2193
    %3238 = vmatpush2.msra.mxu0 %v2192
    %3239 = vmatprep.subr.mxu0 %v2177
    %3240 = vmatpush2.msra.mxu0 %v2176
    %3241 = vmatprep.subr.mxu0 %v2161
    %3242 = vmatpush2.msra.mxu0 %v2160
    %3243 = vmatprep.subr.mxu0 %v2145
    %3244 = vmatpush2.msra.mxu0 %v2144
    %3245 = vmatprep.subr.mxu0 %v2129
    %3246 = vmatpush2.msra.mxu0 %v2128
    %3247 = vmatprep.mubr.f32.mxu0 %v1321
    %3248 = vmatmul.mubr.f32.gmra.mxu0 %v1320
    %v3249 = vpop.f32.mrf.mxu0
    %v3250 = vpop.f32.mrf.mxu0
    %3251 = vmatprep.mubr.f32.mxu0 %v1325
    %3252 = vmatmul.mubr.f32.gmra.mxu0 %v1324
    %v3253 = vpop.f32.mrf.mxu0
    %v3254 = vadd.f32 %v3139, %v3253
    %v3255 = vpop.f32.mrf.mxu0
    %v3256 = vadd.f32 %v3141, %v3255
    %3257 = vmatprep.mubr.f32.mxu0 %v1329
    %3258 = vmatmul.mubr.f32.gmra.mxu0 %v1328
    %v3259 = vpop.f32.mrf.mxu0
    %v3260 = vadd.f32 %v3145, %v3259
    %v3261 = vpop.f32.mrf.mxu0
    %v3262 = vadd.f32 %v3147, %v3261
    %3263 = vmatprep.mubr.f32.mxu0 %v1333
    %3264 = vmatmul.mubr.f32.gmra.mxu0 %v1332
    %v3265 = vpop.f32.mrf.mxu0
    %v3266 = vadd.f32 %v3151, %v3265
    %v3267 = vpop.f32.mrf.mxu0
    %v3268 = vadd.f32 %v3153, %v3267
    %3269 = vmatprep.mubr.f32.mxu0 %v1337
    %3270 = vmatmul.mubr.f32.gmra.mxu0 %v1336
    %v3271 = vpop.f32.mrf.mxu0
    %v3272 = vadd.f32 %v3157, %v3271
    %v3273 = vpop.f32.mrf.mxu0
    %v3274 = vadd.f32 %v3159, %v3273
    %3275 = vmatprep.mubr.f32.mxu0 %v1341
    %3276 = vmatmul.mubr.f32.gmra.mxu0 %v1340
    %v3277 = vpop.f32.mrf.mxu0
    %v3278 = vadd.f32 %v3163, %v3277
    %v3279 = vpop.f32.mrf.mxu0
    %v3280 = vadd.f32 %v3165, %v3279
    %3281 = vmatprep.mubr.f32.mxu0 %v1345
    %3282 = vmatmul.mubr.f32.gmra.mxu0 %v1344
    %v3283 = vpop.f32.mrf.mxu0
    %v3284 = vadd.f32 %v3169, %v3283
    %v3285 = vpop.f32.mrf.mxu0
    %v3286 = vadd.f32 %v3171, %v3285
    %3287 = vmatprep.mubr.f32.mxu0 %v1349
    %3288 = vmatmul.mubr.f32.gmra.mxu0 %v1348
    %v3289 = vpop.f32.mrf.mxu0
    %v3290 = vadd.f32 %v3175, %v3289
    %v3291 = vpop.f32.mrf.mxu0
    %v3292 = vadd.f32 %v3177, %v3291
    %3293 = vmatprep.mubr.f32.mxu0 %v1353
    %3294 = vmatmul.mubr.f32.gmra.mxu0 %v1352
    %v3295 = vpop.f32.mrf.mxu0
    %v3296 = vpop.f32.mrf.mxu0
    %3297 = vdwg.mxu0
    %3298 = vmatprep.subr.mxu0 %v1603
    %3299 = vmatpush1.msra.mxu0 %v1602
    %3300 = vmatprep.subr.mxu0 %v1587
    %3301 = vmatpush1.msra.mxu0 %v1586
    %3302 = vmatprep.subr.mxu0 %v1571
    %3303 = vmatpush1.msra.mxu0 %v1570
    %3304 = vmatprep.subr.mxu0 %v1555
    %3305 = vmatpush1.msra.mxu0 %v1554
    %3306 = vmatprep.subr.mxu0 %v1539
    %3307 = vmatpush1.msra.mxu0 %v1538
    %3308 = vmatprep.subr.mxu0 %v1523
    %3309 = vmatpush1.msra.mxu0 %v1522
    %3310 = vmatprep.subr.mxu0 %v1507
    %3311 = vmatpush1.msra.mxu0 %v1506
    %3312 = vmatprep.subr.mxu0 %v1491
    %3313 = vmatpush1.msra.mxu0 %v1490
    %3314 = vmatprep.subr.mxu0 %v1475
    %3315 = vmatpush1.msra.mxu0 %v1474
    %3316 = vmatprep.subr.mxu0 %v1459
    %3317 = vmatpush1.msra.mxu0 %v1458
    %3318 = vmatprep.subr.mxu0 %v1443
    %3319 = vmatpush1.msra.mxu0 %v1442
    %3320 = vmatprep.subr.mxu0 %v1427
    %3321 = vmatpush1.msra.mxu0 %v1426
    %3322 = vmatprep.subr.mxu0 %v1411
    %3323 = vmatpush1.msra.mxu0 %v1410
    %3324 = vmatprep.subr.mxu0 %v1395
    %3325 = vmatpush1.msra.mxu0 %v1394
    %3326 = vmatprep.subr.mxu0 %v1379
    %3327 = vmatpush1.msra.mxu0 %v1378
    %3328 = vmatprep.subr.mxu0 %v1363
    %3329 = vmatpush1.msra.mxu0 %v1362
    %3330 = vmatprep.subr.mxu0 %v1859
    %3331 = vmatpush2.msra.mxu0 %v1858
    %3332 = vmatprep.subr.mxu0 %v1843
    %3333 = vmatpush2.msra.mxu0 %v1842
    %3334 = vmatprep.subr.mxu0 %v1827
    %3335 = vmatpush2.msra.mxu0 %v1826
    %3336 = vmatprep.subr.mxu0 %v1811
    %3337 = vmatpush2.msra.mxu0 %v1810
    %3338 = vmatprep.subr.mxu0 %v1795
    %3339 = vmatpush2.msra.mxu0 %v1794
    %3340 = vmatprep.subr.mxu0 %v1779
    %3341 = vmatpush2.msra.mxu0 %v1778
    %3342 = vmatprep.subr.mxu0 %v1763
    %3343 = vmatpush2.msra.mxu0 %v1762
    %3344 = vmatprep.subr.mxu0 %v1747
    %3345 = vmatpush2.msra.mxu0 %v1746
    %3346 = vmatprep.subr.mxu0 %v1731
    %3347 = vmatpush2.msra.mxu0 %v1730
    %3348 = vmatprep.subr.mxu0 %v1715
    %3349 = vmatpush2.msra.mxu0 %v1714
    %3350 = vmatprep.subr.mxu0 %v1699
    %3351 = vmatpush2.msra.mxu0 %v1698
    %3352 = vmatprep.subr.mxu0 %v1683
    %3353 = vmatpush2.msra.mxu0 %v1682
    %3354 = vmatprep.subr.mxu0 %v1667
    %3355 = vmatpush2.msra.mxu0 %v1666
    %3356 = vmatprep.subr.mxu0 %v1651
    %3357 = vmatpush2.msra.mxu0 %v1650
    %3358 = vmatprep.subr.mxu0 %v1635
    %3359 = vmatpush2.msra.mxu0 %v1634
    %3360 = vmatprep.subr.mxu0 %v1619
    %3361 = vmatpush2.msra.mxu0 %v1618
    %3362 = vmatprep.mubr.f32.mxu0 %v1319
    %3363 = vmatmul.mubr.f32.gmra.mxu0 %v1318
    %v3364 = vpop.f32.mrf.mxu0
    %v3365 = vadd.f32 0.0, %v3364
    %v3366 = vpop.f32.mrf.mxu0
    %v3367 = vadd.f32 0.0, %v3366
    %3368 = vmatprep.mubr.f32.mxu0 %v1323
    %3369 = vmatmul.mubr.f32.gmra.mxu0 %v1322
    %v3370 = vpop.f32.mrf.mxu0
    %v3371 = vadd.f32 0.0, %v3370
    %v3372 = vpop.f32.mrf.mxu0
    %v3373 = vadd.f32 0.0, %v3372
    %3374 = vmatprep.mubr.f32.mxu0 %v1327
    %3375 = vmatmul.mubr.f32.gmra.mxu0 %v1326
    %v3376 = vpop.f32.mrf.mxu0
    %v3377 = vadd.f32 0.0, %v3376
    %v3378 = vpop.f32.mrf.mxu0
    %v3379 = vadd.f32 0.0, %v3378
    %3380 = vmatprep.mubr.f32.mxu0 %v1331
    %3381 = vmatmul.mubr.f32.gmra.mxu0 %v1330
    %v3382 = vpop.f32.mrf.mxu0
    %v3383 = vadd.f32 0.0, %v3382
    %v3384 = vpop.f32.mrf.mxu0
    %v3385 = vadd.f32 0.0, %v3384
    %3386 = vmatprep.mubr.f32.mxu0 %v1335
    %3387 = vmatmul.mubr.f32.gmra.mxu0 %v1334
    %v3388 = vpop.f32.mrf.mxu0
    %v3389 = vadd.f32 0.0, %v3388
    %v3390 = vpop.f32.mrf.mxu0
    %v3391 = vadd.f32 0.0, %v3390
    %3392 = vmatprep.mubr.f32.mxu0 %v1339
    %3393 = vmatmul.mubr.f32.gmra.mxu0 %v1338
    %v3394 = vpop.f32.mrf.mxu0
    %v3395 = vadd.f32 0.0, %v3394
    %v3396 = vpop.f32.mrf.mxu0
    %v3397 = vadd.f32 0.0, %v3396
    %3398 = vmatprep.mubr.f32.mxu0 %v1343
    %3399 = vmatmul.mubr.f32.gmra.mxu0 %v1342
    %v3400 = vpop.f32.mrf.mxu0
    %v3401 = vadd.f32 0.0, %v3400
    %v3402 = vpop.f32.mrf.mxu0
    %v3403 = vadd.f32 0.0, %v3402
    %3404 = vmatprep.mubr.f32.mxu0 %v1347
    %3405 = vmatmul.mubr.f32.gmra.mxu0 %v1346
    %v3406 = vpop.f32.mrf.mxu0
    %v3407 = vpop.f32.mrf.mxu0
    %3408 = vmatprep.mubr.f32.mxu0 %v1351
    %3409 = vmatmul.mubr.f32.gmra.mxu0 %v1350
    %v3410 = vpop.f32.mrf.mxu0
    %v3411 = vpop.f32.mrf.mxu0
    %3412 = vdwg.mxu0
    %3413 = vmatprep.subr.mxu0 %v2115
    %3414 = vmatpush1.msra.mxu0 %v2114
    %3415 = vmatprep.subr.mxu0 %v2099
    %3416 = vmatpush1.msra.mxu0 %v2098
    %3417 = vmatprep.subr.mxu0 %v2083
    %3418 = vmatpush1.msra.mxu0 %v2082
    %3419 = vmatprep.subr.mxu0 %v2067
    %3420 = vmatpush1.msra.mxu0 %v2066
    %3421 = vmatprep.subr.mxu0 %v2051
    %3422 = vmatpush1.msra.mxu0 %v2050
    %3423 = vmatprep.subr.mxu0 %v2035
    %3424 = vmatpush1.msra.mxu0 %v2034
    %3425 = vmatprep.subr.mxu0 %v2019
    %3426 = vmatpush1.msra.mxu0 %v2018
    %3427 = vmatprep.subr.mxu0 %v2003
    %3428 = vmatpush1.msra.mxu0 %v2002
    %3429 = vmatprep.subr.mxu0 %v1987
    %3430 = vmatpush1.msra.mxu0 %v1986
    %3431 = vmatprep.subr.mxu0 %v1971
    %3432 = vmatpush1.msra.mxu0 %v1970
    %3433 = vmatprep.subr.mxu0 %v1955
    %3434 = vmatpush1.msra.mxu0 %v1954
    %3435 = vmatprep.subr.mxu0 %v1939
    %3436 = vmatpush1.msra.mxu0 %v1938
    %3437 = vmatprep.subr.mxu0 %v1923
    %3438 = vmatpush1.msra.mxu0 %v1922
    %3439 = vmatprep.subr.mxu0 %v1907
    %3440 = vmatpush1.msra.mxu0 %v1906
    %3441 = vmatprep.subr.mxu0 %v1891
    %3442 = vmatpush1.msra.mxu0 %v1890
    %3443 = vmatprep.subr.mxu0 %v1875
    %3444 = vmatpush1.msra.mxu0 %v1874
    %3445 = vmatprep.subr.mxu0 %v2371
    %3446 = vmatpush2.msra.mxu0 %v2370
    %3447 = vmatprep.subr.mxu0 %v2355
    %3448 = vmatpush2.msra.mxu0 %v2354
    %3449 = vmatprep.subr.mxu0 %v2339
    %3450 = vmatpush2.msra.mxu0 %v2338
    %3451 = vmatprep.subr.mxu0 %v2323
    %3452 = vmatpush2.msra.mxu0 %v2322
    %3453 = vmatprep.subr.mxu0 %v2307
    %3454 = vmatpush2.msra.mxu0 %v2306
    %3455 = vmatprep.subr.mxu0 %v2291
    %3456 = vmatpush2.msra.mxu0 %v2290
    %3457 = vmatprep.subr.mxu0 %v2275
    %3458 = vmatpush2.msra.mxu0 %v2274
    %3459 = vmatprep.subr.mxu0 %v2259
    %3460 = vmatpush2.msra.mxu0 %v2258
    %3461 = vmatprep.subr.mxu0 %v2243
    %3462 = vmatpush2.msra.mxu0 %v2242
    %3463 = vmatprep.subr.mxu0 %v2227
    %3464 = vmatpush2.msra.mxu0 %v2226
    %3465 = vmatprep.subr.mxu0 %v2211
    %3466 = vmatpush2.msra.mxu0 %v2210
    %3467 = vmatprep.subr.mxu0 %v2195
    %3468 = vmatpush2.msra.mxu0 %v2194
    %3469 = vmatprep.subr.mxu0 %v2179
    %3470 = vmatpush2.msra.mxu0 %v2178
    %3471 = vmatprep.subr.mxu0 %v2163
    %3472 = vmatpush2.msra.mxu0 %v2162
    %3473 = vmatprep.subr.mxu0 %v2147
    %3474 = vmatpush2.msra.mxu0 %v2146
    %3475 = vmatprep.subr.mxu0 %v2131
    %3476 = vmatpush2.msra.mxu0 %v2130
    %3477 = vmatprep.mubr.f32.mxu0 %v1321
    %3478 = vmatmul.mubr.f32.gmra.mxu0 %v1320
    %v3479 = vpop.f32.mrf.mxu0
    %v3480 = vadd.f32 %v3365, %v3479
    %v3481 = vpop.f32.mrf.mxu0
    %v3482 = vadd.f32 %v3367, %v3481
    %3483 = vmatprep.mubr.f32.mxu0 %v1325
    %3484 = vmatmul.mubr.f32.gmra.mxu0 %v1324
    %v3485 = vpop.f32.mrf.mxu0
    %v3486 = vadd.f32 %v3371, %v3485
    %v3487 = vpop.f32.mrf.mxu0
    %v3488 = vadd.f32 %v3373, %v3487
    %3489 = vmatprep.mubr.f32.mxu0 %v1329
    %3490 = vmatmul.mubr.f32.gmra.mxu0 %v1328
    %v3491 = vpop.f32.mrf.mxu0
    %v3492 = vadd.f32 %v3377, %v3491
    %v3493 = vpop.f32.mrf.mxu0
    %v3494 = vadd.f32 %v3379, %v3493
    %3495 = vmatprep.mubr.f32.mxu0 %v1333
    %3496 = vmatmul.mubr.f32.gmra.mxu0 %v1332
    %v3497 = vpop.f32.mrf.mxu0
    %v3498 = vadd.f32 %v3383, %v3497
    %v3499 = vpop.f32.mrf.mxu0
    %v3500 = vadd.f32 %v3385, %v3499
    %3501 = vmatprep.mubr.f32.mxu0 %v1337
    %3502 = vmatmul.mubr.f32.gmra.mxu0 %v1336
    %v3503 = vpop.f32.mrf.mxu0
    %v3504 = vadd.f32 %v3389, %v3503
    %v3505 = vpop.f32.mrf.mxu0
    %v3506 = vadd.f32 %v3391, %v3505
    %3507 = vmatprep.mubr.f32.mxu0 %v1341
    %3508 = vmatmul.mubr.f32.gmra.mxu0 %v1340
    %v3509 = vpop.f32.mrf.mxu0
    %v3510 = vadd.f32 %v3395, %v3509
    %v3511 = vpop.f32.mrf.mxu0
    %v3512 = vadd.f32 %v3397, %v3511
    %3513 = vmatprep.mubr.f32.mxu0 %v1345
    %3514 = vmatmul.mubr.f32.gmra.mxu0 %v1344
    %v3515 = vpop.f32.mrf.mxu0
    %v3516 = vadd.f32 %v3401, %v3515
    %v3517 = vpop.f32.mrf.mxu0
    %v3518 = vadd.f32 %v3403, %v3517
    %3519 = vmatprep.mubr.f32.mxu0 %v1349
    %3520 = vmatmul.mubr.f32.gmra.mxu0 %v1348
    %v3521 = vpop.f32.mrf.mxu0
    %v3522 = vpop.f32.mrf.mxu0
    %3523 = vmatprep.mubr.f32.mxu0 %v1353
    %3524 = vmatmul.mubr.f32.gmra.mxu0 %v1352
    %v3525 = vpop.f32.mrf.mxu0
    %v3526 = vpop.f32.mrf.mxu0
    %3527 = vdwg.mxu0
    %3528 = vmatprep.subr.mxu0 %v1605
    %3529 = vmatpush1.msra.mxu0 %v1604
    %3530 = vmatprep.subr.mxu0 %v1589
    %3531 = vmatpush1.msra.mxu0 %v1588
    %3532 = vmatprep.subr.mxu0 %v1573
    %3533 = vmatpush1.msra.mxu0 %v1572
    %3534 = vmatprep.subr.mxu0 %v1557
    %3535 = vmatpush1.msra.mxu0 %v1556
    %3536 = vmatprep.subr.mxu0 %v1541
    %3537 = vmatpush1.msra.mxu0 %v1540
    %3538 = vmatprep.subr.mxu0 %v1525
    %3539 = vmatpush1.msra.mxu0 %v1524
    %3540 = vmatprep.subr.mxu0 %v1509
    %3541 = vmatpush1.msra.mxu0 %v1508
    %3542 = vmatprep.subr.mxu0 %v1493
    %3543 = vmatpush1.msra.mxu0 %v1492
    %3544 = vmatprep.subr.mxu0 %v1477
    %3545 = vmatpush1.msra.mxu0 %v1476
    %3546 = vmatprep.subr.mxu0 %v1461
    %3547 = vmatpush1.msra.mxu0 %v1460
    %3548 = vmatprep.subr.mxu0 %v1445
    %3549 = vmatpush1.msra.mxu0 %v1444
    %3550 = vmatprep.subr.mxu0 %v1429
    %3551 = vmatpush1.msra.mxu0 %v1428
    %3552 = vmatprep.subr.mxu0 %v1413
    %3553 = vmatpush1.msra.mxu0 %v1412
    %3554 = vmatprep.subr.mxu0 %v1397
    %3555 = vmatpush1.msra.mxu0 %v1396
    %3556 = vmatprep.subr.mxu0 %v1381
    %3557 = vmatpush1.msra.mxu0 %v1380
    %3558 = vmatprep.subr.mxu0 %v1365
    %3559 = vmatpush1.msra.mxu0 %v1364
    %3560 = vmatprep.subr.mxu0 %v1861
    %3561 = vmatpush2.msra.mxu0 %v1860
    %3562 = vmatprep.subr.mxu0 %v1845
    %3563 = vmatpush2.msra.mxu0 %v1844
    %3564 = vmatprep.subr.mxu0 %v1829
    %3565 = vmatpush2.msra.mxu0 %v1828
    %3566 = vmatprep.subr.mxu0 %v1813
    %3567 = vmatpush2.msra.mxu0 %v1812
    %3568 = vmatprep.subr.mxu0 %v1797
    %3569 = vmatpush2.msra.mxu0 %v1796
    %3570 = vmatprep.subr.mxu0 %v1781
    %3571 = vmatpush2.msra.mxu0 %v1780
    %3572 = vmatprep.subr.mxu0 %v1765
    %3573 = vmatpush2.msra.mxu0 %v1764
    %3574 = vmatprep.subr.mxu0 %v1749
    %3575 = vmatpush2.msra.mxu0 %v1748
    %3576 = vmatprep.subr.mxu0 %v1733
    %3577 = vmatpush2.msra.mxu0 %v1732
    %3578 = vmatprep.subr.mxu0 %v1717
    %3579 = vmatpush2.msra.mxu0 %v1716
    %3580 = vmatprep.subr.mxu0 %v1701
    %3581 = vmatpush2.msra.mxu0 %v1700
    %3582 = vmatprep.subr.mxu0 %v1685
    %3583 = vmatpush2.msra.mxu0 %v1684
    %3584 = vmatprep.subr.mxu0 %v1669
    %3585 = vmatpush2.msra.mxu0 %v1668
    %3586 = vmatprep.subr.mxu0 %v1653
    %3587 = vmatpush2.msra.mxu0 %v1652
    %3588 = vmatprep.subr.mxu0 %v1637
    %3589 = vmatpush2.msra.mxu0 %v1636
    %3590 = vmatprep.subr.mxu0 %v1621
    %3591 = vmatpush2.msra.mxu0 %v1620
    %3592 = vmatprep.mubr.f32.mxu0 %v1319
    %3593 = vmatmul.mubr.f32.gmra.mxu0 %v1318
    %v3594 = vpop.f32.mrf.mxu0
    %v3595 = vadd.f32 0.0, %v3594
    %v3596 = vpop.f32.mrf.mxu0
    %v3597 = vadd.f32 0.0, %v3596
    %3598 = vmatprep.mubr.f32.mxu0 %v1323
    %3599 = vmatmul.mubr.f32.gmra.mxu0 %v1322
    %v3600 = vpop.f32.mrf.mxu0
    %v3601 = vadd.f32 0.0, %v3600
    %v3602 = vpop.f32.mrf.mxu0
    %v3603 = vadd.f32 0.0, %v3602
    %3604 = vmatprep.mubr.f32.mxu0 %v1327
    %3605 = vmatmul.mubr.f32.gmra.mxu0 %v1326
    %v3606 = vpop.f32.mrf.mxu0
    %v3607 = vadd.f32 0.0, %v3606
    %v3608 = vpop.f32.mrf.mxu0
    %v3609 = vadd.f32 0.0, %v3608
    %3610 = vmatprep.mubr.f32.mxu0 %v1331
    %3611 = vmatmul.mubr.f32.gmra.mxu0 %v1330
    %v3612 = vpop.f32.mrf.mxu0
    %v3613 = vadd.f32 0.0, %v3612
    %v3614 = vpop.f32.mrf.mxu0
    %v3615 = vadd.f32 0.0, %v3614
    %3616 = vmatprep.mubr.f32.mxu0 %v1335
    %3617 = vmatmul.mubr.f32.gmra.mxu0 %v1334
    %v3618 = vpop.f32.mrf.mxu0
    %v3619 = vadd.f32 0.0, %v3618
    %v3620 = vpop.f32.mrf.mxu0
    %v3621 = vadd.f32 0.0, %v3620
    %3622 = vmatprep.mubr.f32.mxu0 %v1339
    %3623 = vmatmul.mubr.f32.gmra.mxu0 %v1338
    %v3624 = vpop.f32.mrf.mxu0
    %v3625 = vadd.f32 0.0, %v3624
    %v3626 = vpop.f32.mrf.mxu0
    %v3627 = vadd.f32 0.0, %v3626
    %3628 = vmatprep.mubr.f32.mxu0 %v1343
    %3629 = vmatmul.mubr.f32.gmra.mxu0 %v1342
    %v3630 = vpop.f32.mrf.mxu0
    %v3631 = vadd.f32 0.0, %v3630
    %v3632 = vpop.f32.mrf.mxu0
    %v3633 = vadd.f32 0.0, %v3632
    %3634 = vmatprep.mubr.f32.mxu0 %v1347
    %3635 = vmatmul.mubr.f32.gmra.mxu0 %v1346
    %v3636 = vpop.f32.mrf.mxu0
    %v3637 = vpop.f32.mrf.mxu0
    %3638 = vmatprep.mubr.f32.mxu0 %v1351
    %3639 = vmatmul.mubr.f32.gmra.mxu0 %v1350
    %v3640 = vpop.f32.mrf.mxu0
    %v3641 = vpop.f32.mrf.mxu0
    %3642 = vdwg.mxu0
    %3643 = vmatprep.subr.mxu0 %v2117
    %3644 = vmatpush1.msra.mxu0 %v2116
    %3645 = vmatprep.subr.mxu0 %v2101
    %3646 = vmatpush1.msra.mxu0 %v2100
    %3647 = vmatprep.subr.mxu0 %v2085
    %3648 = vmatpush1.msra.mxu0 %v2084
    %3649 = vmatprep.subr.mxu0 %v2069
    %3650 = vmatpush1.msra.mxu0 %v2068
    %3651 = vmatprep.subr.mxu0 %v2053
    %3652 = vmatpush1.msra.mxu0 %v2052
    %3653 = vmatprep.subr.mxu0 %v2037
    %3654 = vmatpush1.msra.mxu0 %v2036
    %3655 = vmatprep.subr.mxu0 %v2021
    %3656 = vmatpush1.msra.mxu0 %v2020
    %3657 = vmatprep.subr.mxu0 %v2005
    %3658 = vmatpush1.msra.mxu0 %v2004
    %3659 = vmatprep.subr.mxu0 %v1989
    %3660 = vmatpush1.msra.mxu0 %v1988
    %3661 = vmatprep.subr.mxu0 %v1973
    %3662 = vmatpush1.msra.mxu0 %v1972
    %3663 = vmatprep.subr.mxu0 %v1957
    %3664 = vmatpush1.msra.mxu0 %v1956
    %3665 = vmatprep.subr.mxu0 %v1941
    %3666 = vmatpush1.msra.mxu0 %v1940
    %3667 = vmatprep.subr.mxu0 %v1925
    %3668 = vmatpush1.msra.mxu0 %v1924
    %3669 = vmatprep.subr.mxu0 %v1909
    %3670 = vmatpush1.msra.mxu0 %v1908
    %3671 = vmatprep.subr.mxu0 %v1893
    %3672 = vmatpush1.msra.mxu0 %v1892
    %3673 = vmatprep.subr.mxu0 %v1877
    %3674 = vmatpush1.msra.mxu0 %v1876
    %3675 = vmatprep.subr.mxu0 %v2373
    %3676 = vmatpush2.msra.mxu0 %v2372
    %3677 = vmatprep.subr.mxu0 %v2357
    %3678 = vmatpush2.msra.mxu0 %v2356
    %3679 = vmatprep.subr.mxu0 %v2341
    %3680 = vmatpush2.msra.mxu0 %v2340
    %3681 = vmatprep.subr.mxu0 %v2325
    %3682 = vmatpush2.msra.mxu0 %v2324
    %3683 = vmatprep.subr.mxu0 %v2309
    %3684 = vmatpush2.msra.mxu0 %v2308
    %3685 = vmatprep.subr.mxu0 %v2293
    %3686 = vmatpush2.msra.mxu0 %v2292
    %3687 = vmatprep.subr.mxu0 %v2277
    %3688 = vmatpush2.msra.mxu0 %v2276
    %3689 = vmatprep.subr.mxu0 %v2261
    %3690 = vmatpush2.msra.mxu0 %v2260
    %3691 = vmatprep.subr.mxu0 %v2245
    %3692 = vmatpush2.msra.mxu0 %v2244
    %3693 = vmatprep.subr.mxu0 %v2229
    %3694 = vmatpush2.msra.mxu0 %v2228
    %3695 = vmatprep.subr.mxu0 %v2213
    %3696 = vmatpush2.msra.mxu0 %v2212
    %3697 = vmatprep.subr.mxu0 %v2197
    %3698 = vmatpush2.msra.mxu0 %v2196
    %3699 = vmatprep.subr.mxu0 %v2181
    %3700 = vmatpush2.msra.mxu0 %v2180
    %3701 = vmatprep.subr.mxu0 %v2165
    %3702 = vmatpush2.msra.mxu0 %v2164
    %3703 = vmatprep.subr.mxu0 %v2149
    %3704 = vmatpush2.msra.mxu0 %v2148
    %3705 = vmatprep.subr.mxu0 %v2133
    %3706 = vmatpush2.msra.mxu0 %v2132
    %3707 = vmatprep.mubr.f32.mxu0 %v1321
    %3708 = vmatmul.mubr.f32.gmra.mxu0 %v1320
    %v3709 = vpop.f32.mrf.mxu0
    %v3710 = vadd.f32 %v3595, %v3709
    %v3711 = vpop.f32.mrf.mxu0
    %v3712 = vadd.f32 %v3597, %v3711
    %3713 = vmatprep.mubr.f32.mxu0 %v1325
    %3714 = vmatmul.mubr.f32.gmra.mxu0 %v1324
    %v3715 = vpop.f32.mrf.mxu0
    %v3716 = vadd.f32 %v3601, %v3715
    %v3717 = vpop.f32.mrf.mxu0
    %v3718 = vadd.f32 %v3603, %v3717
    %3719 = vmatprep.mubr.f32.mxu0 %v1329
    %3720 = vmatmul.mubr.f32.gmra.mxu0 %v1328
    %v3721 = vpop.f32.mrf.mxu0
    %v3722 = vadd.f32 %v3607, %v3721
    %v3723 = vpop.f32.mrf.mxu0
    %v3724 = vadd.f32 %v3609, %v3723
    %3725 = vmatprep.mubr.f32.mxu0 %v1333
    %3726 = vmatmul.mubr.f32.gmra.mxu0 %v1332
    %v3727 = vpop.f32.mrf.mxu0
    %v3728 = vadd.f32 %v3613, %v3727
    %v3729 = vpop.f32.mrf.mxu0
    %v3730 = vadd.f32 %v3615, %v3729
    %3731 = vmatprep.mubr.f32.mxu0 %v1337
    %3732 = vmatmul.mubr.f32.gmra.mxu0 %v1336
    %v3733 = vpop.f32.mrf.mxu0
    %v3734 = vadd.f32 %v3619, %v3733
    %v3735 = vpop.f32.mrf.mxu0
    %v3736 = vadd.f32 %v3621, %v3735
    %3737 = vmatprep.mubr.f32.mxu0 %v1341
    %3738 = vmatmul.mubr.f32.gmra.mxu0 %v1340
    %v3739 = vpop.f32.mrf.mxu0
    %v3740 = vadd.f32 %v3625, %v3739
    %v3741 = vpop.f32.mrf.mxu0
    %v3742 = vadd.f32 %v3627, %v3741
    %3743 = vmatprep.mubr.f32.mxu0 %v1345
    %3744 = vmatmul.mubr.f32.gmra.mxu0 %v1344
    %v3745 = vpop.f32.mrf.mxu0
    %v3746 = vadd.f32 %v3631, %v3745
    %v3747 = vpop.f32.mrf.mxu0
    %v3748 = vadd.f32 %v3633, %v3747
    %3749 = vmatprep.mubr.f32.mxu0 %v1349
    %3750 = vmatmul.mubr.f32.gmra.mxu0 %v1348
    %v3751 = vpop.f32.mrf.mxu0
    %v3752 = vpop.f32.mrf.mxu0
    %3753 = vmatprep.mubr.f32.mxu0 %v1353
    %3754 = vmatmul.mubr.f32.gmra.mxu0 %v1352
    %v3755 = vpop.f32.mrf.mxu0
    %v3756 = vpop.f32.mrf.mxu0
    %3757 = vdwg.mxu0
    %3758 = vmatprep.subr.mxu0 %v1607
    %3759 = vmatpush1.msra.mxu0 %v1606
    %3760 = vmatprep.subr.mxu0 %v1591
    %3761 = vmatpush1.msra.mxu0 %v1590
    %3762 = vmatprep.subr.mxu0 %v1575
    %3763 = vmatpush1.msra.mxu0 %v1574
    %3764 = vmatprep.subr.mxu0 %v1559
    %3765 = vmatpush1.msra.mxu0 %v1558
    %3766 = vmatprep.subr.mxu0 %v1543
    %3767 = vmatpush1.msra.mxu0 %v1542
    %3768 = vmatprep.subr.mxu0 %v1527
    %3769 = vmatpush1.msra.mxu0 %v1526
    %3770 = vmatprep.subr.mxu0 %v1511
    %3771 = vmatpush1.msra.mxu0 %v1510
    %3772 = vmatprep.subr.mxu0 %v1495
    %3773 = vmatpush1.msra.mxu0 %v1494
    %3774 = vmatprep.subr.mxu0 %v1479
    %3775 = vmatpush1.msra.mxu0 %v1478
    %3776 = vmatprep.subr.mxu0 %v1463
    %3777 = vmatpush1.msra.mxu0 %v1462
    %3778 = vmatprep.subr.mxu0 %v1447
    %3779 = vmatpush1.msra.mxu0 %v1446
    %3780 = vmatprep.subr.mxu0 %v1431
    %3781 = vmatpush1.msra.mxu0 %v1430
    %3782 = vmatprep.subr.mxu0 %v1415
    %3783 = vmatpush1.msra.mxu0 %v1414
    %3784 = vmatprep.subr.mxu0 %v1399
    %3785 = vmatpush1.msra.mxu0 %v1398
    %3786 = vmatprep.subr.mxu0 %v1383
    %3787 = vmatpush1.msra.mxu0 %v1382
    %3788 = vmatprep.subr.mxu0 %v1367
    %3789 = vmatpush1.msra.mxu0 %v1366
    %3790 = vmatprep.subr.mxu0 %v1863
    %3791 = vmatpush2.msra.mxu0 %v1862
    %3792 = vmatprep.subr.mxu0 %v1847
    %3793 = vmatpush2.msra.mxu0 %v1846
    %3794 = vmatprep.subr.mxu0 %v1831
    %3795 = vmatpush2.msra.mxu0 %v1830
    %3796 = vmatprep.subr.mxu0 %v1815
    %3797 = vmatpush2.msra.mxu0 %v1814
    %3798 = vmatprep.subr.mxu0 %v1799
    %3799 = vmatpush2.msra.mxu0 %v1798
    %3800 = vmatprep.subr.mxu0 %v1783
    %3801 = vmatpush2.msra.mxu0 %v1782
    %3802 = vmatprep.subr.mxu0 %v1767
    %3803 = vmatpush2.msra.mxu0 %v1766
    %3804 = vmatprep.subr.mxu0 %v1751
    %3805 = vmatpush2.msra.mxu0 %v1750
    %3806 = vmatprep.subr.mxu0 %v1735
    %3807 = vmatpush2.msra.mxu0 %v1734
    %3808 = vmatprep.subr.mxu0 %v1719
    %3809 = vmatpush2.msra.mxu0 %v1718
    %3810 = vmatprep.subr.mxu0 %v1703
    %3811 = vmatpush2.msra.mxu0 %v1702
    %3812 = vmatprep.subr.mxu0 %v1687
    %3813 = vmatpush2.msra.mxu0 %v1686
    %3814 = vmatprep.subr.mxu0 %v1671
    %3815 = vmatpush2.msra.mxu0 %v1670
    %3816 = vmatprep.subr.mxu0 %v1655
    %3817 = vmatpush2.msra.mxu0 %v1654
    %3818 = vmatprep.subr.mxu0 %v1639
    %3819 = vmatpush2.msra.mxu0 %v1638
    %3820 = vmatprep.subr.mxu0 %v1623
    %3821 = vmatpush2.msra.mxu0 %v1622
    %3822 = vmatprep.mubr.f32.mxu0 %v1319
    %3823 = vmatmul.mubr.f32.gmra.mxu0 %v1318
    %v3824 = vpop.f32.mrf.mxu0
    %v3825 = vpop.f32.mrf.mxu0
    %3826 = vmatprep.mubr.f32.mxu0 %v1323
    %3827 = vmatmul.mubr.f32.gmra.mxu0 %v1322
    %v3828 = vpop.f32.mrf.mxu0
    %v3829 = vpop.f32.mrf.mxu0
    %3830 = vmatprep.mubr.f32.mxu0 %v1327
    %3831 = vmatmul.mubr.f32.gmra.mxu0 %v1326
    %v3832 = vpop.f32.mrf.mxu0
    %v3833 = vadd.f32 0.0, %v3832
    %v3834 = vpop.f32.mrf.mxu0
    %v3835 = vadd.f32 0.0, %v3834
    %3836 = vmatprep.mubr.f32.mxu0 %v1331
    %3837 = vmatmul.mubr.f32.gmra.mxu0 %v1330
    %v3838 = vpop.f32.mrf.mxu0
    %v3839 = vadd.f32 0.0, %v3838
    %v3840 = vpop.f32.mrf.mxu0
    %v3841 = vadd.f32 0.0, %v3840
    %3842 = vmatprep.mubr.f32.mxu0 %v1335
    %3843 = vmatmul.mubr.f32.gmra.mxu0 %v1334
    %v3844 = vpop.f32.mrf.mxu0
    %v3845 = vadd.f32 0.0, %v3844
    %v3846 = vpop.f32.mrf.mxu0
    %v3847 = vadd.f32 0.0, %v3846
    %3848 = vmatprep.mubr.f32.mxu0 %v1339
    %3849 = vmatmul.mubr.f32.gmra.mxu0 %v1338
    %v3850 = vpop.f32.mrf.mxu0
    %v3851 = vadd.f32 0.0, %v3850
    %v3852 = vpop.f32.mrf.mxu0
    %v3853 = vadd.f32 0.0, %v3852
    %3854 = vmatprep.mubr.f32.mxu0 %v1343
    %3855 = vmatmul.mubr.f32.gmra.mxu0 %v1342
    %v3856 = vpop.f32.mrf.mxu0
    %v3857 = vadd.f32 0.0, %v3856
    %v3858 = vpop.f32.mrf.mxu0
    %v3859 = vadd.f32 0.0, %v3858
    %3860 = vmatprep.mubr.f32.mxu0 %v1347
    %3861 = vmatmul.mubr.f32.gmra.mxu0 %v1346
    %v3862 = vpop.f32.mrf.mxu0
    %v3863 = vadd.f32 0.0, %v3862
    %v3864 = vpop.f32.mrf.mxu0
    %v3865 = vadd.f32 0.0, %v3864
    %3866 = vmatprep.mubr.f32.mxu0 %v1351
    %3867 = vmatmul.mubr.f32.gmra.mxu0 %v1350
    %v3868 = vpop.f32.mrf.mxu0
    %v3869 = vadd.f32 0.0, %v3868
    %v3870 = vpop.f32.mrf.mxu0
    %v3871 = vadd.f32 0.0, %v3870
    %3872 = vdwg.mxu0
    %3873 = vmatprep.subr.mxu0 %v2119
    %3874 = vmatpush1.msra.mxu0 %v2118
    %3875 = vmatprep.subr.mxu0 %v2103
    %3876 = vmatpush1.msra.mxu0 %v2102
    %3877 = vmatprep.subr.mxu0 %v2087
    %3878 = vmatpush1.msra.mxu0 %v2086
    %3879 = vmatprep.subr.mxu0 %v2071
    %3880 = vmatpush1.msra.mxu0 %v2070
    %3881 = vmatprep.subr.mxu0 %v2055
    %3882 = vmatpush1.msra.mxu0 %v2054
    %3883 = vmatprep.subr.mxu0 %v2039
    %3884 = vmatpush1.msra.mxu0 %v2038
    %3885 = vmatprep.subr.mxu0 %v2023
    %3886 = vmatpush1.msra.mxu0 %v2022
    %3887 = vmatprep.subr.mxu0 %v2007
    %3888 = vmatpush1.msra.mxu0 %v2006
    %3889 = vmatprep.subr.mxu0 %v1991
    %3890 = vmatpush1.msra.mxu0 %v1990
    %3891 = vmatprep.subr.mxu0 %v1975
    %3892 = vmatpush1.msra.mxu0 %v1974
    %3893 = vmatprep.subr.mxu0 %v1959
    %3894 = vmatpush1.msra.mxu0 %v1958
    %3895 = vmatprep.subr.mxu0 %v1943
    %3896 = vmatpush1.msra.mxu0 %v1942
    %3897 = vmatprep.subr.mxu0 %v1927
    %3898 = vmatpush1.msra.mxu0 %v1926
    %3899 = vmatprep.subr.mxu0 %v1911
    %3900 = vmatpush1.msra.mxu0 %v1910
    %3901 = vmatprep.subr.mxu0 %v1895
    %3902 = vmatpush1.msra.mxu0 %v1894
    %3903 = vmatprep.subr.mxu0 %v1879
    %3904 = vmatpush1.msra.mxu0 %v1878
    %3905 = vmatprep.subr.mxu0 %v2375
    %3906 = vmatpush2.msra.mxu0 %v2374
    %3907 = vmatprep.subr.mxu0 %v2359
    %3908 = vmatpush2.msra.mxu0 %v2358
    %3909 = vmatprep.subr.mxu0 %v2343
    %3910 = vmatpush2.msra.mxu0 %v2342
    %3911 = vmatprep.subr.mxu0 %v2327
    %3912 = vmatpush2.msra.mxu0 %v2326
    %3913 = vmatprep.subr.mxu0 %v2311
    %3914 = vmatpush2.msra.mxu0 %v2310
    %3915 = vmatprep.subr.mxu0 %v2295
    %3916 = vmatpush2.msra.mxu0 %v2294
    %3917 = vmatprep.subr.mxu0 %v2279
    %3918 = vmatpush2.msra.mxu0 %v2278
    %3919 = vmatprep.subr.mxu0 %v2263
    %3920 = vmatpush2.msra.mxu0 %v2262
    %3921 = vmatprep.subr.mxu0 %v2247
    %3922 = vmatpush2.msra.mxu0 %v2246
    %3923 = vmatprep.subr.mxu0 %v2231
    %3924 = vmatpush2.msra.mxu0 %v2230
    %3925 = vmatprep.subr.mxu0 %v2215
    %3926 = vmatpush2.msra.mxu0 %v2214
    %3927 = vmatprep.subr.mxu0 %v2199
    %3928 = vmatpush2.msra.mxu0 %v2198
    %3929 = vmatprep.subr.mxu0 %v2183
    %3930 = vmatpush2.msra.mxu0 %v2182
    %3931 = vmatprep.subr.mxu0 %v2167
    %3932 = vmatpush2.msra.mxu0 %v2166
    %3933 = vmatprep.subr.mxu0 %v2151
    %3934 = vmatpush2.msra.mxu0 %v2150
    %3935 = vmatprep.subr.mxu0 %v2135
    %3936 = vmatpush2.msra.mxu0 %v2134
    %3937 = vmatprep.mubr.f32.mxu0 %v1321
    %3938 = vmatmul.mubr.f32.gmra.mxu0 %v1320
    %v3939 = vpop.f32.mrf.mxu0
    %v3940 = vpop.f32.mrf.mxu0
    %3941 = vmatprep.mubr.f32.mxu0 %v1325
    %3942 = vmatmul.mubr.f32.gmra.mxu0 %v1324
    %v3943 = vpop.f32.mrf.mxu0
    %v3944 = vpop.f32.mrf.mxu0
    %3945 = vmatprep.mubr.f32.mxu0 %v1329
    %3946 = vmatmul.mubr.f32.gmra.mxu0 %v1328
    %v3947 = vpop.f32.mrf.mxu0
    %v3948 = vadd.f32 %v3833, %v3947
    %v3949 = vpop.f32.mrf.mxu0
    %v3950 = vadd.f32 %v3835, %v3949
    %3951 = vmatprep.mubr.f32.mxu0 %v1333
    %3952 = vmatmul.mubr.f32.gmra.mxu0 %v1332
    %v3953 = vpop.f32.mrf.mxu0
    %v3954 = vadd.f32 %v3839, %v3953
    %v3955 = vpop.f32.mrf.mxu0
    %v3956 = vadd.f32 %v3841, %v3955
    %3957 = vmatprep.mubr.f32.mxu0 %v1337
    %3958 = vmatmul.mubr.f32.gmra.mxu0 %v1336
    %v3959 = vpop.f32.mrf.mxu0
    %v3960 = vadd.f32 %v3845, %v3959
    %v3961 = vpop.f32.mrf.mxu0
    %v3962 = vadd.f32 %v3847, %v3961
    %3963 = vmatprep.mubr.f32.mxu0 %v1341
    %3964 = vmatmul.mubr.f32.gmra.mxu0 %v1340
    %v3965 = vpop.f32.mrf.mxu0
    %v3966 = vadd.f32 %v3851, %v3965
    %v3967 = vpop.f32.mrf.mxu0
    %v3968 = vadd.f32 %v3853, %v3967
    %3969 = vmatprep.mubr.f32.mxu0 %v1345
    %3970 = vmatmul.mubr.f32.gmra.mxu0 %v1344
    %v3971 = vpop.f32.mrf.mxu0
    %v3972 = vadd.f32 %v3857, %v3971
    %v3973 = vpop.f32.mrf.mxu0
    %v3974 = vadd.f32 %v3859, %v3973
    %3975 = vmatprep.mubr.f32.mxu0 %v1349
    %3976 = vmatmul.mubr.f32.gmra.mxu0 %v1348
    %v3977 = vpop.f32.mrf.mxu0
    %v3978 = vadd.f32 %v3863, %v3977
    %v3979 = vpop.f32.mrf.mxu0
    %v3980 = vadd.f32 %v3865, %v3979
    %3981 = vmatprep.mubr.f32.mxu0 %v1353
    %3982 = vmatmul.mubr.f32.gmra.mxu0 %v1352
    %v3983 = vpop.f32.mrf.mxu0
    %v3984 = vadd.f32 %v3869, %v3983
    %v3985 = vpop.f32.mrf.mxu0
    %v3986 = vadd.f32 %v3871, %v3985
    %3987 = vdwg.mxu0
    %3988 = vmatprep.subr.mxu0 %v1609
    %3989 = vmatpush1.msra.mxu0 %v1608
    %3990 = vmatprep.subr.mxu0 %v1593
    %3991 = vmatpush1.msra.mxu0 %v1592
    %3992 = vmatprep.subr.mxu0 %v1577
    %3993 = vmatpush1.msra.mxu0 %v1576
    %3994 = vmatprep.subr.mxu0 %v1561
    %3995 = vmatpush1.msra.mxu0 %v1560
    %3996 = vmatprep.subr.mxu0 %v1545
    %3997 = vmatpush1.msra.mxu0 %v1544
    %3998 = vmatprep.subr.mxu0 %v1529
    %3999 = vmatpush1.msra.mxu0 %v1528
    %4000 = vmatprep.subr.mxu0 %v1513
    %4001 = vmatpush1.msra.mxu0 %v1512
    %4002 = vmatprep.subr.mxu0 %v1497
    %4003 = vmatpush1.msra.mxu0 %v1496
    %4004 = vmatprep.subr.mxu0 %v1481
    %4005 = vmatpush1.msra.mxu0 %v1480
    %4006 = vmatprep.subr.mxu0 %v1465
    %4007 = vmatpush1.msra.mxu0 %v1464
    %4008 = vmatprep.subr.mxu0 %v1449
    %4009 = vmatpush1.msra.mxu0 %v1448
    %4010 = vmatprep.subr.mxu0 %v1433
    %4011 = vmatpush1.msra.mxu0 %v1432
    %4012 = vmatprep.subr.mxu0 %v1417
    %4013 = vmatpush1.msra.mxu0 %v1416
    %4014 = vmatprep.subr.mxu0 %v1401
    %4015 = vmatpush1.msra.mxu0 %v1400
    %4016 = vmatprep.subr.mxu0 %v1385
    %4017 = vmatpush1.msra.mxu0 %v1384
    %4018 = vmatprep.subr.mxu0 %v1369
    %4019 = vmatpush1.msra.mxu0 %v1368
    %4020 = vmatprep.subr.mxu0 %v1865
    %4021 = vmatpush2.msra.mxu0 %v1864
    %4022 = vmatprep.subr.mxu0 %v1849
    %4023 = vmatpush2.msra.mxu0 %v1848
    %4024 = vmatprep.subr.mxu0 %v1833
    %4025 = vmatpush2.msra.mxu0 %v1832
    %4026 = vmatprep.subr.mxu0 %v1817
    %4027 = vmatpush2.msra.mxu0 %v1816
    %4028 = vmatprep.subr.mxu0 %v1801
    %4029 = vmatpush2.msra.mxu0 %v1800
    %4030 = vmatprep.subr.mxu0 %v1785
    %4031 = vmatpush2.msra.mxu0 %v1784
    %4032 = vmatprep.subr.mxu0 %v1769
    %4033 = vmatpush2.msra.mxu0 %v1768
    %4034 = vmatprep.subr.mxu0 %v1753
    %4035 = vmatpush2.msra.mxu0 %v1752
    %4036 = vmatprep.subr.mxu0 %v1737
    %4037 = vmatpush2.msra.mxu0 %v1736
    %4038 = vmatprep.subr.mxu0 %v1721
    %4039 = vmatpush2.msra.mxu0 %v1720
    %4040 = vmatprep.subr.mxu0 %v1705
    %4041 = vmatpush2.msra.mxu0 %v1704
    %4042 = vmatprep.subr.mxu0 %v1689
    %4043 = vmatpush2.msra.mxu0 %v1688
    %4044 = vmatprep.subr.mxu0 %v1673
    %4045 = vmatpush2.msra.mxu0 %v1672
    %4046 = vmatprep.subr.mxu0 %v1657
    %4047 = vmatpush2.msra.mxu0 %v1656
    %4048 = vmatprep.subr.mxu0 %v1641
    %4049 = vmatpush2.msra.mxu0 %v1640
    %4050 = vmatprep.subr.mxu0 %v1625
    %4051 = vmatpush2.msra.mxu0 %v1624
    %4052 = vmatprep.mubr.f32.mxu0 %v1319
    %4053 = vmatmul.mubr.f32.gmra.mxu0 %v1318
    %v4054 = vpop.f32.mrf.mxu0
    %v4055 = vpop.f32.mrf.mxu0
    %4056 = vmatprep.mubr.f32.mxu0 %v1323
    %4057 = vmatmul.mubr.f32.gmra.mxu0 %v1322
    %v4058 = vpop.f32.mrf.mxu0
    %v4059 = vpop.f32.mrf.mxu0
    %4060 = vmatprep.mubr.f32.mxu0 %v1327
    %4061 = vmatmul.mubr.f32.gmra.mxu0 %v1326
    %v4062 = vpop.f32.mrf.mxu0
    %v4063 = vadd.f32 0.0, %v4062
    %v4064 = vpop.f32.mrf.mxu0
    %v4065 = vadd.f32 0.0, %v4064
    %4066 = vmatprep.mubr.f32.mxu0 %v1331
    %4067 = vmatmul.mubr.f32.gmra.mxu0 %v1330
    %v4068 = vpop.f32.mrf.mxu0
    %v4069 = vadd.f32 0.0, %v4068
    %v4070 = vpop.f32.mrf.mxu0
    %v4071 = vadd.f32 0.0, %v4070
    %4072 = vmatprep.mubr.f32.mxu0 %v1335
    %4073 = vmatmul.mubr.f32.gmra.mxu0 %v1334
    %v4074 = vpop.f32.mrf.mxu0
    %v4075 = vadd.f32 0.0, %v4074
    %v4076 = vpop.f32.mrf.mxu0
    %v4077 = vadd.f32 0.0, %v4076
    %4078 = vmatprep.mubr.f32.mxu0 %v1339
    %4079 = vmatmul.mubr.f32.gmra.mxu0 %v1338
    %v4080 = vpop.f32.mrf.mxu0
    %v4081 = vadd.f32 0.0, %v4080
    %v4082 = vpop.f32.mrf.mxu0
    %v4083 = vadd.f32 0.0, %v4082
    %4084 = vmatprep.mubr.f32.mxu0 %v1343
    %4085 = vmatmul.mubr.f32.gmra.mxu0 %v1342
    %v4086 = vpop.f32.mrf.mxu0
    %v4087 = vadd.f32 0.0, %v4086
    %v4088 = vpop.f32.mrf.mxu0
    %v4089 = vadd.f32 0.0, %v4088
    %4090 = vmatprep.mubr.f32.mxu0 %v1347
    %4091 = vmatmul.mubr.f32.gmra.mxu0 %v1346
    %v4092 = vpop.f32.mrf.mxu0
    %v4093 = vadd.f32 0.0, %v4092
    %v4094 = vpop.f32.mrf.mxu0
    %v4095 = vadd.f32 0.0, %v4094
    %4096 = vmatprep.mubr.f32.mxu0 %v1351
    %4097 = vmatmul.mubr.f32.gmra.mxu0 %v1350
    %v4098 = vpop.f32.mrf.mxu0
    %v4099 = vadd.f32 0.0, %v4098
    %v4100 = vpop.f32.mrf.mxu0
    %v4101 = vadd.f32 0.0, %v4100
    %4102 = vdwg.mxu0
    %4103 = vmatprep.subr.mxu0 %v2121
    %4104 = vmatpush1.msra.mxu0 %v2120
    %4105 = vmatprep.subr.mxu0 %v2105
    %4106 = vmatpush1.msra.mxu0 %v2104
    %4107 = vmatprep.subr.mxu0 %v2089
    %4108 = vmatpush1.msra.mxu0 %v2088
    %4109 = vmatprep.subr.mxu0 %v2073
    %4110 = vmatpush1.msra.mxu0 %v2072
    %4111 = vmatprep.subr.mxu0 %v2057
    %4112 = vmatpush1.msra.mxu0 %v2056
    %4113 = vmatprep.subr.mxu0 %v2041
    %4114 = vmatpush1.msra.mxu0 %v2040
    %4115 = vmatprep.subr.mxu0 %v2025
    %4116 = vmatpush1.msra.mxu0 %v2024
    %4117 = vmatprep.subr.mxu0 %v2009
    %4118 = vmatpush1.msra.mxu0 %v2008
    %4119 = vmatprep.subr.mxu0 %v1993
    %4120 = vmatpush1.msra.mxu0 %v1992
    %4121 = vmatprep.subr.mxu0 %v1977
    %4122 = vmatpush1.msra.mxu0 %v1976
    %4123 = vmatprep.subr.mxu0 %v1961
    %4124 = vmatpush1.msra.mxu0 %v1960
    %4125 = vmatprep.subr.mxu0 %v1945
    %4126 = vmatpush1.msra.mxu0 %v1944
    %4127 = vmatprep.subr.mxu0 %v1929
    %4128 = vmatpush1.msra.mxu0 %v1928
    %4129 = vmatprep.subr.mxu0 %v1913
    %4130 = vmatpush1.msra.mxu0 %v1912
    %4131 = vmatprep.subr.mxu0 %v1897
    %4132 = vmatpush1.msra.mxu0 %v1896
    %4133 = vmatprep.subr.mxu0 %v1881
    %4134 = vmatpush1.msra.mxu0 %v1880
    %4135 = vmatprep.subr.mxu0 %v2377
    %4136 = vmatpush2.msra.mxu0 %v2376
    %4137 = vmatprep.subr.mxu0 %v2361
    %4138 = vmatpush2.msra.mxu0 %v2360
    %4139 = vmatprep.subr.mxu0 %v2345
    %4140 = vmatpush2.msra.mxu0 %v2344
    %4141 = vmatprep.subr.mxu0 %v2329
    %4142 = vmatpush2.msra.mxu0 %v2328
    %4143 = vmatprep.subr.mxu0 %v2313
    %4144 = vmatpush2.msra.mxu0 %v2312
    %4145 = vmatprep.subr.mxu0 %v2297
    %4146 = vmatpush2.msra.mxu0 %v2296
    %4147 = vmatprep.subr.mxu0 %v2281
    %4148 = vmatpush2.msra.mxu0 %v2280
    %4149 = vmatprep.subr.mxu0 %v2265
    %4150 = vmatpush2.msra.mxu0 %v2264
    %4151 = vmatprep.subr.mxu0 %v2249
    %4152 = vmatpush2.msra.mxu0 %v2248
    %4153 = vmatprep.subr.mxu0 %v2233
    %4154 = vmatpush2.msra.mxu0 %v2232
    %4155 = vmatprep.subr.mxu0 %v2217
    %4156 = vmatpush2.msra.mxu0 %v2216
    %4157 = vmatprep.subr.mxu0 %v2201
    %4158 = vmatpush2.msra.mxu0 %v2200
    %4159 = vmatprep.subr.mxu0 %v2185
    %4160 = vmatpush2.msra.mxu0 %v2184
    %4161 = vmatprep.subr.mxu0 %v2169
    %4162 = vmatpush2.msra.mxu0 %v2168
    %4163 = vmatprep.subr.mxu0 %v2153
    %4164 = vmatpush2.msra.mxu0 %v2152
    %4165 = vmatprep.subr.mxu0 %v2137
    %4166 = vmatpush2.msra.mxu0 %v2136
    %4167 = vmatprep.mubr.f32.mxu0 %v1321
    %4168 = vmatmul.mubr.f32.gmra.mxu0 %v1320
    %v4169 = vpop.f32.mrf.mxu0
    %v4170 = vpop.f32.mrf.mxu0
    %4171 = vmatprep.mubr.f32.mxu0 %v1325
    %4172 = vmatmul.mubr.f32.gmra.mxu0 %v1324
    %v4173 = vpop.f32.mrf.mxu0
    %v4174 = vpop.f32.mrf.mxu0
    %4175 = vmatprep.mubr.f32.mxu0 %v1329
    %4176 = vmatmul.mubr.f32.gmra.mxu0 %v1328
    %v4177 = vpop.f32.mrf.mxu0
    %v4178 = vadd.f32 %v4063, %v4177
    %v4179 = vpop.f32.mrf.mxu0
    %v4180 = vadd.f32 %v4065, %v4179
    %4181 = vmatprep.mubr.f32.mxu0 %v1333
    %4182 = vmatmul.mubr.f32.gmra.mxu0 %v1332
    %v4183 = vpop.f32.mrf.mxu0
    %v4184 = vadd.f32 %v4069, %v4183
    %v4185 = vpop.f32.mrf.mxu0
    %v4186 = vadd.f32 %v4071, %v4185
    %4187 = vmatprep.mubr.f32.mxu0 %v1337
    %4188 = vmatmul.mubr.f32.gmra.mxu0 %v1336
    %v4189 = vpop.f32.mrf.mxu0
    %v4190 = vadd.f32 %v4075, %v4189
    %v4191 = vpop.f32.mrf.mxu0
    %v4192 = vadd.f32 %v4077, %v4191
    %4193 = vmatprep.mubr.f32.mxu0 %v1341
    %4194 = vmatmul.mubr.f32.gmra.mxu0 %v1340
    %v4195 = vpop.f32.mrf.mxu0
    %v4196 = vadd.f32 %v4081, %v4195
    %v4197 = vpop.f32.mrf.mxu0
    %v4198 = vadd.f32 %v4083, %v4197
    %4199 = vmatprep.mubr.f32.mxu0 %v1345
    %4200 = vmatmul.mubr.f32.gmra.mxu0 %v1344
    %v4201 = vpop.f32.mrf.mxu0
    %v4202 = vadd.f32 %v4087, %v4201
    %v4203 = vpop.f32.mrf.mxu0
    %v4204 = vadd.f32 %v4089, %v4203
    %4205 = vmatprep.mubr.f32.mxu0 %v1349
    %4206 = vmatmul.mubr.f32.gmra.mxu0 %v1348
    %v4207 = vpop.f32.mrf.mxu0
    %v4208 = vadd.f32 %v4093, %v4207
    %v4209 = vpop.f32.mrf.mxu0
    %v4210 = vadd.f32 %v4095, %v4209
    %4211 = vmatprep.mubr.f32.mxu0 %v1353
    %4212 = vmatmul.mubr.f32.gmra.mxu0 %v1352
    %v4213 = vpop.f32.mrf.mxu0
    %v4214 = vadd.f32 %v4099, %v4213
    %v4215 = vpop.f32.mrf.mxu0
    %v4216 = vadd.f32 %v4101, %v4215
    %4217 = vdwg.mxu0
    %v4218 = vld [vmem:[#allocation10] sm:$0xf]
    %v4219 = vadd.f32 %v2564, %v3480
    %v4220 = vadd.f32 %v2566, %v3482
    %v4221 = vadd.f32 %v2794, %v3710
    %v4222 = vadd.f32 %v2796, %v3712
    %v4223 = vadd.f32 %v2570, %v3486
    %v4224 = vadd.f32 %v2572, %v3488
    %v4225 = vadd.f32 %v2800, %v3716
    %v4226 = vadd.f32 %v2802, %v3718
    %v4227 = vadd.f32 %v2576, %v3492
    %v4228 = vadd.f32 %v2578, %v3494
    %v4229 = vadd.f32 %v2806, %v3722
    %v4230 = vadd.f32 %v2808, %v3724
    %v4231 = vadd.f32 %v2582, %v3498
    %v4232 = vadd.f32 %v2584, %v3500
    %v4233 = vadd.f32 %v2812, %v3728
    %v4234 = vadd.f32 %v2814, %v3730
    %v4235 = vadd.f32 %v2588, %v3504
    %v4236 = vadd.f32 %v2590, %v3506
    %v4237 = vadd.f32 %v2818, %v3734
    %v4238 = vadd.f32 %v2820, %v3736
    %v4239 = vadd.f32 %v2594, %v3510
    %v4240 = vadd.f32 %v2596, %v3512
    %v4241 = vadd.f32 %v2824, %v3740
    %v4242 = vadd.f32 %v2826, %v3742
    %v4243 = vadd.f32 %v2600, %v3516
    %v4244 = vadd.f32 %v2602, %v3518
    %v4245 = vadd.f32 %v2830, %v3746
    %v4246 = vadd.f32 %v2832, %v3748
    %v4248 = vlaneseq
    %v4249 = vshrl.u32 %v4248, 7
    %v4250 = vsub.s32 0, %v4249
    %v4251 = vrot.slane %v4218, %v4250
    %v4252 = vlaneseq
    %v4253 = vshrl.u32 %v4252, 7
    %v4254 = vsub.s32 1, %v4253
    %v4255 = vrot.slane %v4218, %v4254
    %v4256 = vlaneseq
    %v4257 = vshrl.u32 %v4256, 7
    %v4258 = vsub.s32 2, %v4257
    %v4259 = vrot.slane %v4218, %v4258
    %v4260 = vlaneseq
    %v4261 = vshrl.u32 %v4260, 7
    %v4262 = vsub.s32 3, %v4261
    %v4263 = vrot.slane %v4218, %v4262
    %v4268 = vadd.f32 %v4219, %v4251
    %v4269 = vadd.f32 %v4220, %v4255
    %v4270 = vadd.f32 %v4221, %v4259
    %v4271 = vadd.f32 %v4222, %v4263
    %v4272 = vadd.f32 %v4223, %v4251
    %v4273 = vadd.f32 %v4224, %v4255
    %v4274 = vadd.f32 %v4225, %v4259
    %v4275 = vadd.f32 %v4226, %v4263
    %v4276 = vadd.f32 %v4227, %v4251
    %v4277 = vadd.f32 %v4228, %v4255
    %v4278 = vadd.f32 %v4229, %v4259
    %v4279 = vadd.f32 %v4230, %v4263
    %v4280 = vadd.f32 %v4231, %v4251
    %v4281 = vadd.f32 %v4232, %v4255
    %v4282 = vadd.f32 %v4233, %v4259
    %v4283 = vadd.f32 %v4234, %v4263
    %v4284 = vadd.f32 %v4235, %v4251
    %v4285 = vadd.f32 %v4236, %v4255
    %v4286 = vadd.f32 %v4237, %v4259
    %v4287 = vadd.f32 %v4238, %v4263
    %v4288 = vadd.f32 %v4239, %v4251
    %v4289 = vadd.f32 %v4240, %v4255
    %v4290 = vadd.f32 %v4241, %v4259
    %v4291 = vadd.f32 %v4242, %v4263
    %v4292 = vadd.f32 %v4243, %v4251
    %v4293 = vadd.f32 %v4244, %v4255
    %v4294 = vadd.f32 %v4245, %v4259
    %v4295 = vadd.f32 %v4246, %v4263
    %v4296 = vmax.f32 %v4268, 0.0
    %v4297 = vmax.f32 %v4269, 0.0
    %v4298 = vmax.f32 %v4270, 0.0
    %v4299 = vmax.f32 %v4271, 0.0
    %v4300 = vmax.f32 %v4272, 0.0
    %v4301 = vmax.f32 %v4273, 0.0
    %v4302 = vmax.f32 %v4274, 0.0
    %v4303 = vmax.f32 %v4275, 0.0
    %v4304 = vmax.f32 %v4276, 0.0
    %v4305 = vmax.f32 %v4277, 0.0
    %v4306 = vmax.f32 %v4278, 0.0
    %v4307 = vmax.f32 %v4279, 0.0
    %v4308 = vmax.f32 %v4280, 0.0
    %v4309 = vmax.f32 %v4281, 0.0
    %v4310 = vmax.f32 %v4282, 0.0
    %v4311 = vmax.f32 %v4283, 0.0
    %v4312 = vmax.f32 %v4284, 0.0
    %v4313 = vmax.f32 %v4285, 0.0
    %v4314 = vmax.f32 %v4286, 0.0
    %v4315 = vmax.f32 %v4287, 0.0
    %v4316 = vmax.f32 %v4288, 0.0
    %v4317 = vmax.f32 %v4289, 0.0
    %v4318 = vmax.f32 %v4290, 0.0
    %v4319 = vmax.f32 %v4291, 0.0
    %v4320 = vmax.f32 %v4292, 0.0
    %v4321 = vmax.f32 %v4293, 0.0
    %v4322 = vmax.f32 %v4294, 0.0
    %v4323 = vmax.f32 %v4295, 0.0
    %v4324 = vadd.f32 %v3024, %v3948
    %v4325 = vadd.f32 %v3026, %v3950
    %v4326 = vadd.f32 %v3254, %v4178
    %v4327 = vadd.f32 %v3256, %v4180
    %v4328 = vadd.f32 %v3030, %v3954
    %v4329 = vadd.f32 %v3032, %v3956
    %v4330 = vadd.f32 %v3260, %v4184
    %v4331 = vadd.f32 %v3262, %v4186
    %v4332 = vadd.f32 %v3036, %v3960
    %v4333 = vadd.f32 %v3038, %v3962
    %v4334 = vadd.f32 %v3266, %v4190
    %v4335 = vadd.f32 %v3268, %v4192
    %v4336 = vadd.f32 %v3042, %v3966
    %v4337 = vadd.f32 %v3044, %v3968
    %v4338 = vadd.f32 %v3272, %v4196
    %v4339 = vadd.f32 %v3274, %v4198
    %v4340 = vadd.f32 %v3048, %v3972
    %v4341 = vadd.f32 %v3050, %v3974
    %v4342 = vadd.f32 %v3278, %v4202
    %v4343 = vadd.f32 %v3280, %v4204
    %v4344 = vadd.f32 %v3054, %v3978
    %v4345 = vadd.f32 %v3056, %v3980
    %v4346 = vadd.f32 %v3284, %v4208
    %v4347 = vadd.f32 %v3286, %v4210
    %v4348 = vadd.f32 %v3060, %v3984
    %v4349 = vadd.f32 %v3062, %v3986
    %v4350 = vadd.f32 %v3290, %v4214
    %v4351 = vadd.f32 %v3292, %v4216
    %v4352 = vadd.f32 %v4324, %v4251
    %v4353 = vadd.f32 %v4325, %v4255
    %v4354 = vadd.f32 %v4326, %v4259
    %v4355 = vadd.f32 %v4327, %v4263
    %v4356 = vadd.f32 %v4328, %v4251
    %v4357 = vadd.f32 %v4329, %v4255
    %v4358 = vadd.f32 %v4330, %v4259
    %v4359 = vadd.f32 %v4331, %v4263
    %v4360 = vadd.f32 %v4332, %v4251
    %v4361 = vadd.f32 %v4333, %v4255
    %v4362 = vadd.f32 %v4334, %v4259
    %v4363 = vadd.f32 %v4335, %v4263
    %v4364 = vadd.f32 %v4336, %v4251
    %v4365 = vadd.f32 %v4337, %v4255
    %v4366 = vadd.f32 %v4338, %v4259
    %v4367 = vadd.f32 %v4339, %v4263
    %v4368 = vadd.f32 %v4340, %v4251
    %v4369 = vadd.f32 %v4341, %v4255
    %v4370 = vadd.f32 %v4342, %v4259
    %v4371 = vadd.f32 %v4343, %v4263
    %v4372 = vadd.f32 %v4344, %v4251
    %v4373 = vadd.f32 %v4345, %v4255
    %v4374 = vadd.f32 %v4346, %v4259
    %v4375 = vadd.f32 %v4347, %v4263
    %v4376 = vadd.f32 %v4348, %v4251
    %v4377 = vadd.f32 %v4349, %v4255
    %v4378 = vadd.f32 %v4350, %v4259
    %v4379 = vadd.f32 %v4351, %v4263
    %v4380 = vmax.f32 %v4352, 0.0
    %v4381 = vmax.f32 %v4353, 0.0
    %v4382 = vmax.f32 %v4354, 0.0
    %v4383 = vmax.f32 %v4355, 0.0
    %v4384 = vmax.f32 %v4356, 0.0
    %v4385 = vmax.f32 %v4357, 0.0
    %v4386 = vmax.f32 %v4358, 0.0
    %v4387 = vmax.f32 %v4359, 0.0
    %v4388 = vmax.f32 %v4360, 0.0
    %v4389 = vmax.f32 %v4361, 0.0
    %v4390 = vmax.f32 %v4362, 0.0
    %v4391 = vmax.f32 %v4363, 0.0
    %v4392 = vmax.f32 %v4364, 0.0
    %v4393 = vmax.f32 %v4365, 0.0
    %v4394 = vmax.f32 %v4366, 0.0
    %v4395 = vmax.f32 %v4367, 0.0
    %v4396 = vmax.f32 %v4368, 0.0
    %v4397 = vmax.f32 %v4369, 0.0
    %v4398 = vmax.f32 %v4370, 0.0
    %v4399 = vmax.f32 %v4371, 0.0
    %v4400 = vmax.f32 %v4372, 0.0
    %v4401 = vmax.f32 %v4373, 0.0
    %v4402 = vmax.f32 %v4374, 0.0
    %v4403 = vmax.f32 %v4375, 0.0
    %v4404 = vmax.f32 %v4376, 0.0
    %v4405 = vmax.f32 %v4377, 0.0
    %v4406 = vmax.f32 %v4378, 0.0
    %v4407 = vmax.f32 %v4379, 0.0
    %4408 = vst [vmem:[#allocation3] sm:$0xff] 0.0
    %4409 = vst [vmem:[#allocation3 + $0x8] sm:$0xff] 0.0
    %4410 = vst [vmem:[#allocation3 + $0x10] sm:$0xff] 0.0
    %4411 = vst [vmem:[#allocation3 + $0x18] sm:$0xff] 0.0
    %4412 = vst [vmem:[#allocation3 + $0x1e0] sm:$0xff] 0.0
    %4413 = vst [vmem:[#allocation3 + $0x1e8] sm:$0xff] 0.0
    %4414 = vst [vmem:[#allocation3 + $0x1f0] sm:$0xff] 0.0
    %4415 = vst [vmem:[#allocation3 + $0x1f8] sm:$0xff] 0.0
    %4416 = vst [vmem:[#allocation3 + $0x20] sm:$0xff] %v4296
    %4417 = vst [vmem:[#allocation3 + $0x28] sm:$0xff] %v4297
    %4418 = vst [vmem:[#allocation3 + $0x30] sm:$0xff] %v4298
    %4419 = vst [vmem:[#allocation3 + $0x38] sm:$0xff] %v4299
    %4420 = vst [vmem:[#allocation3 + $0x40] sm:$0xff] %v4380
    %4421 = vst [vmem:[#allocation3 + $0x48] sm:$0xff] %v4381
    %4422 = vst [vmem:[#allocation3 + $0x50] sm:$0xff] %v4382
    %4423 = vst [vmem:[#allocation3 + $0x58] sm:$0xff] %v4383
    %4424 = vst [vmem:[#allocation3 + $0x60] sm:$0xff] %v4300
    %4425 = vst [vmem:[#allocation3 + $0x68] sm:$0xff] %v4301
    %4426 = vst [vmem:[#allocation3 + $0x70] sm:$0xff] %v4302
    %4427 = vst [vmem:[#allocation3 + $0x78] sm:$0xff] %v4303
    %4428 = vst [vmem:[#allocation3 + $0x80] sm:$0xff] %v4384
    %4429 = vst [vmem:[#allocation3 + $0x88] sm:$0xff] %v4385
    %4430 = vst [vmem:[#allocation3 + $0x90] sm:$0xff] %v4386
    %4431 = vst [vmem:[#allocation3 + $0x98] sm:$0xff] %v4387
    %4432 = vst [vmem:[#allocation3 + $0xa0] sm:$0xff] %v4304
    %4433 = vst [vmem:[#allocation3 + $0xa8] sm:$0xff] %v4305
    %4434 = vst [vmem:[#allocation3 + $0xb0] sm:$0xff] %v4306
    %4435 = vst [vmem:[#allocation3 + $0xb8] sm:$0xff] %v4307
    %4436 = vst [vmem:[#allocation3 + $0xc0] sm:$0xff] %v4388
    %4437 = vst [vmem:[#allocation3 + $0xc8] sm:$0xff] %v4389
    %4438 = vst [vmem:[#allocation3 + $0xd0] sm:$0xff] %v4390
    %4439 = vst [vmem:[#allocation3 + $0xd8] sm:$0xff] %v4391
    %4440 = vst [vmem:[#allocation3 + $0xe0] sm:$0xff] %v4308
    %4441 = vst [vmem:[#allocation3 + $0xe8] sm:$0xff] %v4309
    %4442 = vst [vmem:[#allocation3 + $0xf0] sm:$0xff] %v4310
    %4443 = vst [vmem:[#allocation3 + $0xf8] sm:$0xff] %v4311
    %4444 = vst [vmem:[#allocation3 + $0x100] sm:$0xff] %v4392
    %4445 = vst [vmem:[#allocation3 + $0x108] sm:$0xff] %v4393
    %4446 = vst [vmem:[#allocation3 + $0x110] sm:$0xff] %v4394
    %4447 = vst [vmem:[#allocation3 + $0x118] sm:$0xff] %v4395
    %4448 = vst [vmem:[#allocation3 + $0x120] sm:$0xff] %v4312
    %4449 = vst [vmem:[#allocation3 + $0x128] sm:$0xff] %v4313
    %4450 = vst [vmem:[#allocation3 + $0x130] sm:$0xff] %v4314
    %4451 = vst [vmem:[#allocation3 + $0x138] sm:$0xff] %v4315
    %4452 = vst [vmem:[#allocation3 + $0x140] sm:$0xff] %v4396
    %4453 = vst [vmem:[#allocation3 + $0x148] sm:$0xff] %v4397
    %4454 = vst [vmem:[#allocation3 + $0x150] sm:$0xff] %v4398
    %4455 = vst [vmem:[#allocation3 + $0x158] sm:$0xff] %v4399
    %4456 = vst [vmem:[#allocation3 + $0x160] sm:$0xff] %v4316
    %4457 = vst [vmem:[#allocation3 + $0x168] sm:$0xff] %v4317
    %4458 = vst [vmem:[#allocation3 + $0x170] sm:$0xff] %v4318
    %4459 = vst [vmem:[#allocation3 + $0x178] sm:$0xff] %v4319
    %4460 = vst [vmem:[#allocation3 + $0x180] sm:$0xff] %v4400
    %4461 = vst [vmem:[#allocation3 + $0x188] sm:$0xff] %v4401
    %4462 = vst [vmem:[#allocation3 + $0x190] sm:$0xff] %v4402
    %4463 = vst [vmem:[#allocation3 + $0x198] sm:$0xff] %v4403
    %4464 = vst [vmem:[#allocation3 + $0x1a0] sm:$0xff] %v4320
    %4465 = vst [vmem:[#allocation3 + $0x1a8] sm:$0xff] %v4321
    %4466 = vst [vmem:[#allocation3 + $0x1b0] sm:$0xff] %v4322
    %4467 = vst [vmem:[#allocation3 + $0x1b8] sm:$0xff] %v4323
    %4468 = vst [vmem:[#allocation3 + $0x1c0] sm:$0xff] %v4404
    %4469 = vst [vmem:[#allocation3 + $0x1c8] sm:$0xff] %v4405
    %4470 = vst [vmem:[#allocation3 + $0x1d0] sm:$0xff] %v4406
    %4471 = vst [vmem:[#allocation3 + $0x1d8] sm:$0xff] %v4407
    %v4472 = vld [vmem:[#allocation3 + $0x20] sm:$0xff]
    %v4473 = vld [vmem:[#allocation3 + $0x28] sm:$0xff]
    %v4474 = vld [vmem:[#allocation3 + $0x30] sm:$0xff]
    %v4475 = vld [vmem:[#allocation3 + $0x38] sm:$0xff]
    %v4476 = vld [vmem:[#allocation3 + $0x40] sm:$0xff]
    %v4477 = vld [vmem:[#allocation3 + $0x48] sm:$0xff]
    %v4478 = vld [vmem:[#allocation3 + $0x50] sm:$0xff]
    %v4479 = vld [vmem:[#allocation3 + $0x58] sm:$0xff]
    %v4480 = vld [vmem:[#allocation3 + $0x60] sm:$0xff]
    %v4481 = vld [vmem:[#allocation3 + $0x68] sm:$0xff]
    %v4482 = vld [vmem:[#allocation3 + $0x70] sm:$0xff]
    %v4483 = vld [vmem:[#allocation3 + $0x78] sm:$0xff]
    %v4484 = vld [vmem:[#allocation3 + $0x80] sm:$0xff]
    %v4485 = vld [vmem:[#allocation3 + $0x88] sm:$0xff]
    %v4486 = vld [vmem:[#allocation3 + $0x90] sm:$0xff]
    %v4487 = vld [vmem:[#allocation3 + $0x98] sm:$0xff]
    %v4488 = vld [vmem:[#allocation3 + $0xa0] sm:$0xff]
    %v4489 = vld [vmem:[#allocation3 + $0xa8] sm:$0xff]
    %v4490 = vld [vmem:[#allocation3 + $0xb0] sm:$0xff]
    %v4491 = vld [vmem:[#allocation3 + $0xb8] sm:$0xff]
    %v4492 = vld [vmem:[#allocation3 + $0xc0] sm:$0xff]
    %v4493 = vld [vmem:[#allocation3 + $0xc8] sm:$0xff]
    %v4494 = vld [vmem:[#allocation3 + $0xd0] sm:$0xff]
    %v4495 = vld [vmem:[#allocation3 + $0xd8] sm:$0xff]
    %v4496 = vld [vmem:[#allocation3 + $0xe0] sm:$0xff]
    %v4497 = vld [vmem:[#allocation3 + $0xe8] sm:$0xff]
    %v4498 = vld [vmem:[#allocation3 + $0xf0] sm:$0xff]
    %v4499 = vld [vmem:[#allocation3 + $0xf8] sm:$0xff]
    %v4500 = vld [vmem:[#allocation3 + $0x100] sm:$0xff]
    %v4501 = vld [vmem:[#allocation3 + $0x108] sm:$0xff]
    %v4502 = vld [vmem:[#allocation3 + $0x110] sm:$0xff]
    %v4503 = vld [vmem:[#allocation3 + $0x118] sm:$0xff]
    %v4504 = vld [vmem:[#allocation3 + $0x120] sm:$0xff]
    %v4505 = vld [vmem:[#allocation3 + $0x128] sm:$0xff]
    %v4506 = vld [vmem:[#allocation3 + $0x130] sm:$0xff]
    %v4507 = vld [vmem:[#allocation3 + $0x138] sm:$0xff]
    %v4508 = vld [vmem:[#allocation3 + $0x140] sm:$0xff]
    %v4509 = vld [vmem:[#allocation3 + $0x148] sm:$0xff]
    %v4510 = vld [vmem:[#allocation3 + $0x150] sm:$0xff]
    %v4511 = vld [vmem:[#allocation3 + $0x158] sm:$0xff]
    %v4512 = vld [vmem:[#allocation3 + $0x160] sm:$0xff]
    %v4513 = vld [vmem:[#allocation3 + $0x168] sm:$0xff]
    %v4514 = vld [vmem:[#allocation3 + $0x170] sm:$0xff]
    %v4515 = vld [vmem:[#allocation3 + $0x178] sm:$0xff]
    %v4516 = vld [vmem:[#allocation3 + $0x180] sm:$0xff]
    %v4517 = vld [vmem:[#allocation3 + $0x188] sm:$0xff]
    %v4518 = vld [vmem:[#allocation3 + $0x190] sm:$0xff]
    %v4519 = vld [vmem:[#allocation3 + $0x198] sm:$0xff]
    %v4520 = vld [vmem:[#allocation3 + $0x1a0] sm:$0xff]
    %v4521 = vld [vmem:[#allocation3 + $0x1a8] sm:$0xff]
    %v4522 = vld [vmem:[#allocation3 + $0x1b0] sm:$0xff]
    %v4523 = vld [vmem:[#allocation3 + $0x1b8] sm:$0xff]
    %v4524 = vld [vmem:[#allocation3 + $0x1c0] sm:$0xff]
    %v4525 = vld [vmem:[#allocation3 + $0x1c8] sm:$0xff]
    %v4526 = vld [vmem:[#allocation3 + $0x1d0] sm:$0xff]
    %v4527 = vld [vmem:[#allocation3 + $0x1d8] sm:$0xff]
    %v4528 = vld [vmem:[#allocation3] sm:$0xff]
    %v4529 = vld [vmem:[#allocation3 + $0x8] sm:$0xff]
    %v4530 = vld [vmem:[#allocation3 + $0x10] sm:$0xff]
    %v4531 = vld [vmem:[#allocation3 + $0x18] sm:$0xff]
    %v4532 = vld [vmem:[#allocation3 + $0x40] sm:$0xff]
    %v4533 = vld [vmem:[#allocation3 + $0x48] sm:$0xff]
    %v4534 = vld [vmem:[#allocation3 + $0x50] sm:$0xff]
    %v4535 = vld [vmem:[#allocation3 + $0x58] sm:$0xff]
    %v4536 = vld [vmem:[#allocation3 + $0x60] sm:$0xff]
    %v4537 = vld [vmem:[#allocation3 + $0x68] sm:$0xff]
    %v4538 = vld [vmem:[#allocation3 + $0x70] sm:$0xff]
    %v4539 = vld [vmem:[#allocation3 + $0x78] sm:$0xff]
    %v4540 = vld [vmem:[#allocation3 + $0x80] sm:$0xff]
    %v4541 = vld [vmem:[#allocation3 + $0x88] sm:$0xff]
    %v4542 = vld [vmem:[#allocation3 + $0x90] sm:$0xff]
    %v4543 = vld [vmem:[#allocation3 + $0x98] sm:$0xff]
    %v4544 = vld [vmem:[#allocation3 + $0xa0] sm:$0xff]
    %v4545 = vld [vmem:[#allocation3 + $0xa8] sm:$0xff]
    %v4546 = vld [vmem:[#allocation3 + $0xb0] sm:$0xff]
    %v4547 = vld [vmem:[#allocation3 + $0xb8] sm:$0xff]
    %v4548 = vld [vmem:[#allocation3 + $0xc0] sm:$0xff]
    %v4549 = vld [vmem:[#allocation3 + $0xc8] sm:$0xff]
    %v4550 = vld [vmem:[#allocation3 + $0xd0] sm:$0xff]
    %v4551 = vld [vmem:[#allocation3 + $0xd8] sm:$0xff]
    %v4552 = vld [vmem:[#allocation3 + $0xe0] sm:$0xff]
    %v4553 = vld [vmem:[#allocation3 + $0xe8] sm:$0xff]
    %v4554 = vld [vmem:[#allocation3 + $0xf0] sm:$0xff]
    %v4555 = vld [vmem:[#allocation3 + $0xf8] sm:$0xff]
    %v4556 = vld [vmem:[#allocation3 + $0x100] sm:$0xff]
    %v4557 = vld [vmem:[#allocation3 + $0x108] sm:$0xff]
    %v4558 = vld [vmem:[#allocation3 + $0x110] sm:$0xff]
    %v4559 = vld [vmem:[#allocation3 + $0x118] sm:$0xff]
    %v4560 = vld [vmem:[#allocation3 + $0x120] sm:$0xff]
    %v4561 = vld [vmem:[#allocation3 + $0x128] sm:$0xff]
    %v4562 = vld [vmem:[#allocation3 + $0x130] sm:$0xff]
    %v4563 = vld [vmem:[#allocation3 + $0x138] sm:$0xff]
    %v4564 = vld [vmem:[#allocation3 + $0x140] sm:$0xff]
    %v4565 = vld [vmem:[#allocation3 + $0x148] sm:$0xff]
    %v4566 = vld [vmem:[#allocation3 + $0x150] sm:$0xff]
    %v4567 = vld [vmem:[#allocation3 + $0x158] sm:$0xff]
    %v4568 = vld [vmem:[#allocation3 + $0x160] sm:$0xff]
    %v4569 = vld [vmem:[#allocation3 + $0x168] sm:$0xff]
    %v4570 = vld [vmem:[#allocation3 + $0x170] sm:$0xff]
    %v4571 = vld [vmem:[#allocation3 + $0x178] sm:$0xff]
    %v4572 = vld [vmem:[#allocation3 + $0x180] sm:$0xff]
    %v4573 = vld [vmem:[#allocation3 + $0x188] sm:$0xff]
    %v4574 = vld [vmem:[#allocation3 + $0x190] sm:$0xff]
    %v4575 = vld [vmem:[#allocation3 + $0x198] sm:$0xff]
    %v4576 = vld [vmem:[#allocation3 + $0x1a0] sm:$0xff]
    %v4577 = vld [vmem:[#allocation3 + $0x1a8] sm:$0xff]
    %v4578 = vld [vmem:[#allocation3 + $0x1b0] sm:$0xff]
    %v4579 = vld [vmem:[#allocation3 + $0x1b8] sm:$0xff]
    %v4580 = vld [vmem:[#allocation3 + $0x1c0] sm:$0xff]
    %v4581 = vld [vmem:[#allocation3 + $0x1c8] sm:$0xff]
    %v4582 = vld [vmem:[#allocation3 + $0x1d0] sm:$0xff]
    %v4583 = vld [vmem:[#allocation3 + $0x1d8] sm:$0xff]
    %v4584 = vld [vmem:[#allocation3 + $0x1e0] sm:$0xff]
    %v4585 = vld [vmem:[#allocation3 + $0x1e8] sm:$0xff]
    %v4586 = vld [vmem:[#allocation3 + $0x1f0] sm:$0xff]
    %v4587 = vld [vmem:[#allocation3 + $0x1f8] sm:$0xff]
    %v4588 = vld [vmem:[#allocation4] sm:$0x1]
    %s4589 = scalar_lea.vmem %s5, 512
    %v4590 = vld [vmem:[%s4589] sm:$0xff]
    %v4591 = vld [vmem:[%s4589 + $0x8] sm:$0xff]
    %v4592 = vld [vmem:[%s4589 + $0x10] sm:$0xff]
    %v4593 = vld [vmem:[%s4589 + $0x18] sm:$0xff]
    %v4594 = vld [vmem:[%s4589 + $0x20] sm:$0xff]
    %v4595 = vld [vmem:[%s4589 + $0x28] sm:$0xff]
    %v4596 = vld [vmem:[%s4589 + $0x30] sm:$0xff]
    %v4597 = vld [vmem:[%s4589 + $0x38] sm:$0xff]
    %v4598 = vld [vmem:[%s4589 + $0x40] sm:$0xff]
    %v4599 = vld [vmem:[%s4589 + $0x48] sm:$0xff]
    %v4600 = vld [vmem:[%s4589 + $0x50] sm:$0xff]
    %v4601 = vld [vmem:[%s4589 + $0x58] sm:$0xff]
    %v4602 = vld [vmem:[%s4589 + $0x60] sm:$0xff]
    %v4603 = vld [vmem:[%s4589 + $0x68] sm:$0xff]
    %v4604 = vld [vmem:[%s4589 + $0x70] sm:$0xff]
    %v4605 = vld [vmem:[%s4589 + $0x78] sm:$0xff]
    %v4606 = vld [vmem:[%s4589 + $0x80] sm:$0xff]
    %v4607 = vld [vmem:[%s4589 + $0x88] sm:$0xff]
    %v4608 = vld [vmem:[%s4589 + $0x90] sm:$0xff]
    %v4609 = vld [vmem:[%s4589 + $0x98] sm:$0xff]
    %v4610 = vld [vmem:[%s4589 + $0xa0] sm:$0xff]
    %v4611 = vld [vmem:[%s4589 + $0xa8] sm:$0xff]
    %v4612 = vld [vmem:[%s4589 + $0xb0] sm:$0xff]
    %v4613 = vld [vmem:[%s4589 + $0xb8] sm:$0xff]
    %v4614 = vld [vmem:[%s4589 + $0xc0] sm:$0xff]
    %v4615 = vld [vmem:[%s4589 + $0xc8] sm:$0xff]
    %v4616 = vld [vmem:[%s4589 + $0xd0] sm:$0xff]
    %v4617 = vld [vmem:[%s4589 + $0xd8] sm:$0xff]
    %v4618 = vld [vmem:[%s4589 + $0xe0] sm:$0xff]
    %v4619 = vld [vmem:[%s4589 + $0xe8] sm:$0xff]
    %v4620 = vld [vmem:[%s4589 + $0xf0] sm:$0xff]
    %v4621 = vld [vmem:[%s4589 + $0xf8] sm:$0xff]
    %v4622 = vld [vmem:[%s4589 + $0x100] sm:$0xff]
    %v4623 = vld [vmem:[%s4589 + $0x108] sm:$0xff]
    %v4624 = vld [vmem:[%s4589 + $0x110] sm:$0xff]
    %v4625 = vld [vmem:[%s4589 + $0x118] sm:$0xff]
    %v4626 = vld [vmem:[%s4589 + $0x120] sm:$0xff]
    %v4627 = vld [vmem:[%s4589 + $0x128] sm:$0xff]
    %v4628 = vld [vmem:[%s4589 + $0x130] sm:$0xff]
    %v4629 = vld [vmem:[%s4589 + $0x138] sm:$0xff]
    %v4630 = vld [vmem:[%s4589 + $0x140] sm:$0xff]
    %v4631 = vld [vmem:[%s4589 + $0x148] sm:$0xff]
    %v4632 = vld [vmem:[%s4589 + $0x150] sm:$0xff]
    %v4633 = vld [vmem:[%s4589 + $0x158] sm:$0xff]
    %v4634 = vld [vmem:[%s4589 + $0x160] sm:$0xff]
    %v4635 = vld [vmem:[%s4589 + $0x168] sm:$0xff]
    %v4636 = vld [vmem:[%s4589 + $0x170] sm:$0xff]
    %v4637 = vld [vmem:[%s4589 + $0x178] sm:$0xff]
    %v4638 = vld [vmem:[%s4589 + $0x180] sm:$0xff]
    %v4639 = vld [vmem:[%s4589 + $0x188] sm:$0xff]
    %v4640 = vld [vmem:[%s4589 + $0x190] sm:$0xff]
    %v4641 = vld [vmem:[%s4589 + $0x198] sm:$0xff]
    %v4642 = vld [vmem:[%s4589 + $0x1a0] sm:$0xff]
    %v4643 = vld [vmem:[%s4589 + $0x1a8] sm:$0xff]
    %v4644 = vld [vmem:[%s4589 + $0x1b0] sm:$0xff]
    %v4645 = vld [vmem:[%s4589 + $0x1b8] sm:$0xff]
    %v4646 = vld [vmem:[%s4589 + $0x1c0] sm:$0xff]
    %v4647 = vld [vmem:[%s4589 + $0x1c8] sm:$0xff]
    %v4648 = vld [vmem:[%s4589 + $0x1d0] sm:$0xff]
    %v4649 = vld [vmem:[%s4589 + $0x1d8] sm:$0xff]
    %v4650 = vld [vmem:[%s4589 + $0x1e0] sm:$0xff]
    %v4651 = vld [vmem:[%s4589 + $0x1e8] sm:$0xff]
    %v4652 = vld [vmem:[%s4589 + $0x1f0] sm:$0xff]
    %v4653 = vld [vmem:[%s4589 + $0x1f8] sm:$0xff]
    %s4654 = scalar_lea.vmem %s5, 1536
    %v4655 = vld [vmem:[%s4654] sm:$0xff]
    %v4656 = vld [vmem:[%s4654 + $0x8] sm:$0xff]
    %v4657 = vld [vmem:[%s4654 + $0x10] sm:$0xff]
    %v4658 = vld [vmem:[%s4654 + $0x18] sm:$0xff]
    %v4659 = vld [vmem:[%s4654 + $0x20] sm:$0xff]
    %v4660 = vld [vmem:[%s4654 + $0x28] sm:$0xff]
    %v4661 = vld [vmem:[%s4654 + $0x30] sm:$0xff]
    %v4662 = vld [vmem:[%s4654 + $0x38] sm:$0xff]
    %v4663 = vld [vmem:[%s4654 + $0x40] sm:$0xff]
    %v4664 = vld [vmem:[%s4654 + $0x48] sm:$0xff]
    %v4665 = vld [vmem:[%s4654 + $0x50] sm:$0xff]
    %v4666 = vld [vmem:[%s4654 + $0x58] sm:$0xff]
    %v4667 = vld [vmem:[%s4654 + $0x60] sm:$0xff]
    %v4668 = vld [vmem:[%s4654 + $0x68] sm:$0xff]
    %v4669 = vld [vmem:[%s4654 + $0x70] sm:$0xff]
    %v4670 = vld [vmem:[%s4654 + $0x78] sm:$0xff]
    %v4671 = vld [vmem:[%s4654 + $0x80] sm:$0xff]
    %v4672 = vld [vmem:[%s4654 + $0x88] sm:$0xff]
    %v4673 = vld [vmem:[%s4654 + $0x90] sm:$0xff]
    %v4674 = vld [vmem:[%s4654 + $0x98] sm:$0xff]
    %v4675 = vld [vmem:[%s4654 + $0xa0] sm:$0xff]
    %v4676 = vld [vmem:[%s4654 + $0xa8] sm:$0xff]
    %v4677 = vld [vmem:[%s4654 + $0xb0] sm:$0xff]
    %v4678 = vld [vmem:[%s4654 + $0xb8] sm:$0xff]
    %v4679 = vld [vmem:[%s4654 + $0xc0] sm:$0xff]
    %v4680 = vld [vmem:[%s4654 + $0xc8] sm:$0xff]
    %v4681 = vld [vmem:[%s4654 + $0xd0] sm:$0xff]
    %v4682 = vld [vmem:[%s4654 + $0xd8] sm:$0xff]
    %v4683 = vld [vmem:[%s4654 + $0xe0] sm:$0xff]
    %v4684 = vld [vmem:[%s4654 + $0xe8] sm:$0xff]
    %v4685 = vld [vmem:[%s4654 + $0xf0] sm:$0xff]
    %v4686 = vld [vmem:[%s4654 + $0xf8] sm:$0xff]
    %v4687 = vld [vmem:[%s4654 + $0x100] sm:$0xff]
    %v4688 = vld [vmem:[%s4654 + $0x108] sm:$0xff]
    %v4689 = vld [vmem:[%s4654 + $0x110] sm:$0xff]
    %v4690 = vld [vmem:[%s4654 + $0x118] sm:$0xff]
    %v4691 = vld [vmem:[%s4654 + $0x120] sm:$0xff]
    %v4692 = vld [vmem:[%s4654 + $0x128] sm:$0xff]
    %v4693 = vld [vmem:[%s4654 + $0x130] sm:$0xff]
    %v4694 = vld [vmem:[%s4654 + $0x138] sm:$0xff]
    %v4695 = vld [vmem:[%s4654 + $0x140] sm:$0xff]
    %v4696 = vld [vmem:[%s4654 + $0x148] sm:$0xff]
    %v4697 = vld [vmem:[%s4654 + $0x150] sm:$0xff]
    %v4698 = vld [vmem:[%s4654 + $0x158] sm:$0xff]
    %v4699 = vld [vmem:[%s4654 + $0x160] sm:$0xff]
    %v4700 = vld [vmem:[%s4654 + $0x168] sm:$0xff]
    %v4701 = vld [vmem:[%s4654 + $0x170] sm:$0xff]
    %v4702 = vld [vmem:[%s4654 + $0x178] sm:$0xff]
    %v4703 = vld [vmem:[%s4654 + $0x180] sm:$0xff]
    %v4704 = vld [vmem:[%s4654 + $0x188] sm:$0xff]
    %v4705 = vld [vmem:[%s4654 + $0x190] sm:$0xff]
    %v4706 = vld [vmem:[%s4654 + $0x198] sm:$0xff]
    %v4707 = vld [vmem:[%s4654 + $0x1a0] sm:$0xff]
    %v4708 = vld [vmem:[%s4654 + $0x1a8] sm:$0xff]
    %v4709 = vld [vmem:[%s4654 + $0x1b0] sm:$0xff]
    %v4710 = vld [vmem:[%s4654 + $0x1b8] sm:$0xff]
    %v4711 = vld [vmem:[%s4654 + $0x1c0] sm:$0xff]
    %v4712 = vld [vmem:[%s4654 + $0x1c8] sm:$0xff]
    %v4713 = vld [vmem:[%s4654 + $0x1d0] sm:$0xff]
    %v4714 = vld [vmem:[%s4654 + $0x1d8] sm:$0xff]
    %v4715 = vld [vmem:[%s4654 + $0x1e0] sm:$0xff]
    %v4716 = vld [vmem:[%s4654 + $0x1e8] sm:$0xff]
    %v4717 = vld [vmem:[%s4654 + $0x1f0] sm:$0xff]
    %v4718 = vld [vmem:[%s4654 + $0x1f8] sm:$0xff]
    %4719 = vmatprep.subr.mxu0 0.0
    %4720 = vmatpush1.msra.mxu0 %v4670
    %4721 = vmatprep.subr.mxu0 0.0
    %4722 = vmatpush1.msra.mxu0 %v4669
    %4723 = vmatprep.subr.mxu0 0.0
    %4724 = vmatpush1.msra.mxu0 %v4668
    %4725 = vmatprep.subr.mxu0 0.0
    %4726 = vmatpush1.msra.mxu0 %v4667
    %4727 = vmatprep.subr.mxu0 0.0
    %4728 = vmatpush1.msra.mxu0 %v4666
    %4729 = vmatprep.subr.mxu0 0.0
    %4730 = vmatpush1.msra.mxu0 %v4665
    %4731 = vmatprep.subr.mxu0 0.0
    %4732 = vmatpush1.msra.mxu0 %v4664
    %4733 = vmatprep.subr.mxu0 0.0
    %4734 = vmatpush1.msra.mxu0 %v4663
    %4735 = vmatprep.subr.mxu0 0.0
    %4736 = vmatpush1.msra.mxu0 %v4662
    %4737 = vmatprep.subr.mxu0 0.0
    %4738 = vmatpush1.msra.mxu0 %v4661
    %4739 = vmatprep.subr.mxu0 0.0
    %4740 = vmatpush1.msra.mxu0 %v4660
    %4741 = vmatprep.subr.mxu0 0.0
    %4742 = vmatpush1.msra.mxu0 %v4659
    %4743 = vmatprep.subr.mxu0 0.0
    %4744 = vmatpush1.msra.mxu0 %v4658
    %4745 = vmatprep.subr.mxu0 0.0
    %4746 = vmatpush1.msra.mxu0 %v4657
    %4747 = vmatprep.subr.mxu0 0.0
    %4748 = vmatpush1.msra.mxu0 %v4656
    %4749 = vmatprep.subr.mxu0 0.0
    %4750 = vmatpush1.msra.mxu0 %v4655
    %4751 = vmatprep.subr.mxu0 0.0
    %4752 = vmatpush2.msra.mxu0 %v4686
    %4753 = vmatprep.subr.mxu0 0.0
    %4754 = vmatpush2.msra.mxu0 %v4685
    %4755 = vmatprep.subr.mxu0 0.0
    %4756 = vmatpush2.msra.mxu0 %v4684
    %4757 = vmatprep.subr.mxu0 0.0
    %4758 = vmatpush2.msra.mxu0 %v4683
    %4759 = vmatprep.subr.mxu0 0.0
    %4760 = vmatpush2.msra.mxu0 %v4682
    %4761 = vmatprep.subr.mxu0 0.0
    %4762 = vmatpush2.msra.mxu0 %v4681
    %4763 = vmatprep.subr.mxu0 0.0
    %4764 = vmatpush2.msra.mxu0 %v4680
    %4765 = vmatprep.subr.mxu0 0.0
    %4766 = vmatpush2.msra.mxu0 %v4679
    %4767 = vmatprep.subr.mxu0 0.0
    %4768 = vmatpush2.msra.mxu0 %v4678
    %4769 = vmatprep.subr.mxu0 0.0
    %4770 = vmatpush2.msra.mxu0 %v4677
    %4771 = vmatprep.subr.mxu0 0.0
    %4772 = vmatpush2.msra.mxu0 %v4676
    %4773 = vmatprep.subr.mxu0 0.0
    %4774 = vmatpush2.msra.mxu0 %v4675
    %4775 = vmatprep.subr.mxu0 0.0
    %4776 = vmatpush2.msra.mxu0 %v4674
    %4777 = vmatprep.subr.mxu0 0.0
    %4778 = vmatpush2.msra.mxu0 %v4673
    %4779 = vmatprep.subr.mxu0 0.0
    %4780 = vmatpush2.msra.mxu0 %v4672
    %4781 = vmatprep.subr.mxu0 0.0
    %4782 = vmatpush2.msra.mxu0 %v4671
    %4783 = vmatprep.mubr.f32.mxu0 %v4529
    %4784 = vmatmul.mubr.f32.gmra.mxu0 %v4528
    %v4785 = vpop.f32.mrf.mxu0
    %v4786 = vadd.f32 0.0, %v4785
    %v4787 = vpop.f32.mrf.mxu0
    %4788 = vmatprep.mubr.f32.mxu0 %v4473
    %4789 = vmatmul.mubr.f32.gmra.mxu0 %v4472
    %v4790 = vpop.f32.mrf.mxu0
    %v4791 = vadd.f32 0.0, %v4790
    %v4792 = vpop.f32.mrf.mxu0
    %4793 = vmatprep.mubr.f32.mxu0 %v4477
    %4794 = vmatmul.mubr.f32.gmra.mxu0 %v4476
    %v4795 = vpop.f32.mrf.mxu0
    %v4796 = vadd.f32 0.0, %v4795
    %v4797 = vpop.f32.mrf.mxu0
    %4798 = vmatprep.mubr.f32.mxu0 %v4481
    %4799 = vmatmul.mubr.f32.gmra.mxu0 %v4480
    %v4800 = vpop.f32.mrf.mxu0
    %v4801 = vadd.f32 0.0, %v4800
    %v4802 = vpop.f32.mrf.mxu0
    %4803 = vmatprep.mubr.f32.mxu0 %v4485
    %4804 = vmatmul.mubr.f32.gmra.mxu0 %v4484
    %v4805 = vpop.f32.mrf.mxu0
    %v4806 = vadd.f32 0.0, %v4805
    %v4807 = vpop.f32.mrf.mxu0
    %4808 = vmatprep.mubr.f32.mxu0 %v4489
    %4809 = vmatmul.mubr.f32.gmra.mxu0 %v4488
    %v4810 = vpop.f32.mrf.mxu0
    %v4811 = vadd.f32 0.0, %v4810
    %v4812 = vpop.f32.mrf.mxu0
    %4813 = vmatprep.mubr.f32.mxu0 %v4493
    %4814 = vmatmul.mubr.f32.gmra.mxu0 %v4492
    %v4815 = vpop.f32.mrf.mxu0
    %v4816 = vadd.f32 0.0, %v4815
    %v4817 = vpop.f32.mrf.mxu0
    %4818 = vmatprep.mubr.f32.mxu0 %v4497
    %4819 = vmatmul.mubr.f32.gmra.mxu0 %v4496
    %v4820 = vpop.f32.mrf.mxu0
    %v4821 = vadd.f32 0.0, %v4820
    %v4822 = vpop.f32.mrf.mxu0
    %4823 = vmatprep.mubr.f32.mxu0 %v4501
    %4824 = vmatmul.mubr.f32.gmra.mxu0 %v4500
    %v4825 = vpop.f32.mrf.mxu0
    %v4826 = vadd.f32 0.0, %v4825
    %v4827 = vpop.f32.mrf.mxu0
    %4828 = vmatprep.mubr.f32.mxu0 %v4505
    %4829 = vmatmul.mubr.f32.gmra.mxu0 %v4504
    %v4830 = vpop.f32.mrf.mxu0
    %v4831 = vadd.f32 0.0, %v4830
    %v4832 = vpop.f32.mrf.mxu0
    %4833 = vmatprep.mubr.f32.mxu0 %v4509
    %4834 = vmatmul.mubr.f32.gmra.mxu0 %v4508
    %v4835 = vpop.f32.mrf.mxu0
    %v4836 = vadd.f32 0.0, %v4835
    %v4837 = vpop.f32.mrf.mxu0
    %4838 = vmatprep.mubr.f32.mxu0 %v4513
    %4839 = vmatmul.mubr.f32.gmra.mxu0 %v4512
    %v4840 = vpop.f32.mrf.mxu0
    %v4841 = vadd.f32 0.0, %v4840
    %v4842 = vpop.f32.mrf.mxu0
    %4843 = vmatprep.mubr.f32.mxu0 %v4517
    %4844 = vmatmul.mubr.f32.gmra.mxu0 %v4516
    %v4845 = vpop.f32.mrf.mxu0
    %v4846 = vadd.f32 0.0, %v4845
    %v4847 = vpop.f32.mrf.mxu0
    %4848 = vmatprep.mubr.f32.mxu0 %v4521
    %4849 = vmatmul.mubr.f32.gmra.mxu0 %v4520
    %v4850 = vpop.f32.mrf.mxu0
    %v4851 = vadd.f32 0.0, %v4850
    %v4852 = vpop.f32.mrf.mxu0
    %4853 = vdwg.mxu0
    %4854 = vmatprep.subr.mxu0 0.0
    %4855 = vmatpush1.msra.mxu0 %v4702
    %4856 = vmatprep.subr.mxu0 0.0
    %4857 = vmatpush1.msra.mxu0 %v4701
    %4858 = vmatprep.subr.mxu0 0.0
    %4859 = vmatpush1.msra.mxu0 %v4700
    %4860 = vmatprep.subr.mxu0 0.0
    %4861 = vmatpush1.msra.mxu0 %v4699
    %4862 = vmatprep.subr.mxu0 0.0
    %4863 = vmatpush1.msra.mxu0 %v4698
    %4864 = vmatprep.subr.mxu0 0.0
    %4865 = vmatpush1.msra.mxu0 %v4697
    %4866 = vmatprep.subr.mxu0 0.0
    %4867 = vmatpush1.msra.mxu0 %v4696
    %4868 = vmatprep.subr.mxu0 0.0
    %4869 = vmatpush1.msra.mxu0 %v4695
    %4870 = vmatprep.subr.mxu0 0.0
    %4871 = vmatpush1.msra.mxu0 %v4694
    %4872 = vmatprep.subr.mxu0 0.0
    %4873 = vmatpush1.msra.mxu0 %v4693
    %4874 = vmatprep.subr.mxu0 0.0
    %4875 = vmatpush1.msra.mxu0 %v4692
    %4876 = vmatprep.subr.mxu0 0.0
    %4877 = vmatpush1.msra.mxu0 %v4691
    %4878 = vmatprep.subr.mxu0 0.0
    %4879 = vmatpush1.msra.mxu0 %v4690
    %4880 = vmatprep.subr.mxu0 0.0
    %4881 = vmatpush1.msra.mxu0 %v4689
    %4882 = vmatprep.subr.mxu0 0.0
    %4883 = vmatpush1.msra.mxu0 %v4688
    %4884 = vmatprep.subr.mxu0 0.0
    %4885 = vmatpush1.msra.mxu0 %v4687
    %4886 = vmatprep.subr.mxu0 0.0
    %4887 = vmatpush2.msra.mxu0 %v4718
    %4888 = vmatprep.subr.mxu0 0.0
    %4889 = vmatpush2.msra.mxu0 %v4717
    %4890 = vmatprep.subr.mxu0 0.0
    %4891 = vmatpush2.msra.mxu0 %v4716
    %4892 = vmatprep.subr.mxu0 0.0
    %4893 = vmatpush2.msra.mxu0 %v4715
    %4894 = vmatprep.subr.mxu0 0.0
    %4895 = vmatpush2.msra.mxu0 %v4714
    %4896 = vmatprep.subr.mxu0 0.0
    %4897 = vmatpush2.msra.mxu0 %v4713
    %4898 = vmatprep.subr.mxu0 0.0
    %4899 = vmatpush2.msra.mxu0 %v4712
    %4900 = vmatprep.subr.mxu0 0.0
    %4901 = vmatpush2.msra.mxu0 %v4711
    %4902 = vmatprep.subr.mxu0 0.0
    %4903 = vmatpush2.msra.mxu0 %v4710
    %4904 = vmatprep.subr.mxu0 0.0
    %4905 = vmatpush2.msra.mxu0 %v4709
    %4906 = vmatprep.subr.mxu0 0.0
    %4907 = vmatpush2.msra.mxu0 %v4708
    %4908 = vmatprep.subr.mxu0 0.0
    %4909 = vmatpush2.msra.mxu0 %v4707
    %4910 = vmatprep.subr.mxu0 0.0
    %4911 = vmatpush2.msra.mxu0 %v4706
    %4912 = vmatprep.subr.mxu0 0.0
    %4913 = vmatpush2.msra.mxu0 %v4705
    %4914 = vmatprep.subr.mxu0 0.0
    %4915 = vmatpush2.msra.mxu0 %v4704
    %4916 = vmatprep.subr.mxu0 0.0
    %4917 = vmatpush2.msra.mxu0 %v4703
    %4918 = vmatprep.mubr.f32.mxu0 %v4531
    %4919 = vmatmul.mubr.f32.gmra.mxu0 %v4530
    %v4920 = vpop.f32.mrf.mxu0
    %v4921 = vadd.f32 %v4786, %v4920
    %v4922 = vpop.f32.mrf.mxu0
    %4923 = vmatprep.mubr.f32.mxu0 %v4475
    %4924 = vmatmul.mubr.f32.gmra.mxu0 %v4474
    %v4925 = vpop.f32.mrf.mxu0
    %v4926 = vadd.f32 %v4791, %v4925
    %v4927 = vpop.f32.mrf.mxu0
    %4928 = vmatprep.mubr.f32.mxu0 %v4479
    %4929 = vmatmul.mubr.f32.gmra.mxu0 %v4478
    %v4930 = vpop.f32.mrf.mxu0
    %v4931 = vadd.f32 %v4796, %v4930
    %v4932 = vpop.f32.mrf.mxu0
    %4933 = vmatprep.mubr.f32.mxu0 %v4483
    %4934 = vmatmul.mubr.f32.gmra.mxu0 %v4482
    %v4935 = vpop.f32.mrf.mxu0
    %v4936 = vadd.f32 %v4801, %v4935
    %v4937 = vpop.f32.mrf.mxu0
    %4938 = vmatprep.mubr.f32.mxu0 %v4487
    %4939 = vmatmul.mubr.f32.gmra.mxu0 %v4486
    %v4940 = vpop.f32.mrf.mxu0
    %v4941 = vadd.f32 %v4806, %v4940
    %v4942 = vpop.f32.mrf.mxu0
    %4943 = vmatprep.mubr.f32.mxu0 %v4491
    %4944 = vmatmul.mubr.f32.gmra.mxu0 %v4490
    %v4945 = vpop.f32.mrf.mxu0
    %v4946 = vadd.f32 %v4811, %v4945
    %v4947 = vpop.f32.mrf.mxu0
    %4948 = vmatprep.mubr.f32.mxu0 %v4495
    %4949 = vmatmul.mubr.f32.gmra.mxu0 %v4494
    %v4950 = vpop.f32.mrf.mxu0
    %v4951 = vadd.f32 %v4816, %v4950
    %v4952 = vpop.f32.mrf.mxu0
    %4953 = vmatprep.mubr.f32.mxu0 %v4499
    %4954 = vmatmul.mubr.f32.gmra.mxu0 %v4498
    %v4955 = vpop.f32.mrf.mxu0
    %v4956 = vadd.f32 %v4821, %v4955
    %v4957 = vpop.f32.mrf.mxu0
    %4958 = vmatprep.mubr.f32.mxu0 %v4503
    %4959 = vmatmul.mubr.f32.gmra.mxu0 %v4502
    %v4960 = vpop.f32.mrf.mxu0
    %v4961 = vadd.f32 %v4826, %v4960
    %v4962 = vpop.f32.mrf.mxu0
    %4963 = vmatprep.mubr.f32.mxu0 %v4507
    %4964 = vmatmul.mubr.f32.gmra.mxu0 %v4506
    %v4965 = vpop.f32.mrf.mxu0
    %v4966 = vadd.f32 %v4831, %v4965
    %v4967 = vpop.f32.mrf.mxu0
    %4968 = vmatprep.mubr.f32.mxu0 %v4511
    %4969 = vmatmul.mubr.f32.gmra.mxu0 %v4510
    %v4970 = vpop.f32.mrf.mxu0
    %v4971 = vadd.f32 %v4836, %v4970
    %v4972 = vpop.f32.mrf.mxu0
    %4973 = vmatprep.mubr.f32.mxu0 %v4515
    %4974 = vmatmul.mubr.f32.gmra.mxu0 %v4514
    %v4975 = vpop.f32.mrf.mxu0
    %v4976 = vadd.f32 %v4841, %v4975
    %v4977 = vpop.f32.mrf.mxu0
    %4978 = vmatprep.mubr.f32.mxu0 %v4519
    %4979 = vmatmul.mubr.f32.gmra.mxu0 %v4518
    %v4980 = vpop.f32.mrf.mxu0
    %v4981 = vadd.f32 %v4846, %v4980
    %v4982 = vpop.f32.mrf.mxu0
    %4983 = vmatprep.mubr.f32.mxu0 %v4523
    %4984 = vmatmul.mubr.f32.gmra.mxu0 %v4522
    %v4985 = vpop.f32.mrf.mxu0
    %v4986 = vadd.f32 %v4851, %v4985
    %v4987 = vpop.f32.mrf.mxu0
    %4988 = vdwg.mxu0
    %4989 = vmatprep.subr.mxu0 0.0
    %4990 = vmatpush1.msra.mxu0 %v4605
    %4991 = vmatprep.subr.mxu0 0.0
    %4992 = vmatpush1.msra.mxu0 %v4604
    %4993 = vmatprep.subr.mxu0 0.0
    %4994 = vmatpush1.msra.mxu0 %v4603
    %4995 = vmatprep.subr.mxu0 0.0
    %4996 = vmatpush1.msra.mxu0 %v4602
    %4997 = vmatprep.subr.mxu0 0.0
    %4998 = vmatpush1.msra.mxu0 %v4601
    %4999 = vmatprep.subr.mxu0 0.0
    %5000 = vmatpush1.msra.mxu0 %v4600
    %5001 = vmatprep.subr.mxu0 0.0
    %5002 = vmatpush1.msra.mxu0 %v4599
    %5003 = vmatprep.subr.mxu0 0.0
    %5004 = vmatpush1.msra.mxu0 %v4598
    %5005 = vmatprep.subr.mxu0 0.0
    %5006 = vmatpush1.msra.mxu0 %v4597
    %5007 = vmatprep.subr.mxu0 0.0
    %5008 = vmatpush1.msra.mxu0 %v4596
    %5009 = vmatprep.subr.mxu0 0.0
    %5010 = vmatpush1.msra.mxu0 %v4595
    %5011 = vmatprep.subr.mxu0 0.0
    %5012 = vmatpush1.msra.mxu0 %v4594
    %5013 = vmatprep.subr.mxu0 0.0
    %5014 = vmatpush1.msra.mxu0 %v4593
    %5015 = vmatprep.subr.mxu0 0.0
    %5016 = vmatpush1.msra.mxu0 %v4592
    %5017 = vmatprep.subr.mxu0 0.0
    %5018 = vmatpush1.msra.mxu0 %v4591
    %5019 = vmatprep.subr.mxu0 0.0
    %5020 = vmatpush1.msra.mxu0 %v4590
    %5021 = vmatprep.subr.mxu0 0.0
    %5022 = vmatpush2.msra.mxu0 %v4621
    %5023 = vmatprep.subr.mxu0 0.0
    %5024 = vmatpush2.msra.mxu0 %v4620
    %5025 = vmatprep.subr.mxu0 0.0
    %5026 = vmatpush2.msra.mxu0 %v4619
    %5027 = vmatprep.subr.mxu0 0.0
    %5028 = vmatpush2.msra.mxu0 %v4618
    %5029 = vmatprep.subr.mxu0 0.0
    %5030 = vmatpush2.msra.mxu0 %v4617
    %5031 = vmatprep.subr.mxu0 0.0
    %5032 = vmatpush2.msra.mxu0 %v4616
    %5033 = vmatprep.subr.mxu0 0.0
    %5034 = vmatpush2.msra.mxu0 %v4615
    %5035 = vmatprep.subr.mxu0 0.0
    %5036 = vmatpush2.msra.mxu0 %v4614
    %5037 = vmatprep.subr.mxu0 0.0
    %5038 = vmatpush2.msra.mxu0 %v4613
    %5039 = vmatprep.subr.mxu0 0.0
    %5040 = vmatpush2.msra.mxu0 %v4612
    %5041 = vmatprep.subr.mxu0 0.0
    %5042 = vmatpush2.msra.mxu0 %v4611
    %5043 = vmatprep.subr.mxu0 0.0
    %5044 = vmatpush2.msra.mxu0 %v4610
    %5045 = vmatprep.subr.mxu0 0.0
    %5046 = vmatpush2.msra.mxu0 %v4609
    %5047 = vmatprep.subr.mxu0 0.0
    %5048 = vmatpush2.msra.mxu0 %v4608
    %5049 = vmatprep.subr.mxu0 0.0
    %5050 = vmatpush2.msra.mxu0 %v4607
    %5051 = vmatprep.subr.mxu0 0.0
    %5052 = vmatpush2.msra.mxu0 %v4606
    %5053 = vmatprep.mubr.f32.mxu0 %v4473
    %5054 = vmatmul.mubr.f32.gmra.mxu0 %v4472
    %v5055 = vpop.f32.mrf.mxu0
    %v5056 = vadd.f32 %v4921, %v5055
    %v5057 = vpop.f32.mrf.mxu0
    %5058 = vmatprep.mubr.f32.mxu0 %v4477
    %5059 = vmatmul.mubr.f32.gmra.mxu0 %v4476
    %v5060 = vpop.f32.mrf.mxu0
    %v5061 = vadd.f32 %v4926, %v5060
    %v5062 = vpop.f32.mrf.mxu0
    %5063 = vmatprep.mubr.f32.mxu0 %v4481
    %5064 = vmatmul.mubr.f32.gmra.mxu0 %v4480
    %v5065 = vpop.f32.mrf.mxu0
    %v5066 = vadd.f32 %v4931, %v5065
    %v5067 = vpop.f32.mrf.mxu0
    %5068 = vmatprep.mubr.f32.mxu0 %v4485
    %5069 = vmatmul.mubr.f32.gmra.mxu0 %v4484
    %v5070 = vpop.f32.mrf.mxu0
    %v5071 = vadd.f32 %v4936, %v5070
    %v5072 = vpop.f32.mrf.mxu0
    %5073 = vmatprep.mubr.f32.mxu0 %v4489
    %5074 = vmatmul.mubr.f32.gmra.mxu0 %v4488
    %v5075 = vpop.f32.mrf.mxu0
    %v5076 = vadd.f32 %v4941, %v5075
    %v5077 = vpop.f32.mrf.mxu0
    %5078 = vmatprep.mubr.f32.mxu0 %v4493
    %5079 = vmatmul.mubr.f32.gmra.mxu0 %v4492
    %v5080 = vpop.f32.mrf.mxu0
    %v5081 = vadd.f32 %v4946, %v5080
    %v5082 = vpop.f32.mrf.mxu0
    %5083 = vmatprep.mubr.f32.mxu0 %v4497
    %5084 = vmatmul.mubr.f32.gmra.mxu0 %v4496
    %v5085 = vpop.f32.mrf.mxu0
    %v5086 = vadd.f32 %v4951, %v5085
    %v5087 = vpop.f32.mrf.mxu0
    %5088 = vmatprep.mubr.f32.mxu0 %v4501
    %5089 = vmatmul.mubr.f32.gmra.mxu0 %v4500
    %v5090 = vpop.f32.mrf.mxu0
    %v5091 = vadd.f32 %v4956, %v5090
    %v5092 = vpop.f32.mrf.mxu0
    %5093 = vmatprep.mubr.f32.mxu0 %v4505
    %5094 = vmatmul.mubr.f32.gmra.mxu0 %v4504
    %v5095 = vpop.f32.mrf.mxu0
    %v5096 = vadd.f32 %v4961, %v5095
    %v5097 = vpop.f32.mrf.mxu0
    %5098 = vmatprep.mubr.f32.mxu0 %v4509
    %5099 = vmatmul.mubr.f32.gmra.mxu0 %v4508
    %v5100 = vpop.f32.mrf.mxu0
    %v5101 = vadd.f32 %v4966, %v5100
    %v5102 = vpop.f32.mrf.mxu0
    %5103 = vmatprep.mubr.f32.mxu0 %v4513
    %5104 = vmatmul.mubr.f32.gmra.mxu0 %v4512
    %v5105 = vpop.f32.mrf.mxu0
    %v5106 = vadd.f32 %v4971, %v5105
    %v5107 = vpop.f32.mrf.mxu0
    %5108 = vmatprep.mubr.f32.mxu0 %v4517
    %5109 = vmatmul.mubr.f32.gmra.mxu0 %v4516
    %v5110 = vpop.f32.mrf.mxu0
    %v5111 = vadd.f32 %v4976, %v5110
    %v5112 = vpop.f32.mrf.mxu0
    %5113 = vmatprep.mubr.f32.mxu0 %v4521
    %5114 = vmatmul.mubr.f32.gmra.mxu0 %v4520
    %v5115 = vpop.f32.mrf.mxu0
    %v5116 = vadd.f32 %v4981, %v5115
    %v5117 = vpop.f32.mrf.mxu0
    %5118 = vmatprep.mubr.f32.mxu0 %v4525
    %5119 = vmatmul.mubr.f32.gmra.mxu0 %v4524
    %v5120 = vpop.f32.mrf.mxu0
    %v5121 = vadd.f32 %v4986, %v5120
    %v5122 = vpop.f32.mrf.mxu0
    %5123 = vdwg.mxu0
    %5124 = vmatprep.subr.mxu0 0.0
    %5125 = vmatpush1.msra.mxu0 %v4637
    %5126 = vmatprep.subr.mxu0 0.0
    %5127 = vmatpush1.msra.mxu0 %v4636
    %5128 = vmatprep.subr.mxu0 0.0
    %5129 = vmatpush1.msra.mxu0 %v4635
    %5130 = vmatprep.subr.mxu0 0.0
    %5131 = vmatpush1.msra.mxu0 %v4634
    %5132 = vmatprep.subr.mxu0 0.0
    %5133 = vmatpush1.msra.mxu0 %v4633
    %5134 = vmatprep.subr.mxu0 0.0
    %5135 = vmatpush1.msra.mxu0 %v4632
    %5136 = vmatprep.subr.mxu0 0.0
    %5137 = vmatpush1.msra.mxu0 %v4631
    %5138 = vmatprep.subr.mxu0 0.0
    %5139 = vmatpush1.msra.mxu0 %v4630
    %5140 = vmatprep.subr.mxu0 0.0
    %5141 = vmatpush1.msra.mxu0 %v4629
    %5142 = vmatprep.subr.mxu0 0.0
    %5143 = vmatpush1.msra.mxu0 %v4628
    %5144 = vmatprep.subr.mxu0 0.0
    %5145 = vmatpush1.msra.mxu0 %v4627
    %5146 = vmatprep.subr.mxu0 0.0
    %5147 = vmatpush1.msra.mxu0 %v4626
    %5148 = vmatprep.subr.mxu0 0.0
    %5149 = vmatpush1.msra.mxu0 %v4625
    %5150 = vmatprep.subr.mxu0 0.0
    %5151 = vmatpush1.msra.mxu0 %v4624
    %5152 = vmatprep.subr.mxu0 0.0
    %5153 = vmatpush1.msra.mxu0 %v4623
    %5154 = vmatprep.subr.mxu0 0.0
    %5155 = vmatpush1.msra.mxu0 %v4622
    %5156 = vmatprep.subr.mxu0 0.0
    %5157 = vmatpush2.msra.mxu0 %v4653
    %5158 = vmatprep.subr.mxu0 0.0
    %5159 = vmatpush2.msra.mxu0 %v4652
    %5160 = vmatprep.subr.mxu0 0.0
    %5161 = vmatpush2.msra.mxu0 %v4651
    %5162 = vmatprep.subr.mxu0 0.0
    %5163 = vmatpush2.msra.mxu0 %v4650
    %5164 = vmatprep.subr.mxu0 0.0
    %5165 = vmatpush2.msra.mxu0 %v4649
    %5166 = vmatprep.subr.mxu0 0.0
    %5167 = vmatpush2.msra.mxu0 %v4648
    %5168 = vmatprep.subr.mxu0 0.0
    %5169 = vmatpush2.msra.mxu0 %v4647
    %5170 = vmatprep.subr.mxu0 0.0
    %5171 = vmatpush2.msra.mxu0 %v4646
    %5172 = vmatprep.subr.mxu0 0.0
    %5173 = vmatpush2.msra.mxu0 %v4645
    %5174 = vmatprep.subr.mxu0 0.0
    %5175 = vmatpush2.msra.mxu0 %v4644
    %5176 = vmatprep.subr.mxu0 0.0
    %5177 = vmatpush2.msra.mxu0 %v4643
    %5178 = vmatprep.subr.mxu0 0.0
    %5179 = vmatpush2.msra.mxu0 %v4642
    %5180 = vmatprep.subr.mxu0 0.0
    %5181 = vmatpush2.msra.mxu0 %v4641
    %5182 = vmatprep.subr.mxu0 0.0
    %5183 = vmatpush2.msra.mxu0 %v4640
    %5184 = vmatprep.subr.mxu0 0.0
    %5185 = vmatpush2.msra.mxu0 %v4639
    %5186 = vmatprep.subr.mxu0 0.0
    %5187 = vmatpush2.msra.mxu0 %v4638
    %5188 = vmatprep.mubr.f32.mxu0 %v4475
    %5189 = vmatmul.mubr.f32.gmra.mxu0 %v4474
    %v5190 = vpop.f32.mrf.mxu0
    %v5191 = vadd.f32 %v5056, %v5190
    %v5192 = vpop.f32.mrf.mxu0
    %5193 = vmatprep.mubr.f32.mxu0 %v4479
    %5194 = vmatmul.mubr.f32.gmra.mxu0 %v4478
    %v5195 = vpop.f32.mrf.mxu0
    %v5196 = vadd.f32 %v5061, %v5195
    %v5197 = vpop.f32.mrf.mxu0
    %5198 = vmatprep.mubr.f32.mxu0 %v4483
    %5199 = vmatmul.mubr.f32.gmra.mxu0 %v4482
    %v5200 = vpop.f32.mrf.mxu0
    %v5201 = vadd.f32 %v5066, %v5200
    %v5202 = vpop.f32.mrf.mxu0
    %5203 = vmatprep.mubr.f32.mxu0 %v4487
    %5204 = vmatmul.mubr.f32.gmra.mxu0 %v4486
    %v5205 = vpop.f32.mrf.mxu0
    %v5206 = vadd.f32 %v5071, %v5205
    %v5207 = vpop.f32.mrf.mxu0
    %5208 = vmatprep.mubr.f32.mxu0 %v4491
    %5209 = vmatmul.mubr.f32.gmra.mxu0 %v4490
    %v5210 = vpop.f32.mrf.mxu0
    %v5211 = vadd.f32 %v5076, %v5210
    %v5212 = vpop.f32.mrf.mxu0
    %5213 = vmatprep.mubr.f32.mxu0 %v4495
    %5214 = vmatmul.mubr.f32.gmra.mxu0 %v4494
    %v5215 = vpop.f32.mrf.mxu0
    %v5216 = vadd.f32 %v5081, %v5215
    %v5217 = vpop.f32.mrf.mxu0
    %5218 = vmatprep.mubr.f32.mxu0 %v4499
    %5219 = vmatmul.mubr.f32.gmra.mxu0 %v4498
    %v5220 = vpop.f32.mrf.mxu0
    %v5221 = vadd.f32 %v5086, %v5220
    %v5222 = vpop.f32.mrf.mxu0
    %5223 = vmatprep.mubr.f32.mxu0 %v4503
    %5224 = vmatmul.mubr.f32.gmra.mxu0 %v4502
    %v5225 = vpop.f32.mrf.mxu0
    %v5226 = vadd.f32 %v5091, %v5225
    %v5227 = vpop.f32.mrf.mxu0
    %5228 = vmatprep.mubr.f32.mxu0 %v4507
    %5229 = vmatmul.mubr.f32.gmra.mxu0 %v4506
    %v5230 = vpop.f32.mrf.mxu0
    %v5231 = vadd.f32 %v5096, %v5230
    %v5232 = vpop.f32.mrf.mxu0
    %5233 = vmatprep.mubr.f32.mxu0 %v4511
    %5234 = vmatmul.mubr.f32.gmra.mxu0 %v4510
    %v5235 = vpop.f32.mrf.mxu0
    %v5236 = vadd.f32 %v5101, %v5235
    %v5237 = vpop.f32.mrf.mxu0
    %5238 = vmatprep.mubr.f32.mxu0 %v4515
    %5239 = vmatmul.mubr.f32.gmra.mxu0 %v4514
    %v5240 = vpop.f32.mrf.mxu0
    %v5241 = vadd.f32 %v5106, %v5240
    %v5242 = vpop.f32.mrf.mxu0
    %5243 = vmatprep.mubr.f32.mxu0 %v4519
    %5244 = vmatmul.mubr.f32.gmra.mxu0 %v4518
    %v5245 = vpop.f32.mrf.mxu0
    %v5246 = vadd.f32 %v5111, %v5245
    %v5247 = vpop.f32.mrf.mxu0
    %5248 = vmatprep.mubr.f32.mxu0 %v4523
    %5249 = vmatmul.mubr.f32.gmra.mxu0 %v4522
    %v5250 = vpop.f32.mrf.mxu0
    %v5251 = vadd.f32 %v5116, %v5250
    %v5252 = vpop.f32.mrf.mxu0
    %5253 = vmatprep.mubr.f32.mxu0 %v4527
    %5254 = vmatmul.mubr.f32.gmra.mxu0 %v4526
    %v5255 = vpop.f32.mrf.mxu0
    %v5256 = vadd.f32 %v5121, %v5255
    %v5257 = vpop.f32.mrf.mxu0
    %5258 = vdwg.mxu0
    %v5260 = vlaneseq
    %v5261 = vshrl.u32 %v5260, 7
    %v5262 = vsub.s32 0, %v5261
    %v5263 = vrot.slane %v4588, %v5262
    %5264 = vset.pattern.permute.xlu0 0
    %5265 = vperm.xlu0 %5264, %v5263
    %v5266 = vpop.permute.xlu0 %5265
    %v5268 = vadd.f32 %v5191, %v5266
    %v5269 = vadd.f32 %v5196, %v5266
    %v5270 = vadd.f32 %v5201, %v5266
    %v5271 = vadd.f32 %v5206, %v5266
    %v5272 = vadd.f32 %v5211, %v5266
    %v5273 = vadd.f32 %v5216, %v5266
    %v5274 = vadd.f32 %v5221, %v5266
    %v5275 = vadd.f32 %v5226, %v5266
    %v5276 = vadd.f32 %v5231, %v5266
    %v5277 = vadd.f32 %v5236, %v5266
    %v5278 = vadd.f32 %v5241, %v5266
    %v5279 = vadd.f32 %v5246, %v5266
    %v5280 = vadd.f32 %v5251, %v5266
    %v5281 = vadd.f32 %v5256, %v5266
    %s5282 = scalar_lea.vmem %s5, 1024
    %v5283 = vld [vmem:[%s5282] sm:$0xff]
    %v5284 = vld [vmem:[%s5282 + $0x8] sm:$0xff]
    %v5285 = vld [vmem:[%s5282 + $0x10] sm:$0xff]
    %v5286 = vld [vmem:[%s5282 + $0x18] sm:$0xff]
    %v5287 = vld [vmem:[%s5282 + $0x20] sm:$0xff]
    %v5288 = vld [vmem:[%s5282 + $0x28] sm:$0xff]
    %v5289 = vld [vmem:[%s5282 + $0x30] sm:$0xff]
    %v5290 = vld [vmem:[%s5282 + $0x38] sm:$0xff]
    %v5291 = vld [vmem:[%s5282 + $0x40] sm:$0xff]
    %v5292 = vld [vmem:[%s5282 + $0x48] sm:$0xff]
    %v5293 = vld [vmem:[%s5282 + $0x50] sm:$0xff]
    %v5294 = vld [vmem:[%s5282 + $0x58] sm:$0xff]
    %v5295 = vld [vmem:[%s5282 + $0x60] sm:$0xff]
    %v5296 = vld [vmem:[%s5282 + $0x68] sm:$0xff]
    %v5297 = vld [vmem:[%s5282 + $0x70] sm:$0xff]
    %v5298 = vld [vmem:[%s5282 + $0x78] sm:$0xff]
    %v5299 = vld [vmem:[%s5282 + $0x80] sm:$0xff]
    %v5300 = vld [vmem:[%s5282 + $0x88] sm:$0xff]
    %v5301 = vld [vmem:[%s5282 + $0x90] sm:$0xff]
    %v5302 = vld [vmem:[%s5282 + $0x98] sm:$0xff]
    %v5303 = vld [vmem:[%s5282 + $0xa0] sm:$0xff]
    %v5304 = vld [vmem:[%s5282 + $0xa8] sm:$0xff]
    %v5305 = vld [vmem:[%s5282 + $0xb0] sm:$0xff]
    %v5306 = vld [vmem:[%s5282 + $0xb8] sm:$0xff]
    %v5307 = vld [vmem:[%s5282 + $0xc0] sm:$0xff]
    %v5308 = vld [vmem:[%s5282 + $0xc8] sm:$0xff]
    %v5309 = vld [vmem:[%s5282 + $0xd0] sm:$0xff]
    %v5310 = vld [vmem:[%s5282 + $0xd8] sm:$0xff]
    %v5311 = vld [vmem:[%s5282 + $0xe0] sm:$0xff]
    %v5312 = vld [vmem:[%s5282 + $0xe8] sm:$0xff]
    %v5313 = vld [vmem:[%s5282 + $0xf0] sm:$0xff]
    %v5314 = vld [vmem:[%s5282 + $0xf8] sm:$0xff]
    %v5315 = vld [vmem:[%s5282 + $0x100] sm:$0xff]
    %v5316 = vld [vmem:[%s5282 + $0x108] sm:$0xff]
    %v5317 = vld [vmem:[%s5282 + $0x110] sm:$0xff]
    %v5318 = vld [vmem:[%s5282 + $0x118] sm:$0xff]
    %v5319 = vld [vmem:[%s5282 + $0x120] sm:$0xff]
    %v5320 = vld [vmem:[%s5282 + $0x128] sm:$0xff]
    %v5321 = vld [vmem:[%s5282 + $0x130] sm:$0xff]
    %v5322 = vld [vmem:[%s5282 + $0x138] sm:$0xff]
    %v5323 = vld [vmem:[%s5282 + $0x140] sm:$0xff]
    %v5324 = vld [vmem:[%s5282 + $0x148] sm:$0xff]
    %v5325 = vld [vmem:[%s5282 + $0x150] sm:$0xff]
    %v5326 = vld [vmem:[%s5282 + $0x158] sm:$0xff]
    %v5327 = vld [vmem:[%s5282 + $0x160] sm:$0xff]
    %v5328 = vld [vmem:[%s5282 + $0x168] sm:$0xff]
    %v5329 = vld [vmem:[%s5282 + $0x170] sm:$0xff]
    %v5330 = vld [vmem:[%s5282 + $0x178] sm:$0xff]
    %v5331 = vld [vmem:[%s5282 + $0x180] sm:$0xff]
    %v5332 = vld [vmem:[%s5282 + $0x188] sm:$0xff]
    %v5333 = vld [vmem:[%s5282 + $0x190] sm:$0xff]
    %v5334 = vld [vmem:[%s5282 + $0x198] sm:$0xff]
    %v5335 = vld [vmem:[%s5282 + $0x1a0] sm:$0xff]
    %v5336 = vld [vmem:[%s5282 + $0x1a8] sm:$0xff]
    %v5337 = vld [vmem:[%s5282 + $0x1b0] sm:$0xff]
    %v5338 = vld [vmem:[%s5282 + $0x1b8] sm:$0xff]
    %v5339 = vld [vmem:[%s5282 + $0x1c0] sm:$0xff]
    %v5340 = vld [vmem:[%s5282 + $0x1c8] sm:$0xff]
    %v5341 = vld [vmem:[%s5282 + $0x1d0] sm:$0xff]
    %v5342 = vld [vmem:[%s5282 + $0x1d8] sm:$0xff]
    %v5343 = vld [vmem:[%s5282 + $0x1e0] sm:$0xff]
    %v5344 = vld [vmem:[%s5282 + $0x1e8] sm:$0xff]
    %v5345 = vld [vmem:[%s5282 + $0x1f0] sm:$0xff]
    %v5346 = vld [vmem:[%s5282 + $0x1f8] sm:$0xff]
    %v5347 = vld [vmem:[%s5] sm:$0xff]
    %v5348 = vld [vmem:[%s5 + $0x8] sm:$0xff]
    %v5349 = vld [vmem:[%s5 + $0x10] sm:$0xff]
    %v5350 = vld [vmem:[%s5 + $0x18] sm:$0xff]
    %v5351 = vld [vmem:[%s5 + $0x20] sm:$0xff]
    %v5352 = vld [vmem:[%s5 + $0x28] sm:$0xff]
    %v5353 = vld [vmem:[%s5 + $0x30] sm:$0xff]
    %v5354 = vld [vmem:[%s5 + $0x38] sm:$0xff]
    %v5355 = vld [vmem:[%s5 + $0x40] sm:$0xff]
    %v5356 = vld [vmem:[%s5 + $0x48] sm:$0xff]
    %v5357 = vld [vmem:[%s5 + $0x50] sm:$0xff]
    %v5358 = vld [vmem:[%s5 + $0x58] sm:$0xff]
    %v5359 = vld [vmem:[%s5 + $0x60] sm:$0xff]
    %v5360 = vld [vmem:[%s5 + $0x68] sm:$0xff]
    %v5361 = vld [vmem:[%s5 + $0x70] sm:$0xff]
    %v5362 = vld [vmem:[%s5 + $0x78] sm:$0xff]
    %v5363 = vld [vmem:[%s5 + $0x80] sm:$0xff]
    %v5364 = vld [vmem:[%s5 + $0x88] sm:$0xff]
    %v5365 = vld [vmem:[%s5 + $0x90] sm:$0xff]
    %v5366 = vld [vmem:[%s5 + $0x98] sm:$0xff]
    %v5367 = vld [vmem:[%s5 + $0xa0] sm:$0xff]
    %v5368 = vld [vmem:[%s5 + $0xa8] sm:$0xff]
    %v5369 = vld [vmem:[%s5 + $0xb0] sm:$0xff]
    %v5370 = vld [vmem:[%s5 + $0xb8] sm:$0xff]
    %v5371 = vld [vmem:[%s5 + $0xc0] sm:$0xff]
    %v5372 = vld [vmem:[%s5 + $0xc8] sm:$0xff]
    %v5373 = vld [vmem:[%s5 + $0xd0] sm:$0xff]
    %v5374 = vld [vmem:[%s5 + $0xd8] sm:$0xff]
    %v5375 = vld [vmem:[%s5 + $0xe0] sm:$0xff]
    %v5376 = vld [vmem:[%s5 + $0xe8] sm:$0xff]
    %v5377 = vld [vmem:[%s5 + $0xf0] sm:$0xff]
    %v5378 = vld [vmem:[%s5 + $0xf8] sm:$0xff]
    %v5379 = vld [vmem:[%s5 + $0x100] sm:$0xff]
    %v5380 = vld [vmem:[%s5 + $0x108] sm:$0xff]
    %v5381 = vld [vmem:[%s5 + $0x110] sm:$0xff]
    %v5382 = vld [vmem:[%s5 + $0x118] sm:$0xff]
    %v5383 = vld [vmem:[%s5 + $0x120] sm:$0xff]
    %v5384 = vld [vmem:[%s5 + $0x128] sm:$0xff]
    %v5385 = vld [vmem:[%s5 + $0x130] sm:$0xff]
    %v5386 = vld [vmem:[%s5 + $0x138] sm:$0xff]
    %v5387 = vld [vmem:[%s5 + $0x140] sm:$0xff]
    %v5388 = vld [vmem:[%s5 + $0x148] sm:$0xff]
    %v5389 = vld [vmem:[%s5 + $0x150] sm:$0xff]
    %v5390 = vld [vmem:[%s5 + $0x158] sm:$0xff]
    %v5391 = vld [vmem:[%s5 + $0x160] sm:$0xff]
    %v5392 = vld [vmem:[%s5 + $0x168] sm:$0xff]
    %v5393 = vld [vmem:[%s5 + $0x170] sm:$0xff]
    %v5394 = vld [vmem:[%s5 + $0x178] sm:$0xff]
    %v5395 = vld [vmem:[%s5 + $0x180] sm:$0xff]
    %v5396 = vld [vmem:[%s5 + $0x188] sm:$0xff]
    %v5397 = vld [vmem:[%s5 + $0x190] sm:$0xff]
    %v5398 = vld [vmem:[%s5 + $0x198] sm:$0xff]
    %v5399 = vld [vmem:[%s5 + $0x1a0] sm:$0xff]
    %v5400 = vld [vmem:[%s5 + $0x1a8] sm:$0xff]
    %v5401 = vld [vmem:[%s5 + $0x1b0] sm:$0xff]
    %v5402 = vld [vmem:[%s5 + $0x1b8] sm:$0xff]
    %v5403 = vld [vmem:[%s5 + $0x1c0] sm:$0xff]
    %v5404 = vld [vmem:[%s5 + $0x1c8] sm:$0xff]
    %v5405 = vld [vmem:[%s5 + $0x1d0] sm:$0xff]
    %v5406 = vld [vmem:[%s5 + $0x1d8] sm:$0xff]
    %v5407 = vld [vmem:[%s5 + $0x1e0] sm:$0xff]
    %v5408 = vld [vmem:[%s5 + $0x1e8] sm:$0xff]
    %v5409 = vld [vmem:[%s5 + $0x1f0] sm:$0xff]
    %v5410 = vld [vmem:[%s5 + $0x1f8] sm:$0xff]
    %5411 = vmatprep.subr.mxu0 0.0
    %5412 = vmatpush1.msra.mxu0 %v5362
    %5413 = vmatprep.subr.mxu0 0.0
    %5414 = vmatpush1.msra.mxu0 %v5361
    %5415 = vmatprep.subr.mxu0 0.0
    %5416 = vmatpush1.msra.mxu0 %v5360
    %5417 = vmatprep.subr.mxu0 0.0
    %5418 = vmatpush1.msra.mxu0 %v5359
    %5419 = vmatprep.subr.mxu0 0.0
    %5420 = vmatpush1.msra.mxu0 %v5358
    %5421 = vmatprep.subr.mxu0 0.0
    %5422 = vmatpush1.msra.mxu0 %v5357
    %5423 = vmatprep.subr.mxu0 0.0
    %5424 = vmatpush1.msra.mxu0 %v5356
    %5425 = vmatprep.subr.mxu0 0.0
    %5426 = vmatpush1.msra.mxu0 %v5355
    %5427 = vmatprep.subr.mxu0 0.0
    %5428 = vmatpush1.msra.mxu0 %v5354
    %5429 = vmatprep.subr.mxu0 0.0
    %5430 = vmatpush1.msra.mxu0 %v5353
    %5431 = vmatprep.subr.mxu0 0.0
    %5432 = vmatpush1.msra.mxu0 %v5352
    %5433 = vmatprep.subr.mxu0 0.0
    %5434 = vmatpush1.msra.mxu0 %v5351
    %5435 = vmatprep.subr.mxu0 0.0
    %5436 = vmatpush1.msra.mxu0 %v5350
    %5437 = vmatprep.subr.mxu0 0.0
    %5438 = vmatpush1.msra.mxu0 %v5349
    %5439 = vmatprep.subr.mxu0 0.0
    %5440 = vmatpush1.msra.mxu0 %v5348
    %5441 = vmatprep.subr.mxu0 0.0
    %5442 = vmatpush1.msra.mxu0 %v5347
    %5443 = vmatprep.subr.mxu0 0.0
    %5444 = vmatpush2.msra.mxu0 %v5378
    %5445 = vmatprep.subr.mxu0 0.0
    %5446 = vmatpush2.msra.mxu0 %v5377
    %5447 = vmatprep.subr.mxu0 0.0
    %5448 = vmatpush2.msra.mxu0 %v5376
    %5449 = vmatprep.subr.mxu0 0.0
    %5450 = vmatpush2.msra.mxu0 %v5375
    %5451 = vmatprep.subr.mxu0 0.0
    %5452 = vmatpush2.msra.mxu0 %v5374
    %5453 = vmatprep.subr.mxu0 0.0
    %5454 = vmatpush2.msra.mxu0 %v5373
    %5455 = vmatprep.subr.mxu0 0.0
    %5456 = vmatpush2.msra.mxu0 %v5372
    %5457 = vmatprep.subr.mxu0 0.0
    %5458 = vmatpush2.msra.mxu0 %v5371
    %5459 = vmatprep.subr.mxu0 0.0
    %5460 = vmatpush2.msra.mxu0 %v5370
    %5461 = vmatprep.subr.mxu0 0.0
    %5462 = vmatpush2.msra.mxu0 %v5369
    %5463 = vmatprep.subr.mxu0 0.0
    %5464 = vmatpush2.msra.mxu0 %v5368
    %5465 = vmatprep.subr.mxu0 0.0
    %5466 = vmatpush2.msra.mxu0 %v5367
    %5467 = vmatprep.subr.mxu0 0.0
    %5468 = vmatpush2.msra.mxu0 %v5366
    %5469 = vmatprep.subr.mxu0 0.0
    %5470 = vmatpush2.msra.mxu0 %v5365
    %5471 = vmatprep.subr.mxu0 0.0
    %5472 = vmatpush2.msra.mxu0 %v5364
    %5473 = vmatprep.subr.mxu0 0.0
    %5474 = vmatpush2.msra.mxu0 %v5363
    %5475 = vmatprep.mubr.f32.mxu0 %v4533
    %5476 = vmatmul.mubr.f32.gmra.mxu0 %v4532
    %v5477 = vpop.f32.mrf.mxu0
    %v5478 = vadd.f32 0.0, %v5477
    %v5479 = vpop.f32.mrf.mxu0
    %5480 = vmatprep.mubr.f32.mxu0 %v4537
    %5481 = vmatmul.mubr.f32.gmra.mxu0 %v4536
    %v5482 = vpop.f32.mrf.mxu0
    %v5483 = vadd.f32 0.0, %v5482
    %v5484 = vpop.f32.mrf.mxu0
    %5485 = vmatprep.mubr.f32.mxu0 %v4541
    %5486 = vmatmul.mubr.f32.gmra.mxu0 %v4540
    %v5487 = vpop.f32.mrf.mxu0
    %v5488 = vadd.f32 0.0, %v5487
    %v5489 = vpop.f32.mrf.mxu0
    %5490 = vmatprep.mubr.f32.mxu0 %v4545
    %5491 = vmatmul.mubr.f32.gmra.mxu0 %v4544
    %v5492 = vpop.f32.mrf.mxu0
    %v5493 = vadd.f32 0.0, %v5492
    %v5494 = vpop.f32.mrf.mxu0
    %5495 = vmatprep.mubr.f32.mxu0 %v4549
    %5496 = vmatmul.mubr.f32.gmra.mxu0 %v4548
    %v5497 = vpop.f32.mrf.mxu0
    %v5498 = vadd.f32 0.0, %v5497
    %v5499 = vpop.f32.mrf.mxu0
    %5500 = vmatprep.mubr.f32.mxu0 %v4553
    %5501 = vmatmul.mubr.f32.gmra.mxu0 %v4552
    %v5502 = vpop.f32.mrf.mxu0
    %v5503 = vadd.f32 0.0, %v5502
    %v5504 = vpop.f32.mrf.mxu0
    %5505 = vmatprep.mubr.f32.mxu0 %v4557
    %5506 = vmatmul.mubr.f32.gmra.mxu0 %v4556
    %v5507 = vpop.f32.mrf.mxu0
    %v5508 = vadd.f32 0.0, %v5507
    %v5509 = vpop.f32.mrf.mxu0
    %5510 = vmatprep.mubr.f32.mxu0 %v4561
    %5511 = vmatmul.mubr.f32.gmra.mxu0 %v4560
    %v5512 = vpop.f32.mrf.mxu0
    %v5513 = vadd.f32 0.0, %v5512
    %v5514 = vpop.f32.mrf.mxu0
    %5515 = vmatprep.mubr.f32.mxu0 %v4565
    %5516 = vmatmul.mubr.f32.gmra.mxu0 %v4564
    %v5517 = vpop.f32.mrf.mxu0
    %v5518 = vadd.f32 0.0, %v5517
    %v5519 = vpop.f32.mrf.mxu0
    %5520 = vmatprep.mubr.f32.mxu0 %v4569
    %5521 = vmatmul.mubr.f32.gmra.mxu0 %v4568
    %v5522 = vpop.f32.mrf.mxu0
    %v5523 = vadd.f32 0.0, %v5522
    %v5524 = vpop.f32.mrf.mxu0
    %5525 = vmatprep.mubr.f32.mxu0 %v4573
    %5526 = vmatmul.mubr.f32.gmra.mxu0 %v4572
    %v5527 = vpop.f32.mrf.mxu0
    %v5528 = vadd.f32 0.0, %v5527
    %v5529 = vpop.f32.mrf.mxu0
    %5530 = vmatprep.mubr.f32.mxu0 %v4577
    %5531 = vmatmul.mubr.f32.gmra.mxu0 %v4576
    %v5532 = vpop.f32.mrf.mxu0
    %v5533 = vadd.f32 0.0, %v5532
    %v5534 = vpop.f32.mrf.mxu0
    %5535 = vmatprep.mubr.f32.mxu0 %v4581
    %5536 = vmatmul.mubr.f32.gmra.mxu0 %v4580
    %v5537 = vpop.f32.mrf.mxu0
    %v5538 = vadd.f32 0.0, %v5537
    %v5539 = vpop.f32.mrf.mxu0
    %5540 = vmatprep.mubr.f32.mxu0 %v4585
    %5541 = vmatmul.mubr.f32.gmra.mxu0 %v4584
    %v5542 = vpop.f32.mrf.mxu0
    %v5543 = vadd.f32 0.0, %v5542
    %v5544 = vpop.f32.mrf.mxu0
    %5545 = vdwg.mxu0
    %5546 = vmatprep.subr.mxu0 0.0
    %5547 = vmatpush1.msra.mxu0 %v5394
    %5548 = vmatprep.subr.mxu0 0.0
    %5549 = vmatpush1.msra.mxu0 %v5393
    %5550 = vmatprep.subr.mxu0 0.0
    %5551 = vmatpush1.msra.mxu0 %v5392
    %5552 = vmatprep.subr.mxu0 0.0
    %5553 = vmatpush1.msra.mxu0 %v5391
    %5554 = vmatprep.subr.mxu0 0.0
    %5555 = vmatpush1.msra.mxu0 %v5390
    %5556 = vmatprep.subr.mxu0 0.0
    %5557 = vmatpush1.msra.mxu0 %v5389
    %5558 = vmatprep.subr.mxu0 0.0
    %5559 = vmatpush1.msra.mxu0 %v5388
    %5560 = vmatprep.subr.mxu0 0.0
    %5561 = vmatpush1.msra.mxu0 %v5387
    %5562 = vmatprep.subr.mxu0 0.0
    %5563 = vmatpush1.msra.mxu0 %v5386
    %5564 = vmatprep.subr.mxu0 0.0
    %5565 = vmatpush1.msra.mxu0 %v5385
    %5566 = vmatprep.subr.mxu0 0.0
    %5567 = vmatpush1.msra.mxu0 %v5384
    %5568 = vmatprep.subr.mxu0 0.0
    %5569 = vmatpush1.msra.mxu0 %v5383
    %5570 = vmatprep.subr.mxu0 0.0
    %5571 = vmatpush1.msra.mxu0 %v5382
    %5572 = vmatprep.subr.mxu0 0.0
    %5573 = vmatpush1.msra.mxu0 %v5381
    %5574 = vmatprep.subr.mxu0 0.0
    %5575 = vmatpush1.msra.mxu0 %v5380
    %5576 = vmatprep.subr.mxu0 0.0
    %5577 = vmatpush1.msra.mxu0 %v5379
    %5578 = vmatprep.subr.mxu0 0.0
    %5579 = vmatpush2.msra.mxu0 %v5410
    %5580 = vmatprep.subr.mxu0 0.0
    %5581 = vmatpush2.msra.mxu0 %v5409
    %5582 = vmatprep.subr.mxu0 0.0
    %5583 = vmatpush2.msra.mxu0 %v5408
    %5584 = vmatprep.subr.mxu0 0.0
    %5585 = vmatpush2.msra.mxu0 %v5407
    %5586 = vmatprep.subr.mxu0 0.0
    %5587 = vmatpush2.msra.mxu0 %v5406
    %5588 = vmatprep.subr.mxu0 0.0
    %5589 = vmatpush2.msra.mxu0 %v5405
    %5590 = vmatprep.subr.mxu0 0.0
    %5591 = vmatpush2.msra.mxu0 %v5404
    %5592 = vmatprep.subr.mxu0 0.0
    %5593 = vmatpush2.msra.mxu0 %v5403
    %5594 = vmatprep.subr.mxu0 0.0
    %5595 = vmatpush2.msra.mxu0 %v5402
    %5596 = vmatprep.subr.mxu0 0.0
    %5597 = vmatpush2.msra.mxu0 %v5401
    %5598 = vmatprep.subr.mxu0 0.0
    %5599 = vmatpush2.msra.mxu0 %v5400
    %5600 = vmatprep.subr.mxu0 0.0
    %5601 = vmatpush2.msra.mxu0 %v5399
    %5602 = vmatprep.subr.mxu0 0.0
    %5603 = vmatpush2.msra.mxu0 %v5398
    %5604 = vmatprep.subr.mxu0 0.0
    %5605 = vmatpush2.msra.mxu0 %v5397
    %5606 = vmatprep.subr.mxu0 0.0
    %5607 = vmatpush2.msra.mxu0 %v5396
    %5608 = vmatprep.subr.mxu0 0.0
    %5609 = vmatpush2.msra.mxu0 %v5395
    %5610 = vmatprep.mubr.f32.mxu0 %v4535
    %5611 = vmatmul.mubr.f32.gmra.mxu0 %v4534
    %v5612 = vpop.f32.mrf.mxu0
    %v5613 = vadd.f32 %v5478, %v5612
    %v5614 = vpop.f32.mrf.mxu0
    %5615 = vmatprep.mubr.f32.mxu0 %v4539
    %5616 = vmatmul.mubr.f32.gmra.mxu0 %v4538
    %v5617 = vpop.f32.mrf.mxu0
    %v5618 = vadd.f32 %v5483, %v5617
    %v5619 = vpop.f32.mrf.mxu0
    %5620 = vmatprep.mubr.f32.mxu0 %v4543
    %5621 = vmatmul.mubr.f32.gmra.mxu0 %v4542
    %v5622 = vpop.f32.mrf.mxu0
    %v5623 = vadd.f32 %v5488, %v5622
    %v5624 = vpop.f32.mrf.mxu0
    %5625 = vmatprep.mubr.f32.mxu0 %v4547
    %5626 = vmatmul.mubr.f32.gmra.mxu0 %v4546
    %v5627 = vpop.f32.mrf.mxu0
    %v5628 = vadd.f32 %v5493, %v5627
    %v5629 = vpop.f32.mrf.mxu0
    %5630 = vmatprep.mubr.f32.mxu0 %v4551
    %5631 = vmatmul.mubr.f32.gmra.mxu0 %v4550
    %v5632 = vpop.f32.mrf.mxu0
    %v5633 = vadd.f32 %v5498, %v5632
    %v5634 = vpop.f32.mrf.mxu0
    %5635 = vmatprep.mubr.f32.mxu0 %v4555
    %5636 = vmatmul.mubr.f32.gmra.mxu0 %v4554
    %v5637 = vpop.f32.mrf.mxu0
    %v5638 = vadd.f32 %v5503, %v5637
    %v5639 = vpop.f32.mrf.mxu0
    %5640 = vmatprep.mubr.f32.mxu0 %v4559
    %5641 = vmatmul.mubr.f32.gmra.mxu0 %v4558
    %v5642 = vpop.f32.mrf.mxu0
    %v5643 = vadd.f32 %v5508, %v5642
    %v5644 = vpop.f32.mrf.mxu0
    %5645 = vmatprep.mubr.f32.mxu0 %v4563
    %5646 = vmatmul.mubr.f32.gmra.mxu0 %v4562
    %v5647 = vpop.f32.mrf.mxu0
    %v5648 = vadd.f32 %v5513, %v5647
    %v5649 = vpop.f32.mrf.mxu0
    %5650 = vmatprep.mubr.f32.mxu0 %v4567
    %5651 = vmatmul.mubr.f32.gmra.mxu0 %v4566
    %v5652 = vpop.f32.mrf.mxu0
    %v5653 = vadd.f32 %v5518, %v5652
    %v5654 = vpop.f32.mrf.mxu0
    %5655 = vmatprep.mubr.f32.mxu0 %v4571
    %5656 = vmatmul.mubr.f32.gmra.mxu0 %v4570
    %v5657 = vpop.f32.mrf.mxu0
    %v5658 = vadd.f32 %v5523, %v5657
    %v5659 = vpop.f32.mrf.mxu0
    %5660 = vmatprep.mubr.f32.mxu0 %v4575
    %5661 = vmatmul.mubr.f32.gmra.mxu0 %v4574
    %v5662 = vpop.f32.mrf.mxu0
    %v5663 = vadd.f32 %v5528, %v5662
    %v5664 = vpop.f32.mrf.mxu0
    %5665 = vmatprep.mubr.f32.mxu0 %v4579
    %5666 = vmatmul.mubr.f32.gmra.mxu0 %v4578
    %v5667 = vpop.f32.mrf.mxu0
    %v5668 = vadd.f32 %v5533, %v5667
    %v5669 = vpop.f32.mrf.mxu0
    %5670 = vmatprep.mubr.f32.mxu0 %v4583
    %5671 = vmatmul.mubr.f32.gmra.mxu0 %v4582
    %v5672 = vpop.f32.mrf.mxu0
    %v5673 = vadd.f32 %v5538, %v5672
    %v5674 = vpop.f32.mrf.mxu0
    %5675 = vmatprep.mubr.f32.mxu0 %v4587
    %5676 = vmatmul.mubr.f32.gmra.mxu0 %v4586
    %v5677 = vpop.f32.mrf.mxu0
    %v5678 = vadd.f32 %v5543, %v5677
    %v5679 = vpop.f32.mrf.mxu0
    %5680 = vdwg.mxu0
    %5681 = vmatprep.subr.mxu0 0.0
    %5682 = vmatpush1.msra.mxu0 %v5298
    %5683 = vmatprep.subr.mxu0 0.0
    %5684 = vmatpush1.msra.mxu0 %v5297
    %5685 = vmatprep.subr.mxu0 0.0
    %5686 = vmatpush1.msra.mxu0 %v5296
    %5687 = vmatprep.subr.mxu0 0.0
    %5688 = vmatpush1.msra.mxu0 %v5295
    %5689 = vmatprep.subr.mxu0 0.0
    %5690 = vmatpush1.msra.mxu0 %v5294
    %5691 = vmatprep.subr.mxu0 0.0
    %5692 = vmatpush1.msra.mxu0 %v5293
    %5693 = vmatprep.subr.mxu0 0.0
    %5694 = vmatpush1.msra.mxu0 %v5292
    %5695 = vmatprep.subr.mxu0 0.0
    %5696 = vmatpush1.msra.mxu0 %v5291
    %5697 = vmatprep.subr.mxu0 0.0
    %5698 = vmatpush1.msra.mxu0 %v5290
    %5699 = vmatprep.subr.mxu0 0.0
    %5700 = vmatpush1.msra.mxu0 %v5289
    %5701 = vmatprep.subr.mxu0 0.0
    %5702 = vmatpush1.msra.mxu0 %v5288
    %5703 = vmatprep.subr.mxu0 0.0
    %5704 = vmatpush1.msra.mxu0 %v5287
    %5705 = vmatprep.subr.mxu0 0.0
    %5706 = vmatpush1.msra.mxu0 %v5286
    %5707 = vmatprep.subr.mxu0 0.0
    %5708 = vmatpush1.msra.mxu0 %v5285
    %5709 = vmatprep.subr.mxu0 0.0
    %5710 = vmatpush1.msra.mxu0 %v5284
    %5711 = vmatprep.subr.mxu0 0.0
    %5712 = vmatpush1.msra.mxu0 %v5283
    %5713 = vmatprep.subr.mxu0 0.0
    %5714 = vmatpush2.msra.mxu0 %v5314
    %5715 = vmatprep.subr.mxu0 0.0
    %5716 = vmatpush2.msra.mxu0 %v5313
    %5717 = vmatprep.subr.mxu0 0.0
    %5718 = vmatpush2.msra.mxu0 %v5312
    %5719 = vmatprep.subr.mxu0 0.0
    %5720 = vmatpush2.msra.mxu0 %v5311
    %5721 = vmatprep.subr.mxu0 0.0
    %5722 = vmatpush2.msra.mxu0 %v5310
    %5723 = vmatprep.subr.mxu0 0.0
    %5724 = vmatpush2.msra.mxu0 %v5309
    %5725 = vmatprep.subr.mxu0 0.0
    %5726 = vmatpush2.msra.mxu0 %v5308
    %5727 = vmatprep.subr.mxu0 0.0
    %5728 = vmatpush2.msra.mxu0 %v5307
    %5729 = vmatprep.subr.mxu0 0.0
    %5730 = vmatpush2.msra.mxu0 %v5306
    %5731 = vmatprep.subr.mxu0 0.0
    %5732 = vmatpush2.msra.mxu0 %v5305
    %5733 = vmatprep.subr.mxu0 0.0
    %5734 = vmatpush2.msra.mxu0 %v5304
    %5735 = vmatprep.subr.mxu0 0.0
    %5736 = vmatpush2.msra.mxu0 %v5303
    %5737 = vmatprep.subr.mxu0 0.0
    %5738 = vmatpush2.msra.mxu0 %v5302
    %5739 = vmatprep.subr.mxu0 0.0
    %5740 = vmatpush2.msra.mxu0 %v5301
    %5741 = vmatprep.subr.mxu0 0.0
    %5742 = vmatpush2.msra.mxu0 %v5300
    %5743 = vmatprep.subr.mxu0 0.0
    %5744 = vmatpush2.msra.mxu0 %v5299
    %5745 = vmatprep.mubr.f32.mxu0 %v4473
    %5746 = vmatmul.mubr.f32.gmra.mxu0 %v4472
    %v5747 = vpop.f32.mrf.mxu0
    %v5748 = vadd.f32 %v5613, %v5747
    %v5749 = vpop.f32.mrf.mxu0
    %5750 = vmatprep.mubr.f32.mxu0 %v4477
    %5751 = vmatmul.mubr.f32.gmra.mxu0 %v4476
    %v5752 = vpop.f32.mrf.mxu0
    %v5753 = vadd.f32 %v5618, %v5752
    %v5754 = vpop.f32.mrf.mxu0
    %5755 = vmatprep.mubr.f32.mxu0 %v4481
    %5756 = vmatmul.mubr.f32.gmra.mxu0 %v4480
    %v5757 = vpop.f32.mrf.mxu0
    %v5758 = vadd.f32 %v5623, %v5757
    %v5759 = vpop.f32.mrf.mxu0
    %5760 = vmatprep.mubr.f32.mxu0 %v4485
    %5761 = vmatmul.mubr.f32.gmra.mxu0 %v4484
    %v5762 = vpop.f32.mrf.mxu0
    %v5763 = vadd.f32 %v5628, %v5762
    %v5764 = vpop.f32.mrf.mxu0
    %5765 = vmatprep.mubr.f32.mxu0 %v4489
    %5766 = vmatmul.mubr.f32.gmra.mxu0 %v4488
    %v5767 = vpop.f32.mrf.mxu0
    %v5768 = vadd.f32 %v5633, %v5767
    %v5769 = vpop.f32.mrf.mxu0
    %5770 = vmatprep.mubr.f32.mxu0 %v4493
    %5771 = vmatmul.mubr.f32.gmra.mxu0 %v4492
    %v5772 = vpop.f32.mrf.mxu0
    %v5773 = vadd.f32 %v5638, %v5772
    %v5774 = vpop.f32.mrf.mxu0
    %5775 = vmatprep.mubr.f32.mxu0 %v4497
    %5776 = vmatmul.mubr.f32.gmra.mxu0 %v4496
    %v5777 = vpop.f32.mrf.mxu0
    %v5778 = vadd.f32 %v5643, %v5777
    %v5779 = vpop.f32.mrf.mxu0
    %5780 = vmatprep.mubr.f32.mxu0 %v4501
    %5781 = vmatmul.mubr.f32.gmra.mxu0 %v4500
    %v5782 = vpop.f32.mrf.mxu0
    %v5783 = vadd.f32 %v5648, %v5782
    %v5784 = vpop.f32.mrf.mxu0
    %5785 = vmatprep.mubr.f32.mxu0 %v4505
    %5786 = vmatmul.mubr.f32.gmra.mxu0 %v4504
    %v5787 = vpop.f32.mrf.mxu0
    %v5788 = vadd.f32 %v5653, %v5787
    %v5789 = vpop.f32.mrf.mxu0
    %5790 = vmatprep.mubr.f32.mxu0 %v4509
    %5791 = vmatmul.mubr.f32.gmra.mxu0 %v4508
    %v5792 = vpop.f32.mrf.mxu0
    %v5793 = vadd.f32 %v5658, %v5792
    %v5794 = vpop.f32.mrf.mxu0
    %5795 = vmatprep.mubr.f32.mxu0 %v4513
    %5796 = vmatmul.mubr.f32.gmra.mxu0 %v4512
    %v5797 = vpop.f32.mrf.mxu0
    %v5798 = vadd.f32 %v5663, %v5797
    %v5799 = vpop.f32.mrf.mxu0
    %5800 = vmatprep.mubr.f32.mxu0 %v4517
    %5801 = vmatmul.mubr.f32.gmra.mxu0 %v4516
    %v5802 = vpop.f32.mrf.mxu0
    %v5803 = vadd.f32 %v5668, %v5802
    %v5804 = vpop.f32.mrf.mxu0
    %5805 = vmatprep.mubr.f32.mxu0 %v4521
    %5806 = vmatmul.mubr.f32.gmra.mxu0 %v4520
    %v5807 = vpop.f32.mrf.mxu0
    %v5808 = vadd.f32 %v5673, %v5807
    %v5809 = vpop.f32.mrf.mxu0
    %5810 = vmatprep.mubr.f32.mxu0 %v4525
    %5811 = vmatmul.mubr.f32.gmra.mxu0 %v4524
    %v5812 = vpop.f32.mrf.mxu0
    %v5813 = vadd.f32 %v5678, %v5812
    %v5814 = vpop.f32.mrf.mxu0
    %5815 = vdwg.mxu0
    %5816 = vmatprep.subr.mxu0 0.0
    %5817 = vmatpush1.msra.mxu0 %v5330
    %5818 = vmatprep.subr.mxu0 0.0
    %5819 = vmatpush1.msra.mxu0 %v5329
    %5820 = vmatprep.subr.mxu0 0.0
    %5821 = vmatpush1.msra.mxu0 %v5328
    %5822 = vmatprep.subr.mxu0 0.0
    %5823 = vmatpush1.msra.mxu0 %v5327
    %5824 = vmatprep.subr.mxu0 0.0
    %5825 = vmatpush1.msra.mxu0 %v5326
    %5826 = vmatprep.subr.mxu0 0.0
    %5827 = vmatpush1.msra.mxu0 %v5325
    %5828 = vmatprep.subr.mxu0 0.0
    %5829 = vmatpush1.msra.mxu0 %v5324
    %5830 = vmatprep.subr.mxu0 0.0
    %5831 = vmatpush1.msra.mxu0 %v5323
    %5832 = vmatprep.subr.mxu0 0.0
    %5833 = vmatpush1.msra.mxu0 %v5322
    %5834 = vmatprep.subr.mxu0 0.0
    %5835 = vmatpush1.msra.mxu0 %v5321
    %5836 = vmatprep.subr.mxu0 0.0
    %5837 = vmatpush1.msra.mxu0 %v5320
    %5838 = vmatprep.subr.mxu0 0.0
    %5839 = vmatpush1.msra.mxu0 %v5319
    %5840 = vmatprep.subr.mxu0 0.0
    %5841 = vmatpush1.msra.mxu0 %v5318
    %5842 = vmatprep.subr.mxu0 0.0
    %5843 = vmatpush1.msra.mxu0 %v5317
    %5844 = vmatprep.subr.mxu0 0.0
    %5845 = vmatpush1.msra.mxu0 %v5316
    %5846 = vmatprep.subr.mxu0 0.0
    %5847 = vmatpush1.msra.mxu0 %v5315
    %5848 = vmatprep.subr.mxu0 0.0
    %5849 = vmatpush2.msra.mxu0 %v5346
    %5850 = vmatprep.subr.mxu0 0.0
    %5851 = vmatpush2.msra.mxu0 %v5345
    %5852 = vmatprep.subr.mxu0 0.0
    %5853 = vmatpush2.msra.mxu0 %v5344
    %5854 = vmatprep.subr.mxu0 0.0
    %5855 = vmatpush2.msra.mxu0 %v5343
    %5856 = vmatprep.subr.mxu0 0.0
    %5857 = vmatpush2.msra.mxu0 %v5342
    %5858 = vmatprep.subr.mxu0 0.0
    %5859 = vmatpush2.msra.mxu0 %v5341
    %5860 = vmatprep.subr.mxu0 0.0
    %5861 = vmatpush2.msra.mxu0 %v5340
    %5862 = vmatprep.subr.mxu0 0.0
    %5863 = vmatpush2.msra.mxu0 %v5339
    %5864 = vmatprep.subr.mxu0 0.0
    %5865 = vmatpush2.msra.mxu0 %v5338
    %5866 = vmatprep.subr.mxu0 0.0
    %5867 = vmatpush2.msra.mxu0 %v5337
    %5868 = vmatprep.subr.mxu0 0.0
    %5869 = vmatpush2.msra.mxu0 %v5336
    %5870 = vmatprep.subr.mxu0 0.0
    %5871 = vmatpush2.msra.mxu0 %v5335
    %5872 = vmatprep.subr.mxu0 0.0
    %5873 = vmatpush2.msra.mxu0 %v5334
    %5874 = vmatprep.subr.mxu0 0.0
    %5875 = vmatpush2.msra.mxu0 %v5333
    %5876 = vmatprep.subr.mxu0 0.0
    %5877 = vmatpush2.msra.mxu0 %v5332
    %5878 = vmatprep.subr.mxu0 0.0
    %5879 = vmatpush2.msra.mxu0 %v5331
    %5880 = vmatprep.mubr.f32.mxu0 %v4475
    %5881 = vmatmul.mubr.f32.gmra.mxu0 %v4474
    %v5882 = vpop.f32.mrf.mxu0
    %v5883 = vadd.f32 %v5748, %v5882
    %v5884 = vpop.f32.mrf.mxu0
    %5885 = vmatprep.mubr.f32.mxu0 %v4479
    %5886 = vmatmul.mubr.f32.gmra.mxu0 %v4478
    %v5887 = vpop.f32.mrf.mxu0
    %v5888 = vadd.f32 %v5753, %v5887
    %v5889 = vpop.f32.mrf.mxu0
    %5890 = vmatprep.mubr.f32.mxu0 %v4483
    %5891 = vmatmul.mubr.f32.gmra.mxu0 %v4482
    %v5892 = vpop.f32.mrf.mxu0
    %v5893 = vadd.f32 %v5758, %v5892
    %v5894 = vpop.f32.mrf.mxu0
    %5895 = vmatprep.mubr.f32.mxu0 %v4487
    %5896 = vmatmul.mubr.f32.gmra.mxu0 %v4486
    %v5897 = vpop.f32.mrf.mxu0
    %v5898 = vadd.f32 %v5763, %v5897
    %v5899 = vpop.f32.mrf.mxu0
    %5900 = vmatprep.mubr.f32.mxu0 %v4491
    %5901 = vmatmul.mubr.f32.gmra.mxu0 %v4490
    %v5902 = vpop.f32.mrf.mxu0
    %v5903 = vadd.f32 %v5768, %v5902
    %v5904 = vpop.f32.mrf.mxu0
    %5905 = vmatprep.mubr.f32.mxu0 %v4495
    %5906 = vmatmul.mubr.f32.gmra.mxu0 %v4494
    %v5907 = vpop.f32.mrf.mxu0
    %v5908 = vadd.f32 %v5773, %v5907
    %v5909 = vpop.f32.mrf.mxu0
    %5910 = vmatprep.mubr.f32.mxu0 %v4499
    %5911 = vmatmul.mubr.f32.gmra.mxu0 %v4498
    %v5912 = vpop.f32.mrf.mxu0
    %v5913 = vadd.f32 %v5778, %v5912
    %v5914 = vpop.f32.mrf.mxu0
    %5915 = vmatprep.mubr.f32.mxu0 %v4503
    %5916 = vmatmul.mubr.f32.gmra.mxu0 %v4502
    %v5917 = vpop.f32.mrf.mxu0
    %v5918 = vadd.f32 %v5783, %v5917
    %v5919 = vpop.f32.mrf.mxu0
    %5920 = vmatprep.mubr.f32.mxu0 %v4507
    %5921 = vmatmul.mubr.f32.gmra.mxu0 %v4506
    %v5922 = vpop.f32.mrf.mxu0
    %v5923 = vadd.f32 %v5788, %v5922
    %v5924 = vpop.f32.mrf.mxu0
    %5925 = vmatprep.mubr.f32.mxu0 %v4511
    %5926 = vmatmul.mubr.f32.gmra.mxu0 %v4510
    %v5927 = vpop.f32.mrf.mxu0
    %v5928 = vadd.f32 %v5793, %v5927
    %v5929 = vpop.f32.mrf.mxu0
    %5930 = vmatprep.mubr.f32.mxu0 %v4515
    %5931 = vmatmul.mubr.f32.gmra.mxu0 %v4514
    %v5932 = vpop.f32.mrf.mxu0
    %v5933 = vadd.f32 %v5798, %v5932
    %v5934 = vpop.f32.mrf.mxu0
    %5935 = vmatprep.mubr.f32.mxu0 %v4519
    %5936 = vmatmul.mubr.f32.gmra.mxu0 %v4518
    %v5937 = vpop.f32.mrf.mxu0
    %v5938 = vadd.f32 %v5803, %v5937
    %v5939 = vpop.f32.mrf.mxu0
    %5940 = vmatprep.mubr.f32.mxu0 %v4523
    %5941 = vmatmul.mubr.f32.gmra.mxu0 %v4522
    %v5942 = vpop.f32.mrf.mxu0
    %v5943 = vadd.f32 %v5808, %v5942
    %v5944 = vpop.f32.mrf.mxu0
    %5945 = vmatprep.mubr.f32.mxu0 %v4527
    %5946 = vmatmul.mubr.f32.gmra.mxu0 %v4526
    %v5947 = vpop.f32.mrf.mxu0
    %v5948 = vadd.f32 %v5813, %v5947
    %v5949 = vpop.f32.mrf.mxu0
    %5950 = vdwg.mxu0
    %v5951 = vadd.f32 %v5883, %v5266
    %v5952 = vadd.f32 %v5888, %v5266
    %v5953 = vadd.f32 %v5893, %v5266
    %v5954 = vadd.f32 %v5898, %v5266
    %v5955 = vadd.f32 %v5903, %v5266
    %v5956 = vadd.f32 %v5908, %v5266
    %v5957 = vadd.f32 %v5913, %v5266
    %v5958 = vadd.f32 %v5918, %v5266
    %v5959 = vadd.f32 %v5923, %v5266
    %v5960 = vadd.f32 %v5928, %v5266
    %v5961 = vadd.f32 %v5933, %v5266
    %v5962 = vadd.f32 %v5938, %v5266
    %v5963 = vadd.f32 %v5943, %v5266
    %v5964 = vadd.f32 %v5948, %v5266
    %v5965 = vxor.u32 %v5268, 2147483648
    %v5966 = vxor.u32 %v5269, 2147483648
    %v5967 = vxor.u32 %v5270, 2147483648
    %v5968 = vxor.u32 %v5271, 2147483648
    %v5969 = vxor.u32 %v5272, 2147483648
    %v5970 = vxor.u32 %v5273, 2147483648
    %v5971 = vxor.u32 %v5274, 2147483648
    %v5972 = vxor.u32 %v5275, 2147483648
    %v5973 = vxor.u32 %v5276, 2147483648
    %v5974 = vxor.u32 %v5277, 2147483648
    %v5975 = vxor.u32 %v5278, 2147483648
    %v5976 = vxor.u32 %v5279, 2147483648
    %v5977 = vxor.u32 %v5280, 2147483648
    %v5978 = vxor.u32 %v5281, 2147483648
    %v5979 = vmul.f32 %v5965, 1.442695
    %v5980 = vpow.pop %v5979
    %v5981 = vmul.f32 %v5966, 1.442695
    %v5982 = vpow.pop %v5981
    %v5983 = vmul.f32 %v5967, 1.442695
    %v5984 = vpow.pop %v5983
    %v5985 = vmul.f32 %v5968, 1.442695
    %v5986 = vpow.pop %v5985
    %v5987 = vmul.f32 %v5969, 1.442695
    %v5988 = vpow.pop %v5987
    %v5989 = vmul.f32 %v5970, 1.442695
    %v5990 = vpow.pop %v5989
    %v5991 = vmul.f32 %v5971, 1.442695
    %v5992 = vpow.pop %v5991
    %v5993 = vmul.f32 %v5972, 1.442695
    %v5994 = vpow.pop %v5993
    %v5995 = vmul.f32 %v5973, 1.442695
    %v5996 = vpow.pop %v5995
    %v5997 = vmul.f32 %v5974, 1.442695
    %v5998 = vpow.pop %v5997
    %v5999 = vmul.f32 %v5975, 1.442695
    %v6000 = vpow.pop %v5999
    %v6001 = vmul.f32 %v5976, 1.442695
    %v6002 = vpow.pop %v6001
    %v6003 = vmul.f32 %v5977, 1.442695
    %v6004 = vpow.pop %v6003
    %v6005 = vmul.f32 %v5978, 1.442695
    %v6006 = vpow.pop %v6005
    %v6007 = vadd.f32 %v5980, 1.0
    %v6008 = vadd.f32 %v5982, 1.0
    %v6009 = vadd.f32 %v5984, 1.0
    %v6010 = vadd.f32 %v5986, 1.0
    %v6011 = vadd.f32 %v5988, 1.0
    %v6012 = vadd.f32 %v5990, 1.0
    %v6013 = vadd.f32 %v5992, 1.0
    %v6014 = vadd.f32 %v5994, 1.0
    %v6015 = vadd.f32 %v5996, 1.0
    %v6016 = vadd.f32 %v5998, 1.0
    %v6017 = vadd.f32 %v6000, 1.0
    %v6018 = vadd.f32 %v6002, 1.0
    %v6019 = vadd.f32 %v6004, 1.0
    %v6020 = vadd.f32 %v6006, 1.0
    %v6021 = vrcp.pop %v6007
    %v6022 = vmul.f32 1.0, %v6021
    %v6023 = vrcp.pop %v6008
    %v6024 = vmul.f32 1.0, %v6023
    %v6025 = vrcp.pop %v6009
    %v6026 = vmul.f32 1.0, %v6025
    %v6027 = vrcp.pop %v6010
    %v6028 = vmul.f32 1.0, %v6027
    %v6029 = vrcp.pop %v6011
    %v6030 = vmul.f32 1.0, %v6029
    %v6031 = vrcp.pop %v6012
    %v6032 = vmul.f32 1.0, %v6031
    %v6033 = vrcp.pop %v6013
    %v6034 = vmul.f32 1.0, %v6033
    %v6035 = vrcp.pop %v6014
    %v6036 = vmul.f32 1.0, %v6035
    %v6037 = vrcp.pop %v6015
    %v6038 = vmul.f32 1.0, %v6037
    %v6039 = vrcp.pop %v6016
    %v6040 = vmul.f32 1.0, %v6039
    %v6041 = vrcp.pop %v6017
    %v6042 = vmul.f32 1.0, %v6041
    %v6043 = vrcp.pop %v6018
    %v6044 = vmul.f32 1.0, %v6043
    %v6045 = vrcp.pop %v6019
    %v6046 = vmul.f32 1.0, %v6045
    %v6047 = vrcp.pop %v6020
    %v6048 = vmul.f32 1.0, %v6047
    %vm6049 = vcmask 228352
    %6050 = vst.msk [vmem:[%s7] sm:$0xff] %vm6049, %v6022
    %6051 = vst.msk [vmem:[%s7 + $0x8] sm:$0xff] %vm6049, %v6024
    %6052 = vst.msk [vmem:[%s7 + $0x10] sm:$0xff] %vm6049, %v6026
    %6053 = vst.msk [vmem:[%s7 + $0x18] sm:$0xff] %vm6049, %v6028
    %6054 = vst.msk [vmem:[%s7 + $0x20] sm:$0xff] %vm6049, %v6030
    %6055 = vst.msk [vmem:[%s7 + $0x28] sm:$0xff] %vm6049, %v6032
    %6056 = vst.msk [vmem:[%s7 + $0x30] sm:$0xff] %vm6049, %v6034
    %6057 = vst.msk [vmem:[%s7 + $0x38] sm:$0xff] %vm6049, %v6036
    %6058 = vst.msk [vmem:[%s7 + $0x40] sm:$0xff] %vm6049, %v6038
    %6059 = vst.msk [vmem:[%s7 + $0x48] sm:$0xff] %vm6049, %v6040
    %6060 = vst.msk [vmem:[%s7 + $0x50] sm:$0xff] %vm6049, %v6042
    %6061 = vst.msk [vmem:[%s7 + $0x58] sm:$0xff] %vm6049, %v6044
    %6062 = vst.msk [vmem:[%s7 + $0x60] sm:$0xff] %vm6049, %v6046
    %6063 = vst.msk [vmem:[%s7 + $0x68] sm:$0xff] %vm6049, %v6048
    %v6064 = vxor.u32 %v5951, 2147483648
    %v6065 = vxor.u32 %v5952, 2147483648
    %v6066 = vxor.u32 %v5953, 2147483648
    %v6067 = vxor.u32 %v5954, 2147483648
    %v6068 = vxor.u32 %v5955, 2147483648
    %v6069 = vxor.u32 %v5956, 2147483648
    %v6070 = vxor.u32 %v5957, 2147483648
    %v6071 = vxor.u32 %v5958, 2147483648
    %v6072 = vxor.u32 %v5959, 2147483648
    %v6073 = vxor.u32 %v5960, 2147483648
    %v6074 = vxor.u32 %v5961, 2147483648
    %v6075 = vxor.u32 %v5962, 2147483648
    %v6076 = vxor.u32 %v5963, 2147483648
    %v6077 = vxor.u32 %v5964, 2147483648
    %v6078 = vmul.f32 %v6064, 1.442695
    %v6079 = vpow.pop %v6078
    %v6080 = vmul.f32 %v6065, 1.442695
    %v6081 = vpow.pop %v6080
    %v6082 = vmul.f32 %v6066, 1.442695
    %v6083 = vpow.pop %v6082
    %v6084 = vmul.f32 %v6067, 1.442695
    %v6085 = vpow.pop %v6084
    %v6086 = vmul.f32 %v6068, 1.442695
    %v6087 = vpow.pop %v6086
    %v6088 = vmul.f32 %v6069, 1.442695
    %v6089 = vpow.pop %v6088
    %v6090 = vmul.f32 %v6070, 1.442695
    %v6091 = vpow.pop %v6090
    %v6092 = vmul.f32 %v6071, 1.442695
    %v6093 = vpow.pop %v6092
    %v6094 = vmul.f32 %v6072, 1.442695
    %v6095 = vpow.pop %v6094
    %v6096 = vmul.f32 %v6073, 1.442695
    %v6097 = vpow.pop %v6096
    %v6098 = vmul.f32 %v6074, 1.442695
    %v6099 = vpow.pop %v6098
    %v6100 = vmul.f32 %v6075, 1.442695
    %v6101 = vpow.pop %v6100
    %v6102 = vmul.f32 %v6076, 1.442695
    %v6103 = vpow.pop %v6102
    %v6104 = vmul.f32 %v6077, 1.442695
    %v6105 = vpow.pop %v6104
    %v6106 = vadd.f32 %v6079, 1.0
    %v6107 = vadd.f32 %v6081, 1.0
    %v6108 = vadd.f32 %v6083, 1.0
    %v6109 = vadd.f32 %v6085, 1.0
    %v6110 = vadd.f32 %v6087, 1.0
    %v6111 = vadd.f32 %v6089, 1.0
    %v6112 = vadd.f32 %v6091, 1.0
    %v6113 = vadd.f32 %v6093, 1.0
    %v6114 = vadd.f32 %v6095, 1.0
    %v6115 = vadd.f32 %v6097, 1.0
    %v6116 = vadd.f32 %v6099, 1.0
    %v6117 = vadd.f32 %v6101, 1.0
    %v6118 = vadd.f32 %v6103, 1.0
    %v6119 = vadd.f32 %v6105, 1.0
    %v6120 = vrcp.pop %v6106
    %v6121 = vmul.f32 1.0, %v6120
    %v6122 = vrcp.pop %v6107
    %v6123 = vmul.f32 1.0, %v6122
    %v6124 = vrcp.pop %v6108
    %v6125 = vmul.f32 1.0, %v6124
    %v6126 = vrcp.pop %v6109
    %v6127 = vmul.f32 1.0, %v6126
    %v6128 = vrcp.pop %v6110
    %v6129 = vmul.f32 1.0, %v6128
    %v6130 = vrcp.pop %v6111
    %v6131 = vmul.f32 1.0, %v6130
    %v6132 = vrcp.pop %v6112
    %v6133 = vmul.f32 1.0, %v6132
    %v6134 = vrcp.pop %v6113
    %v6135 = vmul.f32 1.0, %v6134
    %v6136 = vrcp.pop %v6114
    %v6137 = vmul.f32 1.0, %v6136
    %v6138 = vrcp.pop %v6115
    %v6139 = vmul.f32 1.0, %v6138
    %v6140 = vrcp.pop %v6116
    %v6141 = vmul.f32 1.0, %v6140
    %v6142 = vrcp.pop %v6117
    %v6143 = vmul.f32 1.0, %v6142
    %v6144 = vrcp.pop %v6118
    %v6145 = vmul.f32 1.0, %v6144
    %v6146 = vrcp.pop %v6119
    %v6147 = vmul.f32 1.0, %v6146
    %s6148 = scalar_lea.vmem %s7, 112
    %6149 = vst.msk [vmem:[%s6148] sm:$0xff] %vm6049, %v6121
    %6150 = vst.msk [vmem:[%s6148 + $0x8] sm:$0xff] %vm6049, %v6123
    %6151 = vst.msk [vmem:[%s6148 + $0x10] sm:$0xff] %vm6049, %v6125
    %6152 = vst.msk [vmem:[%s6148 + $0x18] sm:$0xff] %vm6049, %v6127
    %6153 = vst.msk [vmem:[%s6148 + $0x20] sm:$0xff] %vm6049, %v6129
    %6154 = vst.msk [vmem:[%s6148 + $0x28] sm:$0xff] %vm6049, %v6131
    %6155 = vst.msk [vmem:[%s6148 + $0x30] sm:$0xff] %vm6049, %v6133
    %6156 = vst.msk [vmem:[%s6148 + $0x38] sm:$0xff] %vm6049, %v6135
    %6157 = vst.msk [vmem:[%s6148 + $0x40] sm:$0xff] %vm6049, %v6137
    %6158 = vst.msk [vmem:[%s6148 + $0x48] sm:$0xff] %vm6049, %v6139
    %6159 = vst.msk [vmem:[%s6148 + $0x50] sm:$0xff] %vm6049, %v6141
    %6160 = vst.msk [vmem:[%s6148 + $0x58] sm:$0xff] %vm6049, %v6143
    %6161 = vst.msk [vmem:[%s6148 + $0x60] sm:$0xff] %vm6049, %v6145
    %6162 = vst.msk [vmem:[%s6148 + $0x68] sm:$0xff] %vm6049, %v6147
    // Predicated region
    $region46: #{decoder_forward.1} parent=1 // pred_check
      _
    $region47: #{decoder_forward.1} parent=1 // pred_check_branch
      %6164 = sbr.rel (0) target = $region49
    $region48: #{decoder_forward.1} parent=1 // pred_region
      _
    $region49: #{decoder_forward.1} parent=1 // pred_fallthru
      _
    // Predicated region
    $region50: #{decoder_forward.1} parent=1 // pred_check
      _
    $region51: #{decoder_forward.1} parent=1 // pred_check_branch
      %6166 = sbr.rel (0) target = $region53
    $region52: #{decoder_forward.1} parent=1 // pred_region
      _
    $region53: #{decoder_forward.1} parent=1 // pred_fallthru
      _
    %6167 = vsyncpa [#allocation6], 1
    %6168 = vsyncpa [#allocation8], 1
    %6169 = vsyncpa [#allocation11], 1

</llo_original>
